<compile_context>
chip_gen: v5e
topology: v5e:2x2
jax: 0.10.0
libtpu: 0.0.40
codegen_flags: <defaults>
</compile_context>

<pallas_src>
import functools
import math

import jax
import jax.numpy as jnp
from jax.experimental import pallas as pl
from jax.experimental.pallas import tpu as pltpu


LANE = 128            # TPU lane width (last-dim tiling unit)
SUBLANE = 8           # f32 sublane height
HIDDEN_K_TILE = 2048  # chunk of the 4096-wide hidden dim streamed per grid step
MAX_BATCH_TILE = 1024 # batch-tile cap (raised from 256 per perf review)

# Fixed layer widths from the PyTorch module.
D1, D2, D3, D4, D5 = 128, 512, 4096, 512, 128


def _round_up(x, m):
    return (x + m - 1) // m * m


def _cdiv(a, b):
    return -(-a // b)


# ----------------------------- Pallas kernel ------------------------------- #
def _mlp_kernel(x_ref, wa_ref, wb_ref, ball_ref, w3_ref, b3_ref, w4_ref,
                o_ref, h2_scr, acc4_scr, *, n_in_pad, n_out_pad):
    k = pl.program_id(1)

    # Static offsets into the packed bias operand [b1 | b2 | b4 | b5 | b6].
    o_b2 = D1
    o_b4 = o_b2 + D2
    o_b5 = o_b4 + D4
    o_b6 = o_b5 + D5

    def mxu(lhs, w):
        # bf16 x bf16 on the MXU, f32 accumulation.
        return jnp.dot(lhs.astype(jnp.bfloat16), w,
                       preferred_element_type=jnp.float32)

    # ---- first grid step of this batch tile: layers 1 & 2, zero accumulator.
    @pl.when(k == 0)
    def _():
        w1 = wa_ref[0:n_in_pad, :]                  # (n_in_pad, 128) bf16
        w2 = wb_ref[:, 0:D2]                        # (128, 512)      bf16
        b1 = ball_ref[:, 0:o_b2]
        b2 = ball_ref[:, o_b2:o_b4]
        h1 = jnp.maximum(mxu(x_ref[...], w1) + b1, 0.0)
        h2 = jnp.maximum(mxu(h1, w2) + b2, 0.0)
        h2_scr[...] = h2.astype(jnp.bfloat16)       # bf16 scratch (re-read per k)
        acc4_scr[...] = jnp.zeros_like(acc4_scr)

    # ---- every step: one hidden-dim chunk of layer 3 (+ReLU), layer-4 partial.
    h3 = jnp.maximum(mxu(h2_scr[...], w3_ref[...]) + b3_ref[...], 0.0)
    acc4_scr[...] += mxu(h3, w4_ref[...])

    # ---- last grid step: finish layer 4, then layers 5 & 6, store output.
    @pl.when(k == pl.num_programs(1) - 1)
    def _():
        w5 = wa_ref[n_in_pad:n_in_pad + D4, :]      # (512, 128)       bf16
        w6 = wb_ref[:, D2:D2 + n_out_pad]           # (128, n_out_pad) bf16
        b4 = ball_ref[:, o_b4:o_b5]
        b5 = ball_ref[:, o_b5:o_b6]
        b6 = ball_ref[:, o_b6:o_b6 + n_out_pad]
        h4 = jnp.maximum(acc4_scr[...] + b4, 0.0)
        h5 = jnp.maximum(mxu(h4, w5) + b5, 0.0)
        o_ref[...] = (mxu(h5, w6) + b6).astype(o_ref.dtype)


# ------------------------------ host wrappers ------------------------------ #
def prepare_params(params):
    """Pad first-layer fan_in and last-layer fan_out to 128, cast weights to bf16.

    params: list of (w, b) with w (in, out) f32 and b (1, out) f32.
    Returns (padded_params, n_inputs, n_outputs).
    """
    ws = [w for w, _ in params]
    bs = [b for _, b in params]
    n_in = ws[0].shape[0]
    n_out = ws[-1].shape[1]
    n_in_pad = _round_up(n_in, LANE)
    n_out_pad = _round_up(n_out, LANE)

    ws[0] = jnp.pad(ws[0], ((0, n_in_pad - n_in), (0, 0)))
    ws[-1] = jnp.pad(ws[-1], ((0, 0), (0, n_out_pad - n_out)))
    bs[-1] = jnp.pad(bs[-1], ((0, 0), (0, n_out_pad - n_out)))

    ws = [w.astype(jnp.bfloat16) for w in ws]            # bf16 weight storage
    bs = [b.astype(jnp.float32) for b in bs]             # biases stay f32
    return list(zip(ws, bs)), n_in, n_out


def mlp_forward(x, prepared):
    """x: (batch, n_inputs) f32; prepared: output of prepare_params()."""
    params, n_in, n_out = prepared
    assert x.shape[1] == n_in
    batch = x.shape[0]

    (w1, b1), (w2, b2), (w3, b3), (w4, b4), (w5, b5), (w6, b6) = params
    n_in_pad = w1.shape[0]
    n_out_pad = w6.shape[1]
    d_hidden = w3.shape[1]                                # 4096

    tk = min(HIDDEN_K_TILE, d_hidden)
    assert d_hidden % tk == 0
    n_k = d_hidden // tk

    # Pack the small constant operands: 3 DMA descriptors instead of 9.
    wa = jnp.concatenate([w1, w5], axis=0)                # (n_in_pad+512, 128) bf16
    wb = jnp.concatenate([w2, w6], axis=1)                # (128, 512+n_out_pad) bf16
    ball = jnp.concatenate([b1, b2, b4, b5, b6], axis=1)  # (1, 1280+n_out_pad) f32

    # Batch tiling: cap tb at MAX_BATCH_TILE and choose it so the padded batch
    # is an exact multiple of tb (no divisibility failures for any batch size).
    b_pad0 = max(_round_up(batch, SUBLANE), SUBLANE)
    n_b = _cdiv(b_pad0, MAX_BATCH_TILE)
    tb = _round_up(_cdiv(b_pad0, n_b), SUBLANE)
    b_pad = n_b * tb

    # Pad once in the wrapper; ship activations as bf16 (halves the x DMA).
    x_p = jnp.pad(x.astype(jnp.float32),
                  ((0, b_pad - batch), (0, n_in_pad - n_in))).astype(jnp.bfloat16)

    in_specs = [
        pl.BlockSpec((tb, n_in_pad), lambda i, k: (i, 0)),        # x
        pl.BlockSpec(wa.shape, lambda i, k: (0, 0)),              # [w1; w5]
        pl.BlockSpec(wb.shape, lambda i, k: (0, 0)),              # [w2 | w6]
        pl.BlockSpec(ball.shape, lambda i, k: (0, 0)),            # packed biases
        pl.BlockSpec((w3.shape[0], tk), lambda i, k: (0, k)),     # w3 streamed
        pl.BlockSpec((1, tk), lambda i, k: (0, k)),               # b3 streamed
        pl.BlockSpec((tk, w4.shape[1]), lambda i, k: (k, 0)),     # w4 streamed
    ]
    out_spec = pl.BlockSpec((tb, n_out_pad), lambda i, k: (i, 0))

    # VMEM budget derived from actual usage (double-buffered blocks + scratch).
    streamed = 2 * (w3.shape[0] * tk * 2 + tk * 4 + tk * w4.shape[1] * 2)
    consts = 2 * (int(wa.size) * 2 + int(wb.size) * 2 + int(ball.size) * 4)
    io_tiles = 2 * (tb * n_in_pad * 2 + tb * n_out_pad * 4)
    scratch = tb * D2 * 2 + tb * D4 * 4
    vmem_usage = streamed + consts + io_tiles + scratch
    vmem_limit = min(max(int(vmem_usage * 1.5) + (4 << 20), 16 << 20), 48 << 20)

    # Advisory cost: tiny FLOPs, dominated by streaming the bf16 weights
    # (w3/w4/b3 are re-streamed once per batch tile).
    flops = 2 * b_pad * (n_in_pad * D1 + D1 * D2 + D2 * D3 + D3 * D4
                         + D4 * D5 + D5 * n_out_pad)
    bytes_accessed = (int(x_p.size) * 2 + b_pad * n_out_pad * 4
                      + int(wa.size) * 2 + int(wb.size) * 2 + int(ball.size) * 4
                      + n_b * (int(w3.size) * 2 + int(b3.size) * 4
                               + int(w4.size) * 2))
    cost = pl.CostEstimate(flops=flops, transcendentals=0,
                           bytes_accessed=bytes_accessed)

    out_p = pl.pallas_call(
        functools.partial(_mlp_kernel, n_in_pad=n_in_pad, n_out_pad=n_out_pad),
        out_shape=jax.ShapeDtypeStruct((b_pad, n_out_pad), jnp.float32),
        grid_spec=pltpu.PrefetchScalarGridSpec(
            num_scalar_prefetch=0,
            grid=(n_b, n_k),
            in_specs=in_specs,
            out_specs=out_spec,
            scratch_shapes=[
                pltpu.VMEM((tb, D2), jnp.bfloat16),   # h2 (post layer-2), bf16
                pltpu.VMEM((tb, D4), jnp.float32),    # layer-4 f32 accumulator
            ],
        ),
        compiler_params=pltpu.CompilerParams(
            dimension_semantics=("parallel", "arbitrary"),
            vmem_limit_bytes=vmem_limit,
        ),
        cost_estimate=cost,
    )(x_p, wa, wb, ball, w3, b3, w4)

    return out_p[:batch, :n_out]


# ------------------------ deterministic parameter init ---------------------- #
def _kaiming_uniform(key, fan_in, fan_out):
    # PyTorch kaiming_uniform_(nonlinearity='relu'): bound = sqrt(6 / fan_in)
    bound = math.sqrt(6.0 / fan_in)
    return jax.random.uniform(key, (fan_in, fan_out), jnp.float32, -bound, bound)


def _xavier_uniform(key, fan_in, fan_out):
    bound = math.sqrt(6.0 / (fan_in + fan_out))
    return jax.random.uniform(key, (fan_in, fan_out), jnp.float32, -bound, bound)


def _bias(key, fan_in, fan_out):
    # PyTorch Linear default bias init: U(-1/sqrt(fan_in), 1/sqrt(fan_in))
    bound = 1.0 / math.sqrt(fan_in)
    return jax.random.uniform(key, (1, fan_out), jnp.float32, -bound, bound)


def init_mlp_params(key, n_inputs, n_outputs):
    dims = [n_inputs, 128, 512, 4096, 512, 128, n_outputs]
    params = []
    keys = jax.random.split(key, 2 * (len(dims) - 1))
    for li in range(len(dims) - 1):
        fan_in, fan_out = dims[li], dims[li + 1]
        wk, bk = keys[2 * li], keys[2 * li + 1]
        if li == len(dims) - 2:
            w = _xavier_uniform(wk, fan_in, fan_out)   # hidden6: xavier_uniform_
        else:
            w = _kaiming_uniform(wk, fan_in, fan_out)  # hidden1..5: kaiming_uniform_('relu')
        b = _bias(bk, fan_in, fan_out)
        params.append((w, b))
    return params


# ------------------------------- reference --------------------------------- #
def mlp_reference(x, prepared):
    """Pure-JAX reference using the same padded bf16 weights / f32 accumulation."""
    params, n_in, n_out = prepared
    n_in_pad = params[0][0].shape[0]
    h = jnp.pad(x.astype(jnp.float32), ((0, 0), (0, n_in_pad - n_in)))
    for i, (w, b) in enumerate(params):
        h = jnp.dot(h.astype(jnp.bfloat16), w,
                    preferred_element_type=jnp.float32) + b
        if i < len(params) - 1:
            h = jnp.maximum(h, 0.0)
    return h[:, :n_out]


if __name__ == "__main__":
    key = jax.random.PRNGKey(0)
    k_x, k_p = jax.random.split(key)

    batch, n_inputs, n_outputs = 2, 16, 8
    x = jax.random.normal(k_x, (batch, n_inputs), jnp.float32)
    params = init_mlp_params(k_p, n_inputs, n_outputs)
    prepared = prepare_params(params)

    out = mlp_forward(x, prepared)
    out = jax.block_until_ready(out)

    ref = mlp_reference(x, prepared)
    assert out.shape == (batch, n_outputs)
    assert jnp.allclose(out, ref, atol=1e-2, rtol=1e-2), "mismatch vs pure-JAX reference"

    print("KERNEL_OK")
</pallas_src>

<mosaic_0001>
module attributes {stable_mosaic.version = 11 : i64} {
  func.func @_mlp_kernel(%arg0: i32, %arg1: i32, %arg2: memref<8x128xbf16, #tpu.memory_space<vmem>>, %arg3: memref<640x128xbf16, #tpu.memory_space<vmem>>, %arg4: memref<128x640xbf16, #tpu.memory_space<vmem>>, %arg5: memref<1x1408xf32, #tpu.memory_space<vmem>>, %arg6: memref<512x2048xbf16, #tpu.memory_space<vmem>>, %arg7: memref<1x2048xf32, #tpu.memory_space<vmem>>, %arg8: memref<2048x512xbf16, #tpu.memory_space<vmem>>, %arg9: memref<8x128xf32, #tpu.memory_space<vmem>>, %arg10: memref<8x512xbf16, #tpu.memory_space<vmem>>, %arg11: memref<8x512xf32, #tpu.memory_space<vmem>>) attributes {dimension_semantics = [#tpu.dimension_semantics<parallel>, #tpu.dimension_semantics<arbitrary>], iteration_bounds = array<i64: 1, 2>, scalar_prefetch = 0 : i64, scratch_operands = 2 : i64, tpu.core_type = #tpu.core_type<tc>, window_params = [{transform_indices = @transform_0, window_bounds = array<i64: 8, 128>}, {pipeline_mode = #tpu.pipeline_mode<synchronous>, transform_indices = @transform_1, window_bounds = array<i64: 640, 128>}, {pipeline_mode = #tpu.pipeline_mode<synchronous>, transform_indices = @transform_2, window_bounds = array<i64: 128, 640>}, {pipeline_mode = #tpu.pipeline_mode<synchronous>, transform_indices = @transform_3, window_bounds = array<i64: 1, 1408>}, {transform_indices = @transform_4, window_bounds = array<i64: 512, 2048>}, {transform_indices = @transform_5, window_bounds = array<i64: 1, 2048>}, {transform_indices = @transform_6, window_bounds = array<i64: 2048, 512>}, {transform_indices = @transform_7, window_bounds = array<i64: 8, 128>}]} {
    %c0_i32 = arith.constant 0 : i32
    %0 = arith.cmpi eq, %arg1, %c0_i32 : i32
    %1 = arith.extui %0 : i1 to i32
    %c0_i32_0 = arith.constant 0 : i32
    %2 = arith.cmpi ne, %1, %c0_i32_0 : i32
    scf.if %2 {
      %c0_15 = arith.constant 0 : index
      %c0_16 = arith.constant 0 : index
      %20 = vector.load %arg3[%c0_15, %c0_16] : memref<640x128xbf16, #tpu.memory_space<vmem>>, vector<128x128xbf16>
      %c0_17 = arith.constant 0 : index
      %c0_18 = arith.constant 0 : index
      %21 = vector.load %arg4[%c0_17, %c0_18] : memref<128x640xbf16, #tpu.memory_space<vmem>>, vector<128x512xbf16>
      %c0_19 = arith.constant 0 : index
      %c0_20 = arith.constant 0 : index
      %22 = vector.load %arg5[%c0_19, %c0_20] : memref<1x1408xf32, #tpu.memory_space<vmem>>, vector<1x128xf32>
      %c0_21 = arith.constant 0 : index
      %c128 = arith.constant 128 : index
      %23 = vector.load %arg5[%c0_21, %c128] : memref<1x1408xf32, #tpu.memory_space<vmem>>, vector<1x512xf32>
      %c0_22 = arith.constant 0 : index
      %c0_23 = arith.constant 0 : index
      %24 = vector.load %arg2[%c0_22, %c0_23] : memref<8x128xbf16, #tpu.memory_space<vmem>>, vector<8x128xbf16>
      %cst_24 = arith.constant dense<0.000000e+00> : vector<8x128xf32>
      %25 = tpu.matmul %24, %20, %cst_24 {dimension_numbers = #tpu.dot_dimension_numbers<[1], [0], [0], [1], [0, 0, 1, 1], [], []>} : vector<8x128xbf16>, vector<128x128xbf16>, vector<8x128xf32> -> vector<8x128xf32>
      %26 = vector.broadcast %22 : vector<1x128xf32> to vector<8x128xf32>
      %27 = arith.addf %25, %26 : vector<8x128xf32>
      %cst_25 = arith.constant 0.000000e+00 : f32
      %28 = vector.broadcast %cst_25 : f32 to vector<8x128xf32>
      %29 = arith.maximumf %27, %28 : vector<8x128xf32>
      %30 = arith.truncf %29 : vector<8x128xf32> to vector<8x128xbf16>
      %cst_26 = arith.constant dense<0.000000e+00> : vector<8x512xf32>
      %31 = tpu.matmul %30, %21, %cst_26 {dimension_numbers = #tpu.dot_dimension_numbers<[1], [0], [0], [1], [0, 0, 1, 1], [], []>} : vector<8x128xbf16>, vector<128x512xbf16>, vector<8x512xf32> -> vector<8x512xf32>
      %32 = vector.broadcast %23 : vector<1x512xf32> to vector<8x512xf32>
      %33 = arith.addf %31, %32 : vector<8x512xf32>
      %cst_27 = arith.constant 0.000000e+00 : f32
      %34 = vector.broadcast %cst_27 : f32 to vector<8x512xf32>
      %35 = arith.maximumf %33, %34 : vector<8x512xf32>
      %36 = arith.truncf %35 : vector<8x512xf32> to vector<8x512xbf16>
      %c0_28 = arith.constant 0 : index
      %c0_29 = arith.constant 0 : index
      %37 = vector.load %arg10[%c0_28, %c0_29] : memref<8x512xbf16, #tpu.memory_space<vmem>>, vector<8x512xbf16>
      tpu.vector_store %arg10[%c0_28, %c0_29], %36 {strides = array<i32>} : memref<8x512xbf16, #tpu.memory_space<vmem>>, vector<8x512xbf16>,
      %cst_30 = arith.constant 0.000000e+00 : f32
      %38 = vector.broadcast %cst_30 : f32 to vector<8x512xf32>
      %c0_31 = arith.constant 0 : index
      %c0_32 = arith.constant 0 : index
      %39 = vector.load %arg11[%c0_31, %c0_32] : memref<8x512xf32, #tpu.memory_space<vmem>>, vector<8x512xf32>
      tpu.vector_store %arg11[%c0_31, %c0_32], %38 {strides = array<i32>} : memref<8x512xf32, #tpu.memory_space<vmem>>, vector<8x512xf32>,
    } else {
    }
    %c0 = arith.constant 0 : index
    %c0_1 = arith.constant 0 : index
    %3 = vector.load %arg10[%c0, %c0_1] : memref<8x512xbf16, #tpu.memory_space<vmem>>, vector<8x512xbf16>
    %c0_2 = arith.constant 0 : index
    %c0_3 = arith.constant 0 : index
    %4 = vector.load %arg6[%c0_2, %c0_3] : memref<512x2048xbf16, #tpu.memory_space<vmem>>, vector<512x2048xbf16>
    %cst = arith.constant dense<0.000000e+00> : vector<8x2048xf32>
    %5 = tpu.matmul %3, %4, %cst {dimension_numbers = #tpu.dot_dimension_numbers<[1], [0], [0], [1], [0, 0, 1, 1], [], []>} : vector<8x512xbf16>, vector<512x2048xbf16>, vector<8x2048xf32> -> vector<8x2048xf32>
    %c0_4 = arith.constant 0 : index
    %c0_5 = arith.constant 0 : index
    %6 = vector.load %arg7[%c0_4, %c0_5] : memref<1x2048xf32, #tpu.memory_space<vmem>>, vector<1x2048xf32>
    %7 = vector.broadcast %6 : vector<1x2048xf32> to vector<8x2048xf32>
    %8 = arith.addf %5, %7 : vector<8x2048xf32>
    %cst_6 = arith.constant 0.000000e+00 : f32
    %9 = vector.broadcast %cst_6 : f32 to vector<8x2048xf32>
    %10 = arith.maximumf %8, %9 : vector<8x2048xf32>
    %c0_7 = arith.constant 0 : index
    %c0_8 = arith.constant 0 : index
    %11 = vector.load %arg11[%c0_7, %c0_8] : memref<8x512xf32, #tpu.memory_space<vmem>>, vector<8x512xf32>
    %c0_9 = arith.constant 0 : index
    %c0_10 = arith.constant 0 : index
    %12 = vector.load %arg8[%c0_9, %c0_10] : memref<2048x512xbf16, #tpu.memory_space<vmem>>, vector<2048x512xbf16>
    %13 = arith.truncf %10 : vector<8x2048xf32> to vector<8x2048xbf16>
    %cst_11 = arith.constant dense<0.000000e+00> : vector<8x512xf32>
    %14 = tpu.matmul %13, %12, %cst_11 {dimension_numbers = #tpu.dot_dimension_numbers<[1], [0], [0], [1], [0, 0, 1, 1], [], []>} : vector<8x2048xbf16>, vector<2048x512xbf16>, vector<8x512xf32> -> vector<8x512xf32>
    %15 = arith.addf %11, %14 : vector<8x512xf32>
    %c0_12 = arith.constant 0 : index
    %c0_13 = arith.constant 0 : index
    %16 = vector.load %arg11[%c0_12, %c0_13] : memref<8x512xf32, #tpu.memory_space<vmem>>, vector<8x512xf32>
    tpu.vector_store %arg11[%c0_12, %c0_13], %15 {strides = array<i32>} : memref<8x512xf32, #tpu.memory_space<vmem>>, vector<8x512xf32>,
    %c1_i32 = arith.constant 1 : i32
    %17 = arith.cmpi eq, %arg1, %c1_i32 : i32
    %18 = arith.extui %17 : i1 to i32
    %c0_i32_14 = arith.constant 0 : i32
    %19 = arith.cmpi ne, %18, %c0_i32_14 : i32
    scf.if %19 {
      %c128 = arith.constant 128 : index
      %c0_15 = arith.constant 0 : index
      %20 = vector.load %arg3[%c128, %c0_15] : memref<640x128xbf16, #tpu.memory_space<vmem>>, vector<512x128xbf16>
      %c0_16 = arith.constant 0 : index
      %c512 = arith.constant 512 : index
      %21 = vector.load %arg4[%c0_16, %c512] : memref<128x640xbf16, #tpu.memory_space<vmem>>, vector<128x128xbf16>
      %c0_17 = arith.constant 0 : index
      %c640 = arith.constant 640 : index
      %22 = vector.load %arg5[%c0_17, %c640] : memref<1x1408xf32, #tpu.memory_space<vmem>>, vector<1x512xf32>
      %c0_18 = arith.constant 0 : index
      %c1152 = arith.constant 1152 : index
      %23 = vector.load %arg5[%c0_18, %c1152] : memref<1x1408xf32, #tpu.memory_space<vmem>>, vector<1x128xf32>
      %c0_19 = arith.constant 0 : index
      %c1280 = arith.constant 1280 : index
      %24 = vector.load %arg5[%c0_19, %c1280] : memref<1x1408xf32, #tpu.memory_space<vmem>>, vector<1x128xf32>
      %c0_20 = arith.constant 0 : index
      %c0_21 = arith.constant 0 : index
      %25 = vector.load %arg11[%c0_20, %c0_21] : memref<8x512xf32, #tpu.memory_space<vmem>>, vector<8x512xf32>
      %26 = vector.broadcast %22 : vector<1x512xf32> to vector<8x512xf32>
      %27 = arith.addf %25, %26 : vector<8x512xf32>
      %cst_22 = arith.constant 0.000000e+00 : f32
      %28 = vector.broadcast %cst_22 : f32 to vector<8x512xf32>
      %29 = arith.maximumf %27, %28 : vector<8x512xf32>
      %30 = arith.truncf %29 : vector<8x512xf32> to vector<8x512xbf16>
      %cst_23 = arith.constant dense<0.000000e+00> : vector<8x128xf32>
      %31 = tpu.matmul %30, %20, %cst_23 {dimension_numbers = #tpu.dot_dimension_numbers<[1], [0], [0], [1], [0, 0, 1, 1], [], []>} : vector<8x512xbf16>, vector<512x128xbf16>, vector<8x128xf32> -> vector<8x128xf32>
      %32 = vector.broadcast %23 : vector<1x128xf32> to vector<8x128xf32>
      %33 = arith.addf %31, %32 : vector<8x128xf32>
      %cst_24 = arith.constant 0.000000e+00 : f32
      %34 = vector.broadcast %cst_24 : f32 to vector<8x128xf32>
      %35 = arith.maximumf %33, %34 : vector<8x128xf32>
      %36 = arith.truncf %35 : vector<8x128xf32> to vector<8x128xbf16>
      %cst_25 = arith.constant dense<0.000000e+00> : vector<8x128xf32>
      %37 = tpu.matmul %36, %21, %cst_25 {dimension_numbers = #tpu.dot_dimension_numbers<[1], [0], [0], [1], [0, 0, 1, 1], [], []>} : vector<8x128xbf16>, vector<128x128xbf16>, vector<8x128xf32> -> vector<8x128xf32>
      %38 = vector.broadcast %24 : vector<1x128xf32> to vector<8x128xf32>
      %39 = arith.addf %37, %38 : vector<8x128xf32>
      %c0_26 = arith.constant 0 : index
      %c0_27 = arith.constant 0 : index
      %40 = vector.load %arg9[%c0_26, %c0_27] : memref<8x128xf32, #tpu.memory_space<vmem>>, vector<8x128xf32>
      tpu.vector_store %arg9[%c0_26, %c0_27], %39 {strides = array<i32>} : memref<8x128xf32, #tpu.memory_space<vmem>>, vector<8x128xf32>,
    } else {
    }
    return
  }
  func.func @transform_0(%arg0: i32, %arg1: i32) -> (i32, i32) {
    %c0_i32 = arith.constant 0 : i32
    %c0_i32_0 = arith.constant 0 : i32
    return %arg0, %c0_i32 : i32, i32
  }
  func.func @transform_1(%arg0: i32, %arg1: i32) -> (i32, i32) {
    %c0_i32 = arith.constant 0 : i32
    %c0_i32_0 = arith.constant 0 : i32
    %c0_i32_1 = arith.constant 0 : i32
    return %c0_i32, %c0_i32_0 : i32, i32
  }
  func.func @transform_2(%arg0: i32, %arg1: i32) -> (i32, i32) {
    %c0_i32 = arith.constant 0 : i32
    %c0_i32_0 = arith.constant 0 : i32
    %c0_i32_1 = arith.constant 0 : i32
    return %c0_i32, %c0_i32_0 : i32, i32
  }
  func.func @transform_3(%arg0: i32, %arg1: i32) -> (i32, i32) {
    %c0_i32 = arith.constant 0 : i32
    %c0_i32_0 = arith.constant 0 : i32
    %c0_i32_1 = arith.constant 0 : i32
    return %c0_i32, %c0_i32_0 : i32, i32
  }
  func.func @transform_4(%arg0: i32, %arg1: i32) -> (i32, i32) {
    %c0_i32 = arith.constant 0 : i32
    %c0_i32_0 = arith.constant 0 : i32
    return %c0_i32, %arg1 : i32, i32
  }
  func.func @transform_5(%arg0: i32, %arg1: i32) -> (i32, i32) {
    %c0_i32 = arith.constant 0 : i32
    %c0_i32_0 = arith.constant 0 : i32
    return %c0_i32, %arg1 : i32, i32
  }
  func.func @transform_6(%arg0: i32, %arg1: i32) -> (i32, i32) {
    %c0_i32 = arith.constant 0 : i32
    %c0_i32_0 = arith.constant 0 : i32
    return %arg1, %c0_i32 : i32, i32
  }
  func.func @transform_7(%arg0: i32, %arg1: i32) -> (i32, i32) {
    %c0_i32 = arith.constant 0 : i32
    %c0_i32_0 = arith.constant 0 : i32
    return %arg0, %c0_i32 : i32, i32
  }
}

</mosaic_0001>

<llo_original>
// kernel: tpu_custom_call.1
$region0: #{tpu_custom_call.1}
  #allocation0 [shape = 'u32[]', space=smem, size = 0x4, offset = 0x4, fixed_abs, tag = 'smem constant byte address 0x4 - core index']
  #allocation1 [shape = 'u32[72,128]{1,0:T(1,128)}', space=vmem, size = 0x9000, scoped, tag = 'internal scratch']
  #allocation2 [shape = 'bf16[8,512]{1,0:T(8,128)(2,1)}', space=vmem, size = 0x2000, scoped, tag = 'scratch operand']
  #allocation3 [shape = 'f32[8,512]{1,0:T(8,128)}', space=vmem, size = 0x4000, scoped, tag = 'scratch operand']
  %s0 = inlined_call_operand.hbm [shape: bf16[8,128], index: 0, kind: input, shape index: {}]
  %s1 = inlined_call_operand.hbm [shape: bf16[640,128], index: 1, kind: input, shape index: {}]
  %s2 = inlined_call_operand.hbm [shape: bf16[128,640], index: 2, kind: input, shape index: {}]
  %s3 = inlined_call_operand.hbm [shape: f32[1,1408], index: 3, kind: input, shape index: {}]
  %s4 = inlined_call_operand.hbm [shape: bf16[512,4096], index: 4, kind: input, shape index: {}]
  %s5 = inlined_call_operand.hbm [shape: f32[1,4096], index: 5, kind: input, shape index: {}]
  %s6 = inlined_call_operand.hbm [shape: bf16[4096,512], index: 6, kind: input, shape index: {}]
  %s7 = inlined_call_operand.hbm [shape: f32[8,128], index: 7, kind: output, shape index: {}]
  %s8 = sld [smem:[#allocation0]]
  $region97: #{tpu_custom_call.1} parent=0
    _
  %s10 = ssub.s32 1, %s8
  %s11 = scalar_select 0, %s10, %s8
  $region1: #{tpu_custom_call.1} parent=0
    #allocation4 [shape = 'u8[2048]{0}', space=vmem, size = 0x800, scoped, tag = 'input window, operand 0, single buffered']
    #allocation5 [shape = 's32[2]{0}', space=sflag, size = 0x8, scoped, tag = 'scoped memory for tpu_custom_call.1']
    #allocation6 [shape = 's32[2]{0}', space=sflag, size = 0x8, scoped, tag = 'scoped memory for tpu_custom_call.1']
    #allocation7 [shape = 'u8[163840]{0}', space=vmem, size = 0x28000, scoped, tag = 'input window, operand 1, single buffered']
    #allocation8 [shape = 's32[1]{0}', space=sflag, size = 0x4, scoped, tag = 'scoped memory for tpu_custom_call.1']
    #allocation9 [shape = 'u8[163840]{0}', space=vmem, size = 0x28000, scoped, tag = 'input window, operand 2, single buffered']
    #allocation10 [shape = 'u8[5632]{0}', space=vmem, size = 0x1800, scoped, tag = 'input window, operand 3, single buffered']
    #allocation11 [shape = 's32[1]{0}', space=sflag, size = 0x4, scoped, tag = 'scoped memory for tpu_custom_call.1']
    #allocation12 [shape = 'u8[4194304]{0}', space=vmem, size = 0x400000, scoped, tag = 'input window, operand 4']
    #allocation13 [shape = 'u8[16384]{0}', space=vmem, size = 0x4000, scoped, tag = 'input window, operand 5']
    #allocation14 [shape = 'u8[4194304]{0}', space=vmem, size = 0x400000, scoped, tag = 'input window, operand 6']
    #allocation15 [shape = 'u8[4096]{0}', space=vmem, size = 0x1000, scoped, tag = 'output window, operand 0, single buffered']
    %12 = vsyncpa [#allocation5], 0
    %13 = vsyncpa [#allocation8], 0
    %14 = vsyncpa [#allocation11], 0
    %15 = vsyncpa [#allocation6], 0
    loop: start=0, step=1, limit=4
    $region2: #{tpu_custom_call.1} parent=1 // loop_pre_header
      _
    $region3: #{tpu_custom_call.1} parent=1 // loop_header
      %s17 = sphi 0, %s21
      %p18 = scmp.ge.s32.totalorder %s17, 4
      %s24 = sphi 0, %s36
      %s25 = sphi 0, %s32
      %s26 = sphi 0, %s24
      %s27 = sphi 0, %s25
      %s28 = sphi 0, %s26
      %s29 = sphi 0, %s27
      %s39 = sphi 0, %s41
      %s42 = sphi 0, %s39
      %s43 = sphi 0, %s42
      %s59 = sphi 0, %s43
      %s63 = sphi 0, %s63
      %s65 = sphi 0, %s63
      %s66 = sphi 0, %s65
      %s80 = sphi 0, %s66
      %s84 = sphi 0, %s84
      %s86 = sphi 0, %s84
      %s87 = sphi 0, %s86
      %s101 = sphi 0, %s87
      %s105 = sphi 0, %s105
      %s107 = sphi 0, %s105
      %s108 = sphi 0, %s107
      %s122 = sphi 0, %s108
      %s128 = sphi 0, %s130
      %s131 = sphi 0, %s128
      %s132 = sphi 0, %s131
      %s148 = sphi 0, %s132
      %s154 = sphi 0, %s156
      %s157 = sphi 0, %s154
      %s158 = sphi 0, %s157
      %s174 = sphi 0, %s158
      %s180 = sphi 0, %s182
      %s183 = sphi 0, %s180
      %s184 = sphi 0, %s183
      %s200 = sphi 0, %s184
      %s206 = sphi 0, %s208
      %s209 = sphi 0, %s206
      %s210 = sphi 0, %s209
      %s226 = sphi 0, %s210
    $region4: #{tpu_custom_call.1} parent=1 // loop_header_branch
      %20 = sbr.rel (%p18) target = $region8
    $region5: #{tpu_custom_call.1} parent=1 // loop_body
      %s22 = ssub.s32 %s17, 1
      %s23 = ssub.s32 %s17, 2
      %s30 = sadd.s32 1, %s25
      %p31 = scmp.ge.s32.totalorder %s30, 2
      %s32 = scalar_select %p31, 0, %s30
      %s33 = sadd.s32 1, %s24
      %s34 = scalar_select %p31, %s33, %s24
      %p35 = scmp.ge.s32.totalorder %s34, 1
      %s36 = scalar_select %p35, 0, %s34
      %s37 = ssub.s32 %s24, %s36
      %p38 = scmp.eq.s32.totalorder %s37, 0
      %s40 = sadd.s32 %s39, 1
      %s41 = scalar_select %p38, %s39, %s40
      %p44 = pneg %p38
      %p45 = scmp.eq.s32.totalorder %s17, 1
      %p46 = por %p44, %p45
      %p47 = scmp.ne.s32.totalorder %s39, %s42
      %p48 = scmp.eq.s32.totalorder %s17, 0
      %p49 = por %p47, %p48
      %p50 = scmp.ne.s32.totalorder %s39, %s42
      %p51 = scmp.eq.s32.totalorder %s22, 1
      %p52 = por %p50, %p51
      %p53 = scmp.ne.s32.totalorder %s42, %s43
      %p54 = scmp.eq.s32.totalorder %s22, 0
      %p55 = por %p53, %p54
      %p56 = scmp.ne.s32.totalorder %s42, %s43
      %p57 = scmp.eq.s32.totalorder %s23, 1
      %p58 = por %p56, %p57
      %p60 = scmp.ne.s32.totalorder %s43, %s59
      %p61 = scmp.eq.s32.totalorder %s23, 0
      %p62 = por %p60, %p61
      %s64 = sadd.s32 %s63, 1
      %p67 = scmp.eq.s32.totalorder %s17, 1
      %p68 = scmp.ne.s32.totalorder %s63, %s65
      %p69 = scmp.eq.s32.totalorder %s17, 0
      %p70 = por %p68, %p69
      %p71 = scmp.ne.s32.totalorder %s63, %s65
      %p72 = scmp.eq.s32.totalorder %s22, 1
      %p73 = por %p71, %p72
      %p74 = scmp.ne.s32.totalorder %s65, %s66
      %p75 = scmp.eq.s32.totalorder %s22, 0
      %p76 = por %p74, %p75
      %p77 = scmp.ne.s32.totalorder %s65, %s66
      %p78 = scmp.eq.s32.totalorder %s23, 1
      %p79 = por %p77, %p78
      %p81 = scmp.ne.s32.totalorder %s66, %s80
      %p82 = scmp.eq.s32.totalorder %s23, 0
      %p83 = por %p81, %p82
      %s85 = sadd.s32 %s84, 1
      %p88 = scmp.eq.s32.totalorder %s17, 1
      %p89 = scmp.ne.s32.totalorder %s84, %s86
      %p90 = scmp.eq.s32.totalorder %s17, 0
      %p91 = por %p89, %p90
      %p92 = scmp.ne.s32.totalorder %s84, %s86
      %p93 = scmp.eq.s32.totalorder %s22, 1
      %p94 = por %p92, %p93
      %p95 = scmp.ne.s32.totalorder %s86, %s87
      %p96 = scmp.eq.s32.totalorder %s22, 0
      %p97 = por %p95, %p96
      %p98 = scmp.ne.s32.totalorder %s86, %s87
      %p99 = scmp.eq.s32.totalorder %s23, 1
      %p100 = por %p98, %p99
      %p102 = scmp.ne.s32.totalorder %s87, %s101
      %p103 = scmp.eq.s32.totalorder %s23, 0
      %p104 = por %p102, %p103
      %s106 = sadd.s32 %s105, 1
      %p109 = scmp.eq.s32.totalorder %s17, 1
      %p110 = scmp.ne.s32.totalorder %s105, %s107
      %p111 = scmp.eq.s32.totalorder %s17, 0
      %p112 = por %p110, %p111
      %p113 = scmp.ne.s32.totalorder %s105, %s107
      %p114 = scmp.eq.s32.totalorder %s22, 1
      %p115 = por %p113, %p114
      %p116 = scmp.ne.s32.totalorder %s107, %s108
      %p117 = scmp.eq.s32.totalorder %s22, 0
      %p118 = por %p116, %p117
      %p119 = scmp.ne.s32.totalorder %s107, %s108
      %p120 = scmp.eq.s32.totalorder %s23, 1
      %p121 = por %p119, %p120
      %p123 = scmp.ne.s32.totalorder %s108, %s122
      %p124 = scmp.eq.s32.totalorder %s23, 0
      %p125 = por %p123, %p124
      %s126 = ssub.s32 %s25, %s32
      %p127 = scmp.eq.s32.totalorder %s126, 0
      %s129 = sadd.s32 %s128, 1
      %s130 = scalar_select %p127, %s128, %s129
      %p133 = pneg %p127
      %p134 = scmp.eq.s32.totalorder %s17, 1
      %p135 = por %p133, %p134
      %p136 = scmp.ne.s32.totalorder %s128, %s131
      %p137 = scmp.eq.s32.totalorder %s17, 0
      %p138 = por %p136, %p137
      %p139 = scmp.ne.s32.totalorder %s128, %s131
      %p140 = scmp.eq.s32.totalorder %s22, 1
      %p141 = por %p139, %p140
      %p142 = scmp.ne.s32.totalorder %s131, %s132
      %p143 = scmp.eq.s32.totalorder %s22, 0
      %p144 = por %p142, %p143
      %p145 = scmp.ne.s32.totalorder %s131, %s132
      %p146 = scmp.eq.s32.totalorder %s23, 1
      %p147 = por %p145, %p146
      %p149 = scmp.ne.s32.totalorder %s132, %s148
      %p150 = scmp.eq.s32.totalorder %s23, 0
      %p151 = por %p149, %p150
      %s152 = ssub.s32 %s25, %s32
      %p153 = scmp.eq.s32.totalorder %s152, 0
      %s155 = sadd.s32 %s154, 1
      %s156 = scalar_select %p153, %s154, %s155
      %p159 = pneg %p153
      %p160 = scmp.eq.s32.totalorder %s17, 1
      %p161 = por %p159, %p160
      %p162 = scmp.ne.s32.totalorder %s154, %s157
      %p163 = scmp.eq.s32.totalorder %s17, 0
      %p164 = por %p162, %p163
      %p165 = scmp.ne.s32.totalorder %s154, %s157
      %p166 = scmp.eq.s32.totalorder %s22, 1
      %p167 = por %p165, %p166
      %p168 = scmp.ne.s32.totalorder %s157, %s158
      %p169 = scmp.eq.s32.totalorder %s22, 0
      %p170 = por %p168, %p169
      %p171 = scmp.ne.s32.totalorder %s157, %s158
      %p172 = scmp.eq.s32.totalorder %s23, 1
      %p173 = por %p171, %p172
      %p175 = scmp.ne.s32.totalorder %s158, %s174
      %p176 = scmp.eq.s32.totalorder %s23, 0
      %p177 = por %p175, %p176
      %s178 = ssub.s32 %s25, %s32
      %p179 = scmp.eq.s32.totalorder %s178, 0
      %s181 = sadd.s32 %s180, 1
      %s182 = scalar_select %p179, %s180, %s181
      %p185 = pneg %p179
      %p186 = scmp.eq.s32.totalorder %s17, 1
      %p187 = por %p185, %p186
      %p188 = scmp.ne.s32.totalorder %s180, %s183
      %p189 = scmp.eq.s32.totalorder %s17, 0
      %p190 = por %p188, %p189
      %p191 = scmp.ne.s32.totalorder %s180, %s183
      %p192 = scmp.eq.s32.totalorder %s22, 1
      %p193 = por %p191, %p192
      %p194 = scmp.ne.s32.totalorder %s183, %s184
      %p195 = scmp.eq.s32.totalorder %s22, 0
      %p196 = por %p194, %p195
      %p197 = scmp.ne.s32.totalorder %s183, %s184
      %p198 = scmp.eq.s32.totalorder %s23, 1
      %p199 = por %p197, %p198
      %p201 = scmp.ne.s32.totalorder %s184, %s200
      %p202 = scmp.eq.s32.totalorder %s23, 0
      %p203 = por %p201, %p202
      %s204 = ssub.s32 %s24, %s36
      %p205 = scmp.eq.s32.totalorder %s204, 0
      %s207 = sadd.s32 %s206, 1
      %s208 = scalar_select %p205, %s206, %s207
      %p211 = pneg %p205
      %p212 = scmp.eq.s32.totalorder %s17, 1
      %p213 = por %p211, %p212
      %p214 = scmp.ne.s32.totalorder %s206, %s209
      %p215 = scmp.eq.s32.totalorder %s17, 0
      %p216 = por %p214, %p215
      %p217 = scmp.ne.s32.totalorder %s206, %s209
      %p218 = scmp.eq.s32.totalorder %s22, 1
      %p219 = por %p217, %p218
      %p220 = scmp.ne.s32.totalorder %s209, %s210
      %p221 = scmp.eq.s32.totalorder %s22, 0
      %p222 = por %p220, %p221
      %p223 = scmp.ne.s32.totalorder %s209, %s210
      %p224 = scmp.eq.s32.totalorder %s23, 1
      %p225 = por %p223, %p224
      %p227 = scmp.ne.s32.totalorder %s210, %s226
      %p228 = scmp.eq.s32.totalorder %s23, 0
      %p229 = por %p227, %p228
      %p230 = scmp.le.s32.totalorder 1, %s17
      %p231 = scmp.lt.s32.totalorder %s17, 3
      %p232 = pnand %p230, %p231
      %p233 = pneg %p232
      // Predicated region
      $region9: #{tpu_custom_call.1} parent=5 // pred_check
        _
      $region10: #{tpu_custom_call.1} parent=5 // pred_check_branch
        %235 = sbr.rel (%p232) target = $region12
      $region11: #{tpu_custom_call.1} parent=5 // pred_region
        %s236 = ssub.s32 %s17, 1
        // Predicated region
        $region13: #{tpu_custom_call.1} parent=11 // pred_check
          %p237 = pneg %p55
        $region14: #{tpu_custom_call.1} parent=11 // pred_check_branch
          %239 = sbr.rel (%p237) target = $region16
        $region15: #{tpu_custom_call.1} parent=11 // pred_region
          %241 = vsyncadd [#allocation5], 0
          %s242 = smul.addr %s26, 4
          %s243 = scalar_lea.hbm %s0, %s242
          %s245 = sshll.u32 %s243, 4
          %s246 = int_to_ptr.hbm [resolvable:$true] %s245
          %s247 = sshll.u32 [#allocation4], 4
          %s248 = int_to_ptr.vmem [resolvable:$true] %s247
          %250 = dma.hbm_to_vmem [thread:$0]  %s246, 64, %s248, [#allocation5]
        $region16: #{tpu_custom_call.1} parent=11 // pred_fallthru
          _
        // Predicated region
        $region17: #{tpu_custom_call.1} parent=11 // pred_check
          %p251 = pneg %p76
        $region18: #{tpu_custom_call.1} parent=11 // pred_check_branch
          %253 = sbr.rel (%p251) target = $region20
        $region19: #{tpu_custom_call.1} parent=11 // pred_region
          %255 = vsyncadd [#allocation8], 0
          %s256 = sshll.u32 %s1, 4
          %s257 = int_to_ptr.hbm [resolvable:$true] %s256
          %s258 = sshll.u32 [#allocation7], 4
          %s259 = int_to_ptr.vmem [resolvable:$true] %s258
          %264 = dma.hbm_to_vmem [thread:$0]  %s257, 5120, %s259, [#allocation8], 64, 64, 4
        $region20: #{tpu_custom_call.1} parent=11 // pred_fallthru
          _
        // Predicated region
        $region21: #{tpu_custom_call.1} parent=11 // pred_check
          %p265 = pneg %p97
        $region22: #{tpu_custom_call.1} parent=11 // pred_check_branch
          %267 = sbr.rel (%p265) target = $region24
        $region23: #{tpu_custom_call.1} parent=11 // pred_region
          %269 = vsyncadd [#allocation8], 0
          %s270 = sshll.u32 %s2, 4
          %s271 = int_to_ptr.hbm [resolvable:$true] %s270
          %s272 = sshll.u32 [#allocation9], 4
          %s273 = int_to_ptr.vmem [resolvable:$true] %s272
          %278 = dma.hbm_to_vmem [thread:$0]  %s271, 5120, %s273, [#allocation8], 320, 320, 20
        $region24: #{tpu_custom_call.1} parent=11 // pred_fallthru
          _
        // Predicated region
        $region25: #{tpu_custom_call.1} parent=11 // pred_check
          %p279 = pneg %p118
        $region26: #{tpu_custom_call.1} parent=11 // pred_check_branch
          %281 = sbr.rel (%p279) target = $region28
        $region27: #{tpu_custom_call.1} parent=11 // pred_region
          %283 = vsyncadd [#allocation11], 0
          %s285 = sshll.u32 %s3, 4
          %s286 = int_to_ptr.hbm [resolvable:$true] %s285
          %s287 = sshll.u32 [#allocation10], 4
          %s288 = int_to_ptr.vmem [resolvable:$true] %s287
          %290 = dma.hbm_to_vmem [thread:$0]  %s286, 176, %s288, [#allocation11]
        $region28: #{tpu_custom_call.1} parent=11 // pred_fallthru
          _
      $region12: #{tpu_custom_call.1} parent=5 // pred_fallthru
        _
      %p291 = scmp.lt.s32.totalorder %s17, 2
      // Predicated region
      $region29: #{tpu_custom_call.1} parent=5 // pred_check
        %p292 = pneg %p291
      $region30: #{tpu_custom_call.1} parent=5 // pred_check_branch
        %294 = sbr.rel (%p292) target = $region32
      $region31: #{tpu_custom_call.1} parent=5 // pred_region
        // Predicated region
        $region33: #{tpu_custom_call.1} parent=31 // pred_check
          %p295 = pneg %p138
        $region34: #{tpu_custom_call.1} parent=31 // pred_check_branch
          %297 = sbr.rel (%p295) target = $region36
        $region35: #{tpu_custom_call.1} parent=31 // pred_region
          %s298 = sand.u32 %s17, 1
          %s299 = scalar_lea.sflag [#allocation5], %s298
          %s300 = sand.u32 %s128, 1
          %s301 = smul.addr %s300, 4096
          %s302 = scalar_lea.vmem [#allocation12], %s301
          %s303 = smul.u32 16, %s25
          %305 = vsyncadd %s299, 0
          %s306 = smul.addr %s303, 4
          %s307 = scalar_lea.hbm %s4, %s306
          %s308 = sshll.u32 %s307, 4
          %s309 = int_to_ptr.hbm [resolvable:$true] %s308
          %s310 = sshll.u32 %s302, 4
          %s311 = int_to_ptr.vmem [resolvable:$true] %s310
          %316 = dma.hbm_to_vmem [thread:$0]  %s309, 65536, %s311, %s299, 2048, 1024, 64
        $region36: #{tpu_custom_call.1} parent=31 // pred_fallthru
          _
        // Predicated region
        $region37: #{tpu_custom_call.1} parent=31 // pred_check
          %p317 = pneg %p164
        $region38: #{tpu_custom_call.1} parent=31 // pred_check_branch
          %319 = sbr.rel (%p317) target = $region40
        $region39: #{tpu_custom_call.1} parent=31 // pred_region
          %s320 = sand.u32 %s17, 1
          %s321 = scalar_lea.sflag [#allocation5], %s320
          %s322 = sand.u32 %s154, 1
          %s323 = smul.addr %s322, 16
          %s324 = scalar_lea.vmem [#allocation13], %s323
          %s325 = smul.u32 16, %s25
          %327 = vsyncadd %s321, 0
          %s328 = scalar_lea.hbm %s5, %s325
          %s330 = sshll.u32 %s328, 4
          %s331 = int_to_ptr.hbm [resolvable:$true] %s330
          %s332 = sshll.u32 %s324, 4
          %s333 = int_to_ptr.vmem [resolvable:$true] %s332
          %335 = dma.hbm_to_vmem [thread:$0]  %s331, 256, %s333, %s321
        $region40: #{tpu_custom_call.1} parent=31 // pred_fallthru
          _
        // Predicated region
        $region41: #{tpu_custom_call.1} parent=31 // pred_check
          %p336 = pneg %p190
        $region42: #{tpu_custom_call.1} parent=31 // pred_check_branch
          %338 = sbr.rel (%p336) target = $region44
        $region43: #{tpu_custom_call.1} parent=31 // pred_region
          %s339 = sand.u32 %s17, 1
          %s340 = scalar_lea.sflag [#allocation5], %s339
          %s341 = sand.u32 %s180, 1
          %s342 = smul.addr %s341, 4096
          %s343 = scalar_lea.vmem [#allocation14], %s342
          %s344 = smul.u32 256, %s25
          %346 = vsyncadd %s340, 0
          %s347 = smul.addr %s344, 4
          %s348 = smul.addr %s347, 4
          %s349 = scalar_lea.hbm %s6, %s348
          %s350 = sshll.u32 %s349, 4
          %s351 = int_to_ptr.hbm [resolvable:$true] %s350
          %s352 = sshll.u32 %s343, 4
          %s353 = int_to_ptr.vmem [resolvable:$true] %s352
          %358 = dma.hbm_to_vmem [thread:$0]  %s351, 65536, %s353, %s340, 256, 256, 16
        $region44: #{tpu_custom_call.1} parent=31 // pred_fallthru
          _
      $region32: #{tpu_custom_call.1} parent=5 // pred_fallthru
        _
      %p359 = scmp.le.s32.totalorder 1, %s17
      %p360 = scmp.lt.s32.totalorder %s17, 3
      %p361 = pnand %p359, %p360
      %p362 = pneg %p361
      // Predicated region
      $region45: #{tpu_custom_call.1} parent=5 // pred_check
        _
      $region46: #{tpu_custom_call.1} parent=5 // pred_check_branch
        %364 = sbr.rel (%p361) target = $region48
      $region47: #{tpu_custom_call.1} parent=5 // pred_region
        %s365 = ssub.s32 %s17, 1
        // Predicated region
        $region49: #{tpu_custom_call.1} parent=47 // pred_check
          %p366 = pneg %p55
        $region50: #{tpu_custom_call.1} parent=47 // pred_check_branch
          %368 = sbr.rel (%p366) target = $region52
        $region51: #{tpu_custom_call.1} parent=47 // pred_region
          %370 = dma.done [#allocation5], 64
        $region52: #{tpu_custom_call.1} parent=47 // pred_fallthru
          _
        // Predicated region
        $region53: #{tpu_custom_call.1} parent=47 // pred_check
          %p371 = pneg %p76
        $region54: #{tpu_custom_call.1} parent=47 // pred_check_branch
          %373 = sbr.rel (%p371) target = $region56
        $region55: #{tpu_custom_call.1} parent=47 // pred_region
          %375 = dma.done [#allocation8], 5120
        $region56: #{tpu_custom_call.1} parent=47 // pred_fallthru
          _
        // Predicated region
        $region57: #{tpu_custom_call.1} parent=47 // pred_check
          %p376 = pneg %p97
        $region58: #{tpu_custom_call.1} parent=47 // pred_check_branch
          %378 = sbr.rel (%p376) target = $region60
        $region59: #{tpu_custom_call.1} parent=47 // pred_region
          %380 = dma.done [#allocation8], 5120
        $region60: #{tpu_custom_call.1} parent=47 // pred_fallthru
          _
        // Predicated region
        $region61: #{tpu_custom_call.1} parent=47 // pred_check
          %p381 = pneg %p118
        $region62: #{tpu_custom_call.1} parent=47 // pred_check_branch
          %383 = sbr.rel (%p381) target = $region64
        $region63: #{tpu_custom_call.1} parent=47 // pred_region
          %385 = dma.done [#allocation11], 176
        $region64: #{tpu_custom_call.1} parent=47 // pred_fallthru
          _
        %s386 = sand.u32 %s22, 1
        %s387 = scalar_lea.sflag [#allocation5], %s386
        %s388 = sand.u32 %s131, 1
        %s389 = smul.addr %s388, 4096
        %s390 = scalar_lea.vmem [#allocation12], %s389
        // Predicated region
        $region65: #{tpu_custom_call.1} parent=47 // pred_check
          %p391 = pneg %p144
        $region66: #{tpu_custom_call.1} parent=47 // pred_check_branch
          %393 = sbr.rel (%p391) target = $region68
        $region67: #{tpu_custom_call.1} parent=47 // pred_region
          %395 = dma.done %s387, 65536
        $region68: #{tpu_custom_call.1} parent=47 // pred_fallthru
          _
        %s396 = sand.u32 %s22, 1
        %s397 = scalar_lea.sflag [#allocation5], %s396
        %s398 = sand.u32 %s157, 1
        %s399 = smul.addr %s398, 16
        %s400 = scalar_lea.vmem [#allocation13], %s399
        // Predicated region
        $region69: #{tpu_custom_call.1} parent=47 // pred_check
          %p401 = pneg %p170
        $region70: #{tpu_custom_call.1} parent=47 // pred_check_branch
          %403 = sbr.rel (%p401) target = $region72
        $region71: #{tpu_custom_call.1} parent=47 // pred_region
          %405 = dma.done %s397, 256
        $region72: #{tpu_custom_call.1} parent=47 // pred_fallthru
          _
        %s406 = sand.u32 %s22, 1
        %s407 = scalar_lea.sflag [#allocation5], %s406
        %s408 = sand.u32 %s183, 1
        %s409 = smul.addr %s408, 4096
        %s410 = scalar_lea.vmem [#allocation14], %s409
        // Predicated region
        $region73: #{tpu_custom_call.1} parent=47 // pred_check
          %p411 = pneg %p196
        $region74: #{tpu_custom_call.1} parent=47 // pred_check_branch
          %413 = sbr.rel (%p411) target = $region76
        $region75: #{tpu_custom_call.1} parent=47 // pred_region
          %415 = dma.done %s407, 65536
        $region76: #{tpu_custom_call.1} parent=47 // pred_fallthru
          _
        %p416 = pneg %p55
        %p417 = pneg %p52
        %p418 = pneg %p76
        %p419 = pneg %p73
        %p420 = pneg %p97
        %p421 = pneg %p94
        %p422 = pneg %p118
        %p423 = pneg %p115
        %s424 = sand.u32 %s22, 1
        %s425 = scalar_lea.sflag [#allocation5], %s424
        %s426 = sand.u32 %s131, 1
        %s427 = smul.addr %s426, 4096
        %s428 = scalar_lea.vmem [#allocation12], %s427
        %p429 = pneg %p144
        %p430 = pneg %p141
        %s431 = sand.u32 %s22, 1
        %s432 = scalar_lea.sflag [#allocation5], %s431
        %s433 = sand.u32 %s157, 1
        %s434 = smul.addr %s433, 16
        %s435 = scalar_lea.vmem [#allocation13], %s434
        %p436 = pneg %p170
        %p437 = pneg %p167
        %s438 = sand.u32 %s22, 1
        %s439 = scalar_lea.sflag [#allocation5], %s438
        %s440 = sand.u32 %s183, 1
        %s441 = smul.addr %s440, 4096
        %s442 = scalar_lea.vmem [#allocation14], %s441
        %p443 = pneg %p196
        %p444 = pneg %p193
        %p445 = pneg %p222
        %p446 = pneg %p219
        %s447 = smul.u32 16, %s27
        %s448 = smul.u32 16, %s27
        %s449 = smul.u32 256, %s27
        %p450 = scmp.eq.s32.totalorder %s27, 0
        // Predicated region
        $region77: #{tpu_custom_call.1} parent=47 // pred_check
          %p451 = pneg %p450
        $region78: #{tpu_custom_call.1} parent=47 // pred_check_branch
          %453 = sbr.rel (%p451) target = $region80
        $region79: #{tpu_custom_call.1} parent=47 // pred_region
          %v454 = vld [vmem:[#allocation7] sm:$0xf]
          %v455 = vld [vmem:[#allocation7 + $0x4] sm:$0xf]
          %v456 = vld [vmem:[#allocation7 + $0x8] sm:$0xf]
          %v457 = vld [vmem:[#allocation7 + $0xc] sm:$0xf]
          %v458 = vld [vmem:[#allocation7 + $0x10] sm:$0xf]
          %v459 = vld [vmem:[#allocation7 + $0x14] sm:$0xf]
          %v460 = vld [vmem:[#allocation7 + $0x18] sm:$0xf]
          %v461 = vld [vmem:[#allocation7 + $0x1c] sm:$0xf]
          %v462 = vld [vmem:[#allocation7 + $0x20] sm:$0xf]
          %v463 = vld [vmem:[#allocation7 + $0x24] sm:$0xf]
          %v464 = vld [vmem:[#allocation7 + $0x28] sm:$0xf]
          %v465 = vld [vmem:[#allocation7 + $0x2c] sm:$0xf]
          %v466 = vld [vmem:[#allocation7 + $0x30] sm:$0xf]
          %v467 = vld [vmem:[#allocation7 + $0x34] sm:$0xf]
          %v468 = vld [vmem:[#allocation7 + $0x38] sm:$0xf]
          %v469 = vld [vmem:[#allocation7 + $0x3c] sm:$0xf]
          %v470 = vld [vmem:[#allocation9] sm:$0xff]
          %v471 = vld [vmem:[#allocation9 + $0x8] sm:$0xff]
          %v472 = vld [vmem:[#allocation9 + $0x14] sm:$0xff]
          %v473 = vld [vmem:[#allocation9 + $0x1c] sm:$0xff]
          %v474 = vld [vmem:[#allocation9 + $0x28] sm:$0xff]
          %v475 = vld [vmem:[#allocation9 + $0x30] sm:$0xff]
          %v476 = vld [vmem:[#allocation9 + $0x3c] sm:$0xff]
          %v477 = vld [vmem:[#allocation9 + $0x44] sm:$0xff]
          %v478 = vld [vmem:[#allocation9 + $0x50] sm:$0xff]
          %v479 = vld [vmem:[#allocation9 + $0x58] sm:$0xff]
          %v480 = vld [vmem:[#allocation9 + $0x64] sm:$0xff]
          %v481 = vld [vmem:[#allocation9 + $0x6c] sm:$0xff]
          %v482 = vld [vmem:[#allocation9 + $0x78] sm:$0xff]
          %v483 = vld [vmem:[#allocation9 + $0x80] sm:$0xff]
          %v484 = vld [vmem:[#allocation9 + $0x8c] sm:$0xff]
          %v485 = vld [vmem:[#allocation9 + $0x94] sm:$0xff]
          %v486 = vld [vmem:[#allocation9 + $0xa0] sm:$0xff]
          %v487 = vld [vmem:[#allocation9 + $0xa8] sm:$0xff]
          %v488 = vld [vmem:[#allocation9 + $0xb4] sm:$0xff]
          %v489 = vld [vmem:[#allocation9 + $0xbc] sm:$0xff]
          %v490 = vld [vmem:[#allocation9 + $0xc8] sm:$0xff]
          %v491 = vld [vmem:[#allocation9 + $0xd0] sm:$0xff]
          %v492 = vld [vmem:[#allocation9 + $0xdc] sm:$0xff]
          %v493 = vld [vmem:[#allocation9 + $0xe4] sm:$0xff]
          %v494 = vld [vmem:[#allocation9 + $0xf0] sm:$0xff]
          %v495 = vld [vmem:[#allocation9 + $0xf8] sm:$0xff]
          %v496 = vld [vmem:[#allocation9 + $0x104] sm:$0xff]
          %v497 = vld [vmem:[#allocation9 + $0x10c] sm:$0xff]
          %v498 = vld [vmem:[#allocation9 + $0x118] sm:$0xff]
          %v499 = vld [vmem:[#allocation9 + $0x120] sm:$0xff]
          %v500 = vld [vmem:[#allocation9 + $0x12c] sm:$0xff]
          %v501 = vld [vmem:[#allocation9 + $0x134] sm:$0xff]
          %v502 = vld [vmem:[#allocation10] sm:$0x1]
          %v503 = vld [vmem:[#allocation10 + $0x1] sm:$0xf]
          %v504 = vld [vmem:[#allocation4] sm:$0xf]
          %v506 = vperm.slane %v502, 0
          %v524 = vunpack.c.l.b16 %v454
          %v525 = vunpack.c.l.b16 %v455
          %v526 = vunpack.c.l.b16 %v456
          %v527 = vunpack.c.l.b16 %v457
          %v528 = vunpack.c.l.b16 %v458
          %v529 = vunpack.c.l.b16 %v459
          %v530 = vunpack.c.l.b16 %v460
          %v531 = vunpack.c.l.b16 %v461
          %v532 = vunpack.c.l.b16 %v462
          %v533 = vunpack.c.l.b16 %v463
          %v534 = vunpack.c.l.b16 %v464
          %v535 = vunpack.c.l.b16 %v465
          %v536 = vunpack.c.l.b16 %v466
          %v537 = vunpack.c.l.b16 %v467
          %v538 = vunpack.c.l.b16 %v468
          %v539 = vunpack.c.l.b16 %v469
          %v540 = vpack.c.b16 %v525, %v524
          %v541 = vpack.c.b16 %v527, %v526
          %v542 = vpack.c.b16 %v529, %v528
          %v543 = vpack.c.b16 %v531, %v530
          %v544 = vpack.c.b16 %v533, %v532
          %v545 = vpack.c.b16 %v535, %v534
          %v546 = vpack.c.b16 %v537, %v536
          %v547 = vpack.c.b16 %v539, %v538
          %556 = vmatpush.bf16.msra.mxu0 %v547
          %557 = vmatpush.bf16.msra.mxu0 %v546
          %558 = vmatpush.bf16.msra.mxu0 %v545
          %559 = vmatpush.bf16.msra.mxu0 %v544
          %560 = vmatpush.bf16.msra.mxu0 %v543
          %561 = vmatpush.bf16.msra.mxu0 %v542
          %562 = vmatpush.bf16.msra.mxu0 %v541
          %563 = vmatpush.bf16.msra.mxu0 %v540
          %564 = vmatmul.bf16.gmra.mxu0 %v504
          %v565 = vpop.f32.mrf.mxu0
          %v566 = vadd.f32 %v506, %v565
          %v567 = vpop.f32.mrf.mxu0
          %568 = vdwg.mxu0
          %v569 = vmax.f32 %v566, 0.0
          %v570 = vpack.c.bf16 %v569, %v569
          %v572 = vperm.slane %v503, 0
          %v573 = vperm.slane %v503, 1
          %v574 = vperm.slane %v503, 2
          %v575 = vperm.slane %v503, 3
          %v612 = vunpack.c.l.b16 %v470
          %v613 = vunpack.c.h.b16 %v470
          %v614 = vunpack.c.l.b16 %v471
          %v615 = vunpack.c.h.b16 %v471
          %v616 = vunpack.c.l.b16 %v472
          %v617 = vunpack.c.h.b16 %v472
          %v618 = vunpack.c.l.b16 %v473
          %v619 = vunpack.c.h.b16 %v473
          %v620 = vunpack.c.l.b16 %v474
          %v621 = vunpack.c.h.b16 %v474
          %v622 = vunpack.c.l.b16 %v475
          %v623 = vunpack.c.h.b16 %v475
          %v624 = vunpack.c.l.b16 %v476
          %v625 = vunpack.c.h.b16 %v476
          %v626 = vunpack.c.l.b16 %v477
          %v627 = vunpack.c.h.b16 %v477
          %v628 = vunpack.c.l.b16 %v478
          %v629 = vunpack.c.h.b16 %v478
          %v630 = vunpack.c.l.b16 %v479
          %v631 = vunpack.c.h.b16 %v479
          %v632 = vunpack.c.l.b16 %v480
          %v633 = vunpack.c.h.b16 %v480
          %v634 = vunpack.c.l.b16 %v481
          %v635 = vunpack.c.h.b16 %v481
          %v636 = vunpack.c.l.b16 %v482
          %v637 = vunpack.c.h.b16 %v482
          %v638 = vunpack.c.l.b16 %v483
          %v639 = vunpack.c.h.b16 %v483
          %v640 = vunpack.c.l.b16 %v484
          %v641 = vunpack.c.h.b16 %v484
          %v642 = vunpack.c.l.b16 %v485
          %v643 = vunpack.c.h.b16 %v485
          %v644 = vunpack.c.l.b16 %v486
          %v645 = vunpack.c.h.b16 %v486
          %v646 = vunpack.c.l.b16 %v487
          %v647 = vunpack.c.h.b16 %v487
          %v648 = vunpack.c.l.b16 %v488
          %v649 = vunpack.c.h.b16 %v488
          %v650 = vunpack.c.l.b16 %v489
          %v651 = vunpack.c.h.b16 %v489
          %v652 = vunpack.c.l.b16 %v490
          %v653 = vunpack.c.h.b16 %v490
          %v654 = vunpack.c.l.b16 %v491
          %v655 = vunpack.c.h.b16 %v491
          %v656 = vunpack.c.l.b16 %v492
          %v657 = vunpack.c.h.b16 %v492
          %v658 = vunpack.c.l.b16 %v493
          %v659 = vunpack.c.h.b16 %v493
          %v660 = vunpack.c.l.b16 %v494
          %v661 = vunpack.c.h.b16 %v494
          %v662 = vunpack.c.l.b16 %v495
          %v663 = vunpack.c.h.b16 %v495
          %v664 = vunpack.c.l.b16 %v496
          %v665 = vunpack.c.h.b16 %v496
          %v666 = vunpack.c.l.b16 %v497
          %v667 = vunpack.c.h.b16 %v497
          %v668 = vunpack.c.l.b16 %v498
          %v669 = vunpack.c.h.b16 %v498
          %v670 = vunpack.c.l.b16 %v499
          %v671 = vunpack.c.h.b16 %v499
          %v672 = vunpack.c.l.b16 %v500
          %v673 = vunpack.c.h.b16 %v500
          %v674 = vunpack.c.l.b16 %v501
          %v675 = vunpack.c.h.b16 %v501
          %v676 = vpack.c.b16 %v616, %v612
          %v677 = vpack.c.b16 %v617, %v613
          %v678 = vpack.c.b16 %v618, %v614
          %v679 = vpack.c.b16 %v619, %v615
          %v680 = vpack.c.b16 %v624, %v620
          %v681 = vpack.c.b16 %v625, %v621
          %v682 = vpack.c.b16 %v626, %v622
          %v683 = vpack.c.b16 %v627, %v623
          %v684 = vpack.c.b16 %v632, %v628
          %v685 = vpack.c.b16 %v633, %v629
          %v686 = vpack.c.b16 %v634, %v630
          %v687 = vpack.c.b16 %v635, %v631
          %v688 = vpack.c.b16 %v640, %v636
          %v689 = vpack.c.b16 %v641, %v637
          %v690 = vpack.c.b16 %v642, %v638
          %v691 = vpack.c.b16 %v643, %v639
          %v692 = vpack.c.b16 %v648, %v644
          %v693 = vpack.c.b16 %v649, %v645
          %v694 = vpack.c.b16 %v650, %v646
          %v695 = vpack.c.b16 %v651, %v647
          %v696 = vpack.c.b16 %v656, %v652
          %v697 = vpack.c.b16 %v657, %v653
          %v698 = vpack.c.b16 %v658, %v654
          %v699 = vpack.c.b16 %v659, %v655
          %v700 = vpack.c.b16 %v664, %v660
          %v701 = vpack.c.b16 %v665, %v661
          %v702 = vpack.c.b16 %v666, %v662
          %v703 = vpack.c.b16 %v667, %v663
          %v704 = vpack.c.b16 %v672, %v668
          %v705 = vpack.c.b16 %v673, %v669
          %v706 = vpack.c.b16 %v674, %v670
          %v707 = vpack.c.b16 %v675, %v671
          %740 = vmatpush.bf16.msra.mxu0 %v704
          %741 = vmatpush.bf16.msra.mxu0 %v700
          %742 = vmatpush.bf16.msra.mxu0 %v696
          %743 = vmatpush.bf16.msra.mxu0 %v692
          %744 = vmatpush.bf16.msra.mxu0 %v688
          %745 = vmatpush.bf16.msra.mxu0 %v684
          %746 = vmatpush.bf16.msra.mxu0 %v680
          %747 = vmatpush.bf16.msra.mxu0 %v676
          %748 = vmatmul.bf16.gmra.mxu0 %v570
          %v749 = vpop.f32.mrf.mxu0
          %v750 = vadd.f32 %v572, %v749
          %v751 = vpop.f32.mrf.mxu0
          %752 = vdwg.mxu0
          %753 = vmatpush.bf16.msra.mxu0 %v705
          %754 = vmatpush.bf16.msra.mxu0 %v701
          %755 = vmatpush.bf16.msra.mxu0 %v697
          %756 = vmatpush.bf16.msra.mxu0 %v693
          %757 = vmatpush.bf16.msra.mxu0 %v689
          %758 = vmatpush.bf16.msra.mxu0 %v685
          %759 = vmatpush.bf16.msra.mxu0 %v681
          %760 = vmatpush.bf16.msra.mxu0 %v677
          %761 = vmatmul.bf16.gmra.mxu0 %v570
          %v762 = vpop.f32.mrf.mxu0
          %v763 = vadd.f32 %v573, %v762
          %v764 = vpop.f32.mrf.mxu0
          %765 = vdwg.mxu0
          %766 = vmatpush.bf16.msra.mxu0 %v706
          %767 = vmatpush.bf16.msra.mxu0 %v702
          %768 = vmatpush.bf16.msra.mxu0 %v698
          %769 = vmatpush.bf16.msra.mxu0 %v694
          %770 = vmatpush.bf16.msra.mxu0 %v690
          %771 = vmatpush.bf16.msra.mxu0 %v686
          %772 = vmatpush.bf16.msra.mxu0 %v682
          %773 = vmatpush.bf16.msra.mxu0 %v678
          %774 = vmatmul.bf16.gmra.mxu0 %v570
          %v775 = vpop.f32.mrf.mxu0
          %v776 = vadd.f32 %v574, %v775
          %v777 = vpop.f32.mrf.mxu0
          %778 = vdwg.mxu0
          %779 = vmatpush.bf16.msra.mxu0 %v707
          %780 = vmatpush.bf16.msra.mxu0 %v703
          %781 = vmatpush.bf16.msra.mxu0 %v699
          %782 = vmatpush.bf16.msra.mxu0 %v695
          %783 = vmatpush.bf16.msra.mxu0 %v691
          %784 = vmatpush.bf16.msra.mxu0 %v687
          %785 = vmatpush.bf16.msra.mxu0 %v683
          %786 = vmatpush.bf16.msra.mxu0 %v679
          %787 = vmatmul.bf16.gmra.mxu0 %v570
          %v788 = vpop.f32.mrf.mxu0
          %v789 = vadd.f32 %v575, %v788
          %v790 = vpop.f32.mrf.mxu0
          %791 = vdwg.mxu0
          %v792 = vmax.f32 %v750, 0.0
          %v793 = vmax.f32 %v763, 0.0
          %v794 = vmax.f32 %v776, 0.0
          %v795 = vmax.f32 %v789, 0.0
          %v796 = vpack.c.bf16 %v793, %v792
          %v797 = vpack.c.bf16 %v795, %v794
          %798 = vst [vmem:[#allocation2] sm:$0xff] %v796
          %799 = vst [vmem:[#allocation2 + $0x8] sm:$0xff] %v797
          %800 = vst [vmem:[#allocation3] sm:$0xff] 0.0
          %801 = vst [vmem:[#allocation3 + $0x8] sm:$0xff] 0.0
          %802 = vst [vmem:[#allocation3 + $0x10] sm:$0xff] 0.0
          %803 = vst [vmem:[#allocation3 + $0x18] sm:$0xff] 0.0
        $region80: #{tpu_custom_call.1} parent=47 // pred_fallthru
          _
        %v804 = vld [vmem:[#allocation2] sm:$0xff]
        %v805 = vld [vmem:[#allocation2 + $0x8] sm:$0xff]
        %v806 = vld [vmem:[%s390] sm:$0xff]
        %v807 = vld [vmem:[%s390 + $0x8] sm:$0xff]
        %v808 = vld [vmem:[%s390 + $0x10] sm:$0xff]
        %v809 = vld [vmem:[%s390 + $0x18] sm:$0xff]
        %v810 = vld [vmem:[%s390 + $0x20] sm:$0xff]
        %v811 = vld [vmem:[%s390 + $0x28] sm:$0xff]
        %v812 = vld [vmem:[%s390 + $0x30] sm:$0xff]
        %v813 = vld [vmem:[%s390 + $0x38] sm:$0xff]
        %v814 = vld [vmem:[%s390 + $0x40] sm:$0xff]
        %v815 = vld [vmem:[%s390 + $0x48] sm:$0xff]
        %v816 = vld [vmem:[%s390 + $0x50] sm:$0xff]
        %v817 = vld [vmem:[%s390 + $0x58] sm:$0xff]
        %v818 = vld [vmem:[%s390 + $0x60] sm:$0xff]
        %v819 = vld [vmem:[%s390 + $0x68] sm:$0xff]
        %v820 = vld [vmem:[%s390 + $0x70] sm:$0xff]
        %v821 = vld [vmem:[%s390 + $0x78] sm:$0xff]
        %v822 = vld [vmem:[%s390 + $0x80] sm:$0xff]
        %v823 = vld [vmem:[%s390 + $0x88] sm:$0xff]
        %v824 = vld [vmem:[%s390 + $0x90] sm:$0xff]
        %v825 = vld [vmem:[%s390 + $0x98] sm:$0xff]
        %v826 = vld [vmem:[%s390 + $0xa0] sm:$0xff]
        %v827 = vld [vmem:[%s390 + $0xa8] sm:$0xff]
        %v828 = vld [vmem:[%s390 + $0xb0] sm:$0xff]
        %v829 = vld [vmem:[%s390 + $0xb8] sm:$0xff]
        %v830 = vld [vmem:[%s390 + $0xc0] sm:$0xff]
        %v831 = vld [vmem:[%s390 + $0xc8] sm:$0xff]
        %v832 = vld [vmem:[%s390 + $0xd0] sm:$0xff]
        %v833 = vld [vmem:[%s390 + $0xd8] sm:$0xff]
        %v834 = vld [vmem:[%s390 + $0xe0] sm:$0xff]
        %v835 = vld [vmem:[%s390 + $0xe8] sm:$0xff]
        %v836 = vld [vmem:[%s390 + $0xf0] sm:$0xff]
        %v837 = vld [vmem:[%s390 + $0xf8] sm:$0xff]
        %v838 = vld [vmem:[%s390 + $0x100] sm:$0xff]
        %v839 = vld [vmem:[%s390 + $0x108] sm:$0xff]
        %v840 = vld [vmem:[%s390 + $0x110] sm:$0xff]
        %v841 = vld [vmem:[%s390 + $0x118] sm:$0xff]
        %v842 = vld [vmem:[%s390 + $0x120] sm:$0xff]
        %v843 = vld [vmem:[%s390 + $0x128] sm:$0xff]
        %v844 = vld [vmem:[%s390 + $0x130] sm:$0xff]
        %v845 = vld [vmem:[%s390 + $0x138] sm:$0xff]
        %v846 = vld [vmem:[%s390 + $0x140] sm:$0xff]
        %v847 = vld [vmem:[%s390 + $0x148] sm:$0xff]
        %v848 = vld [vmem:[%s390 + $0x150] sm:$0xff]
        %v849 = vld [vmem:[%s390 + $0x158] sm:$0xff]
        %v850 = vld [vmem:[%s390 + $0x160] sm:$0xff]
        %v851 = vld [vmem:[%s390 + $0x168] sm:$0xff]
        %v852 = vld [vmem:[%s390 + $0x170] sm:$0xff]
        %v853 = vld [vmem:[%s390 + $0x178] sm:$0xff]
        %v854 = vld [vmem:[%s390 + $0x180] sm:$0xff]
        %v855 = vld [vmem:[%s390 + $0x188] sm:$0xff]
        %v856 = vld [vmem:[%s390 + $0x190] sm:$0xff]
        %v857 = vld [vmem:[%s390 + $0x198] sm:$0xff]
        %v858 = vld [vmem:[%s390 + $0x1a0] sm:$0xff]
        %v859 = vld [vmem:[%s390 + $0x1a8] sm:$0xff]
        %v860 = vld [vmem:[%s390 + $0x1b0] sm:$0xff]
        %v861 = vld [vmem:[%s390 + $0x1b8] sm:$0xff]
        %v862 = vld [vmem:[%s390 + $0x1c0] sm:$0xff]
        %v863 = vld [vmem:[%s390 + $0x1c8] sm:$0xff]
        %v864 = vld [vmem:[%s390 + $0x1d0] sm:$0xff]
        %v865 = vld [vmem:[%s390 + $0x1d8] sm:$0xff]
        %v866 = vld [vmem:[%s390 + $0x1e0] sm:$0xff]
        %v867 = vld [vmem:[%s390 + $0x1e8] sm:$0xff]
        %v868 = vld [vmem:[%s390 + $0x1f0] sm:$0xff]
        %v869 = vld [vmem:[%s390 + $0x1f8] sm:$0xff]
        %v870 = vld [vmem:[%s390 + $0x200] sm:$0xff]
        %v871 = vld [vmem:[%s390 + $0x208] sm:$0xff]
        %v872 = vld [vmem:[%s390 + $0x210] sm:$0xff]
        %v873 = vld [vmem:[%s390 + $0x218] sm:$0xff]
        %v874 = vld [vmem:[%s390 + $0x220] sm:$0xff]
        %v875 = vld [vmem:[%s390 + $0x228] sm:$0xff]
        %v876 = vld [vmem:[%s390 + $0x230] sm:$0xff]
        %v877 = vld [vmem:[%s390 + $0x238] sm:$0xff]
        %v878 = vld [vmem:[%s390 + $0x240] sm:$0xff]
        %v879 = vld [vmem:[%s390 + $0x248] sm:$0xff]
        %v880 = vld [vmem:[%s390 + $0x250] sm:$0xff]
        %v881 = vld [vmem:[%s390 + $0x258] sm:$0xff]
        %v882 = vld [vmem:[%s390 + $0x260] sm:$0xff]
        %v883 = vld [vmem:[%s390 + $0x268] sm:$0xff]
        %v884 = vld [vmem:[%s390 + $0x270] sm:$0xff]
        %v885 = vld [vmem:[%s390 + $0x278] sm:$0xff]
        %v886 = vld [vmem:[%s390 + $0x280] sm:$0xff]
        %v887 = vld [vmem:[%s390 + $0x288] sm:$0xff]
        %v888 = vld [vmem:[%s390 + $0x290] sm:$0xff]
        %v889 = vld [vmem:[%s390 + $0x298] sm:$0xff]
        %v890 = vld [vmem:[%s390 + $0x2a0] sm:$0xff]
        %v891 = vld [vmem:[%s390 + $0x2a8] sm:$0xff]
        %v892 = vld [vmem:[%s390 + $0x2b0] sm:$0xff]
        %v893 = vld [vmem:[%s390 + $0x2b8] sm:$0xff]
        %v894 = vld [vmem:[%s390 + $0x2c0] sm:$0xff]
        %v895 = vld [vmem:[%s390 + $0x2c8] sm:$0xff]
        %v896 = vld [vmem:[%s390 + $0x2d0] sm:$0xff]
        %v897 = vld [vmem:[%s390 + $0x2d8] sm:$0xff]
        %v898 = vld [vmem:[%s390 + $0x2e0] sm:$0xff]
        %v899 = vld [vmem:[%s390 + $0x2e8] sm:$0xff]
        %v900 = vld [vmem:[%s390 + $0x2f0] sm:$0xff]
        %v901 = vld [vmem:[%s390 + $0x2f8] sm:$0xff]
        %v902 = vld [vmem:[%s390 + $0x300] sm:$0xff]
        %v903 = vld [vmem:[%s390 + $0x308] sm:$0xff]
        %v904 = vld [vmem:[%s390 + $0x310] sm:$0xff]
        %v905 = vld [vmem:[%s390 + $0x318] sm:$0xff]
        %v906 = vld [vmem:[%s390 + $0x320] sm:$0xff]
        %v907 = vld [vmem:[%s390 + $0x328] sm:$0xff]
        %v908 = vld [vmem:[%s390 + $0x330] sm:$0xff]
        %v909 = vld [vmem:[%s390 + $0x338] sm:$0xff]
        %v910 = vld [vmem:[%s390 + $0x340] sm:$0xff]
        %v911 = vld [vmem:[%s390 + $0x348] sm:$0xff]
        %v912 = vld [vmem:[%s390 + $0x350] sm:$0xff]
        %v913 = vld [vmem:[%s390 + $0x358] sm:$0xff]
        %v914 = vld [vmem:[%s390 + $0x360] sm:$0xff]
        %v915 = vld [vmem:[%s390 + $0x368] sm:$0xff]
        %v916 = vld [vmem:[%s390 + $0x370] sm:$0xff]
        %v917 = vld [vmem:[%s390 + $0x378] sm:$0xff]
        %v918 = vld [vmem:[%s390 + $0x380] sm:$0xff]
        %v919 = vld [vmem:[%s390 + $0x388] sm:$0xff]
        %v920 = vld [vmem:[%s390 + $0x390] sm:$0xff]
        %v921 = vld [vmem:[%s390 + $0x398] sm:$0xff]
        %v922 = vld [vmem:[%s390 + $0x3a0] sm:$0xff]
        %v923 = vld [vmem:[%s390 + $0x3a8] sm:$0xff]
        %v924 = vld [vmem:[%s390 + $0x3b0] sm:$0xff]
        %v925 = vld [vmem:[%s390 + $0x3b8] sm:$0xff]
        %v926 = vld [vmem:[%s390 + $0x3c0] sm:$0xff]
        %v927 = vld [vmem:[%s390 + $0x3c8] sm:$0xff]
        %v928 = vld [vmem:[%s390 + $0x3d0] sm:$0xff]
        %v929 = vld [vmem:[%s390 + $0x3d8] sm:$0xff]
        %v930 = vld [vmem:[%s390 + $0x3e0] sm:$0xff]
        %v931 = vld [vmem:[%s390 + $0x3e8] sm:$0xff]
        %v932 = vld [vmem:[%s390 + $0x3f0] sm:$0xff]
        %v933 = vld [vmem:[%s390 + $0x3f8] sm:$0xff]
        %v934 = vld [vmem:[%s390 + $0x400] sm:$0xff]
        %v935 = vld [vmem:[%s390 + $0x408] sm:$0xff]
        %v936 = vld [vmem:[%s390 + $0x410] sm:$0xff]
        %v937 = vld [vmem:[%s390 + $0x418] sm:$0xff]
        %v938 = vld [vmem:[%s390 + $0x420] sm:$0xff]
        %v939 = vld [vmem:[%s390 + $0x428] sm:$0xff]
        %v940 = vld [vmem:[%s390 + $0x430] sm:$0xff]
        %v941 = vld [vmem:[%s390 + $0x438] sm:$0xff]
        %v942 = vld [vmem:[%s390 + $0x440] sm:$0xff]
        %v943 = vld [vmem:[%s390 + $0x448] sm:$0xff]
        %v944 = vld [vmem:[%s390 + $0x450] sm:$0xff]
        %v945 = vld [vmem:[%s390 + $0x458] sm:$0xff]
        %v946 = vld [vmem:[%s390 + $0x460] sm:$0xff]
        %v947 = vld [vmem:[%s390 + $0x468] sm:$0xff]
        %v948 = vld [vmem:[%s390 + $0x470] sm:$0xff]
        %v949 = vld [vmem:[%s390 + $0x478] sm:$0xff]
        %v950 = vld [vmem:[%s390 + $0x480] sm:$0xff]
        %v951 = vld [vmem:[%s390 + $0x488] sm:$0xff]
        %v952 = vld [vmem:[%s390 + $0x490] sm:$0xff]
        %v953 = vld [vmem:[%s390 + $0x498] sm:$0xff]
        %v954 = vld [vmem:[%s390 + $0x4a0] sm:$0xff]
        %v955 = vld [vmem:[%s390 + $0x4a8] sm:$0xff]
        %v956 = vld [vmem:[%s390 + $0x4b0] sm:$0xff]
        %v957 = vld [vmem:[%s390 + $0x4b8] sm:$0xff]
        %v958 = vld [vmem:[%s390 + $0x4c0] sm:$0xff]
        %v959 = vld [vmem:[%s390 + $0x4c8] sm:$0xff]
        %v960 = vld [vmem:[%s390 + $0x4d0] sm:$0xff]
        %v961 = vld [vmem:[%s390 + $0x4d8] sm:$0xff]
        %v962 = vld [vmem:[%s390 + $0x4e0] sm:$0xff]
        %v963 = vld [vmem:[%s390 + $0x4e8] sm:$0xff]
        %v964 = vld [vmem:[%s390 + $0x4f0] sm:$0xff]
        %v965 = vld [vmem:[%s390 + $0x4f8] sm:$0xff]
        %v966 = vld [vmem:[%s390 + $0x500] sm:$0xff]
        %v967 = vld [vmem:[%s390 + $0x508] sm:$0xff]
        %v968 = vld [vmem:[%s390 + $0x510] sm:$0xff]
        %v969 = vld [vmem:[%s390 + $0x518] sm:$0xff]
        %v970 = vld [vmem:[%s390 + $0x520] sm:$0xff]
        %v971 = vld [vmem:[%s390 + $0x528] sm:$0xff]
        %v972 = vld [vmem:[%s390 + $0x530] sm:$0xff]
        %v973 = vld [vmem:[%s390 + $0x538] sm:$0xff]
        %v974 = vld [vmem:[%s390 + $0x540] sm:$0xff]
        %v975 = vld [vmem:[%s390 + $0x548] sm:$0xff]
        %v976 = vld [vmem:[%s390 + $0x550] sm:$0xff]
        %v977 = vld [vmem:[%s390 + $0x558] sm:$0xff]
        %v978 = vld [vmem:[%s390 + $0x560] sm:$0xff]
        %v979 = vld [vmem:[%s390 + $0x568] sm:$0xff]
        %v980 = vld [vmem:[%s390 + $0x570] sm:$0xff]
        %v981 = vld [vmem:[%s390 + $0x578] sm:$0xff]
        %v982 = vld [vmem:[%s390 + $0x580] sm:$0xff]
        %v983 = vld [vmem:[%s390 + $0x588] sm:$0xff]
        %v984 = vld [vmem:[%s390 + $0x590] sm:$0xff]
        %v985 = vld [vmem:[%s390 + $0x598] sm:$0xff]
        %v986 = vld [vmem:[%s390 + $0x5a0] sm:$0xff]
        %v987 = vld [vmem:[%s390 + $0x5a8] sm:$0xff]
        %v988 = vld [vmem:[%s390 + $0x5b0] sm:$0xff]
        %v989 = vld [vmem:[%s390 + $0x5b8] sm:$0xff]
        %v990 = vld [vmem:[%s390 + $0x5c0] sm:$0xff]
        %v991 = vld [vmem:[%s390 + $0x5c8] sm:$0xff]
        %v992 = vld [vmem:[%s390 + $0x5d0] sm:$0xff]
        %v993 = vld [vmem:[%s390 + $0x5d8] sm:$0xff]
        %v994 = vld [vmem:[%s390 + $0x5e0] sm:$0xff]
        %v995 = vld [vmem:[%s390 + $0x5e8] sm:$0xff]
        %v996 = vld [vmem:[%s390 + $0x5f0] sm:$0xff]
        %v997 = vld [vmem:[%s390 + $0x5f8] sm:$0xff]
        %v998 = vld [vmem:[%s390 + $0x600] sm:$0xff]
        %v999 = vld [vmem:[%s390 + $0x608] sm:$0xff]
        %v1000 = vld [vmem:[%s390 + $0x610] sm:$0xff]
        %v1001 = vld [vmem:[%s390 + $0x618] sm:$0xff]
        %v1002 = vld [vmem:[%s390 + $0x620] sm:$0xff]
        %v1003 = vld [vmem:[%s390 + $0x628] sm:$0xff]
        %v1004 = vld [vmem:[%s390 + $0x630] sm:$0xff]
        %v1005 = vld [vmem:[%s390 + $0x638] sm:$0xff]
        %v1006 = vld [vmem:[%s390 + $0x640] sm:$0xff]
        %v1007 = vld [vmem:[%s390 + $0x648] sm:$0xff]
        %v1008 = vld [vmem:[%s390 + $0x650] sm:$0xff]
        %v1009 = vld [vmem:[%s390 + $0x658] sm:$0xff]
        %v1010 = vld [vmem:[%s390 + $0x660] sm:$0xff]
        %v1011 = vld [vmem:[%s390 + $0x668] sm:$0xff]
        %v1012 = vld [vmem:[%s390 + $0x670] sm:$0xff]
        %v1013 = vld [vmem:[%s390 + $0x678] sm:$0xff]
        %v1014 = vld [vmem:[%s390 + $0x680] sm:$0xff]
        %v1015 = vld [vmem:[%s390 + $0x688] sm:$0xff]
        %v1016 = vld [vmem:[%s390 + $0x690] sm:$0xff]
        %v1017 = vld [vmem:[%s390 + $0x698] sm:$0xff]
        %v1018 = vld [vmem:[%s390 + $0x6a0] sm:$0xff]
        %v1019 = vld [vmem:[%s390 + $0x6a8] sm:$0xff]
        %v1020 = vld [vmem:[%s390 + $0x6b0] sm:$0xff]
        %v1021 = vld [vmem:[%s390 + $0x6b8] sm:$0xff]
        %v1022 = vld [vmem:[%s390 + $0x6c0] sm:$0xff]
        %v1023 = vld [vmem:[%s390 + $0x6c8] sm:$0xff]
        %v1024 = vld [vmem:[%s390 + $0x6d0] sm:$0xff]
        %v1025 = vld [vmem:[%s390 + $0x6d8] sm:$0xff]
        %v1026 = vld [vmem:[%s390 + $0x6e0] sm:$0xff]
        %v1027 = vld [vmem:[%s390 + $0x6e8] sm:$0xff]
        %v1028 = vld [vmem:[%s390 + $0x6f0] sm:$0xff]
        %v1029 = vld [vmem:[%s390 + $0x6f8] sm:$0xff]
        %v1030 = vld [vmem:[%s390 + $0x700] sm:$0xff]
        %v1031 = vld [vmem:[%s390 + $0x708] sm:$0xff]
        %v1032 = vld [vmem:[%s390 + $0x710] sm:$0xff]
        %v1033 = vld [vmem:[%s390 + $0x718] sm:$0xff]
        %v1034 = vld [vmem:[%s390 + $0x720] sm:$0xff]
        %v1035 = vld [vmem:[%s390 + $0x728] sm:$0xff]
        %v1036 = vld [vmem:[%s390 + $0x730] sm:$0xff]
        %v1037 = vld [vmem:[%s390 + $0x738] sm:$0xff]
        %v1038 = vld [vmem:[%s390 + $0x740] sm:$0xff]
        %v1039 = vld [vmem:[%s390 + $0x748] sm:$0xff]
        %v1040 = vld [vmem:[%s390 + $0x750] sm:$0xff]
        %v1041 = vld [vmem:[%s390 + $0x758] sm:$0xff]
        %v1042 = vld [vmem:[%s390 + $0x760] sm:$0xff]
        %v1043 = vld [vmem:[%s390 + $0x768] sm:$0xff]
        %v1044 = vld [vmem:[%s390 + $0x770] sm:$0xff]
        %v1045 = vld [vmem:[%s390 + $0x778] sm:$0xff]
        %v1046 = vld [vmem:[%s390 + $0x780] sm:$0xff]
        %v1047 = vld [vmem:[%s390 + $0x788] sm:$0xff]
        %v1048 = vld [vmem:[%s390 + $0x790] sm:$0xff]
        %v1049 = vld [vmem:[%s390 + $0x798] sm:$0xff]
        %v1050 = vld [vmem:[%s390 + $0x7a0] sm:$0xff]
        %v1051 = vld [vmem:[%s390 + $0x7a8] sm:$0xff]
        %v1052 = vld [vmem:[%s390 + $0x7b0] sm:$0xff]
        %v1053 = vld [vmem:[%s390 + $0x7b8] sm:$0xff]
        %v1054 = vld [vmem:[%s390 + $0x7c0] sm:$0xff]
        %v1055 = vld [vmem:[%s390 + $0x7c8] sm:$0xff]
        %v1056 = vld [vmem:[%s390 + $0x7d0] sm:$0xff]
        %v1057 = vld [vmem:[%s390 + $0x7d8] sm:$0xff]
        %v1058 = vld [vmem:[%s390 + $0x7e0] sm:$0xff]
        %v1059 = vld [vmem:[%s390 + $0x7e8] sm:$0xff]
        %v1060 = vld [vmem:[%s390 + $0x7f0] sm:$0xff]
        %v1061 = vld [vmem:[%s390 + $0x7f8] sm:$0xff]
        %v1062 = vld [vmem:[%s390 + $0x800] sm:$0xff]
        %v1063 = vld [vmem:[%s390 + $0x808] sm:$0xff]
        %v1064 = vld [vmem:[%s390 + $0x810] sm:$0xff]
        %v1065 = vld [vmem:[%s390 + $0x818] sm:$0xff]
        %v1066 = vld [vmem:[%s390 + $0x820] sm:$0xff]
        %v1067 = vld [vmem:[%s390 + $0x828] sm:$0xff]
        %v1068 = vld [vmem:[%s390 + $0x830] sm:$0xff]
        %v1069 = vld [vmem:[%s390 + $0x838] sm:$0xff]
        %v1070 = vld [vmem:[%s390 + $0x840] sm:$0xff]
        %v1071 = vld [vmem:[%s390 + $0x848] sm:$0xff]
        %v1072 = vld [vmem:[%s390 + $0x850] sm:$0xff]
        %v1073 = vld [vmem:[%s390 + $0x858] sm:$0xff]
        %v1074 = vld [vmem:[%s390 + $0x860] sm:$0xff]
        %v1075 = vld [vmem:[%s390 + $0x868] sm:$0xff]
        %v1076 = vld [vmem:[%s390 + $0x870] sm:$0xff]
        %v1077 = vld [vmem:[%s390 + $0x878] sm:$0xff]
        %v1078 = vld [vmem:[%s390 + $0x880] sm:$0xff]
        %v1079 = vld [vmem:[%s390 + $0x888] sm:$0xff]
        %v1080 = vld [vmem:[%s390 + $0x890] sm:$0xff]
        %v1081 = vld [vmem:[%s390 + $0x898] sm:$0xff]
        %v1082 = vld [vmem:[%s390 + $0x8a0] sm:$0xff]
        %v1083 = vld [vmem:[%s390 + $0x8a8] sm:$0xff]
        %v1084 = vld [vmem:[%s390 + $0x8b0] sm:$0xff]
        %v1085 = vld [vmem:[%s390 + $0x8b8] sm:$0xff]
        %v1086 = vld [vmem:[%s390 + $0x8c0] sm:$0xff]
        %v1087 = vld [vmem:[%s390 + $0x8c8] sm:$0xff]
        %v1088 = vld [vmem:[%s390 + $0x8d0] sm:$0xff]
        %v1089 = vld [vmem:[%s390 + $0x8d8] sm:$0xff]
        %v1090 = vld [vmem:[%s390 + $0x8e0] sm:$0xff]
        %v1091 = vld [vmem:[%s390 + $0x8e8] sm:$0xff]
        %v1092 = vld [vmem:[%s390 + $0x8f0] sm:$0xff]
        %v1093 = vld [vmem:[%s390 + $0x8f8] sm:$0xff]
        %v1094 = vld [vmem:[%s390 + $0x900] sm:$0xff]
        %v1095 = vld [vmem:[%s390 + $0x908] sm:$0xff]
        %v1096 = vld [vmem:[%s390 + $0x910] sm:$0xff]
        %v1097 = vld [vmem:[%s390 + $0x918] sm:$0xff]
        %v1098 = vld [vmem:[%s390 + $0x920] sm:$0xff]
        %v1099 = vld [vmem:[%s390 + $0x928] sm:$0xff]
        %v1100 = vld [vmem:[%s390 + $0x930] sm:$0xff]
        %v1101 = vld [vmem:[%s390 + $0x938] sm:$0xff]
        %v1102 = vld [vmem:[%s390 + $0x940] sm:$0xff]
        %v1103 = vld [vmem:[%s390 + $0x948] sm:$0xff]
        %v1104 = vld [vmem:[%s390 + $0x950] sm:$0xff]
        %v1105 = vld [vmem:[%s390 + $0x958] sm:$0xff]
        %v1106 = vld [vmem:[%s390 + $0x960] sm:$0xff]
        %v1107 = vld [vmem:[%s390 + $0x968] sm:$0xff]
        %v1108 = vld [vmem:[%s390 + $0x970] sm:$0xff]
        %v1109 = vld [vmem:[%s390 + $0x978] sm:$0xff]
        %v1110 = vld [vmem:[%s390 + $0x980] sm:$0xff]
        %v1111 = vld [vmem:[%s390 + $0x988] sm:$0xff]
        %v1112 = vld [vmem:[%s390 + $0x990] sm:$0xff]
        %v1113 = vld [vmem:[%s390 + $0x998] sm:$0xff]
        %v1114 = vld [vmem:[%s390 + $0x9a0] sm:$0xff]
        %v1115 = vld [vmem:[%s390 + $0x9a8] sm:$0xff]
        %v1116 = vld [vmem:[%s390 + $0x9b0] sm:$0xff]
        %v1117 = vld [vmem:[%s390 + $0x9b8] sm:$0xff]
        %v1118 = vld [vmem:[%s390 + $0x9c0] sm:$0xff]
        %v1119 = vld [vmem:[%s390 + $0x9c8] sm:$0xff]
        %v1120 = vld [vmem:[%s390 + $0x9d0] sm:$0xff]
        %v1121 = vld [vmem:[%s390 + $0x9d8] sm:$0xff]
        %v1122 = vld [vmem:[%s390 + $0x9e0] sm:$0xff]
        %v1123 = vld [vmem:[%s390 + $0x9e8] sm:$0xff]
        %v1124 = vld [vmem:[%s390 + $0x9f0] sm:$0xff]
        %v1125 = vld [vmem:[%s390 + $0x9f8] sm:$0xff]
        %v1126 = vld [vmem:[%s390 + $0xa00] sm:$0xff]
        %v1127 = vld [vmem:[%s390 + $0xa08] sm:$0xff]
        %v1128 = vld [vmem:[%s390 + $0xa10] sm:$0xff]
        %v1129 = vld [vmem:[%s390 + $0xa18] sm:$0xff]
        %v1130 = vld [vmem:[%s390 + $0xa20] sm:$0xff]
        %v1131 = vld [vmem:[%s390 + $0xa28] sm:$0xff]
        %v1132 = vld [vmem:[%s390 + $0xa30] sm:$0xff]
        %v1133 = vld [vmem:[%s390 + $0xa38] sm:$0xff]
        %v1134 = vld [vmem:[%s390 + $0xa40] sm:$0xff]
        %v1135 = vld [vmem:[%s390 + $0xa48] sm:$0xff]
        %v1136 = vld [vmem:[%s390 + $0xa50] sm:$0xff]
        %v1137 = vld [vmem:[%s390 + $0xa58] sm:$0xff]
        %v1138 = vld [vmem:[%s390 + $0xa60] sm:$0xff]
        %v1139 = vld [vmem:[%s390 + $0xa68] sm:$0xff]
        %v1140 = vld [vmem:[%s390 + $0xa70] sm:$0xff]
        %v1141 = vld [vmem:[%s390 + $0xa78] sm:$0xff]
        %v1142 = vld [vmem:[%s390 + $0xa80] sm:$0xff]
        %v1143 = vld [vmem:[%s390 + $0xa88] sm:$0xff]
        %v1144 = vld [vmem:[%s390 + $0xa90] sm:$0xff]
        %v1145 = vld [vmem:[%s390 + $0xa98] sm:$0xff]
        %v1146 = vld [vmem:[%s390 + $0xaa0] sm:$0xff]
        %v1147 = vld [vmem:[%s390 + $0xaa8] sm:$0xff]
        %v1148 = vld [vmem:[%s390 + $0xab0] sm:$0xff]
        %v1149 = vld [vmem:[%s390 + $0xab8] sm:$0xff]
        %v1150 = vld [vmem:[%s390 + $0xac0] sm:$0xff]
        %v1151 = vld [vmem:[%s390 + $0xac8] sm:$0xff]
        %v1152 = vld [vmem:[%s390 + $0xad0] sm:$0xff]
        %v1153 = vld [vmem:[%s390 + $0xad8] sm:$0xff]
        %v1154 = vld [vmem:[%s390 + $0xae0] sm:$0xff]
        %v1155 = vld [vmem:[%s390 + $0xae8] sm:$0xff]
        %v1156 = vld [vmem:[%s390 + $0xaf0] sm:$0xff]
        %v1157 = vld [vmem:[%s390 + $0xaf8] sm:$0xff]
        %v1158 = vld [vmem:[%s390 + $0xb00] sm:$0xff]
        %v1159 = vld [vmem:[%s390 + $0xb08] sm:$0xff]
        %v1160 = vld [vmem:[%s390 + $0xb10] sm:$0xff]
        %v1161 = vld [vmem:[%s390 + $0xb18] sm:$0xff]
        %v1162 = vld [vmem:[%s390 + $0xb20] sm:$0xff]
        %v1163 = vld [vmem:[%s390 + $0xb28] sm:$0xff]
        %v1164 = vld [vmem:[%s390 + $0xb30] sm:$0xff]
        %v1165 = vld [vmem:[%s390 + $0xb38] sm:$0xff]
        %v1166 = vld [vmem:[%s390 + $0xb40] sm:$0xff]
        %v1167 = vld [vmem:[%s390 + $0xb48] sm:$0xff]
        %v1168 = vld [vmem:[%s390 + $0xb50] sm:$0xff]
        %v1169 = vld [vmem:[%s390 + $0xb58] sm:$0xff]
        %v1170 = vld [vmem:[%s390 + $0xb60] sm:$0xff]
        %v1171 = vld [vmem:[%s390 + $0xb68] sm:$0xff]
        %v1172 = vld [vmem:[%s390 + $0xb70] sm:$0xff]
        %v1173 = vld [vmem:[%s390 + $0xb78] sm:$0xff]
        %v1174 = vld [vmem:[%s390 + $0xb80] sm:$0xff]
        %v1175 = vld [vmem:[%s390 + $0xb88] sm:$0xff]
        %v1176 = vld [vmem:[%s390 + $0xb90] sm:$0xff]
        %v1177 = vld [vmem:[%s390 + $0xb98] sm:$0xff]
        %v1178 = vld [vmem:[%s390 + $0xba0] sm:$0xff]
        %v1179 = vld [vmem:[%s390 + $0xba8] sm:$0xff]
        %v1180 = vld [vmem:[%s390 + $0xbb0] sm:$0xff]
        %v1181 = vld [vmem:[%s390 + $0xbb8] sm:$0xff]
        %v1182 = vld [vmem:[%s390 + $0xbc0] sm:$0xff]
        %v1183 = vld [vmem:[%s390 + $0xbc8] sm:$0xff]
        %v1184 = vld [vmem:[%s390 + $0xbd0] sm:$0xff]
        %v1185 = vld [vmem:[%s390 + $0xbd8] sm:$0xff]
        %v1186 = vld [vmem:[%s390 + $0xbe0] sm:$0xff]
        %v1187 = vld [vmem:[%s390 + $0xbe8] sm:$0xff]
        %v1188 = vld [vmem:[%s390 + $0xbf0] sm:$0xff]
        %v1189 = vld [vmem:[%s390 + $0xbf8] sm:$0xff]
        %v1190 = vld [vmem:[%s390 + $0xc00] sm:$0xff]
        %v1191 = vld [vmem:[%s390 + $0xc08] sm:$0xff]
        %v1192 = vld [vmem:[%s390 + $0xc10] sm:$0xff]
        %v1193 = vld [vmem:[%s390 + $0xc18] sm:$0xff]
        %v1194 = vld [vmem:[%s390 + $0xc20] sm:$0xff]
        %v1195 = vld [vmem:[%s390 + $0xc28] sm:$0xff]
        %v1196 = vld [vmem:[%s390 + $0xc30] sm:$0xff]
        %v1197 = vld [vmem:[%s390 + $0xc38] sm:$0xff]
        %v1198 = vld [vmem:[%s390 + $0xc40] sm:$0xff]
        %v1199 = vld [vmem:[%s390 + $0xc48] sm:$0xff]
        %v1200 = vld [vmem:[%s390 + $0xc50] sm:$0xff]
        %v1201 = vld [vmem:[%s390 + $0xc58] sm:$0xff]
        %v1202 = vld [vmem:[%s390 + $0xc60] sm:$0xff]
        %v1203 = vld [vmem:[%s390 + $0xc68] sm:$0xff]
        %v1204 = vld [vmem:[%s390 + $0xc70] sm:$0xff]
        %v1205 = vld [vmem:[%s390 + $0xc78] sm:$0xff]
        %v1206 = vld [vmem:[%s390 + $0xc80] sm:$0xff]
        %v1207 = vld [vmem:[%s390 + $0xc88] sm:$0xff]
        %v1208 = vld [vmem:[%s390 + $0xc90] sm:$0xff]
        %v1209 = vld [vmem:[%s390 + $0xc98] sm:$0xff]
        %v1210 = vld [vmem:[%s390 + $0xca0] sm:$0xff]
        %v1211 = vld [vmem:[%s390 + $0xca8] sm:$0xff]
        %v1212 = vld [vmem:[%s390 + $0xcb0] sm:$0xff]
        %v1213 = vld [vmem:[%s390 + $0xcb8] sm:$0xff]
        %v1214 = vld [vmem:[%s390 + $0xcc0] sm:$0xff]
        %v1215 = vld [vmem:[%s390 + $0xcc8] sm:$0xff]
        %v1216 = vld [vmem:[%s390 + $0xcd0] sm:$0xff]
        %v1217 = vld [vmem:[%s390 + $0xcd8] sm:$0xff]
        %v1218 = vld [vmem:[%s390 + $0xce0] sm:$0xff]
        %v1219 = vld [vmem:[%s390 + $0xce8] sm:$0xff]
        %v1220 = vld [vmem:[%s390 + $0xcf0] sm:$0xff]
        %v1221 = vld [vmem:[%s390 + $0xcf8] sm:$0xff]
        %v1222 = vld [vmem:[%s390 + $0xd00] sm:$0xff]
        %v1223 = vld [vmem:[%s390 + $0xd08] sm:$0xff]
        %v1224 = vld [vmem:[%s390 + $0xd10] sm:$0xff]
        %v1225 = vld [vmem:[%s390 + $0xd18] sm:$0xff]
        %v1226 = vld [vmem:[%s390 + $0xd20] sm:$0xff]
        %v1227 = vld [vmem:[%s390 + $0xd28] sm:$0xff]
        %v1228 = vld [vmem:[%s390 + $0xd30] sm:$0xff]
        %v1229 = vld [vmem:[%s390 + $0xd38] sm:$0xff]
        %v1230 = vld [vmem:[%s390 + $0xd40] sm:$0xff]
        %v1231 = vld [vmem:[%s390 + $0xd48] sm:$0xff]
        %v1232 = vld [vmem:[%s390 + $0xd50] sm:$0xff]
        %v1233 = vld [vmem:[%s390 + $0xd58] sm:$0xff]
        %v1234 = vld [vmem:[%s390 + $0xd60] sm:$0xff]
        %v1235 = vld [vmem:[%s390 + $0xd68] sm:$0xff]
        %v1236 = vld [vmem:[%s390 + $0xd70] sm:$0xff]
        %v1237 = vld [vmem:[%s390 + $0xd78] sm:$0xff]
        %v1238 = vld [vmem:[%s390 + $0xd80] sm:$0xff]
        %v1239 = vld [vmem:[%s390 + $0xd88] sm:$0xff]
        %v1240 = vld [vmem:[%s390 + $0xd90] sm:$0xff]
        %v1241 = vld [vmem:[%s390 + $0xd98] sm:$0xff]
        %v1242 = vld [vmem:[%s390 + $0xda0] sm:$0xff]
        %v1243 = vld [vmem:[%s390 + $0xda8] sm:$0xff]
        %v1244 = vld [vmem:[%s390 + $0xdb0] sm:$0xff]
        %v1245 = vld [vmem:[%s390 + $0xdb8] sm:$0xff]
        %v1246 = vld [vmem:[%s390 + $0xdc0] sm:$0xff]
        %v1247 = vld [vmem:[%s390 + $0xdc8] sm:$0xff]
        %v1248 = vld [vmem:[%s390 + $0xdd0] sm:$0xff]
        %v1249 = vld [vmem:[%s390 + $0xdd8] sm:$0xff]
        %v1250 = vld [vmem:[%s390 + $0xde0] sm:$0xff]
        %v1251 = vld [vmem:[%s390 + $0xde8] sm:$0xff]
        %v1252 = vld [vmem:[%s390 + $0xdf0] sm:$0xff]
        %v1253 = vld [vmem:[%s390 + $0xdf8] sm:$0xff]
        %v1254 = vld [vmem:[%s390 + $0xe00] sm:$0xff]
        %v1255 = vld [vmem:[%s390 + $0xe08] sm:$0xff]
        %v1256 = vld [vmem:[%s390 + $0xe10] sm:$0xff]
        %v1257 = vld [vmem:[%s390 + $0xe18] sm:$0xff]
        %v1258 = vld [vmem:[%s390 + $0xe20] sm:$0xff]
        %v1259 = vld [vmem:[%s390 + $0xe28] sm:$0xff]
        %v1260 = vld [vmem:[%s390 + $0xe30] sm:$0xff]
        %v1261 = vld [vmem:[%s390 + $0xe38] sm:$0xff]
        %v1262 = vld [vmem:[%s390 + $0xe40] sm:$0xff]
        %v1263 = vld [vmem:[%s390 + $0xe48] sm:$0xff]
        %v1264 = vld [vmem:[%s390 + $0xe50] sm:$0xff]
        %v1265 = vld [vmem:[%s390 + $0xe58] sm:$0xff]
        %v1266 = vld [vmem:[%s390 + $0xe60] sm:$0xff]
        %v1267 = vld [vmem:[%s390 + $0xe68] sm:$0xff]
        %v1268 = vld [vmem:[%s390 + $0xe70] sm:$0xff]
        %v1269 = vld [vmem:[%s390 + $0xe78] sm:$0xff]
        %v1270 = vld [vmem:[%s390 + $0xe80] sm:$0xff]
        %v1271 = vld [vmem:[%s390 + $0xe88] sm:$0xff]
        %v1272 = vld [vmem:[%s390 + $0xe90] sm:$0xff]
        %v1273 = vld [vmem:[%s390 + $0xe98] sm:$0xff]
        %v1274 = vld [vmem:[%s390 + $0xea0] sm:$0xff]
        %v1275 = vld [vmem:[%s390 + $0xea8] sm:$0xff]
        %v1276 = vld [vmem:[%s390 + $0xeb0] sm:$0xff]
        %v1277 = vld [vmem:[%s390 + $0xeb8] sm:$0xff]
        %v1278 = vld [vmem:[%s390 + $0xec0] sm:$0xff]
        %v1279 = vld [vmem:[%s390 + $0xec8] sm:$0xff]
        %v1280 = vld [vmem:[%s390 + $0xed0] sm:$0xff]
        %v1281 = vld [vmem:[%s390 + $0xed8] sm:$0xff]
        %v1282 = vld [vmem:[%s390 + $0xee0] sm:$0xff]
        %v1283 = vld [vmem:[%s390 + $0xee8] sm:$0xff]
        %v1284 = vld [vmem:[%s390 + $0xef0] sm:$0xff]
        %v1285 = vld [vmem:[%s390 + $0xef8] sm:$0xff]
        %v1286 = vld [vmem:[%s390 + $0xf00] sm:$0xff]
        %v1287 = vld [vmem:[%s390 + $0xf08] sm:$0xff]
        %v1288 = vld [vmem:[%s390 + $0xf10] sm:$0xff]
        %v1289 = vld [vmem:[%s390 + $0xf18] sm:$0xff]
        %v1290 = vld [vmem:[%s390 + $0xf20] sm:$0xff]
        %v1291 = vld [vmem:[%s390 + $0xf28] sm:$0xff]
        %v1292 = vld [vmem:[%s390 + $0xf30] sm:$0xff]
        %v1293 = vld [vmem:[%s390 + $0xf38] sm:$0xff]
        %v1294 = vld [vmem:[%s390 + $0xf40] sm:$0xff]
        %v1295 = vld [vmem:[%s390 + $0xf48] sm:$0xff]
        %v1296 = vld [vmem:[%s390 + $0xf50] sm:$0xff]
        %v1297 = vld [vmem:[%s390 + $0xf58] sm:$0xff]
        %v1298 = vld [vmem:[%s390 + $0xf60] sm:$0xff]
        %v1299 = vld [vmem:[%s390 + $0xf68] sm:$0xff]
        %v1300 = vld [vmem:[%s390 + $0xf70] sm:$0xff]
        %v1301 = vld [vmem:[%s390 + $0xf78] sm:$0xff]
        %v1302 = vld [vmem:[%s390 + $0xf80] sm:$0xff]
        %v1303 = vld [vmem:[%s390 + $0xf88] sm:$0xff]
        %v1304 = vld [vmem:[%s390 + $0xf90] sm:$0xff]
        %v1305 = vld [vmem:[%s390 + $0xf98] sm:$0xff]
        %v1306 = vld [vmem:[%s390 + $0xfa0] sm:$0xff]
        %v1307 = vld [vmem:[%s390 + $0xfa8] sm:$0xff]
        %v1308 = vld [vmem:[%s390 + $0xfb0] sm:$0xff]
        %v1309 = vld [vmem:[%s390 + $0xfb8] sm:$0xff]
        %v1310 = vld [vmem:[%s390 + $0xfc0] sm:$0xff]
        %v1311 = vld [vmem:[%s390 + $0xfc8] sm:$0xff]
        %v1312 = vld [vmem:[%s390 + $0xfd0] sm:$0xff]
        %v1313 = vld [vmem:[%s390 + $0xfd8] sm:$0xff]
        %v1314 = vld [vmem:[%s390 + $0xfe0] sm:$0xff]
        %v1315 = vld [vmem:[%s390 + $0xfe8] sm:$0xff]
        %v1316 = vld [vmem:[%s390 + $0xff0] sm:$0xff]
        %v1317 = vld [vmem:[%s390 + $0xff8] sm:$0xff]
        %v1318 = vld [vmem:[%s400] sm:$0xff]
        %v1319 = vld [vmem:[%s400 + $0x8] sm:$0xff]
        %v1322 = vperm.slane %v1318, 0
        %v1323 = vperm.slane %v1318, 1
        %v1324 = vperm.slane %v1318, 2
        %v1325 = vperm.slane %v1318, 3
        %v1326 = vperm.slane %v1318, 4
        %v1327 = vperm.slane %v1318, 5
        %v1328 = vperm.slane %v1318, 6
        %v1329 = vperm.slane %v1318, 7
        %v1330 = vperm.slane %v1319, 0
        %v1331 = vperm.slane %v1319, 1
        %v1332 = vperm.slane %v1319, 2
        %v1333 = vperm.slane %v1319, 3
        %v1334 = vperm.slane %v1319, 4
        %v1335 = vperm.slane %v1319, 5
        %v1336 = vperm.slane %v1319, 6
        %v1337 = vperm.slane %v1319, 7
        %v1356 = vunpack.c.l.b16 %v804
        %v1357 = vunpack.c.h.b16 %v804
        %v1358 = vunpack.c.l.b16 %v805
        %v1359 = vunpack.c.h.b16 %v805
        %v1360 = vpack.c.b16 %v1356, %v1356
        %v1361 = vpack.c.b16 %v1357, %v1357
        %v1362 = vpack.c.b16 %v1358, %v1358
        %v1363 = vpack.c.b16 %v1359, %v1359
        %v1880 = vunpack.c.l.b16 %v806
        %v1881 = vunpack.c.h.b16 %v806
        %v1882 = vunpack.c.l.b16 %v807
        %v1883 = vunpack.c.h.b16 %v807
        %v1884 = vunpack.c.l.b16 %v808
        %v1885 = vunpack.c.h.b16 %v808
        %v1886 = vunpack.c.l.b16 %v809
        %v1887 = vunpack.c.h.b16 %v809
        %v1888 = vunpack.c.l.b16 %v810
        %v1889 = vunpack.c.h.b16 %v810
        %v1890 = vunpack.c.l.b16 %v811
        %v1891 = vunpack.c.h.b16 %v811
        %v1892 = vunpack.c.l.b16 %v812
        %v1893 = vunpack.c.h.b16 %v812
        %v1894 = vunpack.c.l.b16 %v813
        %v1895 = vunpack.c.h.b16 %v813
        %v1896 = vunpack.c.l.b16 %v814
        %v1897 = vunpack.c.h.b16 %v814
        %v1898 = vunpack.c.l.b16 %v815
        %v1899 = vunpack.c.h.b16 %v815
        %v1900 = vunpack.c.l.b16 %v816
        %v1901 = vunpack.c.h.b16 %v816
        %v1902 = vunpack.c.l.b16 %v817
        %v1903 = vunpack.c.h.b16 %v817
        %v1904 = vunpack.c.l.b16 %v818
        %v1905 = vunpack.c.h.b16 %v818
        %v1906 = vunpack.c.l.b16 %v819
        %v1907 = vunpack.c.h.b16 %v819
        %v1908 = vunpack.c.l.b16 %v820
        %v1909 = vunpack.c.h.b16 %v820
        %v1910 = vunpack.c.l.b16 %v821
        %v1911 = vunpack.c.h.b16 %v821
        %v1912 = vunpack.c.l.b16 %v822
        %v1913 = vunpack.c.h.b16 %v822
        %v1914 = vunpack.c.l.b16 %v823
        %v1915 = vunpack.c.h.b16 %v823
        %v1916 = vunpack.c.l.b16 %v824
        %v1917 = vunpack.c.h.b16 %v824
        %v1918 = vunpack.c.l.b16 %v825
        %v1919 = vunpack.c.h.b16 %v825
        %v1920 = vunpack.c.l.b16 %v826
        %v1921 = vunpack.c.h.b16 %v826
        %v1922 = vunpack.c.l.b16 %v827
        %v1923 = vunpack.c.h.b16 %v827
        %v1924 = vunpack.c.l.b16 %v828
        %v1925 = vunpack.c.h.b16 %v828
        %v1926 = vunpack.c.l.b16 %v829
        %v1927 = vunpack.c.h.b16 %v829
        %v1928 = vunpack.c.l.b16 %v830
        %v1929 = vunpack.c.h.b16 %v830
        %v1930 = vunpack.c.l.b16 %v831
        %v1931 = vunpack.c.h.b16 %v831
        %v1932 = vunpack.c.l.b16 %v832
        %v1933 = vunpack.c.h.b16 %v832
        %v1934 = vunpack.c.l.b16 %v833
        %v1935 = vunpack.c.h.b16 %v833
        %v1936 = vunpack.c.l.b16 %v834
        %v1937 = vunpack.c.h.b16 %v834
        %v1938 = vunpack.c.l.b16 %v835
        %v1939 = vunpack.c.h.b16 %v835
        %v1940 = vunpack.c.l.b16 %v836
        %v1941 = vunpack.c.h.b16 %v836
        %v1942 = vunpack.c.l.b16 %v837
        %v1943 = vunpack.c.h.b16 %v837
        %v1944 = vunpack.c.l.b16 %v838
        %v1945 = vunpack.c.h.b16 %v838
        %v1946 = vunpack.c.l.b16 %v839
        %v1947 = vunpack.c.h.b16 %v839
        %v1948 = vunpack.c.l.b16 %v840
        %v1949 = vunpack.c.h.b16 %v840
        %v1950 = vunpack.c.l.b16 %v841
        %v1951 = vunpack.c.h.b16 %v841
        %v1952 = vunpack.c.l.b16 %v842
        %v1953 = vunpack.c.h.b16 %v842
        %v1954 = vunpack.c.l.b16 %v843
        %v1955 = vunpack.c.h.b16 %v843
        %v1956 = vunpack.c.l.b16 %v844
        %v1957 = vunpack.c.h.b16 %v844
        %v1958 = vunpack.c.l.b16 %v845
        %v1959 = vunpack.c.h.b16 %v845
        %v1960 = vunpack.c.l.b16 %v846
        %v1961 = vunpack.c.h.b16 %v846
        %v1962 = vunpack.c.l.b16 %v847
        %v1963 = vunpack.c.h.b16 %v847
        %v1964 = vunpack.c.l.b16 %v848
        %v1965 = vunpack.c.h.b16 %v848
        %v1966 = vunpack.c.l.b16 %v849
        %v1967 = vunpack.c.h.b16 %v849
        %v1968 = vunpack.c.l.b16 %v850
        %v1969 = vunpack.c.h.b16 %v850
        %v1970 = vunpack.c.l.b16 %v851
        %v1971 = vunpack.c.h.b16 %v851
        %v1972 = vunpack.c.l.b16 %v852
        %v1973 = vunpack.c.h.b16 %v852
        %v1974 = vunpack.c.l.b16 %v853
        %v1975 = vunpack.c.h.b16 %v853
        %v1976 = vunpack.c.l.b16 %v854
        %v1977 = vunpack.c.h.b16 %v854
        %v1978 = vunpack.c.l.b16 %v855
        %v1979 = vunpack.c.h.b16 %v855
        %v1980 = vunpack.c.l.b16 %v856
        %v1981 = vunpack.c.h.b16 %v856
        %v1982 = vunpack.c.l.b16 %v857
        %v1983 = vunpack.c.h.b16 %v857
        %v1984 = vunpack.c.l.b16 %v858
        %v1985 = vunpack.c.h.b16 %v858
        %v1986 = vunpack.c.l.b16 %v859
        %v1987 = vunpack.c.h.b16 %v859
        %v1988 = vunpack.c.l.b16 %v860
        %v1989 = vunpack.c.h.b16 %v860
        %v1990 = vunpack.c.l.b16 %v861
        %v1991 = vunpack.c.h.b16 %v861
        %v1992 = vunpack.c.l.b16 %v862
        %v1993 = vunpack.c.h.b16 %v862
        %v1994 = vunpack.c.l.b16 %v863
        %v1995 = vunpack.c.h.b16 %v863
        %v1996 = vunpack.c.l.b16 %v864
        %v1997 = vunpack.c.h.b16 %v864
        %v1998 = vunpack.c.l.b16 %v865
        %v1999 = vunpack.c.h.b16 %v865
        %v2000 = vunpack.c.l.b16 %v866
        %v2001 = vunpack.c.h.b16 %v866
        %v2002 = vunpack.c.l.b16 %v867
        %v2003 = vunpack.c.h.b16 %v867
        %v2004 = vunpack.c.l.b16 %v868
        %v2005 = vunpack.c.h.b16 %v868
        %v2006 = vunpack.c.l.b16 %v869
        %v2007 = vunpack.c.h.b16 %v869
        %v2008 = vunpack.c.l.b16 %v870
        %v2009 = vunpack.c.h.b16 %v870
        %v2010 = vunpack.c.l.b16 %v871
        %v2011 = vunpack.c.h.b16 %v871
        %v2012 = vunpack.c.l.b16 %v872
        %v2013 = vunpack.c.h.b16 %v872
        %v2014 = vunpack.c.l.b16 %v873
        %v2015 = vunpack.c.h.b16 %v873
        %v2016 = vunpack.c.l.b16 %v874
        %v2017 = vunpack.c.h.b16 %v874
        %v2018 = vunpack.c.l.b16 %v875
        %v2019 = vunpack.c.h.b16 %v875
        %v2020 = vunpack.c.l.b16 %v876
        %v2021 = vunpack.c.h.b16 %v876
        %v2022 = vunpack.c.l.b16 %v877
        %v2023 = vunpack.c.h.b16 %v877
        %v2024 = vunpack.c.l.b16 %v878
        %v2025 = vunpack.c.h.b16 %v878
        %v2026 = vunpack.c.l.b16 %v879
        %v2027 = vunpack.c.h.b16 %v879
        %v2028 = vunpack.c.l.b16 %v880
        %v2029 = vunpack.c.h.b16 %v880
        %v2030 = vunpack.c.l.b16 %v881
        %v2031 = vunpack.c.h.b16 %v881
        %v2032 = vunpack.c.l.b16 %v882
        %v2033 = vunpack.c.h.b16 %v882
        %v2034 = vunpack.c.l.b16 %v883
        %v2035 = vunpack.c.h.b16 %v883
        %v2036 = vunpack.c.l.b16 %v884
        %v2037 = vunpack.c.h.b16 %v884
        %v2038 = vunpack.c.l.b16 %v885
        %v2039 = vunpack.c.h.b16 %v885
        %v2040 = vunpack.c.l.b16 %v886
        %v2041 = vunpack.c.h.b16 %v886
        %v2042 = vunpack.c.l.b16 %v887
        %v2043 = vunpack.c.h.b16 %v887
        %v2044 = vunpack.c.l.b16 %v888
        %v2045 = vunpack.c.h.b16 %v888
        %v2046 = vunpack.c.l.b16 %v889
        %v2047 = vunpack.c.h.b16 %v889
        %v2048 = vunpack.c.l.b16 %v890
        %v2049 = vunpack.c.h.b16 %v890
        %v2050 = vunpack.c.l.b16 %v891
        %v2051 = vunpack.c.h.b16 %v891
        %v2052 = vunpack.c.l.b16 %v892
        %v2053 = vunpack.c.h.b16 %v892
        %v2054 = vunpack.c.l.b16 %v893
        %v2055 = vunpack.c.h.b16 %v893
        %v2056 = vunpack.c.l.b16 %v894
        %v2057 = vunpack.c.h.b16 %v894
        %v2058 = vunpack.c.l.b16 %v895
        %v2059 = vunpack.c.h.b16 %v895
        %v2060 = vunpack.c.l.b16 %v896
        %v2061 = vunpack.c.h.b16 %v896
        %v2062 = vunpack.c.l.b16 %v897
        %v2063 = vunpack.c.h.b16 %v897
        %v2064 = vunpack.c.l.b16 %v898
        %v2065 = vunpack.c.h.b16 %v898
        %v2066 = vunpack.c.l.b16 %v899
        %v2067 = vunpack.c.h.b16 %v899
        %v2068 = vunpack.c.l.b16 %v900
        %v2069 = vunpack.c.h.b16 %v900
        %v2070 = vunpack.c.l.b16 %v901
        %v2071 = vunpack.c.h.b16 %v901
        %v2072 = vunpack.c.l.b16 %v902
        %v2073 = vunpack.c.h.b16 %v902
        %v2074 = vunpack.c.l.b16 %v903
        %v2075 = vunpack.c.h.b16 %v903
        %v2076 = vunpack.c.l.b16 %v904
        %v2077 = vunpack.c.h.b16 %v904
        %v2078 = vunpack.c.l.b16 %v905
        %v2079 = vunpack.c.h.b16 %v905
        %v2080 = vunpack.c.l.b16 %v906
        %v2081 = vunpack.c.h.b16 %v906
        %v2082 = vunpack.c.l.b16 %v907
        %v2083 = vunpack.c.h.b16 %v907
        %v2084 = vunpack.c.l.b16 %v908
        %v2085 = vunpack.c.h.b16 %v908
        %v2086 = vunpack.c.l.b16 %v909
        %v2087 = vunpack.c.h.b16 %v909
        %v2088 = vunpack.c.l.b16 %v910
        %v2089 = vunpack.c.h.b16 %v910
        %v2090 = vunpack.c.l.b16 %v911
        %v2091 = vunpack.c.h.b16 %v911
        %v2092 = vunpack.c.l.b16 %v912
        %v2093 = vunpack.c.h.b16 %v912
        %v2094 = vunpack.c.l.b16 %v913
        %v2095 = vunpack.c.h.b16 %v913
        %v2096 = vunpack.c.l.b16 %v914
        %v2097 = vunpack.c.h.b16 %v914
        %v2098 = vunpack.c.l.b16 %v915
        %v2099 = vunpack.c.h.b16 %v915
        %v2100 = vunpack.c.l.b16 %v916
        %v2101 = vunpack.c.h.b16 %v916
        %v2102 = vunpack.c.l.b16 %v917
        %v2103 = vunpack.c.h.b16 %v917
        %v2104 = vunpack.c.l.b16 %v918
        %v2105 = vunpack.c.h.b16 %v918
        %v2106 = vunpack.c.l.b16 %v919
        %v2107 = vunpack.c.h.b16 %v919
        %v2108 = vunpack.c.l.b16 %v920
        %v2109 = vunpack.c.h.b16 %v920
        %v2110 = vunpack.c.l.b16 %v921
        %v2111 = vunpack.c.h.b16 %v921
        %v2112 = vunpack.c.l.b16 %v922
        %v2113 = vunpack.c.h.b16 %v922
        %v2114 = vunpack.c.l.b16 %v923
        %v2115 = vunpack.c.h.b16 %v923
        %v2116 = vunpack.c.l.b16 %v924
        %v2117 = vunpack.c.h.b16 %v924
        %v2118 = vunpack.c.l.b16 %v925
        %v2119 = vunpack.c.h.b16 %v925
        %v2120 = vunpack.c.l.b16 %v926
        %v2121 = vunpack.c.h.b16 %v926
        %v2122 = vunpack.c.l.b16 %v927
        %v2123 = vunpack.c.h.b16 %v927
        %v2124 = vunpack.c.l.b16 %v928
        %v2125 = vunpack.c.h.b16 %v928
        %v2126 = vunpack.c.l.b16 %v929
        %v2127 = vunpack.c.h.b16 %v929
        %v2128 = vunpack.c.l.b16 %v930
        %v2129 = vunpack.c.h.b16 %v930
        %v2130 = vunpack.c.l.b16 %v931
        %v2131 = vunpack.c.h.b16 %v931
        %v2132 = vunpack.c.l.b16 %v932
        %v2133 = vunpack.c.h.b16 %v932
        %v2134 = vunpack.c.l.b16 %v933
        %v2135 = vunpack.c.h.b16 %v933
        %v2136 = vunpack.c.l.b16 %v934
        %v2137 = vunpack.c.h.b16 %v934
        %v2138 = vunpack.c.l.b16 %v935
        %v2139 = vunpack.c.h.b16 %v935
        %v2140 = vunpack.c.l.b16 %v936
        %v2141 = vunpack.c.h.b16 %v936
        %v2142 = vunpack.c.l.b16 %v937
        %v2143 = vunpack.c.h.b16 %v937
        %v2144 = vunpack.c.l.b16 %v938
        %v2145 = vunpack.c.h.b16 %v938
        %v2146 = vunpack.c.l.b16 %v939
        %v2147 = vunpack.c.h.b16 %v939
        %v2148 = vunpack.c.l.b16 %v940
        %v2149 = vunpack.c.h.b16 %v940
        %v2150 = vunpack.c.l.b16 %v941
        %v2151 = vunpack.c.h.b16 %v941
        %v2152 = vunpack.c.l.b16 %v942
        %v2153 = vunpack.c.h.b16 %v942
        %v2154 = vunpack.c.l.b16 %v943
        %v2155 = vunpack.c.h.b16 %v943
        %v2156 = vunpack.c.l.b16 %v944
        %v2157 = vunpack.c.h.b16 %v944
        %v2158 = vunpack.c.l.b16 %v945
        %v2159 = vunpack.c.h.b16 %v945
        %v2160 = vunpack.c.l.b16 %v946
        %v2161 = vunpack.c.h.b16 %v946
        %v2162 = vunpack.c.l.b16 %v947
        %v2163 = vunpack.c.h.b16 %v947
        %v2164 = vunpack.c.l.b16 %v948
        %v2165 = vunpack.c.h.b16 %v948
        %v2166 = vunpack.c.l.b16 %v949
        %v2167 = vunpack.c.h.b16 %v949
        %v2168 = vunpack.c.l.b16 %v950
        %v2169 = vunpack.c.h.b16 %v950
        %v2170 = vunpack.c.l.b16 %v951
        %v2171 = vunpack.c.h.b16 %v951
        %v2172 = vunpack.c.l.b16 %v952
        %v2173 = vunpack.c.h.b16 %v952
        %v2174 = vunpack.c.l.b16 %v953
        %v2175 = vunpack.c.h.b16 %v953
        %v2176 = vunpack.c.l.b16 %v954
        %v2177 = vunpack.c.h.b16 %v954
        %v2178 = vunpack.c.l.b16 %v955
        %v2179 = vunpack.c.h.b16 %v955
        %v2180 = vunpack.c.l.b16 %v956
        %v2181 = vunpack.c.h.b16 %v956
        %v2182 = vunpack.c.l.b16 %v957
        %v2183 = vunpack.c.h.b16 %v957
        %v2184 = vunpack.c.l.b16 %v958
        %v2185 = vunpack.c.h.b16 %v958
        %v2186 = vunpack.c.l.b16 %v959
        %v2187 = vunpack.c.h.b16 %v959
        %v2188 = vunpack.c.l.b16 %v960
        %v2189 = vunpack.c.h.b16 %v960
        %v2190 = vunpack.c.l.b16 %v961
        %v2191 = vunpack.c.h.b16 %v961
        %v2192 = vunpack.c.l.b16 %v962
        %v2193 = vunpack.c.h.b16 %v962
        %v2194 = vunpack.c.l.b16 %v963
        %v2195 = vunpack.c.h.b16 %v963
        %v2196 = vunpack.c.l.b16 %v964
        %v2197 = vunpack.c.h.b16 %v964
        %v2198 = vunpack.c.l.b16 %v965
        %v2199 = vunpack.c.h.b16 %v965
        %v2200 = vunpack.c.l.b16 %v966
        %v2201 = vunpack.c.h.b16 %v966
        %v2202 = vunpack.c.l.b16 %v967
        %v2203 = vunpack.c.h.b16 %v967
        %v2204 = vunpack.c.l.b16 %v968
        %v2205 = vunpack.c.h.b16 %v968
        %v2206 = vunpack.c.l.b16 %v969
        %v2207 = vunpack.c.h.b16 %v969
        %v2208 = vunpack.c.l.b16 %v970
        %v2209 = vunpack.c.h.b16 %v970
        %v2210 = vunpack.c.l.b16 %v971
        %v2211 = vunpack.c.h.b16 %v971
        %v2212 = vunpack.c.l.b16 %v972
        %v2213 = vunpack.c.h.b16 %v972
        %v2214 = vunpack.c.l.b16 %v973
        %v2215 = vunpack.c.h.b16 %v973
        %v2216 = vunpack.c.l.b16 %v974
        %v2217 = vunpack.c.h.b16 %v974
        %v2218 = vunpack.c.l.b16 %v975
        %v2219 = vunpack.c.h.b16 %v975
        %v2220 = vunpack.c.l.b16 %v976
        %v2221 = vunpack.c.h.b16 %v976
        %v2222 = vunpack.c.l.b16 %v977
        %v2223 = vunpack.c.h.b16 %v977
        %v2224 = vunpack.c.l.b16 %v978
        %v2225 = vunpack.c.h.b16 %v978
        %v2226 = vunpack.c.l.b16 %v979
        %v2227 = vunpack.c.h.b16 %v979
        %v2228 = vunpack.c.l.b16 %v980
        %v2229 = vunpack.c.h.b16 %v980
        %v2230 = vunpack.c.l.b16 %v981
        %v2231 = vunpack.c.h.b16 %v981
        %v2232 = vunpack.c.l.b16 %v982
        %v2233 = vunpack.c.h.b16 %v982
        %v2234 = vunpack.c.l.b16 %v983
        %v2235 = vunpack.c.h.b16 %v983
        %v2236 = vunpack.c.l.b16 %v984
        %v2237 = vunpack.c.h.b16 %v984
        %v2238 = vunpack.c.l.b16 %v985
        %v2239 = vunpack.c.h.b16 %v985
        %v2240 = vunpack.c.l.b16 %v986
        %v2241 = vunpack.c.h.b16 %v986
        %v2242 = vunpack.c.l.b16 %v987
        %v2243 = vunpack.c.h.b16 %v987
        %v2244 = vunpack.c.l.b16 %v988
        %v2245 = vunpack.c.h.b16 %v988
        %v2246 = vunpack.c.l.b16 %v989
        %v2247 = vunpack.c.h.b16 %v989
        %v2248 = vunpack.c.l.b16 %v990
        %v2249 = vunpack.c.h.b16 %v990
        %v2250 = vunpack.c.l.b16 %v991
        %v2251 = vunpack.c.h.b16 %v991
        %v2252 = vunpack.c.l.b16 %v992
        %v2253 = vunpack.c.h.b16 %v992
        %v2254 = vunpack.c.l.b16 %v993
        %v2255 = vunpack.c.h.b16 %v993
        %v2256 = vunpack.c.l.b16 %v994
        %v2257 = vunpack.c.h.b16 %v994
        %v2258 = vunpack.c.l.b16 %v995
        %v2259 = vunpack.c.h.b16 %v995
        %v2260 = vunpack.c.l.b16 %v996
        %v2261 = vunpack.c.h.b16 %v996
        %v2262 = vunpack.c.l.b16 %v997
        %v2263 = vunpack.c.h.b16 %v997
        %v2264 = vunpack.c.l.b16 %v998
        %v2265 = vunpack.c.h.b16 %v998
        %v2266 = vunpack.c.l.b16 %v999
        %v2267 = vunpack.c.h.b16 %v999
        %v2268 = vunpack.c.l.b16 %v1000
        %v2269 = vunpack.c.h.b16 %v1000
        %v2270 = vunpack.c.l.b16 %v1001
        %v2271 = vunpack.c.h.b16 %v1001
        %v2272 = vunpack.c.l.b16 %v1002
        %v2273 = vunpack.c.h.b16 %v1002
        %v2274 = vunpack.c.l.b16 %v1003
        %v2275 = vunpack.c.h.b16 %v1003
        %v2276 = vunpack.c.l.b16 %v1004
        %v2277 = vunpack.c.h.b16 %v1004
        %v2278 = vunpack.c.l.b16 %v1005
        %v2279 = vunpack.c.h.b16 %v1005
        %v2280 = vunpack.c.l.b16 %v1006
        %v2281 = vunpack.c.h.b16 %v1006
        %v2282 = vunpack.c.l.b16 %v1007
        %v2283 = vunpack.c.h.b16 %v1007
        %v2284 = vunpack.c.l.b16 %v1008
        %v2285 = vunpack.c.h.b16 %v1008
        %v2286 = vunpack.c.l.b16 %v1009
        %v2287 = vunpack.c.h.b16 %v1009
        %v2288 = vunpack.c.l.b16 %v1010
        %v2289 = vunpack.c.h.b16 %v1010
        %v2290 = vunpack.c.l.b16 %v1011
        %v2291 = vunpack.c.h.b16 %v1011
        %v2292 = vunpack.c.l.b16 %v1012
        %v2293 = vunpack.c.h.b16 %v1012
        %v2294 = vunpack.c.l.b16 %v1013
        %v2295 = vunpack.c.h.b16 %v1013
        %v2296 = vunpack.c.l.b16 %v1014
        %v2297 = vunpack.c.h.b16 %v1014
        %v2298 = vunpack.c.l.b16 %v1015
        %v2299 = vunpack.c.h.b16 %v1015
        %v2300 = vunpack.c.l.b16 %v1016
        %v2301 = vunpack.c.h.b16 %v1016
        %v2302 = vunpack.c.l.b16 %v1017
        %v2303 = vunpack.c.h.b16 %v1017
        %v2304 = vunpack.c.l.b16 %v1018
        %v2305 = vunpack.c.h.b16 %v1018
        %v2306 = vunpack.c.l.b16 %v1019
        %v2307 = vunpack.c.h.b16 %v1019
        %v2308 = vunpack.c.l.b16 %v1020
        %v2309 = vunpack.c.h.b16 %v1020
        %v2310 = vunpack.c.l.b16 %v1021
        %v2311 = vunpack.c.h.b16 %v1021
        %v2312 = vunpack.c.l.b16 %v1022
        %v2313 = vunpack.c.h.b16 %v1022
        %v2314 = vunpack.c.l.b16 %v1023
        %v2315 = vunpack.c.h.b16 %v1023
        %v2316 = vunpack.c.l.b16 %v1024
        %v2317 = vunpack.c.h.b16 %v1024
        %v2318 = vunpack.c.l.b16 %v1025
        %v2319 = vunpack.c.h.b16 %v1025
        %v2320 = vunpack.c.l.b16 %v1026
        %v2321 = vunpack.c.h.b16 %v1026
        %v2322 = vunpack.c.l.b16 %v1027
        %v2323 = vunpack.c.h.b16 %v1027
        %v2324 = vunpack.c.l.b16 %v1028
        %v2325 = vunpack.c.h.b16 %v1028
        %v2326 = vunpack.c.l.b16 %v1029
        %v2327 = vunpack.c.h.b16 %v1029
        %v2328 = vunpack.c.l.b16 %v1030
        %v2329 = vunpack.c.h.b16 %v1030
        %v2330 = vunpack.c.l.b16 %v1031
        %v2331 = vunpack.c.h.b16 %v1031
        %v2332 = vunpack.c.l.b16 %v1032
        %v2333 = vunpack.c.h.b16 %v1032
        %v2334 = vunpack.c.l.b16 %v1033
        %v2335 = vunpack.c.h.b16 %v1033
        %v2336 = vunpack.c.l.b16 %v1034
        %v2337 = vunpack.c.h.b16 %v1034
        %v2338 = vunpack.c.l.b16 %v1035
        %v2339 = vunpack.c.h.b16 %v1035
        %v2340 = vunpack.c.l.b16 %v1036
        %v2341 = vunpack.c.h.b16 %v1036
        %v2342 = vunpack.c.l.b16 %v1037
        %v2343 = vunpack.c.h.b16 %v1037
        %v2344 = vunpack.c.l.b16 %v1038
        %v2345 = vunpack.c.h.b16 %v1038
        %v2346 = vunpack.c.l.b16 %v1039
        %v2347 = vunpack.c.h.b16 %v1039
        %v2348 = vunpack.c.l.b16 %v1040
        %v2349 = vunpack.c.h.b16 %v1040
        %v2350 = vunpack.c.l.b16 %v1041
        %v2351 = vunpack.c.h.b16 %v1041
        %v2352 = vunpack.c.l.b16 %v1042
        %v2353 = vunpack.c.h.b16 %v1042
        %v2354 = vunpack.c.l.b16 %v1043
        %v2355 = vunpack.c.h.b16 %v1043
        %v2356 = vunpack.c.l.b16 %v1044
        %v2357 = vunpack.c.h.b16 %v1044
        %v2358 = vunpack.c.l.b16 %v1045
        %v2359 = vunpack.c.h.b16 %v1045
        %v2360 = vunpack.c.l.b16 %v1046
        %v2361 = vunpack.c.h.b16 %v1046
        %v2362 = vunpack.c.l.b16 %v1047
        %v2363 = vunpack.c.h.b16 %v1047
        %v2364 = vunpack.c.l.b16 %v1048
        %v2365 = vunpack.c.h.b16 %v1048
        %v2366 = vunpack.c.l.b16 %v1049
        %v2367 = vunpack.c.h.b16 %v1049
        %v2368 = vunpack.c.l.b16 %v1050
        %v2369 = vunpack.c.h.b16 %v1050
        %v2370 = vunpack.c.l.b16 %v1051
        %v2371 = vunpack.c.h.b16 %v1051
        %v2372 = vunpack.c.l.b16 %v1052
        %v2373 = vunpack.c.h.b16 %v1052
        %v2374 = vunpack.c.l.b16 %v1053
        %v2375 = vunpack.c.h.b16 %v1053
        %v2376 = vunpack.c.l.b16 %v1054
        %v2377 = vunpack.c.h.b16 %v1054
        %v2378 = vunpack.c.l.b16 %v1055
        %v2379 = vunpack.c.h.b16 %v1055
        %v2380 = vunpack.c.l.b16 %v1056
        %v2381 = vunpack.c.h.b16 %v1056
        %v2382 = vunpack.c.l.b16 %v1057
        %v2383 = vunpack.c.h.b16 %v1057
        %v2384 = vunpack.c.l.b16 %v1058
        %v2385 = vunpack.c.h.b16 %v1058
        %v2386 = vunpack.c.l.b16 %v1059
        %v2387 = vunpack.c.h.b16 %v1059
        %v2388 = vunpack.c.l.b16 %v1060
        %v2389 = vunpack.c.h.b16 %v1060
        %v2390 = vunpack.c.l.b16 %v1061
        %v2391 = vunpack.c.h.b16 %v1061
        %v2392 = vunpack.c.l.b16 %v1062
        %v2393 = vunpack.c.h.b16 %v1062
        %v2394 = vunpack.c.l.b16 %v1063
        %v2395 = vunpack.c.h.b16 %v1063
        %v2396 = vunpack.c.l.b16 %v1064
        %v2397 = vunpack.c.h.b16 %v1064
        %v2398 = vunpack.c.l.b16 %v1065
        %v2399 = vunpack.c.h.b16 %v1065
        %v2400 = vunpack.c.l.b16 %v1066
        %v2401 = vunpack.c.h.b16 %v1066
        %v2402 = vunpack.c.l.b16 %v1067
        %v2403 = vunpack.c.h.b16 %v1067
        %v2404 = vunpack.c.l.b16 %v1068
        %v2405 = vunpack.c.h.b16 %v1068
        %v2406 = vunpack.c.l.b16 %v1069
        %v2407 = vunpack.c.h.b16 %v1069
        %v2408 = vunpack.c.l.b16 %v1070
        %v2409 = vunpack.c.h.b16 %v1070
        %v2410 = vunpack.c.l.b16 %v1071
        %v2411 = vunpack.c.h.b16 %v1071
        %v2412 = vunpack.c.l.b16 %v1072
        %v2413 = vunpack.c.h.b16 %v1072
        %v2414 = vunpack.c.l.b16 %v1073
        %v2415 = vunpack.c.h.b16 %v1073
        %v2416 = vunpack.c.l.b16 %v1074
        %v2417 = vunpack.c.h.b16 %v1074
        %v2418 = vunpack.c.l.b16 %v1075
        %v2419 = vunpack.c.h.b16 %v1075
        %v2420 = vunpack.c.l.b16 %v1076
        %v2421 = vunpack.c.h.b16 %v1076
        %v2422 = vunpack.c.l.b16 %v1077
        %v2423 = vunpack.c.h.b16 %v1077
        %v2424 = vunpack.c.l.b16 %v1078
        %v2425 = vunpack.c.h.b16 %v1078
        %v2426 = vunpack.c.l.b16 %v1079
        %v2427 = vunpack.c.h.b16 %v1079
        %v2428 = vunpack.c.l.b16 %v1080
        %v2429 = vunpack.c.h.b16 %v1080
        %v2430 = vunpack.c.l.b16 %v1081
        %v2431 = vunpack.c.h.b16 %v1081
        %v2432 = vunpack.c.l.b16 %v1082
        %v2433 = vunpack.c.h.b16 %v1082
        %v2434 = vunpack.c.l.b16 %v1083
        %v2435 = vunpack.c.h.b16 %v1083
        %v2436 = vunpack.c.l.b16 %v1084
        %v2437 = vunpack.c.h.b16 %v1084
        %v2438 = vunpack.c.l.b16 %v1085
        %v2439 = vunpack.c.h.b16 %v1085
        %v2440 = vunpack.c.l.b16 %v1086
        %v2441 = vunpack.c.h.b16 %v1086
        %v2442 = vunpack.c.l.b16 %v1087
        %v2443 = vunpack.c.h.b16 %v1087
        %v2444 = vunpack.c.l.b16 %v1088
        %v2445 = vunpack.c.h.b16 %v1088
        %v2446 = vunpack.c.l.b16 %v1089
        %v2447 = vunpack.c.h.b16 %v1089
        %v2448 = vunpack.c.l.b16 %v1090
        %v2449 = vunpack.c.h.b16 %v1090
        %v2450 = vunpack.c.l.b16 %v1091
        %v2451 = vunpack.c.h.b16 %v1091
        %v2452 = vunpack.c.l.b16 %v1092
        %v2453 = vunpack.c.h.b16 %v1092
        %v2454 = vunpack.c.l.b16 %v1093
        %v2455 = vunpack.c.h.b16 %v1093
        %v2456 = vunpack.c.l.b16 %v1094
        %v2457 = vunpack.c.h.b16 %v1094
        %v2458 = vunpack.c.l.b16 %v1095
        %v2459 = vunpack.c.h.b16 %v1095
        %v2460 = vunpack.c.l.b16 %v1096
        %v2461 = vunpack.c.h.b16 %v1096
        %v2462 = vunpack.c.l.b16 %v1097
        %v2463 = vunpack.c.h.b16 %v1097
        %v2464 = vunpack.c.l.b16 %v1098
        %v2465 = vunpack.c.h.b16 %v1098
        %v2466 = vunpack.c.l.b16 %v1099
        %v2467 = vunpack.c.h.b16 %v1099
        %v2468 = vunpack.c.l.b16 %v1100
        %v2469 = vunpack.c.h.b16 %v1100
        %v2470 = vunpack.c.l.b16 %v1101
        %v2471 = vunpack.c.h.b16 %v1101
        %v2472 = vunpack.c.l.b16 %v1102
        %v2473 = vunpack.c.h.b16 %v1102
        %v2474 = vunpack.c.l.b16 %v1103
        %v2475 = vunpack.c.h.b16 %v1103
        %v2476 = vunpack.c.l.b16 %v1104
        %v2477 = vunpack.c.h.b16 %v1104
        %v2478 = vunpack.c.l.b16 %v1105
        %v2479 = vunpack.c.h.b16 %v1105
        %v2480 = vunpack.c.l.b16 %v1106
        %v2481 = vunpack.c.h.b16 %v1106
        %v2482 = vunpack.c.l.b16 %v1107
        %v2483 = vunpack.c.h.b16 %v1107
        %v2484 = vunpack.c.l.b16 %v1108
        %v2485 = vunpack.c.h.b16 %v1108
        %v2486 = vunpack.c.l.b16 %v1109
        %v2487 = vunpack.c.h.b16 %v1109
        %v2488 = vunpack.c.l.b16 %v1110
        %v2489 = vunpack.c.h.b16 %v1110
        %v2490 = vunpack.c.l.b16 %v1111
        %v2491 = vunpack.c.h.b16 %v1111
        %v2492 = vunpack.c.l.b16 %v1112
        %v2493 = vunpack.c.h.b16 %v1112
        %v2494 = vunpack.c.l.b16 %v1113
        %v2495 = vunpack.c.h.b16 %v1113
        %v2496 = vunpack.c.l.b16 %v1114
        %v2497 = vunpack.c.h.b16 %v1114
        %v2498 = vunpack.c.l.b16 %v1115
        %v2499 = vunpack.c.h.b16 %v1115
        %v2500 = vunpack.c.l.b16 %v1116
        %v2501 = vunpack.c.h.b16 %v1116
        %v2502 = vunpack.c.l.b16 %v1117
        %v2503 = vunpack.c.h.b16 %v1117
        %v2504 = vunpack.c.l.b16 %v1118
        %v2505 = vunpack.c.h.b16 %v1118
        %v2506 = vunpack.c.l.b16 %v1119
        %v2507 = vunpack.c.h.b16 %v1119
        %v2508 = vunpack.c.l.b16 %v1120
        %v2509 = vunpack.c.h.b16 %v1120
        %v2510 = vunpack.c.l.b16 %v1121
        %v2511 = vunpack.c.h.b16 %v1121
        %v2512 = vunpack.c.l.b16 %v1122
        %v2513 = vunpack.c.h.b16 %v1122
        %v2514 = vunpack.c.l.b16 %v1123
        %v2515 = vunpack.c.h.b16 %v1123
        %v2516 = vunpack.c.l.b16 %v1124
        %v2517 = vunpack.c.h.b16 %v1124
        %v2518 = vunpack.c.l.b16 %v1125
        %v2519 = vunpack.c.h.b16 %v1125
        %v2520 = vunpack.c.l.b16 %v1126
        %v2521 = vunpack.c.h.b16 %v1126
        %v2522 = vunpack.c.l.b16 %v1127
        %v2523 = vunpack.c.h.b16 %v1127
        %v2524 = vunpack.c.l.b16 %v1128
        %v2525 = vunpack.c.h.b16 %v1128
        %v2526 = vunpack.c.l.b16 %v1129
        %v2527 = vunpack.c.h.b16 %v1129
        %v2528 = vunpack.c.l.b16 %v1130
        %v2529 = vunpack.c.h.b16 %v1130
        %v2530 = vunpack.c.l.b16 %v1131
        %v2531 = vunpack.c.h.b16 %v1131
        %v2532 = vunpack.c.l.b16 %v1132
        %v2533 = vunpack.c.h.b16 %v1132
        %v2534 = vunpack.c.l.b16 %v1133
        %v2535 = vunpack.c.h.b16 %v1133
        %v2536 = vunpack.c.l.b16 %v1134
        %v2537 = vunpack.c.h.b16 %v1134
        %v2538 = vunpack.c.l.b16 %v1135
        %v2539 = vunpack.c.h.b16 %v1135
        %v2540 = vunpack.c.l.b16 %v1136
        %v2541 = vunpack.c.h.b16 %v1136
        %v2542 = vunpack.c.l.b16 %v1137
        %v2543 = vunpack.c.h.b16 %v1137
        %v2544 = vunpack.c.l.b16 %v1138
        %v2545 = vunpack.c.h.b16 %v1138
        %v2546 = vunpack.c.l.b16 %v1139
        %v2547 = vunpack.c.h.b16 %v1139
        %v2548 = vunpack.c.l.b16 %v1140
        %v2549 = vunpack.c.h.b16 %v1140
        %v2550 = vunpack.c.l.b16 %v1141
        %v2551 = vunpack.c.h.b16 %v1141
        %v2552 = vunpack.c.l.b16 %v1142
        %v2553 = vunpack.c.h.b16 %v1142
        %v2554 = vunpack.c.l.b16 %v1143
        %v2555 = vunpack.c.h.b16 %v1143
        %v2556 = vunpack.c.l.b16 %v1144
        %v2557 = vunpack.c.h.b16 %v1144
        %v2558 = vunpack.c.l.b16 %v1145
        %v2559 = vunpack.c.h.b16 %v1145
        %v2560 = vunpack.c.l.b16 %v1146
        %v2561 = vunpack.c.h.b16 %v1146
        %v2562 = vunpack.c.l.b16 %v1147
        %v2563 = vunpack.c.h.b16 %v1147
        %v2564 = vunpack.c.l.b16 %v1148
        %v2565 = vunpack.c.h.b16 %v1148
        %v2566 = vunpack.c.l.b16 %v1149
        %v2567 = vunpack.c.h.b16 %v1149
        %v2568 = vunpack.c.l.b16 %v1150
        %v2569 = vunpack.c.h.b16 %v1150
        %v2570 = vunpack.c.l.b16 %v1151
        %v2571 = vunpack.c.h.b16 %v1151
        %v2572 = vunpack.c.l.b16 %v1152
        %v2573 = vunpack.c.h.b16 %v1152
        %v2574 = vunpack.c.l.b16 %v1153
        %v2575 = vunpack.c.h.b16 %v1153
        %v2576 = vunpack.c.l.b16 %v1154
        %v2577 = vunpack.c.h.b16 %v1154
        %v2578 = vunpack.c.l.b16 %v1155
        %v2579 = vunpack.c.h.b16 %v1155
        %v2580 = vunpack.c.l.b16 %v1156
        %v2581 = vunpack.c.h.b16 %v1156
        %v2582 = vunpack.c.l.b16 %v1157
        %v2583 = vunpack.c.h.b16 %v1157
        %v2584 = vunpack.c.l.b16 %v1158
        %v2585 = vunpack.c.h.b16 %v1158
        %v2586 = vunpack.c.l.b16 %v1159
        %v2587 = vunpack.c.h.b16 %v1159
        %v2588 = vunpack.c.l.b16 %v1160
        %v2589 = vunpack.c.h.b16 %v1160
        %v2590 = vunpack.c.l.b16 %v1161
        %v2591 = vunpack.c.h.b16 %v1161
        %v2592 = vunpack.c.l.b16 %v1162
        %v2593 = vunpack.c.h.b16 %v1162
        %v2594 = vunpack.c.l.b16 %v1163
        %v2595 = vunpack.c.h.b16 %v1163
        %v2596 = vunpack.c.l.b16 %v1164
        %v2597 = vunpack.c.h.b16 %v1164
        %v2598 = vunpack.c.l.b16 %v1165
        %v2599 = vunpack.c.h.b16 %v1165
        %v2600 = vunpack.c.l.b16 %v1166
        %v2601 = vunpack.c.h.b16 %v1166
        %v2602 = vunpack.c.l.b16 %v1167
        %v2603 = vunpack.c.h.b16 %v1167
        %v2604 = vunpack.c.l.b16 %v1168
        %v2605 = vunpack.c.h.b16 %v1168
        %v2606 = vunpack.c.l.b16 %v1169
        %v2607 = vunpack.c.h.b16 %v1169
        %v2608 = vunpack.c.l.b16 %v1170
        %v2609 = vunpack.c.h.b16 %v1170
        %v2610 = vunpack.c.l.b16 %v1171
        %v2611 = vunpack.c.h.b16 %v1171
        %v2612 = vunpack.c.l.b16 %v1172
        %v2613 = vunpack.c.h.b16 %v1172
        %v2614 = vunpack.c.l.b16 %v1173
        %v2615 = vunpack.c.h.b16 %v1173
        %v2616 = vunpack.c.l.b16 %v1174
        %v2617 = vunpack.c.h.b16 %v1174
        %v2618 = vunpack.c.l.b16 %v1175
        %v2619 = vunpack.c.h.b16 %v1175
        %v2620 = vunpack.c.l.b16 %v1176
        %v2621 = vunpack.c.h.b16 %v1176
        %v2622 = vunpack.c.l.b16 %v1177
        %v2623 = vunpack.c.h.b16 %v1177
        %v2624 = vunpack.c.l.b16 %v1178
        %v2625 = vunpack.c.h.b16 %v1178
        %v2626 = vunpack.c.l.b16 %v1179
        %v2627 = vunpack.c.h.b16 %v1179
        %v2628 = vunpack.c.l.b16 %v1180
        %v2629 = vunpack.c.h.b16 %v1180
        %v2630 = vunpack.c.l.b16 %v1181
        %v2631 = vunpack.c.h.b16 %v1181
        %v2632 = vunpack.c.l.b16 %v1182
        %v2633 = vunpack.c.h.b16 %v1182
        %v2634 = vunpack.c.l.b16 %v1183
        %v2635 = vunpack.c.h.b16 %v1183
        %v2636 = vunpack.c.l.b16 %v1184
        %v2637 = vunpack.c.h.b16 %v1184
        %v2638 = vunpack.c.l.b16 %v1185
        %v2639 = vunpack.c.h.b16 %v1185
        %v2640 = vunpack.c.l.b16 %v1186
        %v2641 = vunpack.c.h.b16 %v1186
        %v2642 = vunpack.c.l.b16 %v1187
        %v2643 = vunpack.c.h.b16 %v1187
        %v2644 = vunpack.c.l.b16 %v1188
        %v2645 = vunpack.c.h.b16 %v1188
        %v2646 = vunpack.c.l.b16 %v1189
        %v2647 = vunpack.c.h.b16 %v1189
        %v2648 = vunpack.c.l.b16 %v1190
        %v2649 = vunpack.c.h.b16 %v1190
        %v2650 = vunpack.c.l.b16 %v1191
        %v2651 = vunpack.c.h.b16 %v1191
        %v2652 = vunpack.c.l.b16 %v1192
        %v2653 = vunpack.c.h.b16 %v1192
        %v2654 = vunpack.c.l.b16 %v1193
        %v2655 = vunpack.c.h.b16 %v1193
        %v2656 = vunpack.c.l.b16 %v1194
        %v2657 = vunpack.c.h.b16 %v1194
        %v2658 = vunpack.c.l.b16 %v1195
        %v2659 = vunpack.c.h.b16 %v1195
        %v2660 = vunpack.c.l.b16 %v1196
        %v2661 = vunpack.c.h.b16 %v1196
        %v2662 = vunpack.c.l.b16 %v1197
        %v2663 = vunpack.c.h.b16 %v1197
        %v2664 = vunpack.c.l.b16 %v1198
        %v2665 = vunpack.c.h.b16 %v1198
        %v2666 = vunpack.c.l.b16 %v1199
        %v2667 = vunpack.c.h.b16 %v1199
        %v2668 = vunpack.c.l.b16 %v1200
        %v2669 = vunpack.c.h.b16 %v1200
        %v2670 = vunpack.c.l.b16 %v1201
        %v2671 = vunpack.c.h.b16 %v1201
        %v2672 = vunpack.c.l.b16 %v1202
        %v2673 = vunpack.c.h.b16 %v1202
        %v2674 = vunpack.c.l.b16 %v1203
        %v2675 = vunpack.c.h.b16 %v1203
        %v2676 = vunpack.c.l.b16 %v1204
        %v2677 = vunpack.c.h.b16 %v1204
        %v2678 = vunpack.c.l.b16 %v1205
        %v2679 = vunpack.c.h.b16 %v1205
        %v2680 = vunpack.c.l.b16 %v1206
        %v2681 = vunpack.c.h.b16 %v1206
        %v2682 = vunpack.c.l.b16 %v1207
        %v2683 = vunpack.c.h.b16 %v1207
        %v2684 = vunpack.c.l.b16 %v1208
        %v2685 = vunpack.c.h.b16 %v1208
        %v2686 = vunpack.c.l.b16 %v1209
        %v2687 = vunpack.c.h.b16 %v1209
        %v2688 = vunpack.c.l.b16 %v1210
        %v2689 = vunpack.c.h.b16 %v1210
        %v2690 = vunpack.c.l.b16 %v1211
        %v2691 = vunpack.c.h.b16 %v1211
        %v2692 = vunpack.c.l.b16 %v1212
        %v2693 = vunpack.c.h.b16 %v1212
        %v2694 = vunpack.c.l.b16 %v1213
        %v2695 = vunpack.c.h.b16 %v1213
        %v2696 = vunpack.c.l.b16 %v1214
        %v2697 = vunpack.c.h.b16 %v1214
        %v2698 = vunpack.c.l.b16 %v1215
        %v2699 = vunpack.c.h.b16 %v1215
        %v2700 = vunpack.c.l.b16 %v1216
        %v2701 = vunpack.c.h.b16 %v1216
        %v2702 = vunpack.c.l.b16 %v1217
        %v2703 = vunpack.c.h.b16 %v1217
        %v2704 = vunpack.c.l.b16 %v1218
        %v2705 = vunpack.c.h.b16 %v1218
        %v2706 = vunpack.c.l.b16 %v1219
        %v2707 = vunpack.c.h.b16 %v1219
        %v2708 = vunpack.c.l.b16 %v1220
        %v2709 = vunpack.c.h.b16 %v1220
        %v2710 = vunpack.c.l.b16 %v1221
        %v2711 = vunpack.c.h.b16 %v1221
        %v2712 = vunpack.c.l.b16 %v1222
        %v2713 = vunpack.c.h.b16 %v1222
        %v2714 = vunpack.c.l.b16 %v1223
        %v2715 = vunpack.c.h.b16 %v1223
        %v2716 = vunpack.c.l.b16 %v1224
        %v2717 = vunpack.c.h.b16 %v1224
        %v2718 = vunpack.c.l.b16 %v1225
        %v2719 = vunpack.c.h.b16 %v1225
        %v2720 = vunpack.c.l.b16 %v1226
        %v2721 = vunpack.c.h.b16 %v1226
        %v2722 = vunpack.c.l.b16 %v1227
        %v2723 = vunpack.c.h.b16 %v1227
        %v2724 = vunpack.c.l.b16 %v1228
        %v2725 = vunpack.c.h.b16 %v1228
        %v2726 = vunpack.c.l.b16 %v1229
        %v2727 = vunpack.c.h.b16 %v1229
        %v2728 = vunpack.c.l.b16 %v1230
        %v2729 = vunpack.c.h.b16 %v1230
        %v2730 = vunpack.c.l.b16 %v1231
        %v2731 = vunpack.c.h.b16 %v1231
        %v2732 = vunpack.c.l.b16 %v1232
        %v2733 = vunpack.c.h.b16 %v1232
        %v2734 = vunpack.c.l.b16 %v1233
        %v2735 = vunpack.c.h.b16 %v1233
        %v2736 = vunpack.c.l.b16 %v1234
        %v2737 = vunpack.c.h.b16 %v1234
        %v2738 = vunpack.c.l.b16 %v1235
        %v2739 = vunpack.c.h.b16 %v1235
        %v2740 = vunpack.c.l.b16 %v1236
        %v2741 = vunpack.c.h.b16 %v1236
        %v2742 = vunpack.c.l.b16 %v1237
        %v2743 = vunpack.c.h.b16 %v1237
        %v2744 = vunpack.c.l.b16 %v1238
        %v2745 = vunpack.c.h.b16 %v1238
        %v2746 = vunpack.c.l.b16 %v1239
        %v2747 = vunpack.c.h.b16 %v1239
        %v2748 = vunpack.c.l.b16 %v1240
        %v2749 = vunpack.c.h.b16 %v1240
        %v2750 = vunpack.c.l.b16 %v1241
        %v2751 = vunpack.c.h.b16 %v1241
        %v2752 = vunpack.c.l.b16 %v1242
        %v2753 = vunpack.c.h.b16 %v1242
        %v2754 = vunpack.c.l.b16 %v1243
        %v2755 = vunpack.c.h.b16 %v1243
        %v2756 = vunpack.c.l.b16 %v1244
        %v2757 = vunpack.c.h.b16 %v1244
        %v2758 = vunpack.c.l.b16 %v1245
        %v2759 = vunpack.c.h.b16 %v1245
        %v2760 = vunpack.c.l.b16 %v1246
        %v2761 = vunpack.c.h.b16 %v1246
        %v2762 = vunpack.c.l.b16 %v1247
        %v2763 = vunpack.c.h.b16 %v1247
        %v2764 = vunpack.c.l.b16 %v1248
        %v2765 = vunpack.c.h.b16 %v1248
        %v2766 = vunpack.c.l.b16 %v1249
        %v2767 = vunpack.c.h.b16 %v1249
        %v2768 = vunpack.c.l.b16 %v1250
        %v2769 = vunpack.c.h.b16 %v1250
        %v2770 = vunpack.c.l.b16 %v1251
        %v2771 = vunpack.c.h.b16 %v1251
        %v2772 = vunpack.c.l.b16 %v1252
        %v2773 = vunpack.c.h.b16 %v1252
        %v2774 = vunpack.c.l.b16 %v1253
        %v2775 = vunpack.c.h.b16 %v1253
        %v2776 = vunpack.c.l.b16 %v1254
        %v2777 = vunpack.c.h.b16 %v1254
        %v2778 = vunpack.c.l.b16 %v1255
        %v2779 = vunpack.c.h.b16 %v1255
        %v2780 = vunpack.c.l.b16 %v1256
        %v2781 = vunpack.c.h.b16 %v1256
        %v2782 = vunpack.c.l.b16 %v1257
        %v2783 = vunpack.c.h.b16 %v1257
        %v2784 = vunpack.c.l.b16 %v1258
        %v2785 = vunpack.c.h.b16 %v1258
        %v2786 = vunpack.c.l.b16 %v1259
        %v2787 = vunpack.c.h.b16 %v1259
        %v2788 = vunpack.c.l.b16 %v1260
        %v2789 = vunpack.c.h.b16 %v1260
        %v2790 = vunpack.c.l.b16 %v1261
        %v2791 = vunpack.c.h.b16 %v1261
        %v2792 = vunpack.c.l.b16 %v1262
        %v2793 = vunpack.c.h.b16 %v1262
        %v2794 = vunpack.c.l.b16 %v1263
        %v2795 = vunpack.c.h.b16 %v1263
        %v2796 = vunpack.c.l.b16 %v1264
        %v2797 = vunpack.c.h.b16 %v1264
        %v2798 = vunpack.c.l.b16 %v1265
        %v2799 = vunpack.c.h.b16 %v1265
        %v2800 = vunpack.c.l.b16 %v1266
        %v2801 = vunpack.c.h.b16 %v1266
        %v2802 = vunpack.c.l.b16 %v1267
        %v2803 = vunpack.c.h.b16 %v1267
        %v2804 = vunpack.c.l.b16 %v1268
        %v2805 = vunpack.c.h.b16 %v1268
        %v2806 = vunpack.c.l.b16 %v1269
        %v2807 = vunpack.c.h.b16 %v1269
        %v2808 = vunpack.c.l.b16 %v1270
        %v2809 = vunpack.c.h.b16 %v1270
        %v2810 = vunpack.c.l.b16 %v1271
        %v2811 = vunpack.c.h.b16 %v1271
        %v2812 = vunpack.c.l.b16 %v1272
        %v2813 = vunpack.c.h.b16 %v1272
        %v2814 = vunpack.c.l.b16 %v1273
        %v2815 = vunpack.c.h.b16 %v1273
        %v2816 = vunpack.c.l.b16 %v1274
        %v2817 = vunpack.c.h.b16 %v1274
        %v2818 = vunpack.c.l.b16 %v1275
        %v2819 = vunpack.c.h.b16 %v1275
        %v2820 = vunpack.c.l.b16 %v1276
        %v2821 = vunpack.c.h.b16 %v1276
        %v2822 = vunpack.c.l.b16 %v1277
        %v2823 = vunpack.c.h.b16 %v1277
        %v2824 = vunpack.c.l.b16 %v1278
        %v2825 = vunpack.c.h.b16 %v1278
        %v2826 = vunpack.c.l.b16 %v1279
        %v2827 = vunpack.c.h.b16 %v1279
        %v2828 = vunpack.c.l.b16 %v1280
        %v2829 = vunpack.c.h.b16 %v1280
        %v2830 = vunpack.c.l.b16 %v1281
        %v2831 = vunpack.c.h.b16 %v1281
        %v2832 = vunpack.c.l.b16 %v1282
        %v2833 = vunpack.c.h.b16 %v1282
        %v2834 = vunpack.c.l.b16 %v1283
        %v2835 = vunpack.c.h.b16 %v1283
        %v2836 = vunpack.c.l.b16 %v1284
        %v2837 = vunpack.c.h.b16 %v1284
        %v2838 = vunpack.c.l.b16 %v1285
        %v2839 = vunpack.c.h.b16 %v1285
        %v2840 = vunpack.c.l.b16 %v1286
        %v2841 = vunpack.c.h.b16 %v1286
        %v2842 = vunpack.c.l.b16 %v1287
        %v2843 = vunpack.c.h.b16 %v1287
        %v2844 = vunpack.c.l.b16 %v1288
        %v2845 = vunpack.c.h.b16 %v1288
        %v2846 = vunpack.c.l.b16 %v1289
        %v2847 = vunpack.c.h.b16 %v1289
        %v2848 = vunpack.c.l.b16 %v1290
        %v2849 = vunpack.c.h.b16 %v1290
        %v2850 = vunpack.c.l.b16 %v1291
        %v2851 = vunpack.c.h.b16 %v1291
        %v2852 = vunpack.c.l.b16 %v1292
        %v2853 = vunpack.c.h.b16 %v1292
        %v2854 = vunpack.c.l.b16 %v1293
        %v2855 = vunpack.c.h.b16 %v1293
        %v2856 = vunpack.c.l.b16 %v1294
        %v2857 = vunpack.c.h.b16 %v1294
        %v2858 = vunpack.c.l.b16 %v1295
        %v2859 = vunpack.c.h.b16 %v1295
        %v2860 = vunpack.c.l.b16 %v1296
        %v2861 = vunpack.c.h.b16 %v1296
        %v2862 = vunpack.c.l.b16 %v1297
        %v2863 = vunpack.c.h.b16 %v1297
        %v2864 = vunpack.c.l.b16 %v1298
        %v2865 = vunpack.c.h.b16 %v1298
        %v2866 = vunpack.c.l.b16 %v1299
        %v2867 = vunpack.c.h.b16 %v1299
        %v2868 = vunpack.c.l.b16 %v1300
        %v2869 = vunpack.c.h.b16 %v1300
        %v2870 = vunpack.c.l.b16 %v1301
        %v2871 = vunpack.c.h.b16 %v1301
        %v2872 = vunpack.c.l.b16 %v1302
        %v2873 = vunpack.c.h.b16 %v1302
        %v2874 = vunpack.c.l.b16 %v1303
        %v2875 = vunpack.c.h.b16 %v1303
        %v2876 = vunpack.c.l.b16 %v1304
        %v2877 = vunpack.c.h.b16 %v1304
        %v2878 = vunpack.c.l.b16 %v1305
        %v2879 = vunpack.c.h.b16 %v1305
        %v2880 = vunpack.c.l.b16 %v1306
        %v2881 = vunpack.c.h.b16 %v1306
        %v2882 = vunpack.c.l.b16 %v1307
        %v2883 = vunpack.c.h.b16 %v1307
        %v2884 = vunpack.c.l.b16 %v1308
        %v2885 = vunpack.c.h.b16 %v1308
        %v2886 = vunpack.c.l.b16 %v1309
        %v2887 = vunpack.c.h.b16 %v1309
        %v2888 = vunpack.c.l.b16 %v1310
        %v2889 = vunpack.c.h.b16 %v1310
        %v2890 = vunpack.c.l.b16 %v1311
        %v2891 = vunpack.c.h.b16 %v1311
        %v2892 = vunpack.c.l.b16 %v1312
        %v2893 = vunpack.c.h.b16 %v1312
        %v2894 = vunpack.c.l.b16 %v1313
        %v2895 = vunpack.c.h.b16 %v1313
        %v2896 = vunpack.c.l.b16 %v1314
        %v2897 = vunpack.c.h.b16 %v1314
        %v2898 = vunpack.c.l.b16 %v1315
        %v2899 = vunpack.c.h.b16 %v1315
        %v2900 = vunpack.c.l.b16 %v1316
        %v2901 = vunpack.c.h.b16 %v1316
        %v2902 = vunpack.c.l.b16 %v1317
        %v2903 = vunpack.c.h.b16 %v1317
        %v2904 = vpack.c.b16 %v1896, %v1880
        %v2905 = vpack.c.b16 %v1897, %v1881
        %v2906 = vpack.c.b16 %v1898, %v1882
        %v2907 = vpack.c.b16 %v1899, %v1883
        %v2908 = vpack.c.b16 %v1900, %v1884
        %v2909 = vpack.c.b16 %v1901, %v1885
        %v2910 = vpack.c.b16 %v1902, %v1886
        %v2911 = vpack.c.b16 %v1903, %v1887
        %v2912 = vpack.c.b16 %v1904, %v1888
        %v2913 = vpack.c.b16 %v1905, %v1889
        %v2914 = vpack.c.b16 %v1906, %v1890
        %v2915 = vpack.c.b16 %v1907, %v1891
        %v2916 = vpack.c.b16 %v1908, %v1892
        %v2917 = vpack.c.b16 %v1909, %v1893
        %v2918 = vpack.c.b16 %v1910, %v1894
        %v2919 = vpack.c.b16 %v1911, %v1895
        %v2920 = vpack.c.b16 %v1928, %v1912
        %v2921 = vpack.c.b16 %v1929, %v1913
        %v2922 = vpack.c.b16 %v1930, %v1914
        %v2923 = vpack.c.b16 %v1931, %v1915
        %v2924 = vpack.c.b16 %v1932, %v1916
        %v2925 = vpack.c.b16 %v1933, %v1917
        %v2926 = vpack.c.b16 %v1934, %v1918
        %v2927 = vpack.c.b16 %v1935, %v1919
        %v2928 = vpack.c.b16 %v1936, %v1920
        %v2929 = vpack.c.b16 %v1937, %v1921
        %v2930 = vpack.c.b16 %v1938, %v1922
        %v2931 = vpack.c.b16 %v1939, %v1923
        %v2932 = vpack.c.b16 %v1940, %v1924
        %v2933 = vpack.c.b16 %v1941, %v1925
        %v2934 = vpack.c.b16 %v1942, %v1926
        %v2935 = vpack.c.b16 %v1943, %v1927
        %v2936 = vpack.c.b16 %v1960, %v1944
        %v2937 = vpack.c.b16 %v1961, %v1945
        %v2938 = vpack.c.b16 %v1962, %v1946
        %v2939 = vpack.c.b16 %v1963, %v1947
        %v2940 = vpack.c.b16 %v1964, %v1948
        %v2941 = vpack.c.b16 %v1965, %v1949
        %v2942 = vpack.c.b16 %v1966, %v1950
        %v2943 = vpack.c.b16 %v1967, %v1951
        %v2944 = vpack.c.b16 %v1968, %v1952
        %v2945 = vpack.c.b16 %v1969, %v1953
        %v2946 = vpack.c.b16 %v1970, %v1954
        %v2947 = vpack.c.b16 %v1971, %v1955
        %v2948 = vpack.c.b16 %v1972, %v1956
        %v2949 = vpack.c.b16 %v1973, %v1957
        %v2950 = vpack.c.b16 %v1974, %v1958
        %v2951 = vpack.c.b16 %v1975, %v1959
        %v2952 = vpack.c.b16 %v1992, %v1976
        %v2953 = vpack.c.b16 %v1993, %v1977
        %v2954 = vpack.c.b16 %v1994, %v1978
        %v2955 = vpack.c.b16 %v1995, %v1979
        %v2956 = vpack.c.b16 %v1996, %v1980
        %v2957 = vpack.c.b16 %v1997, %v1981
        %v2958 = vpack.c.b16 %v1998, %v1982
        %v2959 = vpack.c.b16 %v1999, %v1983
        %v2960 = vpack.c.b16 %v2000, %v1984
        %v2961 = vpack.c.b16 %v2001, %v1985
        %v2962 = vpack.c.b16 %v2002, %v1986
        %v2963 = vpack.c.b16 %v2003, %v1987
        %v2964 = vpack.c.b16 %v2004, %v1988
        %v2965 = vpack.c.b16 %v2005, %v1989
        %v2966 = vpack.c.b16 %v2006, %v1990
        %v2967 = vpack.c.b16 %v2007, %v1991
        %v2968 = vpack.c.b16 %v2024, %v2008
        %v2969 = vpack.c.b16 %v2025, %v2009
        %v2970 = vpack.c.b16 %v2026, %v2010
        %v2971 = vpack.c.b16 %v2027, %v2011
        %v2972 = vpack.c.b16 %v2028, %v2012
        %v2973 = vpack.c.b16 %v2029, %v2013
        %v2974 = vpack.c.b16 %v2030, %v2014
        %v2975 = vpack.c.b16 %v2031, %v2015
        %v2976 = vpack.c.b16 %v2032, %v2016
        %v2977 = vpack.c.b16 %v2033, %v2017
        %v2978 = vpack.c.b16 %v2034, %v2018
        %v2979 = vpack.c.b16 %v2035, %v2019
        %v2980 = vpack.c.b16 %v2036, %v2020
        %v2981 = vpack.c.b16 %v2037, %v2021
        %v2982 = vpack.c.b16 %v2038, %v2022
        %v2983 = vpack.c.b16 %v2039, %v2023
        %v2984 = vpack.c.b16 %v2056, %v2040
        %v2985 = vpack.c.b16 %v2057, %v2041
        %v2986 = vpack.c.b16 %v2058, %v2042
        %v2987 = vpack.c.b16 %v2059, %v2043
        %v2988 = vpack.c.b16 %v2060, %v2044
        %v2989 = vpack.c.b16 %v2061, %v2045
        %v2990 = vpack.c.b16 %v2062, %v2046
        %v2991 = vpack.c.b16 %v2063, %v2047
        %v2992 = vpack.c.b16 %v2064, %v2048
        %v2993 = vpack.c.b16 %v2065, %v2049
        %v2994 = vpack.c.b16 %v2066, %v2050
        %v2995 = vpack.c.b16 %v2067, %v2051
        %v2996 = vpack.c.b16 %v2068, %v2052
        %v2997 = vpack.c.b16 %v2069, %v2053
        %v2998 = vpack.c.b16 %v2070, %v2054
        %v2999 = vpack.c.b16 %v2071, %v2055
        %v3000 = vpack.c.b16 %v2088, %v2072
        %v3001 = vpack.c.b16 %v2089, %v2073
        %v3002 = vpack.c.b16 %v2090, %v2074
        %v3003 = vpack.c.b16 %v2091, %v2075
        %v3004 = vpack.c.b16 %v2092, %v2076
        %v3005 = vpack.c.b16 %v2093, %v2077
        %v3006 = vpack.c.b16 %v2094, %v2078
        %v3007 = vpack.c.b16 %v2095, %v2079
        %v3008 = vpack.c.b16 %v2096, %v2080
        %v3009 = vpack.c.b16 %v2097, %v2081
        %v3010 = vpack.c.b16 %v2098, %v2082
        %v3011 = vpack.c.b16 %v2099, %v2083
        %v3012 = vpack.c.b16 %v2100, %v2084
        %v3013 = vpack.c.b16 %v2101, %v2085
        %v3014 = vpack.c.b16 %v2102, %v2086
        %v3015 = vpack.c.b16 %v2103, %v2087
        %v3016 = vpack.c.b16 %v2120, %v2104
        %v3017 = vpack.c.b16 %v2121, %v2105
        %v3018 = vpack.c.b16 %v2122, %v2106
        %v3019 = vpack.c.b16 %v2123, %v2107
        %v3020 = vpack.c.b16 %v2124, %v2108
        %v3021 = vpack.c.b16 %v2125, %v2109
        %v3022 = vpack.c.b16 %v2126, %v2110
        %v3023 = vpack.c.b16 %v2127, %v2111
        %v3024 = vpack.c.b16 %v2128, %v2112
        %v3025 = vpack.c.b16 %v2129, %v2113
        %v3026 = vpack.c.b16 %v2130, %v2114
        %v3027 = vpack.c.b16 %v2131, %v2115
        %v3028 = vpack.c.b16 %v2132, %v2116
        %v3029 = vpack.c.b16 %v2133, %v2117
        %v3030 = vpack.c.b16 %v2134, %v2118
        %v3031 = vpack.c.b16 %v2135, %v2119
        %v3032 = vpack.c.b16 %v2152, %v2136
        %v3033 = vpack.c.b16 %v2153, %v2137
        %v3034 = vpack.c.b16 %v2154, %v2138
        %v3035 = vpack.c.b16 %v2155, %v2139
        %v3036 = vpack.c.b16 %v2156, %v2140
        %v3037 = vpack.c.b16 %v2157, %v2141
        %v3038 = vpack.c.b16 %v2158, %v2142
        %v3039 = vpack.c.b16 %v2159, %v2143
        %v3040 = vpack.c.b16 %v2160, %v2144
        %v3041 = vpack.c.b16 %v2161, %v2145
        %v3042 = vpack.c.b16 %v2162, %v2146
        %v3043 = vpack.c.b16 %v2163, %v2147
        %v3044 = vpack.c.b16 %v2164, %v2148
        %v3045 = vpack.c.b16 %v2165, %v2149
        %v3046 = vpack.c.b16 %v2166, %v2150
        %v3047 = vpack.c.b16 %v2167, %v2151
        %v3048 = vpack.c.b16 %v2184, %v2168
        %v3049 = vpack.c.b16 %v2185, %v2169
        %v3050 = vpack.c.b16 %v2186, %v2170
        %v3051 = vpack.c.b16 %v2187, %v2171
        %v3052 = vpack.c.b16 %v2188, %v2172
        %v3053 = vpack.c.b16 %v2189, %v2173
        %v3054 = vpack.c.b16 %v2190, %v2174
        %v3055 = vpack.c.b16 %v2191, %v2175
        %v3056 = vpack.c.b16 %v2192, %v2176
        %v3057 = vpack.c.b16 %v2193, %v2177
        %v3058 = vpack.c.b16 %v2194, %v2178
        %v3059 = vpack.c.b16 %v2195, %v2179
        %v3060 = vpack.c.b16 %v2196, %v2180
        %v3061 = vpack.c.b16 %v2197, %v2181
        %v3062 = vpack.c.b16 %v2198, %v2182
        %v3063 = vpack.c.b16 %v2199, %v2183
        %v3064 = vpack.c.b16 %v2216, %v2200
        %v3065 = vpack.c.b16 %v2217, %v2201
        %v3066 = vpack.c.b16 %v2218, %v2202
        %v3067 = vpack.c.b16 %v2219, %v2203
        %v3068 = vpack.c.b16 %v2220, %v2204
        %v3069 = vpack.c.b16 %v2221, %v2205
        %v3070 = vpack.c.b16 %v2222, %v2206
        %v3071 = vpack.c.b16 %v2223, %v2207
        %v3072 = vpack.c.b16 %v2224, %v2208
        %v3073 = vpack.c.b16 %v2225, %v2209
        %v3074 = vpack.c.b16 %v2226, %v2210
        %v3075 = vpack.c.b16 %v2227, %v2211
        %v3076 = vpack.c.b16 %v2228, %v2212
        %v3077 = vpack.c.b16 %v2229, %v2213
        %v3078 = vpack.c.b16 %v2230, %v2214
        %v3079 = vpack.c.b16 %v2231, %v2215
        %v3080 = vpack.c.b16 %v2248, %v2232
        %v3081 = vpack.c.b16 %v2249, %v2233
        %v3082 = vpack.c.b16 %v2250, %v2234
        %v3083 = vpack.c.b16 %v2251, %v2235
        %v3084 = vpack.c.b16 %v2252, %v2236
        %v3085 = vpack.c.b16 %v2253, %v2237
        %v3086 = vpack.c.b16 %v2254, %v2238
        %v3087 = vpack.c.b16 %v2255, %v2239
        %v3088 = vpack.c.b16 %v2256, %v2240
        %v3089 = vpack.c.b16 %v2257, %v2241
        %v3090 = vpack.c.b16 %v2258, %v2242
        %v3091 = vpack.c.b16 %v2259, %v2243
        %v3092 = vpack.c.b16 %v2260, %v2244
        %v3093 = vpack.c.b16 %v2261, %v2245
        %v3094 = vpack.c.b16 %v2262, %v2246
        %v3095 = vpack.c.b16 %v2263, %v2247
        %v3096 = vpack.c.b16 %v2280, %v2264
        %v3097 = vpack.c.b16 %v2281, %v2265
        %v3098 = vpack.c.b16 %v2282, %v2266
        %v3099 = vpack.c.b16 %v2283, %v2267
        %v3100 = vpack.c.b16 %v2284, %v2268
        %v3101 = vpack.c.b16 %v2285, %v2269
        %v3102 = vpack.c.b16 %v2286, %v2270
        %v3103 = vpack.c.b16 %v2287, %v2271
        %v3104 = vpack.c.b16 %v2288, %v2272
        %v3105 = vpack.c.b16 %v2289, %v2273
        %v3106 = vpack.c.b16 %v2290, %v2274
        %v3107 = vpack.c.b16 %v2291, %v2275
        %v3108 = vpack.c.b16 %v2292, %v2276
        %v3109 = vpack.c.b16 %v2293, %v2277
        %v3110 = vpack.c.b16 %v2294, %v2278
        %v3111 = vpack.c.b16 %v2295, %v2279
        %v3112 = vpack.c.b16 %v2312, %v2296
        %v3113 = vpack.c.b16 %v2313, %v2297
        %v3114 = vpack.c.b16 %v2314, %v2298
        %v3115 = vpack.c.b16 %v2315, %v2299
        %v3116 = vpack.c.b16 %v2316, %v2300
        %v3117 = vpack.c.b16 %v2317, %v2301
        %v3118 = vpack.c.b16 %v2318, %v2302
        %v3119 = vpack.c.b16 %v2319, %v2303
        %v3120 = vpack.c.b16 %v2320, %v2304
        %v3121 = vpack.c.b16 %v2321, %v2305
        %v3122 = vpack.c.b16 %v2322, %v2306
        %v3123 = vpack.c.b16 %v2323, %v2307
        %v3124 = vpack.c.b16 %v2324, %v2308
        %v3125 = vpack.c.b16 %v2325, %v2309
        %v3126 = vpack.c.b16 %v2326, %v2310
        %v3127 = vpack.c.b16 %v2327, %v2311
        %v3128 = vpack.c.b16 %v2344, %v2328
        %v3129 = vpack.c.b16 %v2345, %v2329
        %v3130 = vpack.c.b16 %v2346, %v2330
        %v3131 = vpack.c.b16 %v2347, %v2331
        %v3132 = vpack.c.b16 %v2348, %v2332
        %v3133 = vpack.c.b16 %v2349, %v2333
        %v3134 = vpack.c.b16 %v2350, %v2334
        %v3135 = vpack.c.b16 %v2351, %v2335
        %v3136 = vpack.c.b16 %v2352, %v2336
        %v3137 = vpack.c.b16 %v2353, %v2337
        %v3138 = vpack.c.b16 %v2354, %v2338
        %v3139 = vpack.c.b16 %v2355, %v2339
        %v3140 = vpack.c.b16 %v2356, %v2340
        %v3141 = vpack.c.b16 %v2357, %v2341
        %v3142 = vpack.c.b16 %v2358, %v2342
        %v3143 = vpack.c.b16 %v2359, %v2343
        %v3144 = vpack.c.b16 %v2376, %v2360
        %v3145 = vpack.c.b16 %v2377, %v2361
        %v3146 = vpack.c.b16 %v2378, %v2362
        %v3147 = vpack.c.b16 %v2379, %v2363
        %v3148 = vpack.c.b16 %v2380, %v2364
        %v3149 = vpack.c.b16 %v2381, %v2365
        %v3150 = vpack.c.b16 %v2382, %v2366
        %v3151 = vpack.c.b16 %v2383, %v2367
        %v3152 = vpack.c.b16 %v2384, %v2368
        %v3153 = vpack.c.b16 %v2385, %v2369
        %v3154 = vpack.c.b16 %v2386, %v2370
        %v3155 = vpack.c.b16 %v2387, %v2371
        %v3156 = vpack.c.b16 %v2388, %v2372
        %v3157 = vpack.c.b16 %v2389, %v2373
        %v3158 = vpack.c.b16 %v2390, %v2374
        %v3159 = vpack.c.b16 %v2391, %v2375
        %v3160 = vpack.c.b16 %v2408, %v2392
        %v3161 = vpack.c.b16 %v2409, %v2393
        %v3162 = vpack.c.b16 %v2410, %v2394
        %v3163 = vpack.c.b16 %v2411, %v2395
        %v3164 = vpack.c.b16 %v2412, %v2396
        %v3165 = vpack.c.b16 %v2413, %v2397
        %v3166 = vpack.c.b16 %v2414, %v2398
        %v3167 = vpack.c.b16 %v2415, %v2399
        %v3168 = vpack.c.b16 %v2416, %v2400
        %v3169 = vpack.c.b16 %v2417, %v2401
        %v3170 = vpack.c.b16 %v2418, %v2402
        %v3171 = vpack.c.b16 %v2419, %v2403
        %v3172 = vpack.c.b16 %v2420, %v2404
        %v3173 = vpack.c.b16 %v2421, %v2405
        %v3174 = vpack.c.b16 %v2422, %v2406
        %v3175 = vpack.c.b16 %v2423, %v2407
        %v3176 = vpack.c.b16 %v2440, %v2424
        %v3177 = vpack.c.b16 %v2441, %v2425
        %v3178 = vpack.c.b16 %v2442, %v2426
        %v3179 = vpack.c.b16 %v2443, %v2427
        %v3180 = vpack.c.b16 %v2444, %v2428
        %v3181 = vpack.c.b16 %v2445, %v2429
        %v3182 = vpack.c.b16 %v2446, %v2430
        %v3183 = vpack.c.b16 %v2447, %v2431
        %v3184 = vpack.c.b16 %v2448, %v2432
        %v3185 = vpack.c.b16 %v2449, %v2433
        %v3186 = vpack.c.b16 %v2450, %v2434
        %v3187 = vpack.c.b16 %v2451, %v2435
        %v3188 = vpack.c.b16 %v2452, %v2436
        %v3189 = vpack.c.b16 %v2453, %v2437
        %v3190 = vpack.c.b16 %v2454, %v2438
        %v3191 = vpack.c.b16 %v2455, %v2439
        %v3192 = vpack.c.b16 %v2472, %v2456
        %v3193 = vpack.c.b16 %v2473, %v2457
        %v3194 = vpack.c.b16 %v2474, %v2458
        %v3195 = vpack.c.b16 %v2475, %v2459
        %v3196 = vpack.c.b16 %v2476, %v2460
        %v3197 = vpack.c.b16 %v2477, %v2461
        %v3198 = vpack.c.b16 %v2478, %v2462
        %v3199 = vpack.c.b16 %v2479, %v2463
        %v3200 = vpack.c.b16 %v2480, %v2464
        %v3201 = vpack.c.b16 %v2481, %v2465
        %v3202 = vpack.c.b16 %v2482, %v2466
        %v3203 = vpack.c.b16 %v2483, %v2467
        %v3204 = vpack.c.b16 %v2484, %v2468
        %v3205 = vpack.c.b16 %v2485, %v2469
        %v3206 = vpack.c.b16 %v2486, %v2470
        %v3207 = vpack.c.b16 %v2487, %v2471
        %v3208 = vpack.c.b16 %v2504, %v2488
        %v3209 = vpack.c.b16 %v2505, %v2489
        %v3210 = vpack.c.b16 %v2506, %v2490
        %v3211 = vpack.c.b16 %v2507, %v2491
        %v3212 = vpack.c.b16 %v2508, %v2492
        %v3213 = vpack.c.b16 %v2509, %v2493
        %v3214 = vpack.c.b16 %v2510, %v2494
        %v3215 = vpack.c.b16 %v2511, %v2495
        %v3216 = vpack.c.b16 %v2512, %v2496
        %v3217 = vpack.c.b16 %v2513, %v2497
        %v3218 = vpack.c.b16 %v2514, %v2498
        %v3219 = vpack.c.b16 %v2515, %v2499
        %v3220 = vpack.c.b16 %v2516, %v2500
        %v3221 = vpack.c.b16 %v2517, %v2501
        %v3222 = vpack.c.b16 %v2518, %v2502
        %v3223 = vpack.c.b16 %v2519, %v2503
        %v3224 = vpack.c.b16 %v2536, %v2520
        %v3225 = vpack.c.b16 %v2537, %v2521
        %v3226 = vpack.c.b16 %v2538, %v2522
        %v3227 = vpack.c.b16 %v2539, %v2523
        %v3228 = vpack.c.b16 %v2540, %v2524
        %v3229 = vpack.c.b16 %v2541, %v2525
        %v3230 = vpack.c.b16 %v2542, %v2526
        %v3231 = vpack.c.b16 %v2543, %v2527
        %v3232 = vpack.c.b16 %v2544, %v2528
        %v3233 = vpack.c.b16 %v2545, %v2529
        %v3234 = vpack.c.b16 %v2546, %v2530
        %v3235 = vpack.c.b16 %v2547, %v2531
        %v3236 = vpack.c.b16 %v2548, %v2532
        %v3237 = vpack.c.b16 %v2549, %v2533
        %v3238 = vpack.c.b16 %v2550, %v2534
        %v3239 = vpack.c.b16 %v2551, %v2535
        %v3240 = vpack.c.b16 %v2568, %v2552
        %v3241 = vpack.c.b16 %v2569, %v2553
        %v3242 = vpack.c.b16 %v2570, %v2554
        %v3243 = vpack.c.b16 %v2571, %v2555
        %v3244 = vpack.c.b16 %v2572, %v2556
        %v3245 = vpack.c.b16 %v2573, %v2557
        %v3246 = vpack.c.b16 %v2574, %v2558
        %v3247 = vpack.c.b16 %v2575, %v2559
        %v3248 = vpack.c.b16 %v2576, %v2560
        %v3249 = vpack.c.b16 %v2577, %v2561
        %v3250 = vpack.c.b16 %v2578, %v2562
        %v3251 = vpack.c.b16 %v2579, %v2563
        %v3252 = vpack.c.b16 %v2580, %v2564
        %v3253 = vpack.c.b16 %v2581, %v2565
        %v3254 = vpack.c.b16 %v2582, %v2566
        %v3255 = vpack.c.b16 %v2583, %v2567
        %v3256 = vpack.c.b16 %v2600, %v2584
        %v3257 = vpack.c.b16 %v2601, %v2585
        %v3258 = vpack.c.b16 %v2602, %v2586
        %v3259 = vpack.c.b16 %v2603, %v2587
        %v3260 = vpack.c.b16 %v2604, %v2588
        %v3261 = vpack.c.b16 %v2605, %v2589
        %v3262 = vpack.c.b16 %v2606, %v2590
        %v3263 = vpack.c.b16 %v2607, %v2591
        %v3264 = vpack.c.b16 %v2608, %v2592
        %v3265 = vpack.c.b16 %v2609, %v2593
        %v3266 = vpack.c.b16 %v2610, %v2594
        %v3267 = vpack.c.b16 %v2611, %v2595
        %v3268 = vpack.c.b16 %v2612, %v2596
        %v3269 = vpack.c.b16 %v2613, %v2597
        %v3270 = vpack.c.b16 %v2614, %v2598
        %v3271 = vpack.c.b16 %v2615, %v2599
        %v3272 = vpack.c.b16 %v2632, %v2616
        %v3273 = vpack.c.b16 %v2633, %v2617
        %v3274 = vpack.c.b16 %v2634, %v2618
        %v3275 = vpack.c.b16 %v2635, %v2619
        %v3276 = vpack.c.b16 %v2636, %v2620
        %v3277 = vpack.c.b16 %v2637, %v2621
        %v3278 = vpack.c.b16 %v2638, %v2622
        %v3279 = vpack.c.b16 %v2639, %v2623
        %v3280 = vpack.c.b16 %v2640, %v2624
        %v3281 = vpack.c.b16 %v2641, %v2625
        %v3282 = vpack.c.b16 %v2642, %v2626
        %v3283 = vpack.c.b16 %v2643, %v2627
        %v3284 = vpack.c.b16 %v2644, %v2628
        %v3285 = vpack.c.b16 %v2645, %v2629
        %v3286 = vpack.c.b16 %v2646, %v2630
        %v3287 = vpack.c.b16 %v2647, %v2631
        %v3288 = vpack.c.b16 %v2664, %v2648
        %v3289 = vpack.c.b16 %v2665, %v2649
        %v3290 = vpack.c.b16 %v2666, %v2650
        %v3291 = vpack.c.b16 %v2667, %v2651
        %v3292 = vpack.c.b16 %v2668, %v2652
        %v3293 = vpack.c.b16 %v2669, %v2653
        %v3294 = vpack.c.b16 %v2670, %v2654
        %v3295 = vpack.c.b16 %v2671, %v2655
        %v3296 = vpack.c.b16 %v2672, %v2656
        %v3297 = vpack.c.b16 %v2673, %v2657
        %v3298 = vpack.c.b16 %v2674, %v2658
        %v3299 = vpack.c.b16 %v2675, %v2659
        %v3300 = vpack.c.b16 %v2676, %v2660
        %v3301 = vpack.c.b16 %v2677, %v2661
        %v3302 = vpack.c.b16 %v2678, %v2662
        %v3303 = vpack.c.b16 %v2679, %v2663
        %v3304 = vpack.c.b16 %v2696, %v2680
        %v3305 = vpack.c.b16 %v2697, %v2681
        %v3306 = vpack.c.b16 %v2698, %v2682
        %v3307 = vpack.c.b16 %v2699, %v2683
        %v3308 = vpack.c.b16 %v2700, %v2684
        %v3309 = vpack.c.b16 %v2701, %v2685
        %v3310 = vpack.c.b16 %v2702, %v2686
        %v3311 = vpack.c.b16 %v2703, %v2687
        %v3312 = vpack.c.b16 %v2704, %v2688
        %v3313 = vpack.c.b16 %v2705, %v2689
        %v3314 = vpack.c.b16 %v2706, %v2690
        %v3315 = vpack.c.b16 %v2707, %v2691
        %v3316 = vpack.c.b16 %v2708, %v2692
        %v3317 = vpack.c.b16 %v2709, %v2693
        %v3318 = vpack.c.b16 %v2710, %v2694
        %v3319 = vpack.c.b16 %v2711, %v2695
        %v3320 = vpack.c.b16 %v2728, %v2712
        %v3321 = vpack.c.b16 %v2729, %v2713
        %v3322 = vpack.c.b16 %v2730, %v2714
        %v3323 = vpack.c.b16 %v2731, %v2715
        %v3324 = vpack.c.b16 %v2732, %v2716
        %v3325 = vpack.c.b16 %v2733, %v2717
        %v3326 = vpack.c.b16 %v2734, %v2718
        %v3327 = vpack.c.b16 %v2735, %v2719
        %v3328 = vpack.c.b16 %v2736, %v2720
        %v3329 = vpack.c.b16 %v2737, %v2721
        %v3330 = vpack.c.b16 %v2738, %v2722
        %v3331 = vpack.c.b16 %v2739, %v2723
        %v3332 = vpack.c.b16 %v2740, %v2724
        %v3333 = vpack.c.b16 %v2741, %v2725
        %v3334 = vpack.c.b16 %v2742, %v2726
        %v3335 = vpack.c.b16 %v2743, %v2727
        %v3336 = vpack.c.b16 %v2760, %v2744
        %v3337 = vpack.c.b16 %v2761, %v2745
        %v3338 = vpack.c.b16 %v2762, %v2746
        %v3339 = vpack.c.b16 %v2763, %v2747
        %v3340 = vpack.c.b16 %v2764, %v2748
        %v3341 = vpack.c.b16 %v2765, %v2749
        %v3342 = vpack.c.b16 %v2766, %v2750
        %v3343 = vpack.c.b16 %v2767, %v2751
        %v3344 = vpack.c.b16 %v2768, %v2752
        %v3345 = vpack.c.b16 %v2769, %v2753
        %v3346 = vpack.c.b16 %v2770, %v2754
        %v3347 = vpack.c.b16 %v2771, %v2755
        %v3348 = vpack.c.b16 %v2772, %v2756
        %v3349 = vpack.c.b16 %v2773, %v2757
        %v3350 = vpack.c.b16 %v2774, %v2758
        %v3351 = vpack.c.b16 %v2775, %v2759
        %v3352 = vpack.c.b16 %v2792, %v2776
        %v3353 = vpack.c.b16 %v2793, %v2777
        %v3354 = vpack.c.b16 %v2794, %v2778
        %v3355 = vpack.c.b16 %v2795, %v2779
        %v3356 = vpack.c.b16 %v2796, %v2780
        %v3357 = vpack.c.b16 %v2797, %v2781
        %v3358 = vpack.c.b16 %v2798, %v2782
        %v3359 = vpack.c.b16 %v2799, %v2783
        %v3360 = vpack.c.b16 %v2800, %v2784
        %v3361 = vpack.c.b16 %v2801, %v2785
        %v3362 = vpack.c.b16 %v2802, %v2786
        %v3363 = vpack.c.b16 %v2803, %v2787
        %v3364 = vpack.c.b16 %v2804, %v2788
        %v3365 = vpack.c.b16 %v2805, %v2789
        %v3366 = vpack.c.b16 %v2806, %v2790
        %v3367 = vpack.c.b16 %v2807, %v2791
        %v3368 = vpack.c.b16 %v2824, %v2808
        %v3369 = vpack.c.b16 %v2825, %v2809
        %v3370 = vpack.c.b16 %v2826, %v2810
        %v3371 = vpack.c.b16 %v2827, %v2811
        %v3372 = vpack.c.b16 %v2828, %v2812
        %v3373 = vpack.c.b16 %v2829, %v2813
        %v3374 = vpack.c.b16 %v2830, %v2814
        %v3375 = vpack.c.b16 %v2831, %v2815
        %v3376 = vpack.c.b16 %v2832, %v2816
        %v3377 = vpack.c.b16 %v2833, %v2817
        %v3378 = vpack.c.b16 %v2834, %v2818
        %v3379 = vpack.c.b16 %v2835, %v2819
        %v3380 = vpack.c.b16 %v2836, %v2820
        %v3381 = vpack.c.b16 %v2837, %v2821
        %v3382 = vpack.c.b16 %v2838, %v2822
        %v3383 = vpack.c.b16 %v2839, %v2823
        %v3384 = vpack.c.b16 %v2856, %v2840
        %v3385 = vpack.c.b16 %v2857, %v2841
        %v3386 = vpack.c.b16 %v2858, %v2842
        %v3387 = vpack.c.b16 %v2859, %v2843
        %v3388 = vpack.c.b16 %v2860, %v2844
        %v3389 = vpack.c.b16 %v2861, %v2845
        %v3390 = vpack.c.b16 %v2862, %v2846
        %v3391 = vpack.c.b16 %v2863, %v2847
        %v3392 = vpack.c.b16 %v2864, %v2848
        %v3393 = vpack.c.b16 %v2865, %v2849
        %v3394 = vpack.c.b16 %v2866, %v2850
        %v3395 = vpack.c.b16 %v2867, %v2851
        %v3396 = vpack.c.b16 %v2868, %v2852
        %v3397 = vpack.c.b16 %v2869, %v2853
        %v3398 = vpack.c.b16 %v2870, %v2854
        %v3399 = vpack.c.b16 %v2871, %v2855
        %v3400 = vpack.c.b16 %v2888, %v2872
        %v3401 = vpack.c.b16 %v2889, %v2873
        %v3402 = vpack.c.b16 %v2890, %v2874
        %v3403 = vpack.c.b16 %v2891, %v2875
        %v3404 = vpack.c.b16 %v2892, %v2876
        %v3405 = vpack.c.b16 %v2893, %v2877
        %v3406 = vpack.c.b16 %v2894, %v2878
        %v3407 = vpack.c.b16 %v2895, %v2879
        %v3408 = vpack.c.b16 %v2896, %v2880
        %v3409 = vpack.c.b16 %v2897, %v2881
        %v3410 = vpack.c.b16 %v2898, %v2882
        %v3411 = vpack.c.b16 %v2899, %v2883
        %v3412 = vpack.c.b16 %v2900, %v2884
        %v3413 = vpack.c.b16 %v2901, %v2885
        %v3414 = vpack.c.b16 %v2902, %v2886
        %v3415 = vpack.c.b16 %v2903, %v2887
        %3928 = vmatpush.bf16.msra.mxu0 %v3016
        %3929 = vmatpush.bf16.msra.mxu0 %v3000
        %3930 = vmatpush.bf16.msra.mxu0 %v2984
        %3931 = vmatpush.bf16.msra.mxu0 %v2968
        %3932 = vmatpush.bf16.msra.mxu0 %v2952
        %3933 = vmatpush.bf16.msra.mxu0 %v2936
        %3934 = vmatpush.bf16.msra.mxu0 %v2920
        %3935 = vmatpush.bf16.msra.mxu0 %v2904
        %3936 = vmatmul.bf16.gmra.mxu0 %v1360
        %v3937 = vpop.f32.mrf.mxu0
        %v3938 = vadd.f32 %v1322, %v3937
        %v3939 = vpop.f32.mrf.mxu0
        %3940 = vdwg.mxu0
        %3941 = vmatpush.bf16.msra.mxu0 %v3144
        %3942 = vmatpush.bf16.msra.mxu0 %v3128
        %3943 = vmatpush.bf16.msra.mxu0 %v3112
        %3944 = vmatpush.bf16.msra.mxu0 %v3096
        %3945 = vmatpush.bf16.msra.mxu0 %v3080
        %3946 = vmatpush.bf16.msra.mxu0 %v3064
        %3947 = vmatpush.bf16.msra.mxu0 %v3048
        %3948 = vmatpush.bf16.msra.mxu0 %v3032
        %3949 = vmatmul.bf16.gmra.mxu0 %v1361
        %v3950 = vpop.f32.mrf.mxu0
        %v3951 = vadd.f32 %v3938, %v3950
        %v3952 = vpop.f32.mrf.mxu0
        %3953 = vdwg.mxu0
        %3954 = vmatpush.bf16.msra.mxu0 %v3272
        %3955 = vmatpush.bf16.msra.mxu0 %v3256
        %3956 = vmatpush.bf16.msra.mxu0 %v3240
        %3957 = vmatpush.bf16.msra.mxu0 %v3224
        %3958 = vmatpush.bf16.msra.mxu0 %v3208
        %3959 = vmatpush.bf16.msra.mxu0 %v3192
        %3960 = vmatpush.bf16.msra.mxu0 %v3176
        %3961 = vmatpush.bf16.msra.mxu0 %v3160
        %3962 = vmatmul.bf16.gmra.mxu0 %v1362
        %v3963 = vpop.f32.mrf.mxu0
        %v3964 = vadd.f32 %v3951, %v3963
        %v3965 = vpop.f32.mrf.mxu0
        %3966 = vdwg.mxu0
        %3967 = vmatpush.bf16.msra.mxu0 %v3400
        %3968 = vmatpush.bf16.msra.mxu0 %v3384
        %3969 = vmatpush.bf16.msra.mxu0 %v3368
        %3970 = vmatpush.bf16.msra.mxu0 %v3352
        %3971 = vmatpush.bf16.msra.mxu0 %v3336
        %3972 = vmatpush.bf16.msra.mxu0 %v3320
        %3973 = vmatpush.bf16.msra.mxu0 %v3304
        %3974 = vmatpush.bf16.msra.mxu0 %v3288
        %3975 = vmatmul.bf16.gmra.mxu0 %v1363
        %v3976 = vpop.f32.mrf.mxu0
        %v3977 = vadd.f32 %v3964, %v3976
        %v3978 = vpop.f32.mrf.mxu0
        %3979 = vdwg.mxu0
        %3980 = vmatpush.bf16.msra.mxu0 %v3017
        %3981 = vmatpush.bf16.msra.mxu0 %v3001
        %3982 = vmatpush.bf16.msra.mxu0 %v2985
        %3983 = vmatpush.bf16.msra.mxu0 %v2969
        %3984 = vmatpush.bf16.msra.mxu0 %v2953
        %3985 = vmatpush.bf16.msra.mxu0 %v2937
        %3986 = vmatpush.bf16.msra.mxu0 %v2921
        %3987 = vmatpush.bf16.msra.mxu0 %v2905
        %3988 = vmatmul.bf16.gmra.mxu0 %v1360
        %v3989 = vpop.f32.mrf.mxu0
        %v3990 = vadd.f32 %v1323, %v3989
        %v3991 = vpop.f32.mrf.mxu0
        %3992 = vdwg.mxu0
        %3993 = vmatpush.bf16.msra.mxu0 %v3145
        %3994 = vmatpush.bf16.msra.mxu0 %v3129
        %3995 = vmatpush.bf16.msra.mxu0 %v3113
        %3996 = vmatpush.bf16.msra.mxu0 %v3097
        %3997 = vmatpush.bf16.msra.mxu0 %v3081
        %3998 = vmatpush.bf16.msra.mxu0 %v3065
        %3999 = vmatpush.bf16.msra.mxu0 %v3049
        %4000 = vmatpush.bf16.msra.mxu0 %v3033
        %4001 = vmatmul.bf16.gmra.mxu0 %v1361
        %v4002 = vpop.f32.mrf.mxu0
        %v4003 = vadd.f32 %v3990, %v4002
        %v4004 = vpop.f32.mrf.mxu0
        %4005 = vdwg.mxu0
        %4006 = vmatpush.bf16.msra.mxu0 %v3273
        %4007 = vmatpush.bf16.msra.mxu0 %v3257
        %4008 = vmatpush.bf16.msra.mxu0 %v3241
        %4009 = vmatpush.bf16.msra.mxu0 %v3225
        %4010 = vmatpush.bf16.msra.mxu0 %v3209
        %4011 = vmatpush.bf16.msra.mxu0 %v3193
        %4012 = vmatpush.bf16.msra.mxu0 %v3177
        %4013 = vmatpush.bf16.msra.mxu0 %v3161
        %4014 = vmatmul.bf16.gmra.mxu0 %v1362
        %v4015 = vpop.f32.mrf.mxu0
        %v4016 = vadd.f32 %v4003, %v4015
        %v4017 = vpop.f32.mrf.mxu0
        %4018 = vdwg.mxu0
        %4019 = vmatpush.bf16.msra.mxu0 %v3401
        %4020 = vmatpush.bf16.msra.mxu0 %v3385
        %4021 = vmatpush.bf16.msra.mxu0 %v3369
        %4022 = vmatpush.bf16.msra.mxu0 %v3353
        %4023 = vmatpush.bf16.msra.mxu0 %v3337
        %4024 = vmatpush.bf16.msra.mxu0 %v3321
        %4025 = vmatpush.bf16.msra.mxu0 %v3305
        %4026 = vmatpush.bf16.msra.mxu0 %v3289
        %4027 = vmatmul.bf16.gmra.mxu0 %v1363
        %v4028 = vpop.f32.mrf.mxu0
        %v4029 = vadd.f32 %v4016, %v4028
        %v4030 = vpop.f32.mrf.mxu0
        %4031 = vdwg.mxu0
        %4032 = vmatpush.bf16.msra.mxu0 %v3018
        %4033 = vmatpush.bf16.msra.mxu0 %v3002
        %4034 = vmatpush.bf16.msra.mxu0 %v2986
        %4035 = vmatpush.bf16.msra.mxu0 %v2970
        %4036 = vmatpush.bf16.msra.mxu0 %v2954
        %4037 = vmatpush.bf16.msra.mxu0 %v2938
        %4038 = vmatpush.bf16.msra.mxu0 %v2922
        %4039 = vmatpush.bf16.msra.mxu0 %v2906
        %4040 = vmatmul.bf16.gmra.mxu0 %v1360
        %v4041 = vpop.f32.mrf.mxu0
        %v4042 = vadd.f32 %v1324, %v4041
        %v4043 = vpop.f32.mrf.mxu0
        %4044 = vdwg.mxu0
        %4045 = vmatpush.bf16.msra.mxu0 %v3146
        %4046 = vmatpush.bf16.msra.mxu0 %v3130
        %4047 = vmatpush.bf16.msra.mxu0 %v3114
        %4048 = vmatpush.bf16.msra.mxu0 %v3098
        %4049 = vmatpush.bf16.msra.mxu0 %v3082
        %4050 = vmatpush.bf16.msra.mxu0 %v3066
        %4051 = vmatpush.bf16.msra.mxu0 %v3050
        %4052 = vmatpush.bf16.msra.mxu0 %v3034
        %4053 = vmatmul.bf16.gmra.mxu0 %v1361
        %v4054 = vpop.f32.mrf.mxu0
        %v4055 = vadd.f32 %v4042, %v4054
        %v4056 = vpop.f32.mrf.mxu0
        %4057 = vdwg.mxu0
        %4058 = vmatpush.bf16.msra.mxu0 %v3274
        %4059 = vmatpush.bf16.msra.mxu0 %v3258
        %4060 = vmatpush.bf16.msra.mxu0 %v3242
        %4061 = vmatpush.bf16.msra.mxu0 %v3226
        %4062 = vmatpush.bf16.msra.mxu0 %v3210
        %4063 = vmatpush.bf16.msra.mxu0 %v3194
        %4064 = vmatpush.bf16.msra.mxu0 %v3178
        %4065 = vmatpush.bf16.msra.mxu0 %v3162
        %4066 = vmatmul.bf16.gmra.mxu0 %v1362
        %v4067 = vpop.f32.mrf.mxu0
        %v4068 = vadd.f32 %v4055, %v4067
        %v4069 = vpop.f32.mrf.mxu0
        %4070 = vdwg.mxu0
        %4071 = vmatpush.bf16.msra.mxu0 %v3402
        %4072 = vmatpush.bf16.msra.mxu0 %v3386
        %4073 = vmatpush.bf16.msra.mxu0 %v3370
        %4074 = vmatpush.bf16.msra.mxu0 %v3354
        %4075 = vmatpush.bf16.msra.mxu0 %v3338
        %4076 = vmatpush.bf16.msra.mxu0 %v3322
        %4077 = vmatpush.bf16.msra.mxu0 %v3306
        %4078 = vmatpush.bf16.msra.mxu0 %v3290
        %4079 = vmatmul.bf16.gmra.mxu0 %v1363
        %v4080 = vpop.f32.mrf.mxu0
        %v4081 = vadd.f32 %v4068, %v4080
        %v4082 = vpop.f32.mrf.mxu0
        %4083 = vdwg.mxu0
        %4084 = vmatpush.bf16.msra.mxu0 %v3019
        %4085 = vmatpush.bf16.msra.mxu0 %v3003
        %4086 = vmatpush.bf16.msra.mxu0 %v2987
        %4087 = vmatpush.bf16.msra.mxu0 %v2971
        %4088 = vmatpush.bf16.msra.mxu0 %v2955
        %4089 = vmatpush.bf16.msra.mxu0 %v2939
        %4090 = vmatpush.bf16.msra.mxu0 %v2923
        %4091 = vmatpush.bf16.msra.mxu0 %v2907
        %4092 = vmatmul.bf16.gmra.mxu0 %v1360
        %v4093 = vpop.f32.mrf.mxu0
        %v4094 = vadd.f32 %v1325, %v4093
        %v4095 = vpop.f32.mrf.mxu0
        %4096 = vdwg.mxu0
        %4097 = vmatpush.bf16.msra.mxu0 %v3147
        %4098 = vmatpush.bf16.msra.mxu0 %v3131
        %4099 = vmatpush.bf16.msra.mxu0 %v3115
        %4100 = vmatpush.bf16.msra.mxu0 %v3099
        %4101 = vmatpush.bf16.msra.mxu0 %v3083
        %4102 = vmatpush.bf16.msra.mxu0 %v3067
        %4103 = vmatpush.bf16.msra.mxu0 %v3051
        %4104 = vmatpush.bf16.msra.mxu0 %v3035
        %4105 = vmatmul.bf16.gmra.mxu0 %v1361
        %v4106 = vpop.f32.mrf.mxu0
        %v4107 = vadd.f32 %v4094, %v4106
        %v4108 = vpop.f32.mrf.mxu0
        %4109 = vdwg.mxu0
        %4110 = vmatpush.bf16.msra.mxu0 %v3275
        %4111 = vmatpush.bf16.msra.mxu0 %v3259
        %4112 = vmatpush.bf16.msra.mxu0 %v3243
        %4113 = vmatpush.bf16.msra.mxu0 %v3227
        %4114 = vmatpush.bf16.msra.mxu0 %v3211
        %4115 = vmatpush.bf16.msra.mxu0 %v3195
        %4116 = vmatpush.bf16.msra.mxu0 %v3179
        %4117 = vmatpush.bf16.msra.mxu0 %v3163
        %4118 = vmatmul.bf16.gmra.mxu0 %v1362
        %v4119 = vpop.f32.mrf.mxu0
        %v4120 = vadd.f32 %v4107, %v4119
        %v4121 = vpop.f32.mrf.mxu0
        %4122 = vdwg.mxu0
        %4123 = vmatpush.bf16.msra.mxu0 %v3403
        %4124 = vmatpush.bf16.msra.mxu0 %v3387
        %4125 = vmatpush.bf16.msra.mxu0 %v3371
        %4126 = vmatpush.bf16.msra.mxu0 %v3355
        %4127 = vmatpush.bf16.msra.mxu0 %v3339
        %4128 = vmatpush.bf16.msra.mxu0 %v3323
        %4129 = vmatpush.bf16.msra.mxu0 %v3307
        %4130 = vmatpush.bf16.msra.mxu0 %v3291
        %4131 = vmatmul.bf16.gmra.mxu0 %v1363
        %v4132 = vpop.f32.mrf.mxu0
        %v4133 = vadd.f32 %v4120, %v4132
        %v4134 = vpop.f32.mrf.mxu0
        %4135 = vdwg.mxu0
        %4136 = vmatpush.bf16.msra.mxu0 %v3020
        %4137 = vmatpush.bf16.msra.mxu0 %v3004
        %4138 = vmatpush.bf16.msra.mxu0 %v2988
        %4139 = vmatpush.bf16.msra.mxu0 %v2972
        %4140 = vmatpush.bf16.msra.mxu0 %v2956
        %4141 = vmatpush.bf16.msra.mxu0 %v2940
        %4142 = vmatpush.bf16.msra.mxu0 %v2924
        %4143 = vmatpush.bf16.msra.mxu0 %v2908
        %4144 = vmatmul.bf16.gmra.mxu0 %v1360
        %v4145 = vpop.f32.mrf.mxu0
        %v4146 = vadd.f32 %v1326, %v4145
        %v4147 = vpop.f32.mrf.mxu0
        %4148 = vdwg.mxu0
        %4149 = vmatpush.bf16.msra.mxu0 %v3148
        %4150 = vmatpush.bf16.msra.mxu0 %v3132
        %4151 = vmatpush.bf16.msra.mxu0 %v3116
        %4152 = vmatpush.bf16.msra.mxu0 %v3100
        %4153 = vmatpush.bf16.msra.mxu0 %v3084
        %4154 = vmatpush.bf16.msra.mxu0 %v3068
        %4155 = vmatpush.bf16.msra.mxu0 %v3052
        %4156 = vmatpush.bf16.msra.mxu0 %v3036
        %4157 = vmatmul.bf16.gmra.mxu0 %v1361
        %v4158 = vpop.f32.mrf.mxu0
        %v4159 = vadd.f32 %v4146, %v4158
        %v4160 = vpop.f32.mrf.mxu0
        %4161 = vdwg.mxu0
        %4162 = vmatpush.bf16.msra.mxu0 %v3276
        %4163 = vmatpush.bf16.msra.mxu0 %v3260
        %4164 = vmatpush.bf16.msra.mxu0 %v3244
        %4165 = vmatpush.bf16.msra.mxu0 %v3228
        %4166 = vmatpush.bf16.msra.mxu0 %v3212
        %4167 = vmatpush.bf16.msra.mxu0 %v3196
        %4168 = vmatpush.bf16.msra.mxu0 %v3180
        %4169 = vmatpush.bf16.msra.mxu0 %v3164
        %4170 = vmatmul.bf16.gmra.mxu0 %v1362
        %v4171 = vpop.f32.mrf.mxu0
        %v4172 = vadd.f32 %v4159, %v4171
        %v4173 = vpop.f32.mrf.mxu0
        %4174 = vdwg.mxu0
        %4175 = vmatpush.bf16.msra.mxu0 %v3404
        %4176 = vmatpush.bf16.msra.mxu0 %v3388
        %4177 = vmatpush.bf16.msra.mxu0 %v3372
        %4178 = vmatpush.bf16.msra.mxu0 %v3356
        %4179 = vmatpush.bf16.msra.mxu0 %v3340
        %4180 = vmatpush.bf16.msra.mxu0 %v3324
        %4181 = vmatpush.bf16.msra.mxu0 %v3308
        %4182 = vmatpush.bf16.msra.mxu0 %v3292
        %4183 = vmatmul.bf16.gmra.mxu0 %v1363
        %v4184 = vpop.f32.mrf.mxu0
        %v4185 = vadd.f32 %v4172, %v4184
        %v4186 = vpop.f32.mrf.mxu0
        %4187 = vdwg.mxu0
        %4188 = vmatpush.bf16.msra.mxu0 %v3021
        %4189 = vmatpush.bf16.msra.mxu0 %v3005
        %4190 = vmatpush.bf16.msra.mxu0 %v2989
        %4191 = vmatpush.bf16.msra.mxu0 %v2973
        %4192 = vmatpush.bf16.msra.mxu0 %v2957
        %4193 = vmatpush.bf16.msra.mxu0 %v2941
        %4194 = vmatpush.bf16.msra.mxu0 %v2925
        %4195 = vmatpush.bf16.msra.mxu0 %v2909
        %4196 = vmatmul.bf16.gmra.mxu0 %v1360
        %v4197 = vpop.f32.mrf.mxu0
        %v4198 = vadd.f32 %v1327, %v4197
        %v4199 = vpop.f32.mrf.mxu0
        %4200 = vdwg.mxu0
        %4201 = vmatpush.bf16.msra.mxu0 %v3149
        %4202 = vmatpush.bf16.msra.mxu0 %v3133
        %4203 = vmatpush.bf16.msra.mxu0 %v3117
        %4204 = vmatpush.bf16.msra.mxu0 %v3101
        %4205 = vmatpush.bf16.msra.mxu0 %v3085
        %4206 = vmatpush.bf16.msra.mxu0 %v3069
        %4207 = vmatpush.bf16.msra.mxu0 %v3053
        %4208 = vmatpush.bf16.msra.mxu0 %v3037
        %4209 = vmatmul.bf16.gmra.mxu0 %v1361
        %v4210 = vpop.f32.mrf.mxu0
        %v4211 = vadd.f32 %v4198, %v4210
        %v4212 = vpop.f32.mrf.mxu0
        %4213 = vdwg.mxu0
        %4214 = vmatpush.bf16.msra.mxu0 %v3277
        %4215 = vmatpush.bf16.msra.mxu0 %v3261
        %4216 = vmatpush.bf16.msra.mxu0 %v3245
        %4217 = vmatpush.bf16.msra.mxu0 %v3229
        %4218 = vmatpush.bf16.msra.mxu0 %v3213
        %4219 = vmatpush.bf16.msra.mxu0 %v3197
        %4220 = vmatpush.bf16.msra.mxu0 %v3181
        %4221 = vmatpush.bf16.msra.mxu0 %v3165
        %4222 = vmatmul.bf16.gmra.mxu0 %v1362
        %v4223 = vpop.f32.mrf.mxu0
        %v4224 = vadd.f32 %v4211, %v4223
        %v4225 = vpop.f32.mrf.mxu0
        %4226 = vdwg.mxu0
        %4227 = vmatpush.bf16.msra.mxu0 %v3405
        %4228 = vmatpush.bf16.msra.mxu0 %v3389
        %4229 = vmatpush.bf16.msra.mxu0 %v3373
        %4230 = vmatpush.bf16.msra.mxu0 %v3357
        %4231 = vmatpush.bf16.msra.mxu0 %v3341
        %4232 = vmatpush.bf16.msra.mxu0 %v3325
        %4233 = vmatpush.bf16.msra.mxu0 %v3309
        %4234 = vmatpush.bf16.msra.mxu0 %v3293
        %4235 = vmatmul.bf16.gmra.mxu0 %v1363
        %v4236 = vpop.f32.mrf.mxu0
        %v4237 = vadd.f32 %v4224, %v4236
        %v4238 = vpop.f32.mrf.mxu0
        %4239 = vdwg.mxu0
        %4240 = vmatpush.bf16.msra.mxu0 %v3022
        %4241 = vmatpush.bf16.msra.mxu0 %v3006
        %4242 = vmatpush.bf16.msra.mxu0 %v2990
        %4243 = vmatpush.bf16.msra.mxu0 %v2974
        %4244 = vmatpush.bf16.msra.mxu0 %v2958
        %4245 = vmatpush.bf16.msra.mxu0 %v2942
        %4246 = vmatpush.bf16.msra.mxu0 %v2926
        %4247 = vmatpush.bf16.msra.mxu0 %v2910
        %4248 = vmatmul.bf16.gmra.mxu0 %v1360
        %v4249 = vpop.f32.mrf.mxu0
        %v4250 = vadd.f32 %v1328, %v4249
        %v4251 = vpop.f32.mrf.mxu0
        %4252 = vdwg.mxu0
        %4253 = vmatpush.bf16.msra.mxu0 %v3150
        %4254 = vmatpush.bf16.msra.mxu0 %v3134
        %4255 = vmatpush.bf16.msra.mxu0 %v3118
        %4256 = vmatpush.bf16.msra.mxu0 %v3102
        %4257 = vmatpush.bf16.msra.mxu0 %v3086
        %4258 = vmatpush.bf16.msra.mxu0 %v3070
        %4259 = vmatpush.bf16.msra.mxu0 %v3054
        %4260 = vmatpush.bf16.msra.mxu0 %v3038
        %4261 = vmatmul.bf16.gmra.mxu0 %v1361
        %v4262 = vpop.f32.mrf.mxu0
        %v4263 = vadd.f32 %v4250, %v4262
        %v4264 = vpop.f32.mrf.mxu0
        %4265 = vdwg.mxu0
        %4266 = vmatpush.bf16.msra.mxu0 %v3278
        %4267 = vmatpush.bf16.msra.mxu0 %v3262
        %4268 = vmatpush.bf16.msra.mxu0 %v3246
        %4269 = vmatpush.bf16.msra.mxu0 %v3230
        %4270 = vmatpush.bf16.msra.mxu0 %v3214
        %4271 = vmatpush.bf16.msra.mxu0 %v3198
        %4272 = vmatpush.bf16.msra.mxu0 %v3182
        %4273 = vmatpush.bf16.msra.mxu0 %v3166
        %4274 = vmatmul.bf16.gmra.mxu0 %v1362
        %v4275 = vpop.f32.mrf.mxu0
        %v4276 = vadd.f32 %v4263, %v4275
        %v4277 = vpop.f32.mrf.mxu0
        %4278 = vdwg.mxu0
        %4279 = vmatpush.bf16.msra.mxu0 %v3406
        %4280 = vmatpush.bf16.msra.mxu0 %v3390
        %4281 = vmatpush.bf16.msra.mxu0 %v3374
        %4282 = vmatpush.bf16.msra.mxu0 %v3358
        %4283 = vmatpush.bf16.msra.mxu0 %v3342
        %4284 = vmatpush.bf16.msra.mxu0 %v3326
        %4285 = vmatpush.bf16.msra.mxu0 %v3310
        %4286 = vmatpush.bf16.msra.mxu0 %v3294
        %4287 = vmatmul.bf16.gmra.mxu0 %v1363
        %v4288 = vpop.f32.mrf.mxu0
        %v4289 = vadd.f32 %v4276, %v4288
        %v4290 = vpop.f32.mrf.mxu0
        %4291 = vdwg.mxu0
        %4292 = vmatpush.bf16.msra.mxu0 %v3023
        %4293 = vmatpush.bf16.msra.mxu0 %v3007
        %4294 = vmatpush.bf16.msra.mxu0 %v2991
        %4295 = vmatpush.bf16.msra.mxu0 %v2975
        %4296 = vmatpush.bf16.msra.mxu0 %v2959
        %4297 = vmatpush.bf16.msra.mxu0 %v2943
        %4298 = vmatpush.bf16.msra.mxu0 %v2927
        %4299 = vmatpush.bf16.msra.mxu0 %v2911
        %4300 = vmatmul.bf16.gmra.mxu0 %v1360
        %v4301 = vpop.f32.mrf.mxu0
        %v4302 = vadd.f32 %v1329, %v4301
        %v4303 = vpop.f32.mrf.mxu0
        %4304 = vdwg.mxu0
        %4305 = vmatpush.bf16.msra.mxu0 %v3151
        %4306 = vmatpush.bf16.msra.mxu0 %v3135
        %4307 = vmatpush.bf16.msra.mxu0 %v3119
        %4308 = vmatpush.bf16.msra.mxu0 %v3103
        %4309 = vmatpush.bf16.msra.mxu0 %v3087
        %4310 = vmatpush.bf16.msra.mxu0 %v3071
        %4311 = vmatpush.bf16.msra.mxu0 %v3055
        %4312 = vmatpush.bf16.msra.mxu0 %v3039
        %4313 = vmatmul.bf16.gmra.mxu0 %v1361
        %v4314 = vpop.f32.mrf.mxu0
        %v4315 = vadd.f32 %v4302, %v4314
        %v4316 = vpop.f32.mrf.mxu0
        %4317 = vdwg.mxu0
        %4318 = vmatpush.bf16.msra.mxu0 %v3279
        %4319 = vmatpush.bf16.msra.mxu0 %v3263
        %4320 = vmatpush.bf16.msra.mxu0 %v3247
        %4321 = vmatpush.bf16.msra.mxu0 %v3231
        %4322 = vmatpush.bf16.msra.mxu0 %v3215
        %4323 = vmatpush.bf16.msra.mxu0 %v3199
        %4324 = vmatpush.bf16.msra.mxu0 %v3183
        %4325 = vmatpush.bf16.msra.mxu0 %v3167
        %4326 = vmatmul.bf16.gmra.mxu0 %v1362
        %v4327 = vpop.f32.mrf.mxu0
        %v4328 = vadd.f32 %v4315, %v4327
        %v4329 = vpop.f32.mrf.mxu0
        %4330 = vdwg.mxu0
        %4331 = vmatpush.bf16.msra.mxu0 %v3407
        %4332 = vmatpush.bf16.msra.mxu0 %v3391
        %4333 = vmatpush.bf16.msra.mxu0 %v3375
        %4334 = vmatpush.bf16.msra.mxu0 %v3359
        %4335 = vmatpush.bf16.msra.mxu0 %v3343
        %4336 = vmatpush.bf16.msra.mxu0 %v3327
        %4337 = vmatpush.bf16.msra.mxu0 %v3311
        %4338 = vmatpush.bf16.msra.mxu0 %v3295
        %4339 = vmatmul.bf16.gmra.mxu0 %v1363
        %v4340 = vpop.f32.mrf.mxu0
        %v4341 = vadd.f32 %v4328, %v4340
        %v4342 = vpop.f32.mrf.mxu0
        %4343 = vdwg.mxu0
        %4344 = vmatpush.bf16.msra.mxu0 %v3024
        %4345 = vmatpush.bf16.msra.mxu0 %v3008
        %4346 = vmatpush.bf16.msra.mxu0 %v2992
        %4347 = vmatpush.bf16.msra.mxu0 %v2976
        %4348 = vmatpush.bf16.msra.mxu0 %v2960
        %4349 = vmatpush.bf16.msra.mxu0 %v2944
        %4350 = vmatpush.bf16.msra.mxu0 %v2928
        %4351 = vmatpush.bf16.msra.mxu0 %v2912
        %4352 = vmatmul.bf16.gmra.mxu0 %v1360
        %v4353 = vpop.f32.mrf.mxu0
        %v4354 = vadd.f32 %v1330, %v4353
        %v4355 = vpop.f32.mrf.mxu0
        %4356 = vdwg.mxu0
        %4357 = vmatpush.bf16.msra.mxu0 %v3152
        %4358 = vmatpush.bf16.msra.mxu0 %v3136
        %4359 = vmatpush.bf16.msra.mxu0 %v3120
        %4360 = vmatpush.bf16.msra.mxu0 %v3104
        %4361 = vmatpush.bf16.msra.mxu0 %v3088
        %4362 = vmatpush.bf16.msra.mxu0 %v3072
        %4363 = vmatpush.bf16.msra.mxu0 %v3056
        %4364 = vmatpush.bf16.msra.mxu0 %v3040
        %4365 = vmatmul.bf16.gmra.mxu0 %v1361
        %v4366 = vpop.f32.mrf.mxu0
        %v4367 = vadd.f32 %v4354, %v4366
        %v4368 = vpop.f32.mrf.mxu0
        %4369 = vdwg.mxu0
        %4370 = vmatpush.bf16.msra.mxu0 %v3280
        %4371 = vmatpush.bf16.msra.mxu0 %v3264
        %4372 = vmatpush.bf16.msra.mxu0 %v3248
        %4373 = vmatpush.bf16.msra.mxu0 %v3232
        %4374 = vmatpush.bf16.msra.mxu0 %v3216
        %4375 = vmatpush.bf16.msra.mxu0 %v3200
        %4376 = vmatpush.bf16.msra.mxu0 %v3184
        %4377 = vmatpush.bf16.msra.mxu0 %v3168
        %4378 = vmatmul.bf16.gmra.mxu0 %v1362
        %v4379 = vpop.f32.mrf.mxu0
        %v4380 = vadd.f32 %v4367, %v4379
        %v4381 = vpop.f32.mrf.mxu0
        %4382 = vdwg.mxu0
        %4383 = vmatpush.bf16.msra.mxu0 %v3408
        %4384 = vmatpush.bf16.msra.mxu0 %v3392
        %4385 = vmatpush.bf16.msra.mxu0 %v3376
        %4386 = vmatpush.bf16.msra.mxu0 %v3360
        %4387 = vmatpush.bf16.msra.mxu0 %v3344
        %4388 = vmatpush.bf16.msra.mxu0 %v3328
        %4389 = vmatpush.bf16.msra.mxu0 %v3312
        %4390 = vmatpush.bf16.msra.mxu0 %v3296
        %4391 = vmatmul.bf16.gmra.mxu0 %v1363
        %v4392 = vpop.f32.mrf.mxu0
        %v4393 = vadd.f32 %v4380, %v4392
        %v4394 = vpop.f32.mrf.mxu0
        %4395 = vdwg.mxu0
        %4396 = vmatpush.bf16.msra.mxu0 %v3025
        %4397 = vmatpush.bf16.msra.mxu0 %v3009
        %4398 = vmatpush.bf16.msra.mxu0 %v2993
        %4399 = vmatpush.bf16.msra.mxu0 %v2977
        %4400 = vmatpush.bf16.msra.mxu0 %v2961
        %4401 = vmatpush.bf16.msra.mxu0 %v2945
        %4402 = vmatpush.bf16.msra.mxu0 %v2929
        %4403 = vmatpush.bf16.msra.mxu0 %v2913
        %4404 = vmatmul.bf16.gmra.mxu0 %v1360
        %v4405 = vpop.f32.mrf.mxu0
        %v4406 = vadd.f32 %v1331, %v4405
        %v4407 = vpop.f32.mrf.mxu0
        %4408 = vdwg.mxu0
        %4409 = vmatpush.bf16.msra.mxu0 %v3153
        %4410 = vmatpush.bf16.msra.mxu0 %v3137
        %4411 = vmatpush.bf16.msra.mxu0 %v3121
        %4412 = vmatpush.bf16.msra.mxu0 %v3105
        %4413 = vmatpush.bf16.msra.mxu0 %v3089
        %4414 = vmatpush.bf16.msra.mxu0 %v3073
        %4415 = vmatpush.bf16.msra.mxu0 %v3057
        %4416 = vmatpush.bf16.msra.mxu0 %v3041
        %4417 = vmatmul.bf16.gmra.mxu0 %v1361
        %v4418 = vpop.f32.mrf.mxu0
        %v4419 = vadd.f32 %v4406, %v4418
        %v4420 = vpop.f32.mrf.mxu0
        %4421 = vdwg.mxu0
        %4422 = vmatpush.bf16.msra.mxu0 %v3281
        %4423 = vmatpush.bf16.msra.mxu0 %v3265
        %4424 = vmatpush.bf16.msra.mxu0 %v3249
        %4425 = vmatpush.bf16.msra.mxu0 %v3233
        %4426 = vmatpush.bf16.msra.mxu0 %v3217
        %4427 = vmatpush.bf16.msra.mxu0 %v3201
        %4428 = vmatpush.bf16.msra.mxu0 %v3185
        %4429 = vmatpush.bf16.msra.mxu0 %v3169
        %4430 = vmatmul.bf16.gmra.mxu0 %v1362
        %v4431 = vpop.f32.mrf.mxu0
        %v4432 = vadd.f32 %v4419, %v4431
        %v4433 = vpop.f32.mrf.mxu0
        %4434 = vdwg.mxu0
        %4435 = vmatpush.bf16.msra.mxu0 %v3409
        %4436 = vmatpush.bf16.msra.mxu0 %v3393
        %4437 = vmatpush.bf16.msra.mxu0 %v3377
        %4438 = vmatpush.bf16.msra.mxu0 %v3361
        %4439 = vmatpush.bf16.msra.mxu0 %v3345
        %4440 = vmatpush.bf16.msra.mxu0 %v3329
        %4441 = vmatpush.bf16.msra.mxu0 %v3313
        %4442 = vmatpush.bf16.msra.mxu0 %v3297
        %4443 = vmatmul.bf16.gmra.mxu0 %v1363
        %v4444 = vpop.f32.mrf.mxu0
        %v4445 = vadd.f32 %v4432, %v4444
        %v4446 = vpop.f32.mrf.mxu0
        %4447 = vdwg.mxu0
        %4448 = vmatpush.bf16.msra.mxu0 %v3026
        %4449 = vmatpush.bf16.msra.mxu0 %v3010
        %4450 = vmatpush.bf16.msra.mxu0 %v2994
        %4451 = vmatpush.bf16.msra.mxu0 %v2978
        %4452 = vmatpush.bf16.msra.mxu0 %v2962
        %4453 = vmatpush.bf16.msra.mxu0 %v2946
        %4454 = vmatpush.bf16.msra.mxu0 %v2930
        %4455 = vmatpush.bf16.msra.mxu0 %v2914
        %4456 = vmatmul.bf16.gmra.mxu0 %v1360
        %v4457 = vpop.f32.mrf.mxu0
        %v4458 = vadd.f32 %v1332, %v4457
        %v4459 = vpop.f32.mrf.mxu0
        %4460 = vdwg.mxu0
        %4461 = vmatpush.bf16.msra.mxu0 %v3154
        %4462 = vmatpush.bf16.msra.mxu0 %v3138
        %4463 = vmatpush.bf16.msra.mxu0 %v3122
        %4464 = vmatpush.bf16.msra.mxu0 %v3106
        %4465 = vmatpush.bf16.msra.mxu0 %v3090
        %4466 = vmatpush.bf16.msra.mxu0 %v3074
        %4467 = vmatpush.bf16.msra.mxu0 %v3058
        %4468 = vmatpush.bf16.msra.mxu0 %v3042
        %4469 = vmatmul.bf16.gmra.mxu0 %v1361
        %v4470 = vpop.f32.mrf.mxu0
        %v4471 = vadd.f32 %v4458, %v4470
        %v4472 = vpop.f32.mrf.mxu0
        %4473 = vdwg.mxu0
        %4474 = vmatpush.bf16.msra.mxu0 %v3282
        %4475 = vmatpush.bf16.msra.mxu0 %v3266
        %4476 = vmatpush.bf16.msra.mxu0 %v3250
        %4477 = vmatpush.bf16.msra.mxu0 %v3234
        %4478 = vmatpush.bf16.msra.mxu0 %v3218
        %4479 = vmatpush.bf16.msra.mxu0 %v3202
        %4480 = vmatpush.bf16.msra.mxu0 %v3186
        %4481 = vmatpush.bf16.msra.mxu0 %v3170
        %4482 = vmatmul.bf16.gmra.mxu0 %v1362
        %v4483 = vpop.f32.mrf.mxu0
        %v4484 = vadd.f32 %v4471, %v4483
        %v4485 = vpop.f32.mrf.mxu0
        %4486 = vdwg.mxu0
        %4487 = vmatpush.bf16.msra.mxu0 %v3410
        %4488 = vmatpush.bf16.msra.mxu0 %v3394
        %4489 = vmatpush.bf16.msra.mxu0 %v3378
        %4490 = vmatpush.bf16.msra.mxu0 %v3362
        %4491 = vmatpush.bf16.msra.mxu0 %v3346
        %4492 = vmatpush.bf16.msra.mxu0 %v3330
        %4493 = vmatpush.bf16.msra.mxu0 %v3314
        %4494 = vmatpush.bf16.msra.mxu0 %v3298
        %4495 = vmatmul.bf16.gmra.mxu0 %v1363
        %v4496 = vpop.f32.mrf.mxu0
        %v4497 = vadd.f32 %v4484, %v4496
        %v4498 = vpop.f32.mrf.mxu0
        %4499 = vdwg.mxu0
        %4500 = vmatpush.bf16.msra.mxu0 %v3027
        %4501 = vmatpush.bf16.msra.mxu0 %v3011
        %4502 = vmatpush.bf16.msra.mxu0 %v2995
        %4503 = vmatpush.bf16.msra.mxu0 %v2979
        %4504 = vmatpush.bf16.msra.mxu0 %v2963
        %4505 = vmatpush.bf16.msra.mxu0 %v2947
        %4506 = vmatpush.bf16.msra.mxu0 %v2931
        %4507 = vmatpush.bf16.msra.mxu0 %v2915
        %4508 = vmatmul.bf16.gmra.mxu0 %v1360
        %v4509 = vpop.f32.mrf.mxu0
        %v4510 = vadd.f32 %v1333, %v4509
        %v4511 = vpop.f32.mrf.mxu0
        %4512 = vdwg.mxu0
        %4513 = vmatpush.bf16.msra.mxu0 %v3155
        %4514 = vmatpush.bf16.msra.mxu0 %v3139
        %4515 = vmatpush.bf16.msra.mxu0 %v3123
        %4516 = vmatpush.bf16.msra.mxu0 %v3107
        %4517 = vmatpush.bf16.msra.mxu0 %v3091
        %4518 = vmatpush.bf16.msra.mxu0 %v3075
        %4519 = vmatpush.bf16.msra.mxu0 %v3059
        %4520 = vmatpush.bf16.msra.mxu0 %v3043
        %4521 = vmatmul.bf16.gmra.mxu0 %v1361
        %v4522 = vpop.f32.mrf.mxu0
        %v4523 = vadd.f32 %v4510, %v4522
        %v4524 = vpop.f32.mrf.mxu0
        %4525 = vdwg.mxu0
        %4526 = vmatpush.bf16.msra.mxu0 %v3283
        %4527 = vmatpush.bf16.msra.mxu0 %v3267
        %4528 = vmatpush.bf16.msra.mxu0 %v3251
        %4529 = vmatpush.bf16.msra.mxu0 %v3235
        %4530 = vmatpush.bf16.msra.mxu0 %v3219
        %4531 = vmatpush.bf16.msra.mxu0 %v3203
        %4532 = vmatpush.bf16.msra.mxu0 %v3187
        %4533 = vmatpush.bf16.msra.mxu0 %v3171
        %4534 = vmatmul.bf16.gmra.mxu0 %v1362
        %v4535 = vpop.f32.mrf.mxu0
        %v4536 = vadd.f32 %v4523, %v4535
        %v4537 = vpop.f32.mrf.mxu0
        %4538 = vdwg.mxu0
        %4539 = vmatpush.bf16.msra.mxu0 %v3411
        %4540 = vmatpush.bf16.msra.mxu0 %v3395
        %4541 = vmatpush.bf16.msra.mxu0 %v3379
        %4542 = vmatpush.bf16.msra.mxu0 %v3363
        %4543 = vmatpush.bf16.msra.mxu0 %v3347
        %4544 = vmatpush.bf16.msra.mxu0 %v3331
        %4545 = vmatpush.bf16.msra.mxu0 %v3315
        %4546 = vmatpush.bf16.msra.mxu0 %v3299
        %4547 = vmatmul.bf16.gmra.mxu0 %v1363
        %v4548 = vpop.f32.mrf.mxu0
        %v4549 = vadd.f32 %v4536, %v4548
        %v4550 = vpop.f32.mrf.mxu0
        %4551 = vdwg.mxu0
        %4552 = vmatpush.bf16.msra.mxu0 %v3028
        %4553 = vmatpush.bf16.msra.mxu0 %v3012
        %4554 = vmatpush.bf16.msra.mxu0 %v2996
        %4555 = vmatpush.bf16.msra.mxu0 %v2980
        %4556 = vmatpush.bf16.msra.mxu0 %v2964
        %4557 = vmatpush.bf16.msra.mxu0 %v2948
        %4558 = vmatpush.bf16.msra.mxu0 %v2932
        %4559 = vmatpush.bf16.msra.mxu0 %v2916
        %4560 = vmatmul.bf16.gmra.mxu0 %v1360
        %v4561 = vpop.f32.mrf.mxu0
        %v4562 = vadd.f32 %v1334, %v4561
        %v4563 = vpop.f32.mrf.mxu0
        %4564 = vdwg.mxu0
        %4565 = vmatpush.bf16.msra.mxu0 %v3156
        %4566 = vmatpush.bf16.msra.mxu0 %v3140
        %4567 = vmatpush.bf16.msra.mxu0 %v3124
        %4568 = vmatpush.bf16.msra.mxu0 %v3108
        %4569 = vmatpush.bf16.msra.mxu0 %v3092
        %4570 = vmatpush.bf16.msra.mxu0 %v3076
        %4571 = vmatpush.bf16.msra.mxu0 %v3060
        %4572 = vmatpush.bf16.msra.mxu0 %v3044
        %4573 = vmatmul.bf16.gmra.mxu0 %v1361
        %v4574 = vpop.f32.mrf.mxu0
        %v4575 = vadd.f32 %v4562, %v4574
        %v4576 = vpop.f32.mrf.mxu0
        %4577 = vdwg.mxu0
        %4578 = vmatpush.bf16.msra.mxu0 %v3284
        %4579 = vmatpush.bf16.msra.mxu0 %v3268
        %4580 = vmatpush.bf16.msra.mxu0 %v3252
        %4581 = vmatpush.bf16.msra.mxu0 %v3236
        %4582 = vmatpush.bf16.msra.mxu0 %v3220
        %4583 = vmatpush.bf16.msra.mxu0 %v3204
        %4584 = vmatpush.bf16.msra.mxu0 %v3188
        %4585 = vmatpush.bf16.msra.mxu0 %v3172
        %4586 = vmatmul.bf16.gmra.mxu0 %v1362
        %v4587 = vpop.f32.mrf.mxu0
        %v4588 = vadd.f32 %v4575, %v4587
        %v4589 = vpop.f32.mrf.mxu0
        %4590 = vdwg.mxu0
        %4591 = vmatpush.bf16.msra.mxu0 %v3412
        %4592 = vmatpush.bf16.msra.mxu0 %v3396
        %4593 = vmatpush.bf16.msra.mxu0 %v3380
        %4594 = vmatpush.bf16.msra.mxu0 %v3364
        %4595 = vmatpush.bf16.msra.mxu0 %v3348
        %4596 = vmatpush.bf16.msra.mxu0 %v3332
        %4597 = vmatpush.bf16.msra.mxu0 %v3316
        %4598 = vmatpush.bf16.msra.mxu0 %v3300
        %4599 = vmatmul.bf16.gmra.mxu0 %v1363
        %v4600 = vpop.f32.mrf.mxu0
        %v4601 = vadd.f32 %v4588, %v4600
        %v4602 = vpop.f32.mrf.mxu0
        %4603 = vdwg.mxu0
        %4604 = vmatpush.bf16.msra.mxu0 %v3029
        %4605 = vmatpush.bf16.msra.mxu0 %v3013
        %4606 = vmatpush.bf16.msra.mxu0 %v2997
        %4607 = vmatpush.bf16.msra.mxu0 %v2981
        %4608 = vmatpush.bf16.msra.mxu0 %v2965
        %4609 = vmatpush.bf16.msra.mxu0 %v2949
        %4610 = vmatpush.bf16.msra.mxu0 %v2933
        %4611 = vmatpush.bf16.msra.mxu0 %v2917
        %4612 = vmatmul.bf16.gmra.mxu0 %v1360
        %v4613 = vpop.f32.mrf.mxu0
        %v4614 = vadd.f32 %v1335, %v4613
        %v4615 = vpop.f32.mrf.mxu0
        %4616 = vdwg.mxu0
        %4617 = vmatpush.bf16.msra.mxu0 %v3157
        %4618 = vmatpush.bf16.msra.mxu0 %v3141
        %4619 = vmatpush.bf16.msra.mxu0 %v3125
        %4620 = vmatpush.bf16.msra.mxu0 %v3109
        %4621 = vmatpush.bf16.msra.mxu0 %v3093
        %4622 = vmatpush.bf16.msra.mxu0 %v3077
        %4623 = vmatpush.bf16.msra.mxu0 %v3061
        %4624 = vmatpush.bf16.msra.mxu0 %v3045
        %4625 = vmatmul.bf16.gmra.mxu0 %v1361
        %v4626 = vpop.f32.mrf.mxu0
        %v4627 = vadd.f32 %v4614, %v4626
        %v4628 = vpop.f32.mrf.mxu0
        %4629 = vdwg.mxu0
        %4630 = vmatpush.bf16.msra.mxu0 %v3285
        %4631 = vmatpush.bf16.msra.mxu0 %v3269
        %4632 = vmatpush.bf16.msra.mxu0 %v3253
        %4633 = vmatpush.bf16.msra.mxu0 %v3237
        %4634 = vmatpush.bf16.msra.mxu0 %v3221
        %4635 = vmatpush.bf16.msra.mxu0 %v3205
        %4636 = vmatpush.bf16.msra.mxu0 %v3189
        %4637 = vmatpush.bf16.msra.mxu0 %v3173
        %4638 = vmatmul.bf16.gmra.mxu0 %v1362
        %v4639 = vpop.f32.mrf.mxu0
        %v4640 = vadd.f32 %v4627, %v4639
        %v4641 = vpop.f32.mrf.mxu0
        %4642 = vdwg.mxu0
        %4643 = vmatpush.bf16.msra.mxu0 %v3413
        %4644 = vmatpush.bf16.msra.mxu0 %v3397
        %4645 = vmatpush.bf16.msra.mxu0 %v3381
        %4646 = vmatpush.bf16.msra.mxu0 %v3365
        %4647 = vmatpush.bf16.msra.mxu0 %v3349
        %4648 = vmatpush.bf16.msra.mxu0 %v3333
        %4649 = vmatpush.bf16.msra.mxu0 %v3317
        %4650 = vmatpush.bf16.msra.mxu0 %v3301
        %4651 = vmatmul.bf16.gmra.mxu0 %v1363
        %v4652 = vpop.f32.mrf.mxu0
        %v4653 = vadd.f32 %v4640, %v4652
        %v4654 = vpop.f32.mrf.mxu0
        %4655 = vdwg.mxu0
        %4656 = vmatpush.bf16.msra.mxu0 %v3030
        %4657 = vmatpush.bf16.msra.mxu0 %v3014
        %4658 = vmatpush.bf16.msra.mxu0 %v2998
        %4659 = vmatpush.bf16.msra.mxu0 %v2982
        %4660 = vmatpush.bf16.msra.mxu0 %v2966
        %4661 = vmatpush.bf16.msra.mxu0 %v2950
        %4662 = vmatpush.bf16.msra.mxu0 %v2934
        %4663 = vmatpush.bf16.msra.mxu0 %v2918
        %4664 = vmatmul.bf16.gmra.mxu0 %v1360
        %v4665 = vpop.f32.mrf.mxu0
        %v4666 = vadd.f32 %v1336, %v4665
        %v4667 = vpop.f32.mrf.mxu0
        %4668 = vdwg.mxu0
        %4669 = vmatpush.bf16.msra.mxu0 %v3158
        %4670 = vmatpush.bf16.msra.mxu0 %v3142
        %4671 = vmatpush.bf16.msra.mxu0 %v3126
        %4672 = vmatpush.bf16.msra.mxu0 %v3110
        %4673 = vmatpush.bf16.msra.mxu0 %v3094
        %4674 = vmatpush.bf16.msra.mxu0 %v3078
        %4675 = vmatpush.bf16.msra.mxu0 %v3062
        %4676 = vmatpush.bf16.msra.mxu0 %v3046
        %4677 = vmatmul.bf16.gmra.mxu0 %v1361
        %v4678 = vpop.f32.mrf.mxu0
        %v4679 = vadd.f32 %v4666, %v4678
        %v4680 = vpop.f32.mrf.mxu0
        %4681 = vdwg.mxu0
        %4682 = vmatpush.bf16.msra.mxu0 %v3286
        %4683 = vmatpush.bf16.msra.mxu0 %v3270
        %4684 = vmatpush.bf16.msra.mxu0 %v3254
        %4685 = vmatpush.bf16.msra.mxu0 %v3238
        %4686 = vmatpush.bf16.msra.mxu0 %v3222
        %4687 = vmatpush.bf16.msra.mxu0 %v3206
        %4688 = vmatpush.bf16.msra.mxu0 %v3190
        %4689 = vmatpush.bf16.msra.mxu0 %v3174
        %4690 = vmatmul.bf16.gmra.mxu0 %v1362
        %v4691 = vpop.f32.mrf.mxu0
        %v4692 = vadd.f32 %v4679, %v4691
        %v4693 = vpop.f32.mrf.mxu0
        %4694 = vdwg.mxu0
        %4695 = vmatpush.bf16.msra.mxu0 %v3414
        %4696 = vmatpush.bf16.msra.mxu0 %v3398
        %4697 = vmatpush.bf16.msra.mxu0 %v3382
        %4698 = vmatpush.bf16.msra.mxu0 %v3366
        %4699 = vmatpush.bf16.msra.mxu0 %v3350
        %4700 = vmatpush.bf16.msra.mxu0 %v3334
        %4701 = vmatpush.bf16.msra.mxu0 %v3318
        %4702 = vmatpush.bf16.msra.mxu0 %v3302
        %4703 = vmatmul.bf16.gmra.mxu0 %v1363
        %v4704 = vpop.f32.mrf.mxu0
        %v4705 = vadd.f32 %v4692, %v4704
        %v4706 = vpop.f32.mrf.mxu0
        %4707 = vdwg.mxu0
        %4708 = vmatpush.bf16.msra.mxu0 %v3031
        %4709 = vmatpush.bf16.msra.mxu0 %v3015
        %4710 = vmatpush.bf16.msra.mxu0 %v2999
        %4711 = vmatpush.bf16.msra.mxu0 %v2983
        %4712 = vmatpush.bf16.msra.mxu0 %v2967
        %4713 = vmatpush.bf16.msra.mxu0 %v2951
        %4714 = vmatpush.bf16.msra.mxu0 %v2935
        %4715 = vmatpush.bf16.msra.mxu0 %v2919
        %4716 = vmatmul.bf16.gmra.mxu0 %v1360
        %v4717 = vpop.f32.mrf.mxu0
        %v4718 = vadd.f32 %v1337, %v4717
        %v4719 = vpop.f32.mrf.mxu0
        %4720 = vdwg.mxu0
        %4721 = vmatpush.bf16.msra.mxu0 %v3159
        %4722 = vmatpush.bf16.msra.mxu0 %v3143
        %4723 = vmatpush.bf16.msra.mxu0 %v3127
        %4724 = vmatpush.bf16.msra.mxu0 %v3111
        %4725 = vmatpush.bf16.msra.mxu0 %v3095
        %4726 = vmatpush.bf16.msra.mxu0 %v3079
        %4727 = vmatpush.bf16.msra.mxu0 %v3063
        %4728 = vmatpush.bf16.msra.mxu0 %v3047
        %4729 = vmatmul.bf16.gmra.mxu0 %v1361
        %v4730 = vpop.f32.mrf.mxu0
        %v4731 = vadd.f32 %v4718, %v4730
        %v4732 = vpop.f32.mrf.mxu0
        %4733 = vdwg.mxu0
        %4734 = vmatpush.bf16.msra.mxu0 %v3287
        %4735 = vmatpush.bf16.msra.mxu0 %v3271
        %4736 = vmatpush.bf16.msra.mxu0 %v3255
        %4737 = vmatpush.bf16.msra.mxu0 %v3239
        %4738 = vmatpush.bf16.msra.mxu0 %v3223
        %4739 = vmatpush.bf16.msra.mxu0 %v3207
        %4740 = vmatpush.bf16.msra.mxu0 %v3191
        %4741 = vmatpush.bf16.msra.mxu0 %v3175
        %4742 = vmatmul.bf16.gmra.mxu0 %v1362
        %v4743 = vpop.f32.mrf.mxu0
        %v4744 = vadd.f32 %v4731, %v4743
        %v4745 = vpop.f32.mrf.mxu0
        %4746 = vdwg.mxu0
        %4747 = vmatpush.bf16.msra.mxu0 %v3415
        %4748 = vmatpush.bf16.msra.mxu0 %v3399
        %4749 = vmatpush.bf16.msra.mxu0 %v3383
        %4750 = vmatpush.bf16.msra.mxu0 %v3367
        %4751 = vmatpush.bf16.msra.mxu0 %v3351
        %4752 = vmatpush.bf16.msra.mxu0 %v3335
        %4753 = vmatpush.bf16.msra.mxu0 %v3319
        %4754 = vmatpush.bf16.msra.mxu0 %v3303
        %4755 = vmatmul.bf16.gmra.mxu0 %v1363
        %v4756 = vpop.f32.mrf.mxu0
        %v4757 = vadd.f32 %v4744, %v4756
        %v4758 = vpop.f32.mrf.mxu0
        %4759 = vdwg.mxu0
        %v4760 = vmax.f32 %v3977, 0.0
        %v4761 = vmax.f32 %v4029, 0.0
        %v4762 = vmax.f32 %v4081, 0.0
        %v4763 = vmax.f32 %v4133, 0.0
        %v4764 = vmax.f32 %v4185, 0.0
        %v4765 = vmax.f32 %v4237, 0.0
        %v4766 = vmax.f32 %v4289, 0.0
        %v4767 = vmax.f32 %v4341, 0.0
        %v4768 = vmax.f32 %v4393, 0.0
        %v4769 = vmax.f32 %v4445, 0.0
        %v4770 = vmax.f32 %v4497, 0.0
        %v4771 = vmax.f32 %v4549, 0.0
        %v4772 = vmax.f32 %v4601, 0.0
        %v4773 = vmax.f32 %v4653, 0.0
        %v4774 = vmax.f32 %v4705, 0.0
        %v4775 = vmax.f32 %v4757, 0.0
        %v4776 = vld [vmem:[#allocation3] sm:$0xff]
        %v4777 = vld [vmem:[#allocation3 + $0x8] sm:$0xff]
        %v4778 = vld [vmem:[#allocation3 + $0x10] sm:$0xff]
        %v4779 = vld [vmem:[#allocation3 + $0x18] sm:$0xff]
        %v4780 = vld [vmem:[%s410] sm:$0xff]
        %v4781 = vld [vmem:[%s410 + $0x8] sm:$0xff]
        %v4782 = vld [vmem:[%s410 + $0x10] sm:$0xff]
        %v4783 = vld [vmem:[%s410 + $0x18] sm:$0xff]
        %v4784 = vld [vmem:[%s410 + $0x20] sm:$0xff]
        %v4785 = vld [vmem:[%s410 + $0x28] sm:$0xff]
        %v4786 = vld [vmem:[%s410 + $0x30] sm:$0xff]
        %v4787 = vld [vmem:[%s410 + $0x38] sm:$0xff]
        %v4788 = vld [vmem:[%s410 + $0x40] sm:$0xff]
        %v4789 = vld [vmem:[%s410 + $0x48] sm:$0xff]
        %v4790 = vld [vmem:[%s410 + $0x50] sm:$0xff]
        %v4791 = vld [vmem:[%s410 + $0x58] sm:$0xff]
        %v4792 = vld [vmem:[%s410 + $0x60] sm:$0xff]
        %v4793 = vld [vmem:[%s410 + $0x68] sm:$0xff]
        %v4794 = vld [vmem:[%s410 + $0x70] sm:$0xff]
        %v4795 = vld [vmem:[%s410 + $0x78] sm:$0xff]
        %v4796 = vld [vmem:[%s410 + $0x80] sm:$0xff]
        %v4797 = vld [vmem:[%s410 + $0x88] sm:$0xff]
        %v4798 = vld [vmem:[%s410 + $0x90] sm:$0xff]
        %v4799 = vld [vmem:[%s410 + $0x98] sm:$0xff]
        %v4800 = vld [vmem:[%s410 + $0xa0] sm:$0xff]
        %v4801 = vld [vmem:[%s410 + $0xa8] sm:$0xff]
        %v4802 = vld [vmem:[%s410 + $0xb0] sm:$0xff]
        %v4803 = vld [vmem:[%s410 + $0xb8] sm:$0xff]
        %v4804 = vld [vmem:[%s410 + $0xc0] sm:$0xff]
        %v4805 = vld [vmem:[%s410 + $0xc8] sm:$0xff]
        %v4806 = vld [vmem:[%s410 + $0xd0] sm:$0xff]
        %v4807 = vld [vmem:[%s410 + $0xd8] sm:$0xff]
        %v4808 = vld [vmem:[%s410 + $0xe0] sm:$0xff]
        %v4809 = vld [vmem:[%s410 + $0xe8] sm:$0xff]
        %v4810 = vld [vmem:[%s410 + $0xf0] sm:$0xff]
        %v4811 = vld [vmem:[%s410 + $0xf8] sm:$0xff]
        %v4812 = vld [vmem:[%s410 + $0x100] sm:$0xff]
        %v4813 = vld [vmem:[%s410 + $0x108] sm:$0xff]
        %v4814 = vld [vmem:[%s410 + $0x110] sm:$0xff]
        %v4815 = vld [vmem:[%s410 + $0x118] sm:$0xff]
        %v4816 = vld [vmem:[%s410 + $0x120] sm:$0xff]
        %v4817 = vld [vmem:[%s410 + $0x128] sm:$0xff]
        %v4818 = vld [vmem:[%s410 + $0x130] sm:$0xff]
        %v4819 = vld [vmem:[%s410 + $0x138] sm:$0xff]
        %v4820 = vld [vmem:[%s410 + $0x140] sm:$0xff]
        %v4821 = vld [vmem:[%s410 + $0x148] sm:$0xff]
        %v4822 = vld [vmem:[%s410 + $0x150] sm:$0xff]
        %v4823 = vld [vmem:[%s410 + $0x158] sm:$0xff]
        %v4824 = vld [vmem:[%s410 + $0x160] sm:$0xff]
        %v4825 = vld [vmem:[%s410 + $0x168] sm:$0xff]
        %v4826 = vld [vmem:[%s410 + $0x170] sm:$0xff]
        %v4827 = vld [vmem:[%s410 + $0x178] sm:$0xff]
        %v4828 = vld [vmem:[%s410 + $0x180] sm:$0xff]
        %v4829 = vld [vmem:[%s410 + $0x188] sm:$0xff]
        %v4830 = vld [vmem:[%s410 + $0x190] sm:$0xff]
        %v4831 = vld [vmem:[%s410 + $0x198] sm:$0xff]
        %v4832 = vld [vmem:[%s410 + $0x1a0] sm:$0xff]
        %v4833 = vld [vmem:[%s410 + $0x1a8] sm:$0xff]
        %v4834 = vld [vmem:[%s410 + $0x1b0] sm:$0xff]
        %v4835 = vld [vmem:[%s410 + $0x1b8] sm:$0xff]
        %v4836 = vld [vmem:[%s410 + $0x1c0] sm:$0xff]
        %v4837 = vld [vmem:[%s410 + $0x1c8] sm:$0xff]
        %v4838 = vld [vmem:[%s410 + $0x1d0] sm:$0xff]
        %v4839 = vld [vmem:[%s410 + $0x1d8] sm:$0xff]
        %v4840 = vld [vmem:[%s410 + $0x1e0] sm:$0xff]
        %v4841 = vld [vmem:[%s410 + $0x1e8] sm:$0xff]
        %v4842 = vld [vmem:[%s410 + $0x1f0] sm:$0xff]
        %v4843 = vld [vmem:[%s410 + $0x1f8] sm:$0xff]
        %v4844 = vld [vmem:[%s410 + $0x200] sm:$0xff]
        %v4845 = vld [vmem:[%s410 + $0x208] sm:$0xff]
        %v4846 = vld [vmem:[%s410 + $0x210] sm:$0xff]
        %v4847 = vld [vmem:[%s410 + $0x218] sm:$0xff]
        %v4848 = vld [vmem:[%s410 + $0x220] sm:$0xff]
        %v4849 = vld [vmem:[%s410 + $0x228] sm:$0xff]
        %v4850 = vld [vmem:[%s410 + $0x230] sm:$0xff]
        %v4851 = vld [vmem:[%s410 + $0x238] sm:$0xff]
        %v4852 = vld [vmem:[%s410 + $0x240] sm:$0xff]
        %v4853 = vld [vmem:[%s410 + $0x248] sm:$0xff]
        %v4854 = vld [vmem:[%s410 + $0x250] sm:$0xff]
        %v4855 = vld [vmem:[%s410 + $0x258] sm:$0xff]
        %v4856 = vld [vmem:[%s410 + $0x260] sm:$0xff]
        %v4857 = vld [vmem:[%s410 + $0x268] sm:$0xff]
        %v4858 = vld [vmem:[%s410 + $0x270] sm:$0xff]
        %v4859 = vld [vmem:[%s410 + $0x278] sm:$0xff]
        %v4860 = vld [vmem:[%s410 + $0x280] sm:$0xff]
        %v4861 = vld [vmem:[%s410 + $0x288] sm:$0xff]
        %v4862 = vld [vmem:[%s410 + $0x290] sm:$0xff]
        %v4863 = vld [vmem:[%s410 + $0x298] sm:$0xff]
        %v4864 = vld [vmem:[%s410 + $0x2a0] sm:$0xff]
        %v4865 = vld [vmem:[%s410 + $0x2a8] sm:$0xff]
        %v4866 = vld [vmem:[%s410 + $0x2b0] sm:$0xff]
        %v4867 = vld [vmem:[%s410 + $0x2b8] sm:$0xff]
        %v4868 = vld [vmem:[%s410 + $0x2c0] sm:$0xff]
        %v4869 = vld [vmem:[%s410 + $0x2c8] sm:$0xff]
        %v4870 = vld [vmem:[%s410 + $0x2d0] sm:$0xff]
        %v4871 = vld [vmem:[%s410 + $0x2d8] sm:$0xff]
        %v4872 = vld [vmem:[%s410 + $0x2e0] sm:$0xff]
        %v4873 = vld [vmem:[%s410 + $0x2e8] sm:$0xff]
        %v4874 = vld [vmem:[%s410 + $0x2f0] sm:$0xff]
        %v4875 = vld [vmem:[%s410 + $0x2f8] sm:$0xff]
        %v4876 = vld [vmem:[%s410 + $0x300] sm:$0xff]
        %v4877 = vld [vmem:[%s410 + $0x308] sm:$0xff]
        %v4878 = vld [vmem:[%s410 + $0x310] sm:$0xff]
        %v4879 = vld [vmem:[%s410 + $0x318] sm:$0xff]
        %v4880 = vld [vmem:[%s410 + $0x320] sm:$0xff]
        %v4881 = vld [vmem:[%s410 + $0x328] sm:$0xff]
        %v4882 = vld [vmem:[%s410 + $0x330] sm:$0xff]
        %v4883 = vld [vmem:[%s410 + $0x338] sm:$0xff]
        %v4884 = vld [vmem:[%s410 + $0x340] sm:$0xff]
        %v4885 = vld [vmem:[%s410 + $0x348] sm:$0xff]
        %v4886 = vld [vmem:[%s410 + $0x350] sm:$0xff]
        %v4887 = vld [vmem:[%s410 + $0x358] sm:$0xff]
        %v4888 = vld [vmem:[%s410 + $0x360] sm:$0xff]
        %v4889 = vld [vmem:[%s410 + $0x368] sm:$0xff]
        %v4890 = vld [vmem:[%s410 + $0x370] sm:$0xff]
        %v4891 = vld [vmem:[%s410 + $0x378] sm:$0xff]
        %v4892 = vld [vmem:[%s410 + $0x380] sm:$0xff]
        %v4893 = vld [vmem:[%s410 + $0x388] sm:$0xff]
        %v4894 = vld [vmem:[%s410 + $0x390] sm:$0xff]
        %v4895 = vld [vmem:[%s410 + $0x398] sm:$0xff]
        %v4896 = vld [vmem:[%s410 + $0x3a0] sm:$0xff]
        %v4897 = vld [vmem:[%s410 + $0x3a8] sm:$0xff]
        %v4898 = vld [vmem:[%s410 + $0x3b0] sm:$0xff]
        %v4899 = vld [vmem:[%s410 + $0x3b8] sm:$0xff]
        %v4900 = vld [vmem:[%s410 + $0x3c0] sm:$0xff]
        %v4901 = vld [vmem:[%s410 + $0x3c8] sm:$0xff]
        %v4902 = vld [vmem:[%s410 + $0x3d0] sm:$0xff]
        %v4903 = vld [vmem:[%s410 + $0x3d8] sm:$0xff]
        %v4904 = vld [vmem:[%s410 + $0x3e0] sm:$0xff]
        %v4905 = vld [vmem:[%s410 + $0x3e8] sm:$0xff]
        %v4906 = vld [vmem:[%s410 + $0x3f0] sm:$0xff]
        %v4907 = vld [vmem:[%s410 + $0x3f8] sm:$0xff]
        %v4908 = vld [vmem:[%s410 + $0x400] sm:$0xff]
        %v4909 = vld [vmem:[%s410 + $0x408] sm:$0xff]
        %v4910 = vld [vmem:[%s410 + $0x410] sm:$0xff]
        %v4911 = vld [vmem:[%s410 + $0x418] sm:$0xff]
        %v4912 = vld [vmem:[%s410 + $0x420] sm:$0xff]
        %v4913 = vld [vmem:[%s410 + $0x428] sm:$0xff]
        %v4914 = vld [vmem:[%s410 + $0x430] sm:$0xff]
        %v4915 = vld [vmem:[%s410 + $0x438] sm:$0xff]
        %v4916 = vld [vmem:[%s410 + $0x440] sm:$0xff]
        %v4917 = vld [vmem:[%s410 + $0x448] sm:$0xff]
        %v4918 = vld [vmem:[%s410 + $0x450] sm:$0xff]
        %v4919 = vld [vmem:[%s410 + $0x458] sm:$0xff]
        %v4920 = vld [vmem:[%s410 + $0x460] sm:$0xff]
        %v4921 = vld [vmem:[%s410 + $0x468] sm:$0xff]
        %v4922 = vld [vmem:[%s410 + $0x470] sm:$0xff]
        %v4923 = vld [vmem:[%s410 + $0x478] sm:$0xff]
        %v4924 = vld [vmem:[%s410 + $0x480] sm:$0xff]
        %v4925 = vld [vmem:[%s410 + $0x488] sm:$0xff]
        %v4926 = vld [vmem:[%s410 + $0x490] sm:$0xff]
        %v4927 = vld [vmem:[%s410 + $0x498] sm:$0xff]
        %v4928 = vld [vmem:[%s410 + $0x4a0] sm:$0xff]
        %v4929 = vld [vmem:[%s410 + $0x4a8] sm:$0xff]
        %v4930 = vld [vmem:[%s410 + $0x4b0] sm:$0xff]
        %v4931 = vld [vmem:[%s410 + $0x4b8] sm:$0xff]
        %v4932 = vld [vmem:[%s410 + $0x4c0] sm:$0xff]
        %v4933 = vld [vmem:[%s410 + $0x4c8] sm:$0xff]
        %v4934 = vld [vmem:[%s410 + $0x4d0] sm:$0xff]
        %v4935 = vld [vmem:[%s410 + $0x4d8] sm:$0xff]
        %v4936 = vld [vmem:[%s410 + $0x4e0] sm:$0xff]
        %v4937 = vld [vmem:[%s410 + $0x4e8] sm:$0xff]
        %v4938 = vld [vmem:[%s410 + $0x4f0] sm:$0xff]
        %v4939 = vld [vmem:[%s410 + $0x4f8] sm:$0xff]
        %v4940 = vld [vmem:[%s410 + $0x500] sm:$0xff]
        %v4941 = vld [vmem:[%s410 + $0x508] sm:$0xff]
        %v4942 = vld [vmem:[%s410 + $0x510] sm:$0xff]
        %v4943 = vld [vmem:[%s410 + $0x518] sm:$0xff]
        %v4944 = vld [vmem:[%s410 + $0x520] sm:$0xff]
        %v4945 = vld [vmem:[%s410 + $0x528] sm:$0xff]
        %v4946 = vld [vmem:[%s410 + $0x530] sm:$0xff]
        %v4947 = vld [vmem:[%s410 + $0x538] sm:$0xff]
        %v4948 = vld [vmem:[%s410 + $0x540] sm:$0xff]
        %v4949 = vld [vmem:[%s410 + $0x548] sm:$0xff]
        %v4950 = vld [vmem:[%s410 + $0x550] sm:$0xff]
        %v4951 = vld [vmem:[%s410 + $0x558] sm:$0xff]
        %v4952 = vld [vmem:[%s410 + $0x560] sm:$0xff]
        %v4953 = vld [vmem:[%s410 + $0x568] sm:$0xff]
        %v4954 = vld [vmem:[%s410 + $0x570] sm:$0xff]
        %v4955 = vld [vmem:[%s410 + $0x578] sm:$0xff]
        %v4956 = vld [vmem:[%s410 + $0x580] sm:$0xff]
        %v4957 = vld [vmem:[%s410 + $0x588] sm:$0xff]
        %v4958 = vld [vmem:[%s410 + $0x590] sm:$0xff]
        %v4959 = vld [vmem:[%s410 + $0x598] sm:$0xff]
        %v4960 = vld [vmem:[%s410 + $0x5a0] sm:$0xff]
        %v4961 = vld [vmem:[%s410 + $0x5a8] sm:$0xff]
        %v4962 = vld [vmem:[%s410 + $0x5b0] sm:$0xff]
        %v4963 = vld [vmem:[%s410 + $0x5b8] sm:$0xff]
        %v4964 = vld [vmem:[%s410 + $0x5c0] sm:$0xff]
        %v4965 = vld [vmem:[%s410 + $0x5c8] sm:$0xff]
        %v4966 = vld [vmem:[%s410 + $0x5d0] sm:$0xff]
        %v4967 = vld [vmem:[%s410 + $0x5d8] sm:$0xff]
        %v4968 = vld [vmem:[%s410 + $0x5e0] sm:$0xff]
        %v4969 = vld [vmem:[%s410 + $0x5e8] sm:$0xff]
        %v4970 = vld [vmem:[%s410 + $0x5f0] sm:$0xff]
        %v4971 = vld [vmem:[%s410 + $0x5f8] sm:$0xff]
        %v4972 = vld [vmem:[%s410 + $0x600] sm:$0xff]
        %v4973 = vld [vmem:[%s410 + $0x608] sm:$0xff]
        %v4974 = vld [vmem:[%s410 + $0x610] sm:$0xff]
        %v4975 = vld [vmem:[%s410 + $0x618] sm:$0xff]
        %v4976 = vld [vmem:[%s410 + $0x620] sm:$0xff]
        %v4977 = vld [vmem:[%s410 + $0x628] sm:$0xff]
        %v4978 = vld [vmem:[%s410 + $0x630] sm:$0xff]
        %v4979 = vld [vmem:[%s410 + $0x638] sm:$0xff]
        %v4980 = vld [vmem:[%s410 + $0x640] sm:$0xff]
        %v4981 = vld [vmem:[%s410 + $0x648] sm:$0xff]
        %v4982 = vld [vmem:[%s410 + $0x650] sm:$0xff]
        %v4983 = vld [vmem:[%s410 + $0x658] sm:$0xff]
        %v4984 = vld [vmem:[%s410 + $0x660] sm:$0xff]
        %v4985 = vld [vmem:[%s410 + $0x668] sm:$0xff]
        %v4986 = vld [vmem:[%s410 + $0x670] sm:$0xff]
        %v4987 = vld [vmem:[%s410 + $0x678] sm:$0xff]
        %v4988 = vld [vmem:[%s410 + $0x680] sm:$0xff]
        %v4989 = vld [vmem:[%s410 + $0x688] sm:$0xff]
        %v4990 = vld [vmem:[%s410 + $0x690] sm:$0xff]
        %v4991 = vld [vmem:[%s410 + $0x698] sm:$0xff]
        %v4992 = vld [vmem:[%s410 + $0x6a0] sm:$0xff]
        %v4993 = vld [vmem:[%s410 + $0x6a8] sm:$0xff]
        %v4994 = vld [vmem:[%s410 + $0x6b0] sm:$0xff]
        %v4995 = vld [vmem:[%s410 + $0x6b8] sm:$0xff]
        %v4996 = vld [vmem:[%s410 + $0x6c0] sm:$0xff]
        %v4997 = vld [vmem:[%s410 + $0x6c8] sm:$0xff]
        %v4998 = vld [vmem:[%s410 + $0x6d0] sm:$0xff]
        %v4999 = vld [vmem:[%s410 + $0x6d8] sm:$0xff]
        %v5000 = vld [vmem:[%s410 + $0x6e0] sm:$0xff]
        %v5001 = vld [vmem:[%s410 + $0x6e8] sm:$0xff]
        %v5002 = vld [vmem:[%s410 + $0x6f0] sm:$0xff]
        %v5003 = vld [vmem:[%s410 + $0x6f8] sm:$0xff]
        %v5004 = vld [vmem:[%s410 + $0x700] sm:$0xff]
        %v5005 = vld [vmem:[%s410 + $0x708] sm:$0xff]
        %v5006 = vld [vmem:[%s410 + $0x710] sm:$0xff]
        %v5007 = vld [vmem:[%s410 + $0x718] sm:$0xff]
        %v5008 = vld [vmem:[%s410 + $0x720] sm:$0xff]
        %v5009 = vld [vmem:[%s410 + $0x728] sm:$0xff]
        %v5010 = vld [vmem:[%s410 + $0x730] sm:$0xff]
        %v5011 = vld [vmem:[%s410 + $0x738] sm:$0xff]
        %v5012 = vld [vmem:[%s410 + $0x740] sm:$0xff]
        %v5013 = vld [vmem:[%s410 + $0x748] sm:$0xff]
        %v5014 = vld [vmem:[%s410 + $0x750] sm:$0xff]
        %v5015 = vld [vmem:[%s410 + $0x758] sm:$0xff]
        %v5016 = vld [vmem:[%s410 + $0x760] sm:$0xff]
        %v5017 = vld [vmem:[%s410 + $0x768] sm:$0xff]
        %v5018 = vld [vmem:[%s410 + $0x770] sm:$0xff]
        %v5019 = vld [vmem:[%s410 + $0x778] sm:$0xff]
        %v5020 = vld [vmem:[%s410 + $0x780] sm:$0xff]
        %v5021 = vld [vmem:[%s410 + $0x788] sm:$0xff]
        %v5022 = vld [vmem:[%s410 + $0x790] sm:$0xff]
        %v5023 = vld [vmem:[%s410 + $0x798] sm:$0xff]
        %v5024 = vld [vmem:[%s410 + $0x7a0] sm:$0xff]
        %v5025 = vld [vmem:[%s410 + $0x7a8] sm:$0xff]
        %v5026 = vld [vmem:[%s410 + $0x7b0] sm:$0xff]
        %v5027 = vld [vmem:[%s410 + $0x7b8] sm:$0xff]
        %v5028 = vld [vmem:[%s410 + $0x7c0] sm:$0xff]
        %v5029 = vld [vmem:[%s410 + $0x7c8] sm:$0xff]
        %v5030 = vld [vmem:[%s410 + $0x7d0] sm:$0xff]
        %v5031 = vld [vmem:[%s410 + $0x7d8] sm:$0xff]
        %v5032 = vld [vmem:[%s410 + $0x7e0] sm:$0xff]
        %v5033 = vld [vmem:[%s410 + $0x7e8] sm:$0xff]
        %v5034 = vld [vmem:[%s410 + $0x7f0] sm:$0xff]
        %v5035 = vld [vmem:[%s410 + $0x7f8] sm:$0xff]
        %v5036 = vld [vmem:[%s410 + $0x800] sm:$0xff]
        %v5037 = vld [vmem:[%s410 + $0x808] sm:$0xff]
        %v5038 = vld [vmem:[%s410 + $0x810] sm:$0xff]
        %v5039 = vld [vmem:[%s410 + $0x818] sm:$0xff]
        %v5040 = vld [vmem:[%s410 + $0x820] sm:$0xff]
        %v5041 = vld [vmem:[%s410 + $0x828] sm:$0xff]
        %v5042 = vld [vmem:[%s410 + $0x830] sm:$0xff]
        %v5043 = vld [vmem:[%s410 + $0x838] sm:$0xff]
        %v5044 = vld [vmem:[%s410 + $0x840] sm:$0xff]
        %v5045 = vld [vmem:[%s410 + $0x848] sm:$0xff]
        %v5046 = vld [vmem:[%s410 + $0x850] sm:$0xff]
        %v5047 = vld [vmem:[%s410 + $0x858] sm:$0xff]
        %v5048 = vld [vmem:[%s410 + $0x860] sm:$0xff]
        %v5049 = vld [vmem:[%s410 + $0x868] sm:$0xff]
        %v5050 = vld [vmem:[%s410 + $0x870] sm:$0xff]
        %v5051 = vld [vmem:[%s410 + $0x878] sm:$0xff]
        %v5052 = vld [vmem:[%s410 + $0x880] sm:$0xff]
        %v5053 = vld [vmem:[%s410 + $0x888] sm:$0xff]
        %v5054 = vld [vmem:[%s410 + $0x890] sm:$0xff]
        %v5055 = vld [vmem:[%s410 + $0x898] sm:$0xff]
        %v5056 = vld [vmem:[%s410 + $0x8a0] sm:$0xff]
        %v5057 = vld [vmem:[%s410 + $0x8a8] sm:$0xff]
        %v5058 = vld [vmem:[%s410 + $0x8b0] sm:$0xff]
        %v5059 = vld [vmem:[%s410 + $0x8b8] sm:$0xff]
        %v5060 = vld [vmem:[%s410 + $0x8c0] sm:$0xff]
        %v5061 = vld [vmem:[%s410 + $0x8c8] sm:$0xff]
        %v5062 = vld [vmem:[%s410 + $0x8d0] sm:$0xff]
        %v5063 = vld [vmem:[%s410 + $0x8d8] sm:$0xff]
        %v5064 = vld [vmem:[%s410 + $0x8e0] sm:$0xff]
        %v5065 = vld [vmem:[%s410 + $0x8e8] sm:$0xff]
        %v5066 = vld [vmem:[%s410 + $0x8f0] sm:$0xff]
        %v5067 = vld [vmem:[%s410 + $0x8f8] sm:$0xff]
        %v5068 = vld [vmem:[%s410 + $0x900] sm:$0xff]
        %v5069 = vld [vmem:[%s410 + $0x908] sm:$0xff]
        %v5070 = vld [vmem:[%s410 + $0x910] sm:$0xff]
        %v5071 = vld [vmem:[%s410 + $0x918] sm:$0xff]
        %v5072 = vld [vmem:[%s410 + $0x920] sm:$0xff]
        %v5073 = vld [vmem:[%s410 + $0x928] sm:$0xff]
        %v5074 = vld [vmem:[%s410 + $0x930] sm:$0xff]
        %v5075 = vld [vmem:[%s410 + $0x938] sm:$0xff]
        %v5076 = vld [vmem:[%s410 + $0x940] sm:$0xff]
        %v5077 = vld [vmem:[%s410 + $0x948] sm:$0xff]
        %v5078 = vld [vmem:[%s410 + $0x950] sm:$0xff]
        %v5079 = vld [vmem:[%s410 + $0x958] sm:$0xff]
        %v5080 = vld [vmem:[%s410 + $0x960] sm:$0xff]
        %v5081 = vld [vmem:[%s410 + $0x968] sm:$0xff]
        %v5082 = vld [vmem:[%s410 + $0x970] sm:$0xff]
        %v5083 = vld [vmem:[%s410 + $0x978] sm:$0xff]
        %v5084 = vld [vmem:[%s410 + $0x980] sm:$0xff]
        %v5085 = vld [vmem:[%s410 + $0x988] sm:$0xff]
        %v5086 = vld [vmem:[%s410 + $0x990] sm:$0xff]
        %v5087 = vld [vmem:[%s410 + $0x998] sm:$0xff]
        %v5088 = vld [vmem:[%s410 + $0x9a0] sm:$0xff]
        %v5089 = vld [vmem:[%s410 + $0x9a8] sm:$0xff]
        %v5090 = vld [vmem:[%s410 + $0x9b0] sm:$0xff]
        %v5091 = vld [vmem:[%s410 + $0x9b8] sm:$0xff]
        %v5092 = vld [vmem:[%s410 + $0x9c0] sm:$0xff]
        %v5093 = vld [vmem:[%s410 + $0x9c8] sm:$0xff]
        %v5094 = vld [vmem:[%s410 + $0x9d0] sm:$0xff]
        %v5095 = vld [vmem:[%s410 + $0x9d8] sm:$0xff]
        %v5096 = vld [vmem:[%s410 + $0x9e0] sm:$0xff]
        %v5097 = vld [vmem:[%s410 + $0x9e8] sm:$0xff]
        %v5098 = vld [vmem:[%s410 + $0x9f0] sm:$0xff]
        %v5099 = vld [vmem:[%s410 + $0x9f8] sm:$0xff]
        %v5100 = vld [vmem:[%s410 + $0xa00] sm:$0xff]
        %v5101 = vld [vmem:[%s410 + $0xa08] sm:$0xff]
        %v5102 = vld [vmem:[%s410 + $0xa10] sm:$0xff]
        %v5103 = vld [vmem:[%s410 + $0xa18] sm:$0xff]
        %v5104 = vld [vmem:[%s410 + $0xa20] sm:$0xff]
        %v5105 = vld [vmem:[%s410 + $0xa28] sm:$0xff]
        %v5106 = vld [vmem:[%s410 + $0xa30] sm:$0xff]
        %v5107 = vld [vmem:[%s410 + $0xa38] sm:$0xff]
        %v5108 = vld [vmem:[%s410 + $0xa40] sm:$0xff]
        %v5109 = vld [vmem:[%s410 + $0xa48] sm:$0xff]
        %v5110 = vld [vmem:[%s410 + $0xa50] sm:$0xff]
        %v5111 = vld [vmem:[%s410 + $0xa58] sm:$0xff]
        %v5112 = vld [vmem:[%s410 + $0xa60] sm:$0xff]
        %v5113 = vld [vmem:[%s410 + $0xa68] sm:$0xff]
        %v5114 = vld [vmem:[%s410 + $0xa70] sm:$0xff]
        %v5115 = vld [vmem:[%s410 + $0xa78] sm:$0xff]
        %v5116 = vld [vmem:[%s410 + $0xa80] sm:$0xff]
        %v5117 = vld [vmem:[%s410 + $0xa88] sm:$0xff]
        %v5118 = vld [vmem:[%s410 + $0xa90] sm:$0xff]
        %v5119 = vld [vmem:[%s410 + $0xa98] sm:$0xff]
        %v5120 = vld [vmem:[%s410 + $0xaa0] sm:$0xff]
        %v5121 = vld [vmem:[%s410 + $0xaa8] sm:$0xff]
        %v5122 = vld [vmem:[%s410 + $0xab0] sm:$0xff]
        %v5123 = vld [vmem:[%s410 + $0xab8] sm:$0xff]
        %v5124 = vld [vmem:[%s410 + $0xac0] sm:$0xff]
        %v5125 = vld [vmem:[%s410 + $0xac8] sm:$0xff]
        %v5126 = vld [vmem:[%s410 + $0xad0] sm:$0xff]
        %v5127 = vld [vmem:[%s410 + $0xad8] sm:$0xff]
        %v5128 = vld [vmem:[%s410 + $0xae0] sm:$0xff]
        %v5129 = vld [vmem:[%s410 + $0xae8] sm:$0xff]
        %v5130 = vld [vmem:[%s410 + $0xaf0] sm:$0xff]
        %v5131 = vld [vmem:[%s410 + $0xaf8] sm:$0xff]
        %v5132 = vld [vmem:[%s410 + $0xb00] sm:$0xff]
        %v5133 = vld [vmem:[%s410 + $0xb08] sm:$0xff]
        %v5134 = vld [vmem:[%s410 + $0xb10] sm:$0xff]
        %v5135 = vld [vmem:[%s410 + $0xb18] sm:$0xff]
        %v5136 = vld [vmem:[%s410 + $0xb20] sm:$0xff]
        %v5137 = vld [vmem:[%s410 + $0xb28] sm:$0xff]
        %v5138 = vld [vmem:[%s410 + $0xb30] sm:$0xff]
        %v5139 = vld [vmem:[%s410 + $0xb38] sm:$0xff]
        %v5140 = vld [vmem:[%s410 + $0xb40] sm:$0xff]
        %v5141 = vld [vmem:[%s410 + $0xb48] sm:$0xff]
        %v5142 = vld [vmem:[%s410 + $0xb50] sm:$0xff]
        %v5143 = vld [vmem:[%s410 + $0xb58] sm:$0xff]
        %v5144 = vld [vmem:[%s410 + $0xb60] sm:$0xff]
        %v5145 = vld [vmem:[%s410 + $0xb68] sm:$0xff]
        %v5146 = vld [vmem:[%s410 + $0xb70] sm:$0xff]
        %v5147 = vld [vmem:[%s410 + $0xb78] sm:$0xff]
        %v5148 = vld [vmem:[%s410 + $0xb80] sm:$0xff]
        %v5149 = vld [vmem:[%s410 + $0xb88] sm:$0xff]
        %v5150 = vld [vmem:[%s410 + $0xb90] sm:$0xff]
        %v5151 = vld [vmem:[%s410 + $0xb98] sm:$0xff]
        %v5152 = vld [vmem:[%s410 + $0xba0] sm:$0xff]
        %v5153 = vld [vmem:[%s410 + $0xba8] sm:$0xff]
        %v5154 = vld [vmem:[%s410 + $0xbb0] sm:$0xff]
        %v5155 = vld [vmem:[%s410 + $0xbb8] sm:$0xff]
        %v5156 = vld [vmem:[%s410 + $0xbc0] sm:$0xff]
        %v5157 = vld [vmem:[%s410 + $0xbc8] sm:$0xff]
        %v5158 = vld [vmem:[%s410 + $0xbd0] sm:$0xff]
        %v5159 = vld [vmem:[%s410 + $0xbd8] sm:$0xff]
        %v5160 = vld [vmem:[%s410 + $0xbe0] sm:$0xff]
        %v5161 = vld [vmem:[%s410 + $0xbe8] sm:$0xff]
        %v5162 = vld [vmem:[%s410 + $0xbf0] sm:$0xff]
        %v5163 = vld [vmem:[%s410 + $0xbf8] sm:$0xff]
        %v5164 = vld [vmem:[%s410 + $0xc00] sm:$0xff]
        %v5165 = vld [vmem:[%s410 + $0xc08] sm:$0xff]
        %v5166 = vld [vmem:[%s410 + $0xc10] sm:$0xff]
        %v5167 = vld [vmem:[%s410 + $0xc18] sm:$0xff]
        %v5168 = vld [vmem:[%s410 + $0xc20] sm:$0xff]
        %v5169 = vld [vmem:[%s410 + $0xc28] sm:$0xff]
        %v5170 = vld [vmem:[%s410 + $0xc30] sm:$0xff]
        %v5171 = vld [vmem:[%s410 + $0xc38] sm:$0xff]
        %v5172 = vld [vmem:[%s410 + $0xc40] sm:$0xff]
        %v5173 = vld [vmem:[%s410 + $0xc48] sm:$0xff]
        %v5174 = vld [vmem:[%s410 + $0xc50] sm:$0xff]
        %v5175 = vld [vmem:[%s410 + $0xc58] sm:$0xff]
        %v5176 = vld [vmem:[%s410 + $0xc60] sm:$0xff]
        %v5177 = vld [vmem:[%s410 + $0xc68] sm:$0xff]
        %v5178 = vld [vmem:[%s410 + $0xc70] sm:$0xff]
        %v5179 = vld [vmem:[%s410 + $0xc78] sm:$0xff]
        %v5180 = vld [vmem:[%s410 + $0xc80] sm:$0xff]
        %v5181 = vld [vmem:[%s410 + $0xc88] sm:$0xff]
        %v5182 = vld [vmem:[%s410 + $0xc90] sm:$0xff]
        %v5183 = vld [vmem:[%s410 + $0xc98] sm:$0xff]
        %v5184 = vld [vmem:[%s410 + $0xca0] sm:$0xff]
        %v5185 = vld [vmem:[%s410 + $0xca8] sm:$0xff]
        %v5186 = vld [vmem:[%s410 + $0xcb0] sm:$0xff]
        %v5187 = vld [vmem:[%s410 + $0xcb8] sm:$0xff]
        %v5188 = vld [vmem:[%s410 + $0xcc0] sm:$0xff]
        %v5189 = vld [vmem:[%s410 + $0xcc8] sm:$0xff]
        %v5190 = vld [vmem:[%s410 + $0xcd0] sm:$0xff]
        %v5191 = vld [vmem:[%s410 + $0xcd8] sm:$0xff]
        %v5192 = vld [vmem:[%s410 + $0xce0] sm:$0xff]
        %v5193 = vld [vmem:[%s410 + $0xce8] sm:$0xff]
        %v5194 = vld [vmem:[%s410 + $0xcf0] sm:$0xff]
        %v5195 = vld [vmem:[%s410 + $0xcf8] sm:$0xff]
        %v5196 = vld [vmem:[%s410 + $0xd00] sm:$0xff]
        %v5197 = vld [vmem:[%s410 + $0xd08] sm:$0xff]
        %v5198 = vld [vmem:[%s410 + $0xd10] sm:$0xff]
        %v5199 = vld [vmem:[%s410 + $0xd18] sm:$0xff]
        %v5200 = vld [vmem:[%s410 + $0xd20] sm:$0xff]
        %v5201 = vld [vmem:[%s410 + $0xd28] sm:$0xff]
        %v5202 = vld [vmem:[%s410 + $0xd30] sm:$0xff]
        %v5203 = vld [vmem:[%s410 + $0xd38] sm:$0xff]
        %v5204 = vld [vmem:[%s410 + $0xd40] sm:$0xff]
        %v5205 = vld [vmem:[%s410 + $0xd48] sm:$0xff]
        %v5206 = vld [vmem:[%s410 + $0xd50] sm:$0xff]
        %v5207 = vld [vmem:[%s410 + $0xd58] sm:$0xff]
        %v5208 = vld [vmem:[%s410 + $0xd60] sm:$0xff]
        %v5209 = vld [vmem:[%s410 + $0xd68] sm:$0xff]
        %v5210 = vld [vmem:[%s410 + $0xd70] sm:$0xff]
        %v5211 = vld [vmem:[%s410 + $0xd78] sm:$0xff]
        %v5212 = vld [vmem:[%s410 + $0xd80] sm:$0xff]
        %v5213 = vld [vmem:[%s410 + $0xd88] sm:$0xff]
        %v5214 = vld [vmem:[%s410 + $0xd90] sm:$0xff]
        %v5215 = vld [vmem:[%s410 + $0xd98] sm:$0xff]
        %v5216 = vld [vmem:[%s410 + $0xda0] sm:$0xff]
        %v5217 = vld [vmem:[%s410 + $0xda8] sm:$0xff]
        %v5218 = vld [vmem:[%s410 + $0xdb0] sm:$0xff]
        %v5219 = vld [vmem:[%s410 + $0xdb8] sm:$0xff]
        %v5220 = vld [vmem:[%s410 + $0xdc0] sm:$0xff]
        %v5221 = vld [vmem:[%s410 + $0xdc8] sm:$0xff]
        %v5222 = vld [vmem:[%s410 + $0xdd0] sm:$0xff]
        %v5223 = vld [vmem:[%s410 + $0xdd8] sm:$0xff]
        %v5224 = vld [vmem:[%s410 + $0xde0] sm:$0xff]
        %v5225 = vld [vmem:[%s410 + $0xde8] sm:$0xff]
        %v5226 = vld [vmem:[%s410 + $0xdf0] sm:$0xff]
        %v5227 = vld [vmem:[%s410 + $0xdf8] sm:$0xff]
        %v5228 = vld [vmem:[%s410 + $0xe00] sm:$0xff]
        %v5229 = vld [vmem:[%s410 + $0xe08] sm:$0xff]
        %v5230 = vld [vmem:[%s410 + $0xe10] sm:$0xff]
        %v5231 = vld [vmem:[%s410 + $0xe18] sm:$0xff]
        %v5232 = vld [vmem:[%s410 + $0xe20] sm:$0xff]
        %v5233 = vld [vmem:[%s410 + $0xe28] sm:$0xff]
        %v5234 = vld [vmem:[%s410 + $0xe30] sm:$0xff]
        %v5235 = vld [vmem:[%s410 + $0xe38] sm:$0xff]
        %v5236 = vld [vmem:[%s410 + $0xe40] sm:$0xff]
        %v5237 = vld [vmem:[%s410 + $0xe48] sm:$0xff]
        %v5238 = vld [vmem:[%s410 + $0xe50] sm:$0xff]
        %v5239 = vld [vmem:[%s410 + $0xe58] sm:$0xff]
        %v5240 = vld [vmem:[%s410 + $0xe60] sm:$0xff]
        %v5241 = vld [vmem:[%s410 + $0xe68] sm:$0xff]
        %v5242 = vld [vmem:[%s410 + $0xe70] sm:$0xff]
        %v5243 = vld [vmem:[%s410 + $0xe78] sm:$0xff]
        %v5244 = vld [vmem:[%s410 + $0xe80] sm:$0xff]
        %v5245 = vld [vmem:[%s410 + $0xe88] sm:$0xff]
        %v5246 = vld [vmem:[%s410 + $0xe90] sm:$0xff]
        %v5247 = vld [vmem:[%s410 + $0xe98] sm:$0xff]
        %v5248 = vld [vmem:[%s410 + $0xea0] sm:$0xff]
        %v5249 = vld [vmem:[%s410 + $0xea8] sm:$0xff]
        %v5250 = vld [vmem:[%s410 + $0xeb0] sm:$0xff]
        %v5251 = vld [vmem:[%s410 + $0xeb8] sm:$0xff]
        %v5252 = vld [vmem:[%s410 + $0xec0] sm:$0xff]
        %v5253 = vld [vmem:[%s410 + $0xec8] sm:$0xff]
        %v5254 = vld [vmem:[%s410 + $0xed0] sm:$0xff]
        %v5255 = vld [vmem:[%s410 + $0xed8] sm:$0xff]
        %v5256 = vld [vmem:[%s410 + $0xee0] sm:$0xff]
        %v5257 = vld [vmem:[%s410 + $0xee8] sm:$0xff]
        %v5258 = vld [vmem:[%s410 + $0xef0] sm:$0xff]
        %v5259 = vld [vmem:[%s410 + $0xef8] sm:$0xff]
        %v5260 = vld [vmem:[%s410 + $0xf00] sm:$0xff]
        %v5261 = vld [vmem:[%s410 + $0xf08] sm:$0xff]
        %v5262 = vld [vmem:[%s410 + $0xf10] sm:$0xff]
        %v5263 = vld [vmem:[%s410 + $0xf18] sm:$0xff]
        %v5264 = vld [vmem:[%s410 + $0xf20] sm:$0xff]
        %v5265 = vld [vmem:[%s410 + $0xf28] sm:$0xff]
        %v5266 = vld [vmem:[%s410 + $0xf30] sm:$0xff]
        %v5267 = vld [vmem:[%s410 + $0xf38] sm:$0xff]
        %v5268 = vld [vmem:[%s410 + $0xf40] sm:$0xff]
        %v5269 = vld [vmem:[%s410 + $0xf48] sm:$0xff]
        %v5270 = vld [vmem:[%s410 + $0xf50] sm:$0xff]
        %v5271 = vld [vmem:[%s410 + $0xf58] sm:$0xff]
        %v5272 = vld [vmem:[%s410 + $0xf60] sm:$0xff]
        %v5273 = vld [vmem:[%s410 + $0xf68] sm:$0xff]
        %v5274 = vld [vmem:[%s410 + $0xf70] sm:$0xff]
        %v5275 = vld [vmem:[%s410 + $0xf78] sm:$0xff]
        %v5276 = vld [vmem:[%s410 + $0xf80] sm:$0xff]
        %v5277 = vld [vmem:[%s410 + $0xf88] sm:$0xff]
        %v5278 = vld [vmem:[%s410 + $0xf90] sm:$0xff]
        %v5279 = vld [vmem:[%s410 + $0xf98] sm:$0xff]
        %v5280 = vld [vmem:[%s410 + $0xfa0] sm:$0xff]
        %v5281 = vld [vmem:[%s410 + $0xfa8] sm:$0xff]
        %v5282 = vld [vmem:[%s410 + $0xfb0] sm:$0xff]
        %v5283 = vld [vmem:[%s410 + $0xfb8] sm:$0xff]
        %v5284 = vld [vmem:[%s410 + $0xfc0] sm:$0xff]
        %v5285 = vld [vmem:[%s410 + $0xfc8] sm:$0xff]
        %v5286 = vld [vmem:[%s410 + $0xfd0] sm:$0xff]
        %v5287 = vld [vmem:[%s410 + $0xfd8] sm:$0xff]
        %v5288 = vld [vmem:[%s410 + $0xfe0] sm:$0xff]
        %v5289 = vld [vmem:[%s410 + $0xfe8] sm:$0xff]
        %v5290 = vld [vmem:[%s410 + $0xff0] sm:$0xff]
        %v5291 = vld [vmem:[%s410 + $0xff8] sm:$0xff]
        %v5292 = vpack.c.bf16 %v4760, %v4760
        %v5293 = vpack.c.bf16 %v4761, %v4761
        %v5294 = vpack.c.bf16 %v4762, %v4762
        %v5295 = vpack.c.bf16 %v4763, %v4763
        %v5296 = vpack.c.bf16 %v4764, %v4764
        %v5297 = vpack.c.bf16 %v4765, %v4765
        %v5298 = vpack.c.bf16 %v4766, %v4766
        %v5299 = vpack.c.bf16 %v4767, %v4767
        %v5300 = vpack.c.bf16 %v4768, %v4768
        %v5301 = vpack.c.bf16 %v4769, %v4769
        %v5302 = vpack.c.bf16 %v4770, %v4770
        %v5303 = vpack.c.bf16 %v4771, %v4771
        %v5304 = vpack.c.bf16 %v4772, %v4772
        %v5305 = vpack.c.bf16 %v4773, %v4773
        %v5306 = vpack.c.bf16 %v4774, %v4774
        %v5307 = vpack.c.bf16 %v4775, %v4775
        %v5820 = vunpack.c.l.b16 %v4780
        %v5821 = vunpack.c.h.b16 %v4780
        %v5822 = vunpack.c.l.b16 %v4781
        %v5823 = vunpack.c.h.b16 %v4781
        %v5824 = vunpack.c.l.b16 %v4782
        %v5825 = vunpack.c.h.b16 %v4782
        %v5826 = vunpack.c.l.b16 %v4783
        %v5827 = vunpack.c.h.b16 %v4783
        %v5828 = vunpack.c.l.b16 %v4784
        %v5829 = vunpack.c.h.b16 %v4784
        %v5830 = vunpack.c.l.b16 %v4785
        %v5831 = vunpack.c.h.b16 %v4785
        %v5832 = vunpack.c.l.b16 %v4786
        %v5833 = vunpack.c.h.b16 %v4786
        %v5834 = vunpack.c.l.b16 %v4787
        %v5835 = vunpack.c.h.b16 %v4787
        %v5836 = vunpack.c.l.b16 %v4788
        %v5837 = vunpack.c.h.b16 %v4788
        %v5838 = vunpack.c.l.b16 %v4789
        %v5839 = vunpack.c.h.b16 %v4789
        %v5840 = vunpack.c.l.b16 %v4790
        %v5841 = vunpack.c.h.b16 %v4790
        %v5842 = vunpack.c.l.b16 %v4791
        %v5843 = vunpack.c.h.b16 %v4791
        %v5844 = vunpack.c.l.b16 %v4792
        %v5845 = vunpack.c.h.b16 %v4792
        %v5846 = vunpack.c.l.b16 %v4793
        %v5847 = vunpack.c.h.b16 %v4793
        %v5848 = vunpack.c.l.b16 %v4794
        %v5849 = vunpack.c.h.b16 %v4794
        %v5850 = vunpack.c.l.b16 %v4795
        %v5851 = vunpack.c.h.b16 %v4795
        %v5852 = vunpack.c.l.b16 %v4796
        %v5853 = vunpack.c.h.b16 %v4796
        %v5854 = vunpack.c.l.b16 %v4797
        %v5855 = vunpack.c.h.b16 %v4797
        %v5856 = vunpack.c.l.b16 %v4798
        %v5857 = vunpack.c.h.b16 %v4798
        %v5858 = vunpack.c.l.b16 %v4799
        %v5859 = vunpack.c.h.b16 %v4799
        %v5860 = vunpack.c.l.b16 %v4800
        %v5861 = vunpack.c.h.b16 %v4800
        %v5862 = vunpack.c.l.b16 %v4801
        %v5863 = vunpack.c.h.b16 %v4801
        %v5864 = vunpack.c.l.b16 %v4802
        %v5865 = vunpack.c.h.b16 %v4802
        %v5866 = vunpack.c.l.b16 %v4803
        %v5867 = vunpack.c.h.b16 %v4803
        %v5868 = vunpack.c.l.b16 %v4804
        %v5869 = vunpack.c.h.b16 %v4804
        %v5870 = vunpack.c.l.b16 %v4805
        %v5871 = vunpack.c.h.b16 %v4805
        %v5872 = vunpack.c.l.b16 %v4806
        %v5873 = vunpack.c.h.b16 %v4806
        %v5874 = vunpack.c.l.b16 %v4807
        %v5875 = vunpack.c.h.b16 %v4807
        %v5876 = vunpack.c.l.b16 %v4808
        %v5877 = vunpack.c.h.b16 %v4808
        %v5878 = vunpack.c.l.b16 %v4809
        %v5879 = vunpack.c.h.b16 %v4809
        %v5880 = vunpack.c.l.b16 %v4810
        %v5881 = vunpack.c.h.b16 %v4810
        %v5882 = vunpack.c.l.b16 %v4811
        %v5883 = vunpack.c.h.b16 %v4811
        %v5884 = vunpack.c.l.b16 %v4812
        %v5885 = vunpack.c.h.b16 %v4812
        %v5886 = vunpack.c.l.b16 %v4813
        %v5887 = vunpack.c.h.b16 %v4813
        %v5888 = vunpack.c.l.b16 %v4814
        %v5889 = vunpack.c.h.b16 %v4814
        %v5890 = vunpack.c.l.b16 %v4815
        %v5891 = vunpack.c.h.b16 %v4815
        %v5892 = vunpack.c.l.b16 %v4816
        %v5893 = vunpack.c.h.b16 %v4816
        %v5894 = vunpack.c.l.b16 %v4817
        %v5895 = vunpack.c.h.b16 %v4817
        %v5896 = vunpack.c.l.b16 %v4818
        %v5897 = vunpack.c.h.b16 %v4818
        %v5898 = vunpack.c.l.b16 %v4819
        %v5899 = vunpack.c.h.b16 %v4819
        %v5900 = vunpack.c.l.b16 %v4820
        %v5901 = vunpack.c.h.b16 %v4820
        %v5902 = vunpack.c.l.b16 %v4821
        %v5903 = vunpack.c.h.b16 %v4821
        %v5904 = vunpack.c.l.b16 %v4822
        %v5905 = vunpack.c.h.b16 %v4822
        %v5906 = vunpack.c.l.b16 %v4823
        %v5907 = vunpack.c.h.b16 %v4823
        %v5908 = vunpack.c.l.b16 %v4824
        %v5909 = vunpack.c.h.b16 %v4824
        %v5910 = vunpack.c.l.b16 %v4825
        %v5911 = vunpack.c.h.b16 %v4825
        %v5912 = vunpack.c.l.b16 %v4826
        %v5913 = vunpack.c.h.b16 %v4826
        %v5914 = vunpack.c.l.b16 %v4827
        %v5915 = vunpack.c.h.b16 %v4827
        %v5916 = vunpack.c.l.b16 %v4828
        %v5917 = vunpack.c.h.b16 %v4828
        %v5918 = vunpack.c.l.b16 %v4829
        %v5919 = vunpack.c.h.b16 %v4829
        %v5920 = vunpack.c.l.b16 %v4830
        %v5921 = vunpack.c.h.b16 %v4830
        %v5922 = vunpack.c.l.b16 %v4831
        %v5923 = vunpack.c.h.b16 %v4831
        %v5924 = vunpack.c.l.b16 %v4832
        %v5925 = vunpack.c.h.b16 %v4832
        %v5926 = vunpack.c.l.b16 %v4833
        %v5927 = vunpack.c.h.b16 %v4833
        %v5928 = vunpack.c.l.b16 %v4834
        %v5929 = vunpack.c.h.b16 %v4834
        %v5930 = vunpack.c.l.b16 %v4835
        %v5931 = vunpack.c.h.b16 %v4835
        %v5932 = vunpack.c.l.b16 %v4836
        %v5933 = vunpack.c.h.b16 %v4836
        %v5934 = vunpack.c.l.b16 %v4837
        %v5935 = vunpack.c.h.b16 %v4837
        %v5936 = vunpack.c.l.b16 %v4838
        %v5937 = vunpack.c.h.b16 %v4838
        %v5938 = vunpack.c.l.b16 %v4839
        %v5939 = vunpack.c.h.b16 %v4839
        %v5940 = vunpack.c.l.b16 %v4840
        %v5941 = vunpack.c.h.b16 %v4840
        %v5942 = vunpack.c.l.b16 %v4841
        %v5943 = vunpack.c.h.b16 %v4841
        %v5944 = vunpack.c.l.b16 %v4842
        %v5945 = vunpack.c.h.b16 %v4842
        %v5946 = vunpack.c.l.b16 %v4843
        %v5947 = vunpack.c.h.b16 %v4843
        %v5948 = vunpack.c.l.b16 %v4844
        %v5949 = vunpack.c.h.b16 %v4844
        %v5950 = vunpack.c.l.b16 %v4845
        %v5951 = vunpack.c.h.b16 %v4845
        %v5952 = vunpack.c.l.b16 %v4846
        %v5953 = vunpack.c.h.b16 %v4846
        %v5954 = vunpack.c.l.b16 %v4847
        %v5955 = vunpack.c.h.b16 %v4847
        %v5956 = vunpack.c.l.b16 %v4848
        %v5957 = vunpack.c.h.b16 %v4848
        %v5958 = vunpack.c.l.b16 %v4849
        %v5959 = vunpack.c.h.b16 %v4849
        %v5960 = vunpack.c.l.b16 %v4850
        %v5961 = vunpack.c.h.b16 %v4850
        %v5962 = vunpack.c.l.b16 %v4851
        %v5963 = vunpack.c.h.b16 %v4851
        %v5964 = vunpack.c.l.b16 %v4852
        %v5965 = vunpack.c.h.b16 %v4852
        %v5966 = vunpack.c.l.b16 %v4853
        %v5967 = vunpack.c.h.b16 %v4853
        %v5968 = vunpack.c.l.b16 %v4854
        %v5969 = vunpack.c.h.b16 %v4854
        %v5970 = vunpack.c.l.b16 %v4855
        %v5971 = vunpack.c.h.b16 %v4855
        %v5972 = vunpack.c.l.b16 %v4856
        %v5973 = vunpack.c.h.b16 %v4856
        %v5974 = vunpack.c.l.b16 %v4857
        %v5975 = vunpack.c.h.b16 %v4857
        %v5976 = vunpack.c.l.b16 %v4858
        %v5977 = vunpack.c.h.b16 %v4858
        %v5978 = vunpack.c.l.b16 %v4859
        %v5979 = vunpack.c.h.b16 %v4859
        %v5980 = vunpack.c.l.b16 %v4860
        %v5981 = vunpack.c.h.b16 %v4860
        %v5982 = vunpack.c.l.b16 %v4861
        %v5983 = vunpack.c.h.b16 %v4861
        %v5984 = vunpack.c.l.b16 %v4862
        %v5985 = vunpack.c.h.b16 %v4862
        %v5986 = vunpack.c.l.b16 %v4863
        %v5987 = vunpack.c.h.b16 %v4863
        %v5988 = vunpack.c.l.b16 %v4864
        %v5989 = vunpack.c.h.b16 %v4864
        %v5990 = vunpack.c.l.b16 %v4865
        %v5991 = vunpack.c.h.b16 %v4865
        %v5992 = vunpack.c.l.b16 %v4866
        %v5993 = vunpack.c.h.b16 %v4866
        %v5994 = vunpack.c.l.b16 %v4867
        %v5995 = vunpack.c.h.b16 %v4867
        %v5996 = vunpack.c.l.b16 %v4868
        %v5997 = vunpack.c.h.b16 %v4868
        %v5998 = vunpack.c.l.b16 %v4869
        %v5999 = vunpack.c.h.b16 %v4869
        %v6000 = vunpack.c.l.b16 %v4870
        %v6001 = vunpack.c.h.b16 %v4870
        %v6002 = vunpack.c.l.b16 %v4871
        %v6003 = vunpack.c.h.b16 %v4871
        %v6004 = vunpack.c.l.b16 %v4872
        %v6005 = vunpack.c.h.b16 %v4872
        %v6006 = vunpack.c.l.b16 %v4873
        %v6007 = vunpack.c.h.b16 %v4873
        %v6008 = vunpack.c.l.b16 %v4874
        %v6009 = vunpack.c.h.b16 %v4874
        %v6010 = vunpack.c.l.b16 %v4875
        %v6011 = vunpack.c.h.b16 %v4875
        %v6012 = vunpack.c.l.b16 %v4876
        %v6013 = vunpack.c.h.b16 %v4876
        %v6014 = vunpack.c.l.b16 %v4877
        %v6015 = vunpack.c.h.b16 %v4877
        %v6016 = vunpack.c.l.b16 %v4878
        %v6017 = vunpack.c.h.b16 %v4878
        %v6018 = vunpack.c.l.b16 %v4879
        %v6019 = vunpack.c.h.b16 %v4879
        %v6020 = vunpack.c.l.b16 %v4880
        %v6021 = vunpack.c.h.b16 %v4880
        %v6022 = vunpack.c.l.b16 %v4881
        %v6023 = vunpack.c.h.b16 %v4881
        %v6024 = vunpack.c.l.b16 %v4882
        %v6025 = vunpack.c.h.b16 %v4882
        %v6026 = vunpack.c.l.b16 %v4883
        %v6027 = vunpack.c.h.b16 %v4883
        %v6028 = vunpack.c.l.b16 %v4884
        %v6029 = vunpack.c.h.b16 %v4884
        %v6030 = vunpack.c.l.b16 %v4885
        %v6031 = vunpack.c.h.b16 %v4885
        %v6032 = vunpack.c.l.b16 %v4886
        %v6033 = vunpack.c.h.b16 %v4886
        %v6034 = vunpack.c.l.b16 %v4887
        %v6035 = vunpack.c.h.b16 %v4887
        %v6036 = vunpack.c.l.b16 %v4888
        %v6037 = vunpack.c.h.b16 %v4888
        %v6038 = vunpack.c.l.b16 %v4889
        %v6039 = vunpack.c.h.b16 %v4889
        %v6040 = vunpack.c.l.b16 %v4890
        %v6041 = vunpack.c.h.b16 %v4890
        %v6042 = vunpack.c.l.b16 %v4891
        %v6043 = vunpack.c.h.b16 %v4891
        %v6044 = vunpack.c.l.b16 %v4892
        %v6045 = vunpack.c.h.b16 %v4892
        %v6046 = vunpack.c.l.b16 %v4893
        %v6047 = vunpack.c.h.b16 %v4893
        %v6048 = vunpack.c.l.b16 %v4894
        %v6049 = vunpack.c.h.b16 %v4894
        %v6050 = vunpack.c.l.b16 %v4895
        %v6051 = vunpack.c.h.b16 %v4895
        %v6052 = vunpack.c.l.b16 %v4896
        %v6053 = vunpack.c.h.b16 %v4896
        %v6054 = vunpack.c.l.b16 %v4897
        %v6055 = vunpack.c.h.b16 %v4897
        %v6056 = vunpack.c.l.b16 %v4898
        %v6057 = vunpack.c.h.b16 %v4898
        %v6058 = vunpack.c.l.b16 %v4899
        %v6059 = vunpack.c.h.b16 %v4899
        %v6060 = vunpack.c.l.b16 %v4900
        %v6061 = vunpack.c.h.b16 %v4900
        %v6062 = vunpack.c.l.b16 %v4901
        %v6063 = vunpack.c.h.b16 %v4901
        %v6064 = vunpack.c.l.b16 %v4902
        %v6065 = vunpack.c.h.b16 %v4902
        %v6066 = vunpack.c.l.b16 %v4903
        %v6067 = vunpack.c.h.b16 %v4903
        %v6068 = vunpack.c.l.b16 %v4904
        %v6069 = vunpack.c.h.b16 %v4904
        %v6070 = vunpack.c.l.b16 %v4905
        %v6071 = vunpack.c.h.b16 %v4905
        %v6072 = vunpack.c.l.b16 %v4906
        %v6073 = vunpack.c.h.b16 %v4906
        %v6074 = vunpack.c.l.b16 %v4907
        %v6075 = vunpack.c.h.b16 %v4907
        %v6076 = vunpack.c.l.b16 %v4908
        %v6077 = vunpack.c.h.b16 %v4908
        %v6078 = vunpack.c.l.b16 %v4909
        %v6079 = vunpack.c.h.b16 %v4909
        %v6080 = vunpack.c.l.b16 %v4910
        %v6081 = vunpack.c.h.b16 %v4910
        %v6082 = vunpack.c.l.b16 %v4911
        %v6083 = vunpack.c.h.b16 %v4911
        %v6084 = vunpack.c.l.b16 %v4912
        %v6085 = vunpack.c.h.b16 %v4912
        %v6086 = vunpack.c.l.b16 %v4913
        %v6087 = vunpack.c.h.b16 %v4913
        %v6088 = vunpack.c.l.b16 %v4914
        %v6089 = vunpack.c.h.b16 %v4914
        %v6090 = vunpack.c.l.b16 %v4915
        %v6091 = vunpack.c.h.b16 %v4915
        %v6092 = vunpack.c.l.b16 %v4916
        %v6093 = vunpack.c.h.b16 %v4916
        %v6094 = vunpack.c.l.b16 %v4917
        %v6095 = vunpack.c.h.b16 %v4917
        %v6096 = vunpack.c.l.b16 %v4918
        %v6097 = vunpack.c.h.b16 %v4918
        %v6098 = vunpack.c.l.b16 %v4919
        %v6099 = vunpack.c.h.b16 %v4919
        %v6100 = vunpack.c.l.b16 %v4920
        %v6101 = vunpack.c.h.b16 %v4920
        %v6102 = vunpack.c.l.b16 %v4921
        %v6103 = vunpack.c.h.b16 %v4921
        %v6104 = vunpack.c.l.b16 %v4922
        %v6105 = vunpack.c.h.b16 %v4922
        %v6106 = vunpack.c.l.b16 %v4923
        %v6107 = vunpack.c.h.b16 %v4923
        %v6108 = vunpack.c.l.b16 %v4924
        %v6109 = vunpack.c.h.b16 %v4924
        %v6110 = vunpack.c.l.b16 %v4925
        %v6111 = vunpack.c.h.b16 %v4925
        %v6112 = vunpack.c.l.b16 %v4926
        %v6113 = vunpack.c.h.b16 %v4926
        %v6114 = vunpack.c.l.b16 %v4927
        %v6115 = vunpack.c.h.b16 %v4927
        %v6116 = vunpack.c.l.b16 %v4928
        %v6117 = vunpack.c.h.b16 %v4928
        %v6118 = vunpack.c.l.b16 %v4929
        %v6119 = vunpack.c.h.b16 %v4929
        %v6120 = vunpack.c.l.b16 %v4930
        %v6121 = vunpack.c.h.b16 %v4930
        %v6122 = vunpack.c.l.b16 %v4931
        %v6123 = vunpack.c.h.b16 %v4931
        %v6124 = vunpack.c.l.b16 %v4932
        %v6125 = vunpack.c.h.b16 %v4932
        %v6126 = vunpack.c.l.b16 %v4933
        %v6127 = vunpack.c.h.b16 %v4933
        %v6128 = vunpack.c.l.b16 %v4934
        %v6129 = vunpack.c.h.b16 %v4934
        %v6130 = vunpack.c.l.b16 %v4935
        %v6131 = vunpack.c.h.b16 %v4935
        %v6132 = vunpack.c.l.b16 %v4936
        %v6133 = vunpack.c.h.b16 %v4936
        %v6134 = vunpack.c.l.b16 %v4937
        %v6135 = vunpack.c.h.b16 %v4937
        %v6136 = vunpack.c.l.b16 %v4938
        %v6137 = vunpack.c.h.b16 %v4938
        %v6138 = vunpack.c.l.b16 %v4939
        %v6139 = vunpack.c.h.b16 %v4939
        %v6140 = vunpack.c.l.b16 %v4940
        %v6141 = vunpack.c.h.b16 %v4940
        %v6142 = vunpack.c.l.b16 %v4941
        %v6143 = vunpack.c.h.b16 %v4941
        %v6144 = vunpack.c.l.b16 %v4942
        %v6145 = vunpack.c.h.b16 %v4942
        %v6146 = vunpack.c.l.b16 %v4943
        %v6147 = vunpack.c.h.b16 %v4943
        %v6148 = vunpack.c.l.b16 %v4944
        %v6149 = vunpack.c.h.b16 %v4944
        %v6150 = vunpack.c.l.b16 %v4945
        %v6151 = vunpack.c.h.b16 %v4945
        %v6152 = vunpack.c.l.b16 %v4946
        %v6153 = vunpack.c.h.b16 %v4946
        %v6154 = vunpack.c.l.b16 %v4947
        %v6155 = vunpack.c.h.b16 %v4947
        %v6156 = vunpack.c.l.b16 %v4948
        %v6157 = vunpack.c.h.b16 %v4948
        %v6158 = vunpack.c.l.b16 %v4949
        %v6159 = vunpack.c.h.b16 %v4949
        %v6160 = vunpack.c.l.b16 %v4950
        %v6161 = vunpack.c.h.b16 %v4950
        %v6162 = vunpack.c.l.b16 %v4951
        %v6163 = vunpack.c.h.b16 %v4951
        %v6164 = vunpack.c.l.b16 %v4952
        %v6165 = vunpack.c.h.b16 %v4952
        %v6166 = vunpack.c.l.b16 %v4953
        %v6167 = vunpack.c.h.b16 %v4953
        %v6168 = vunpack.c.l.b16 %v4954
        %v6169 = vunpack.c.h.b16 %v4954
        %v6170 = vunpack.c.l.b16 %v4955
        %v6171 = vunpack.c.h.b16 %v4955
        %v6172 = vunpack.c.l.b16 %v4956
        %v6173 = vunpack.c.h.b16 %v4956
        %v6174 = vunpack.c.l.b16 %v4957
        %v6175 = vunpack.c.h.b16 %v4957
        %v6176 = vunpack.c.l.b16 %v4958
        %v6177 = vunpack.c.h.b16 %v4958
        %v6178 = vunpack.c.l.b16 %v4959
        %v6179 = vunpack.c.h.b16 %v4959
        %v6180 = vunpack.c.l.b16 %v4960
        %v6181 = vunpack.c.h.b16 %v4960
        %v6182 = vunpack.c.l.b16 %v4961
        %v6183 = vunpack.c.h.b16 %v4961
        %v6184 = vunpack.c.l.b16 %v4962
        %v6185 = vunpack.c.h.b16 %v4962
        %v6186 = vunpack.c.l.b16 %v4963
        %v6187 = vunpack.c.h.b16 %v4963
        %v6188 = vunpack.c.l.b16 %v4964
        %v6189 = vunpack.c.h.b16 %v4964
        %v6190 = vunpack.c.l.b16 %v4965
        %v6191 = vunpack.c.h.b16 %v4965
        %v6192 = vunpack.c.l.b16 %v4966
        %v6193 = vunpack.c.h.b16 %v4966
        %v6194 = vunpack.c.l.b16 %v4967
        %v6195 = vunpack.c.h.b16 %v4967
        %v6196 = vunpack.c.l.b16 %v4968
        %v6197 = vunpack.c.h.b16 %v4968
        %v6198 = vunpack.c.l.b16 %v4969
        %v6199 = vunpack.c.h.b16 %v4969
        %v6200 = vunpack.c.l.b16 %v4970
        %v6201 = vunpack.c.h.b16 %v4970
        %v6202 = vunpack.c.l.b16 %v4971
        %v6203 = vunpack.c.h.b16 %v4971
        %v6204 = vunpack.c.l.b16 %v4972
        %v6205 = vunpack.c.h.b16 %v4972
        %v6206 = vunpack.c.l.b16 %v4973
        %v6207 = vunpack.c.h.b16 %v4973
        %v6208 = vunpack.c.l.b16 %v4974
        %v6209 = vunpack.c.h.b16 %v4974
        %v6210 = vunpack.c.l.b16 %v4975
        %v6211 = vunpack.c.h.b16 %v4975
        %v6212 = vunpack.c.l.b16 %v4976
        %v6213 = vunpack.c.h.b16 %v4976
        %v6214 = vunpack.c.l.b16 %v4977
        %v6215 = vunpack.c.h.b16 %v4977
        %v6216 = vunpack.c.l.b16 %v4978
        %v6217 = vunpack.c.h.b16 %v4978
        %v6218 = vunpack.c.l.b16 %v4979
        %v6219 = vunpack.c.h.b16 %v4979
        %v6220 = vunpack.c.l.b16 %v4980
        %v6221 = vunpack.c.h.b16 %v4980
        %v6222 = vunpack.c.l.b16 %v4981
        %v6223 = vunpack.c.h.b16 %v4981
        %v6224 = vunpack.c.l.b16 %v4982
        %v6225 = vunpack.c.h.b16 %v4982
        %v6226 = vunpack.c.l.b16 %v4983
        %v6227 = vunpack.c.h.b16 %v4983
        %v6228 = vunpack.c.l.b16 %v4984
        %v6229 = vunpack.c.h.b16 %v4984
        %v6230 = vunpack.c.l.b16 %v4985
        %v6231 = vunpack.c.h.b16 %v4985
        %v6232 = vunpack.c.l.b16 %v4986
        %v6233 = vunpack.c.h.b16 %v4986
        %v6234 = vunpack.c.l.b16 %v4987
        %v6235 = vunpack.c.h.b16 %v4987
        %v6236 = vunpack.c.l.b16 %v4988
        %v6237 = vunpack.c.h.b16 %v4988
        %v6238 = vunpack.c.l.b16 %v4989
        %v6239 = vunpack.c.h.b16 %v4989
        %v6240 = vunpack.c.l.b16 %v4990
        %v6241 = vunpack.c.h.b16 %v4990
        %v6242 = vunpack.c.l.b16 %v4991
        %v6243 = vunpack.c.h.b16 %v4991
        %v6244 = vunpack.c.l.b16 %v4992
        %v6245 = vunpack.c.h.b16 %v4992
        %v6246 = vunpack.c.l.b16 %v4993
        %v6247 = vunpack.c.h.b16 %v4993
        %v6248 = vunpack.c.l.b16 %v4994
        %v6249 = vunpack.c.h.b16 %v4994
        %v6250 = vunpack.c.l.b16 %v4995
        %v6251 = vunpack.c.h.b16 %v4995
        %v6252 = vunpack.c.l.b16 %v4996
        %v6253 = vunpack.c.h.b16 %v4996
        %v6254 = vunpack.c.l.b16 %v4997
        %v6255 = vunpack.c.h.b16 %v4997
        %v6256 = vunpack.c.l.b16 %v4998
        %v6257 = vunpack.c.h.b16 %v4998
        %v6258 = vunpack.c.l.b16 %v4999
        %v6259 = vunpack.c.h.b16 %v4999
        %v6260 = vunpack.c.l.b16 %v5000
        %v6261 = vunpack.c.h.b16 %v5000
        %v6262 = vunpack.c.l.b16 %v5001
        %v6263 = vunpack.c.h.b16 %v5001
        %v6264 = vunpack.c.l.b16 %v5002
        %v6265 = vunpack.c.h.b16 %v5002
        %v6266 = vunpack.c.l.b16 %v5003
        %v6267 = vunpack.c.h.b16 %v5003
        %v6268 = vunpack.c.l.b16 %v5004
        %v6269 = vunpack.c.h.b16 %v5004
        %v6270 = vunpack.c.l.b16 %v5005
        %v6271 = vunpack.c.h.b16 %v5005
        %v6272 = vunpack.c.l.b16 %v5006
        %v6273 = vunpack.c.h.b16 %v5006
        %v6274 = vunpack.c.l.b16 %v5007
        %v6275 = vunpack.c.h.b16 %v5007
        %v6276 = vunpack.c.l.b16 %v5008
        %v6277 = vunpack.c.h.b16 %v5008
        %v6278 = vunpack.c.l.b16 %v5009
        %v6279 = vunpack.c.h.b16 %v5009
        %v6280 = vunpack.c.l.b16 %v5010
        %v6281 = vunpack.c.h.b16 %v5010
        %v6282 = vunpack.c.l.b16 %v5011
        %v6283 = vunpack.c.h.b16 %v5011
        %v6284 = vunpack.c.l.b16 %v5012
        %v6285 = vunpack.c.h.b16 %v5012
        %v6286 = vunpack.c.l.b16 %v5013
        %v6287 = vunpack.c.h.b16 %v5013
        %v6288 = vunpack.c.l.b16 %v5014
        %v6289 = vunpack.c.h.b16 %v5014
        %v6290 = vunpack.c.l.b16 %v5015
        %v6291 = vunpack.c.h.b16 %v5015
        %v6292 = vunpack.c.l.b16 %v5016
        %v6293 = vunpack.c.h.b16 %v5016
        %v6294 = vunpack.c.l.b16 %v5017
        %v6295 = vunpack.c.h.b16 %v5017
        %v6296 = vunpack.c.l.b16 %v5018
        %v6297 = vunpack.c.h.b16 %v5018
        %v6298 = vunpack.c.l.b16 %v5019
        %v6299 = vunpack.c.h.b16 %v5019
        %v6300 = vunpack.c.l.b16 %v5020
        %v6301 = vunpack.c.h.b16 %v5020
        %v6302 = vunpack.c.l.b16 %v5021
        %v6303 = vunpack.c.h.b16 %v5021
        %v6304 = vunpack.c.l.b16 %v5022
        %v6305 = vunpack.c.h.b16 %v5022
        %v6306 = vunpack.c.l.b16 %v5023
        %v6307 = vunpack.c.h.b16 %v5023
        %v6308 = vunpack.c.l.b16 %v5024
        %v6309 = vunpack.c.h.b16 %v5024
        %v6310 = vunpack.c.l.b16 %v5025
        %v6311 = vunpack.c.h.b16 %v5025
        %v6312 = vunpack.c.l.b16 %v5026
        %v6313 = vunpack.c.h.b16 %v5026
        %v6314 = vunpack.c.l.b16 %v5027
        %v6315 = vunpack.c.h.b16 %v5027
        %v6316 = vunpack.c.l.b16 %v5028
        %v6317 = vunpack.c.h.b16 %v5028
        %v6318 = vunpack.c.l.b16 %v5029
        %v6319 = vunpack.c.h.b16 %v5029
        %v6320 = vunpack.c.l.b16 %v5030
        %v6321 = vunpack.c.h.b16 %v5030
        %v6322 = vunpack.c.l.b16 %v5031
        %v6323 = vunpack.c.h.b16 %v5031
        %v6324 = vunpack.c.l.b16 %v5032
        %v6325 = vunpack.c.h.b16 %v5032
        %v6326 = vunpack.c.l.b16 %v5033
        %v6327 = vunpack.c.h.b16 %v5033
        %v6328 = vunpack.c.l.b16 %v5034
        %v6329 = vunpack.c.h.b16 %v5034
        %v6330 = vunpack.c.l.b16 %v5035
        %v6331 = vunpack.c.h.b16 %v5035
        %v6332 = vunpack.c.l.b16 %v5036
        %v6333 = vunpack.c.h.b16 %v5036
        %v6334 = vunpack.c.l.b16 %v5037
        %v6335 = vunpack.c.h.b16 %v5037
        %v6336 = vunpack.c.l.b16 %v5038
        %v6337 = vunpack.c.h.b16 %v5038
        %v6338 = vunpack.c.l.b16 %v5039
        %v6339 = vunpack.c.h.b16 %v5039
        %v6340 = vunpack.c.l.b16 %v5040
        %v6341 = vunpack.c.h.b16 %v5040
        %v6342 = vunpack.c.l.b16 %v5041
        %v6343 = vunpack.c.h.b16 %v5041
        %v6344 = vunpack.c.l.b16 %v5042
        %v6345 = vunpack.c.h.b16 %v5042
        %v6346 = vunpack.c.l.b16 %v5043
        %v6347 = vunpack.c.h.b16 %v5043
        %v6348 = vunpack.c.l.b16 %v5044
        %v6349 = vunpack.c.h.b16 %v5044
        %v6350 = vunpack.c.l.b16 %v5045
        %v6351 = vunpack.c.h.b16 %v5045
        %v6352 = vunpack.c.l.b16 %v5046
        %v6353 = vunpack.c.h.b16 %v5046
        %v6354 = vunpack.c.l.b16 %v5047
        %v6355 = vunpack.c.h.b16 %v5047
        %v6356 = vunpack.c.l.b16 %v5048
        %v6357 = vunpack.c.h.b16 %v5048
        %v6358 = vunpack.c.l.b16 %v5049
        %v6359 = vunpack.c.h.b16 %v5049
        %v6360 = vunpack.c.l.b16 %v5050
        %v6361 = vunpack.c.h.b16 %v5050
        %v6362 = vunpack.c.l.b16 %v5051
        %v6363 = vunpack.c.h.b16 %v5051
        %v6364 = vunpack.c.l.b16 %v5052
        %v6365 = vunpack.c.h.b16 %v5052
        %v6366 = vunpack.c.l.b16 %v5053
        %v6367 = vunpack.c.h.b16 %v5053
        %v6368 = vunpack.c.l.b16 %v5054
        %v6369 = vunpack.c.h.b16 %v5054
        %v6370 = vunpack.c.l.b16 %v5055
        %v6371 = vunpack.c.h.b16 %v5055
        %v6372 = vunpack.c.l.b16 %v5056
        %v6373 = vunpack.c.h.b16 %v5056
        %v6374 = vunpack.c.l.b16 %v5057
        %v6375 = vunpack.c.h.b16 %v5057
        %v6376 = vunpack.c.l.b16 %v5058
        %v6377 = vunpack.c.h.b16 %v5058
        %v6378 = vunpack.c.l.b16 %v5059
        %v6379 = vunpack.c.h.b16 %v5059
        %v6380 = vunpack.c.l.b16 %v5060
        %v6381 = vunpack.c.h.b16 %v5060
        %v6382 = vunpack.c.l.b16 %v5061
        %v6383 = vunpack.c.h.b16 %v5061
        %v6384 = vunpack.c.l.b16 %v5062
        %v6385 = vunpack.c.h.b16 %v5062
        %v6386 = vunpack.c.l.b16 %v5063
        %v6387 = vunpack.c.h.b16 %v5063
        %v6388 = vunpack.c.l.b16 %v5064
        %v6389 = vunpack.c.h.b16 %v5064
        %v6390 = vunpack.c.l.b16 %v5065
        %v6391 = vunpack.c.h.b16 %v5065
        %v6392 = vunpack.c.l.b16 %v5066
        %v6393 = vunpack.c.h.b16 %v5066
        %v6394 = vunpack.c.l.b16 %v5067
        %v6395 = vunpack.c.h.b16 %v5067
        %v6396 = vunpack.c.l.b16 %v5068
        %v6397 = vunpack.c.h.b16 %v5068
        %v6398 = vunpack.c.l.b16 %v5069
        %v6399 = vunpack.c.h.b16 %v5069
        %v6400 = vunpack.c.l.b16 %v5070
        %v6401 = vunpack.c.h.b16 %v5070
        %v6402 = vunpack.c.l.b16 %v5071
        %v6403 = vunpack.c.h.b16 %v5071
        %v6404 = vunpack.c.l.b16 %v5072
        %v6405 = vunpack.c.h.b16 %v5072
        %v6406 = vunpack.c.l.b16 %v5073
        %v6407 = vunpack.c.h.b16 %v5073
        %v6408 = vunpack.c.l.b16 %v5074
        %v6409 = vunpack.c.h.b16 %v5074
        %v6410 = vunpack.c.l.b16 %v5075
        %v6411 = vunpack.c.h.b16 %v5075
        %v6412 = vunpack.c.l.b16 %v5076
        %v6413 = vunpack.c.h.b16 %v5076
        %v6414 = vunpack.c.l.b16 %v5077
        %v6415 = vunpack.c.h.b16 %v5077
        %v6416 = vunpack.c.l.b16 %v5078
        %v6417 = vunpack.c.h.b16 %v5078
        %v6418 = vunpack.c.l.b16 %v5079
        %v6419 = vunpack.c.h.b16 %v5079
        %v6420 = vunpack.c.l.b16 %v5080
        %v6421 = vunpack.c.h.b16 %v5080
        %v6422 = vunpack.c.l.b16 %v5081
        %v6423 = vunpack.c.h.b16 %v5081
        %v6424 = vunpack.c.l.b16 %v5082
        %v6425 = vunpack.c.h.b16 %v5082
        %v6426 = vunpack.c.l.b16 %v5083
        %v6427 = vunpack.c.h.b16 %v5083
        %v6428 = vunpack.c.l.b16 %v5084
        %v6429 = vunpack.c.h.b16 %v5084
        %v6430 = vunpack.c.l.b16 %v5085
        %v6431 = vunpack.c.h.b16 %v5085
        %v6432 = vunpack.c.l.b16 %v5086
        %v6433 = vunpack.c.h.b16 %v5086
        %v6434 = vunpack.c.l.b16 %v5087
        %v6435 = vunpack.c.h.b16 %v5087
        %v6436 = vunpack.c.l.b16 %v5088
        %v6437 = vunpack.c.h.b16 %v5088
        %v6438 = vunpack.c.l.b16 %v5089
        %v6439 = vunpack.c.h.b16 %v5089
        %v6440 = vunpack.c.l.b16 %v5090
        %v6441 = vunpack.c.h.b16 %v5090
        %v6442 = vunpack.c.l.b16 %v5091
        %v6443 = vunpack.c.h.b16 %v5091
        %v6444 = vunpack.c.l.b16 %v5092
        %v6445 = vunpack.c.h.b16 %v5092
        %v6446 = vunpack.c.l.b16 %v5093
        %v6447 = vunpack.c.h.b16 %v5093
        %v6448 = vunpack.c.l.b16 %v5094
        %v6449 = vunpack.c.h.b16 %v5094
        %v6450 = vunpack.c.l.b16 %v5095
        %v6451 = vunpack.c.h.b16 %v5095
        %v6452 = vunpack.c.l.b16 %v5096
        %v6453 = vunpack.c.h.b16 %v5096
        %v6454 = vunpack.c.l.b16 %v5097
        %v6455 = vunpack.c.h.b16 %v5097
        %v6456 = vunpack.c.l.b16 %v5098
        %v6457 = vunpack.c.h.b16 %v5098
        %v6458 = vunpack.c.l.b16 %v5099
        %v6459 = vunpack.c.h.b16 %v5099
        %v6460 = vunpack.c.l.b16 %v5100
        %v6461 = vunpack.c.h.b16 %v5100
        %v6462 = vunpack.c.l.b16 %v5101
        %v6463 = vunpack.c.h.b16 %v5101
        %v6464 = vunpack.c.l.b16 %v5102
        %v6465 = vunpack.c.h.b16 %v5102
        %v6466 = vunpack.c.l.b16 %v5103
        %v6467 = vunpack.c.h.b16 %v5103
        %v6468 = vunpack.c.l.b16 %v5104
        %v6469 = vunpack.c.h.b16 %v5104
        %v6470 = vunpack.c.l.b16 %v5105
        %v6471 = vunpack.c.h.b16 %v5105
        %v6472 = vunpack.c.l.b16 %v5106
        %v6473 = vunpack.c.h.b16 %v5106
        %v6474 = vunpack.c.l.b16 %v5107
        %v6475 = vunpack.c.h.b16 %v5107
        %v6476 = vunpack.c.l.b16 %v5108
        %v6477 = vunpack.c.h.b16 %v5108
        %v6478 = vunpack.c.l.b16 %v5109
        %v6479 = vunpack.c.h.b16 %v5109
        %v6480 = vunpack.c.l.b16 %v5110
        %v6481 = vunpack.c.h.b16 %v5110
        %v6482 = vunpack.c.l.b16 %v5111
        %v6483 = vunpack.c.h.b16 %v5111
        %v6484 = vunpack.c.l.b16 %v5112
        %v6485 = vunpack.c.h.b16 %v5112
        %v6486 = vunpack.c.l.b16 %v5113
        %v6487 = vunpack.c.h.b16 %v5113
        %v6488 = vunpack.c.l.b16 %v5114
        %v6489 = vunpack.c.h.b16 %v5114
        %v6490 = vunpack.c.l.b16 %v5115
        %v6491 = vunpack.c.h.b16 %v5115
        %v6492 = vunpack.c.l.b16 %v5116
        %v6493 = vunpack.c.h.b16 %v5116
        %v6494 = vunpack.c.l.b16 %v5117
        %v6495 = vunpack.c.h.b16 %v5117
        %v6496 = vunpack.c.l.b16 %v5118
        %v6497 = vunpack.c.h.b16 %v5118
        %v6498 = vunpack.c.l.b16 %v5119
        %v6499 = vunpack.c.h.b16 %v5119
        %v6500 = vunpack.c.l.b16 %v5120
        %v6501 = vunpack.c.h.b16 %v5120
        %v6502 = vunpack.c.l.b16 %v5121
        %v6503 = vunpack.c.h.b16 %v5121
        %v6504 = vunpack.c.l.b16 %v5122
        %v6505 = vunpack.c.h.b16 %v5122
        %v6506 = vunpack.c.l.b16 %v5123
        %v6507 = vunpack.c.h.b16 %v5123
        %v6508 = vunpack.c.l.b16 %v5124
        %v6509 = vunpack.c.h.b16 %v5124
        %v6510 = vunpack.c.l.b16 %v5125
        %v6511 = vunpack.c.h.b16 %v5125
        %v6512 = vunpack.c.l.b16 %v5126
        %v6513 = vunpack.c.h.b16 %v5126
        %v6514 = vunpack.c.l.b16 %v5127
        %v6515 = vunpack.c.h.b16 %v5127
        %v6516 = vunpack.c.l.b16 %v5128
        %v6517 = vunpack.c.h.b16 %v5128
        %v6518 = vunpack.c.l.b16 %v5129
        %v6519 = vunpack.c.h.b16 %v5129
        %v6520 = vunpack.c.l.b16 %v5130
        %v6521 = vunpack.c.h.b16 %v5130
        %v6522 = vunpack.c.l.b16 %v5131
        %v6523 = vunpack.c.h.b16 %v5131
        %v6524 = vunpack.c.l.b16 %v5132
        %v6525 = vunpack.c.h.b16 %v5132
        %v6526 = vunpack.c.l.b16 %v5133
        %v6527 = vunpack.c.h.b16 %v5133
        %v6528 = vunpack.c.l.b16 %v5134
        %v6529 = vunpack.c.h.b16 %v5134
        %v6530 = vunpack.c.l.b16 %v5135
        %v6531 = vunpack.c.h.b16 %v5135
        %v6532 = vunpack.c.l.b16 %v5136
        %v6533 = vunpack.c.h.b16 %v5136
        %v6534 = vunpack.c.l.b16 %v5137
        %v6535 = vunpack.c.h.b16 %v5137
        %v6536 = vunpack.c.l.b16 %v5138
        %v6537 = vunpack.c.h.b16 %v5138
        %v6538 = vunpack.c.l.b16 %v5139
        %v6539 = vunpack.c.h.b16 %v5139
        %v6540 = vunpack.c.l.b16 %v5140
        %v6541 = vunpack.c.h.b16 %v5140
        %v6542 = vunpack.c.l.b16 %v5141
        %v6543 = vunpack.c.h.b16 %v5141
        %v6544 = vunpack.c.l.b16 %v5142
        %v6545 = vunpack.c.h.b16 %v5142
        %v6546 = vunpack.c.l.b16 %v5143
        %v6547 = vunpack.c.h.b16 %v5143
        %v6548 = vunpack.c.l.b16 %v5144
        %v6549 = vunpack.c.h.b16 %v5144
        %v6550 = vunpack.c.l.b16 %v5145
        %v6551 = vunpack.c.h.b16 %v5145
        %v6552 = vunpack.c.l.b16 %v5146
        %v6553 = vunpack.c.h.b16 %v5146
        %v6554 = vunpack.c.l.b16 %v5147
        %v6555 = vunpack.c.h.b16 %v5147
        %v6556 = vunpack.c.l.b16 %v5148
        %v6557 = vunpack.c.h.b16 %v5148
        %v6558 = vunpack.c.l.b16 %v5149
        %v6559 = vunpack.c.h.b16 %v5149
        %v6560 = vunpack.c.l.b16 %v5150
        %v6561 = vunpack.c.h.b16 %v5150
        %v6562 = vunpack.c.l.b16 %v5151
        %v6563 = vunpack.c.h.b16 %v5151
        %v6564 = vunpack.c.l.b16 %v5152
        %v6565 = vunpack.c.h.b16 %v5152
        %v6566 = vunpack.c.l.b16 %v5153
        %v6567 = vunpack.c.h.b16 %v5153
        %v6568 = vunpack.c.l.b16 %v5154
        %v6569 = vunpack.c.h.b16 %v5154
        %v6570 = vunpack.c.l.b16 %v5155
        %v6571 = vunpack.c.h.b16 %v5155
        %v6572 = vunpack.c.l.b16 %v5156
        %v6573 = vunpack.c.h.b16 %v5156
        %v6574 = vunpack.c.l.b16 %v5157
        %v6575 = vunpack.c.h.b16 %v5157
        %v6576 = vunpack.c.l.b16 %v5158
        %v6577 = vunpack.c.h.b16 %v5158
        %v6578 = vunpack.c.l.b16 %v5159
        %v6579 = vunpack.c.h.b16 %v5159
        %v6580 = vunpack.c.l.b16 %v5160
        %v6581 = vunpack.c.h.b16 %v5160
        %v6582 = vunpack.c.l.b16 %v5161
        %v6583 = vunpack.c.h.b16 %v5161
        %v6584 = vunpack.c.l.b16 %v5162
        %v6585 = vunpack.c.h.b16 %v5162
        %v6586 = vunpack.c.l.b16 %v5163
        %v6587 = vunpack.c.h.b16 %v5163
        %v6588 = vunpack.c.l.b16 %v5164
        %v6589 = vunpack.c.h.b16 %v5164
        %v6590 = vunpack.c.l.b16 %v5165
        %v6591 = vunpack.c.h.b16 %v5165
        %v6592 = vunpack.c.l.b16 %v5166
        %v6593 = vunpack.c.h.b16 %v5166
        %v6594 = vunpack.c.l.b16 %v5167
        %v6595 = vunpack.c.h.b16 %v5167
        %v6596 = vunpack.c.l.b16 %v5168
        %v6597 = vunpack.c.h.b16 %v5168
        %v6598 = vunpack.c.l.b16 %v5169
        %v6599 = vunpack.c.h.b16 %v5169
        %v6600 = vunpack.c.l.b16 %v5170
        %v6601 = vunpack.c.h.b16 %v5170
        %v6602 = vunpack.c.l.b16 %v5171
        %v6603 = vunpack.c.h.b16 %v5171
        %v6604 = vunpack.c.l.b16 %v5172
        %v6605 = vunpack.c.h.b16 %v5172
        %v6606 = vunpack.c.l.b16 %v5173
        %v6607 = vunpack.c.h.b16 %v5173
        %v6608 = vunpack.c.l.b16 %v5174
        %v6609 = vunpack.c.h.b16 %v5174
        %v6610 = vunpack.c.l.b16 %v5175
        %v6611 = vunpack.c.h.b16 %v5175
        %v6612 = vunpack.c.l.b16 %v5176
        %v6613 = vunpack.c.h.b16 %v5176
        %v6614 = vunpack.c.l.b16 %v5177
        %v6615 = vunpack.c.h.b16 %v5177
        %v6616 = vunpack.c.l.b16 %v5178
        %v6617 = vunpack.c.h.b16 %v5178
        %v6618 = vunpack.c.l.b16 %v5179
        %v6619 = vunpack.c.h.b16 %v5179
        %v6620 = vunpack.c.l.b16 %v5180
        %v6621 = vunpack.c.h.b16 %v5180
        %v6622 = vunpack.c.l.b16 %v5181
        %v6623 = vunpack.c.h.b16 %v5181
        %v6624 = vunpack.c.l.b16 %v5182
        %v6625 = vunpack.c.h.b16 %v5182
        %v6626 = vunpack.c.l.b16 %v5183
        %v6627 = vunpack.c.h.b16 %v5183
        %v6628 = vunpack.c.l.b16 %v5184
        %v6629 = vunpack.c.h.b16 %v5184
        %v6630 = vunpack.c.l.b16 %v5185
        %v6631 = vunpack.c.h.b16 %v5185
        %v6632 = vunpack.c.l.b16 %v5186
        %v6633 = vunpack.c.h.b16 %v5186
        %v6634 = vunpack.c.l.b16 %v5187
        %v6635 = vunpack.c.h.b16 %v5187
        %v6636 = vunpack.c.l.b16 %v5188
        %v6637 = vunpack.c.h.b16 %v5188
        %v6638 = vunpack.c.l.b16 %v5189
        %v6639 = vunpack.c.h.b16 %v5189
        %v6640 = vunpack.c.l.b16 %v5190
        %v6641 = vunpack.c.h.b16 %v5190
        %v6642 = vunpack.c.l.b16 %v5191
        %v6643 = vunpack.c.h.b16 %v5191
        %v6644 = vunpack.c.l.b16 %v5192
        %v6645 = vunpack.c.h.b16 %v5192
        %v6646 = vunpack.c.l.b16 %v5193
        %v6647 = vunpack.c.h.b16 %v5193
        %v6648 = vunpack.c.l.b16 %v5194
        %v6649 = vunpack.c.h.b16 %v5194
        %v6650 = vunpack.c.l.b16 %v5195
        %v6651 = vunpack.c.h.b16 %v5195
        %v6652 = vunpack.c.l.b16 %v5196
        %v6653 = vunpack.c.h.b16 %v5196
        %v6654 = vunpack.c.l.b16 %v5197
        %v6655 = vunpack.c.h.b16 %v5197
        %v6656 = vunpack.c.l.b16 %v5198
        %v6657 = vunpack.c.h.b16 %v5198
        %v6658 = vunpack.c.l.b16 %v5199
        %v6659 = vunpack.c.h.b16 %v5199
        %v6660 = vunpack.c.l.b16 %v5200
        %v6661 = vunpack.c.h.b16 %v5200
        %v6662 = vunpack.c.l.b16 %v5201
        %v6663 = vunpack.c.h.b16 %v5201
        %v6664 = vunpack.c.l.b16 %v5202
        %v6665 = vunpack.c.h.b16 %v5202
        %v6666 = vunpack.c.l.b16 %v5203
        %v6667 = vunpack.c.h.b16 %v5203
        %v6668 = vunpack.c.l.b16 %v5204
        %v6669 = vunpack.c.h.b16 %v5204
        %v6670 = vunpack.c.l.b16 %v5205
        %v6671 = vunpack.c.h.b16 %v5205
        %v6672 = vunpack.c.l.b16 %v5206
        %v6673 = vunpack.c.h.b16 %v5206
        %v6674 = vunpack.c.l.b16 %v5207
        %v6675 = vunpack.c.h.b16 %v5207
        %v6676 = vunpack.c.l.b16 %v5208
        %v6677 = vunpack.c.h.b16 %v5208
        %v6678 = vunpack.c.l.b16 %v5209
        %v6679 = vunpack.c.h.b16 %v5209
        %v6680 = vunpack.c.l.b16 %v5210
        %v6681 = vunpack.c.h.b16 %v5210
        %v6682 = vunpack.c.l.b16 %v5211
        %v6683 = vunpack.c.h.b16 %v5211
        %v6684 = vunpack.c.l.b16 %v5212
        %v6685 = vunpack.c.h.b16 %v5212
        %v6686 = vunpack.c.l.b16 %v5213
        %v6687 = vunpack.c.h.b16 %v5213
        %v6688 = vunpack.c.l.b16 %v5214
        %v6689 = vunpack.c.h.b16 %v5214
        %v6690 = vunpack.c.l.b16 %v5215
        %v6691 = vunpack.c.h.b16 %v5215
        %v6692 = vunpack.c.l.b16 %v5216
        %v6693 = vunpack.c.h.b16 %v5216
        %v6694 = vunpack.c.l.b16 %v5217
        %v6695 = vunpack.c.h.b16 %v5217
        %v6696 = vunpack.c.l.b16 %v5218
        %v6697 = vunpack.c.h.b16 %v5218
        %v6698 = vunpack.c.l.b16 %v5219
        %v6699 = vunpack.c.h.b16 %v5219
        %v6700 = vunpack.c.l.b16 %v5220
        %v6701 = vunpack.c.h.b16 %v5220
        %v6702 = vunpack.c.l.b16 %v5221
        %v6703 = vunpack.c.h.b16 %v5221
        %v6704 = vunpack.c.l.b16 %v5222
        %v6705 = vunpack.c.h.b16 %v5222
        %v6706 = vunpack.c.l.b16 %v5223
        %v6707 = vunpack.c.h.b16 %v5223
        %v6708 = vunpack.c.l.b16 %v5224
        %v6709 = vunpack.c.h.b16 %v5224
        %v6710 = vunpack.c.l.b16 %v5225
        %v6711 = vunpack.c.h.b16 %v5225
        %v6712 = vunpack.c.l.b16 %v5226
        %v6713 = vunpack.c.h.b16 %v5226
        %v6714 = vunpack.c.l.b16 %v5227
        %v6715 = vunpack.c.h.b16 %v5227
        %v6716 = vunpack.c.l.b16 %v5228
        %v6717 = vunpack.c.h.b16 %v5228
        %v6718 = vunpack.c.l.b16 %v5229
        %v6719 = vunpack.c.h.b16 %v5229
        %v6720 = vunpack.c.l.b16 %v5230
        %v6721 = vunpack.c.h.b16 %v5230
        %v6722 = vunpack.c.l.b16 %v5231
        %v6723 = vunpack.c.h.b16 %v5231
        %v6724 = vunpack.c.l.b16 %v5232
        %v6725 = vunpack.c.h.b16 %v5232
        %v6726 = vunpack.c.l.b16 %v5233
        %v6727 = vunpack.c.h.b16 %v5233
        %v6728 = vunpack.c.l.b16 %v5234
        %v6729 = vunpack.c.h.b16 %v5234
        %v6730 = vunpack.c.l.b16 %v5235
        %v6731 = vunpack.c.h.b16 %v5235
        %v6732 = vunpack.c.l.b16 %v5236
        %v6733 = vunpack.c.h.b16 %v5236
        %v6734 = vunpack.c.l.b16 %v5237
        %v6735 = vunpack.c.h.b16 %v5237
        %v6736 = vunpack.c.l.b16 %v5238
        %v6737 = vunpack.c.h.b16 %v5238
        %v6738 = vunpack.c.l.b16 %v5239
        %v6739 = vunpack.c.h.b16 %v5239
        %v6740 = vunpack.c.l.b16 %v5240
        %v6741 = vunpack.c.h.b16 %v5240
        %v6742 = vunpack.c.l.b16 %v5241
        %v6743 = vunpack.c.h.b16 %v5241
        %v6744 = vunpack.c.l.b16 %v5242
        %v6745 = vunpack.c.h.b16 %v5242
        %v6746 = vunpack.c.l.b16 %v5243
        %v6747 = vunpack.c.h.b16 %v5243
        %v6748 = vunpack.c.l.b16 %v5244
        %v6749 = vunpack.c.h.b16 %v5244
        %v6750 = vunpack.c.l.b16 %v5245
        %v6751 = vunpack.c.h.b16 %v5245
        %v6752 = vunpack.c.l.b16 %v5246
        %v6753 = vunpack.c.h.b16 %v5246
        %v6754 = vunpack.c.l.b16 %v5247
        %v6755 = vunpack.c.h.b16 %v5247
        %v6756 = vunpack.c.l.b16 %v5248
        %v6757 = vunpack.c.h.b16 %v5248
        %v6758 = vunpack.c.l.b16 %v5249
        %v6759 = vunpack.c.h.b16 %v5249
        %v6760 = vunpack.c.l.b16 %v5250
        %v6761 = vunpack.c.h.b16 %v5250
        %v6762 = vunpack.c.l.b16 %v5251
        %v6763 = vunpack.c.h.b16 %v5251
        %v6764 = vunpack.c.l.b16 %v5252
        %v6765 = vunpack.c.h.b16 %v5252
        %v6766 = vunpack.c.l.b16 %v5253
        %v6767 = vunpack.c.h.b16 %v5253
        %v6768 = vunpack.c.l.b16 %v5254
        %v6769 = vunpack.c.h.b16 %v5254
        %v6770 = vunpack.c.l.b16 %v5255
        %v6771 = vunpack.c.h.b16 %v5255
        %v6772 = vunpack.c.l.b16 %v5256
        %v6773 = vunpack.c.h.b16 %v5256
        %v6774 = vunpack.c.l.b16 %v5257
        %v6775 = vunpack.c.h.b16 %v5257
        %v6776 = vunpack.c.l.b16 %v5258
        %v6777 = vunpack.c.h.b16 %v5258
        %v6778 = vunpack.c.l.b16 %v5259
        %v6779 = vunpack.c.h.b16 %v5259
        %v6780 = vunpack.c.l.b16 %v5260
        %v6781 = vunpack.c.h.b16 %v5260
        %v6782 = vunpack.c.l.b16 %v5261
        %v6783 = vunpack.c.h.b16 %v5261
        %v6784 = vunpack.c.l.b16 %v5262
        %v6785 = vunpack.c.h.b16 %v5262
        %v6786 = vunpack.c.l.b16 %v5263
        %v6787 = vunpack.c.h.b16 %v5263
        %v6788 = vunpack.c.l.b16 %v5264
        %v6789 = vunpack.c.h.b16 %v5264
        %v6790 = vunpack.c.l.b16 %v5265
        %v6791 = vunpack.c.h.b16 %v5265
        %v6792 = vunpack.c.l.b16 %v5266
        %v6793 = vunpack.c.h.b16 %v5266
        %v6794 = vunpack.c.l.b16 %v5267
        %v6795 = vunpack.c.h.b16 %v5267
        %v6796 = vunpack.c.l.b16 %v5268
        %v6797 = vunpack.c.h.b16 %v5268
        %v6798 = vunpack.c.l.b16 %v5269
        %v6799 = vunpack.c.h.b16 %v5269
        %v6800 = vunpack.c.l.b16 %v5270
        %v6801 = vunpack.c.h.b16 %v5270
        %v6802 = vunpack.c.l.b16 %v5271
        %v6803 = vunpack.c.h.b16 %v5271
        %v6804 = vunpack.c.l.b16 %v5272
        %v6805 = vunpack.c.h.b16 %v5272
        %v6806 = vunpack.c.l.b16 %v5273
        %v6807 = vunpack.c.h.b16 %v5273
        %v6808 = vunpack.c.l.b16 %v5274
        %v6809 = vunpack.c.h.b16 %v5274
        %v6810 = vunpack.c.l.b16 %v5275
        %v6811 = vunpack.c.h.b16 %v5275
        %v6812 = vunpack.c.l.b16 %v5276
        %v6813 = vunpack.c.h.b16 %v5276
        %v6814 = vunpack.c.l.b16 %v5277
        %v6815 = vunpack.c.h.b16 %v5277
        %v6816 = vunpack.c.l.b16 %v5278
        %v6817 = vunpack.c.h.b16 %v5278
        %v6818 = vunpack.c.l.b16 %v5279
        %v6819 = vunpack.c.h.b16 %v5279
        %v6820 = vunpack.c.l.b16 %v5280
        %v6821 = vunpack.c.h.b16 %v5280
        %v6822 = vunpack.c.l.b16 %v5281
        %v6823 = vunpack.c.h.b16 %v5281
        %v6824 = vunpack.c.l.b16 %v5282
        %v6825 = vunpack.c.h.b16 %v5282
        %v6826 = vunpack.c.l.b16 %v5283
        %v6827 = vunpack.c.h.b16 %v5283
        %v6828 = vunpack.c.l.b16 %v5284
        %v6829 = vunpack.c.h.b16 %v5284
        %v6830 = vunpack.c.l.b16 %v5285
        %v6831 = vunpack.c.h.b16 %v5285
        %v6832 = vunpack.c.l.b16 %v5286
        %v6833 = vunpack.c.h.b16 %v5286
        %v6834 = vunpack.c.l.b16 %v5287
        %v6835 = vunpack.c.h.b16 %v5287
        %v6836 = vunpack.c.l.b16 %v5288
        %v6837 = vunpack.c.h.b16 %v5288
        %v6838 = vunpack.c.l.b16 %v5289
        %v6839 = vunpack.c.h.b16 %v5289
        %v6840 = vunpack.c.l.b16 %v5290
        %v6841 = vunpack.c.h.b16 %v5290
        %v6842 = vunpack.c.l.b16 %v5291
        %v6843 = vunpack.c.h.b16 %v5291
        %v6844 = vpack.c.b16 %v5824, %v5820
        %v6845 = vpack.c.b16 %v5825, %v5821
        %v6846 = vpack.c.b16 %v5826, %v5822
        %v6847 = vpack.c.b16 %v5827, %v5823
        %v6848 = vpack.c.b16 %v5832, %v5828
        %v6849 = vpack.c.b16 %v5833, %v5829
        %v6850 = vpack.c.b16 %v5834, %v5830
        %v6851 = vpack.c.b16 %v5835, %v5831
        %v6852 = vpack.c.b16 %v5840, %v5836
        %v6853 = vpack.c.b16 %v5841, %v5837
        %v6854 = vpack.c.b16 %v5842, %v5838
        %v6855 = vpack.c.b16 %v5843, %v5839
        %v6856 = vpack.c.b16 %v5848, %v5844
        %v6857 = vpack.c.b16 %v5849, %v5845
        %v6858 = vpack.c.b16 %v5850, %v5846
        %v6859 = vpack.c.b16 %v5851, %v5847
        %v6860 = vpack.c.b16 %v5856, %v5852
        %v6861 = vpack.c.b16 %v5857, %v5853
        %v6862 = vpack.c.b16 %v5858, %v5854
        %v6863 = vpack.c.b16 %v5859, %v5855
        %v6864 = vpack.c.b16 %v5864, %v5860
        %v6865 = vpack.c.b16 %v5865, %v5861
        %v6866 = vpack.c.b16 %v5866, %v5862
        %v6867 = vpack.c.b16 %v5867, %v5863
        %v6868 = vpack.c.b16 %v5872, %v5868
        %v6869 = vpack.c.b16 %v5873, %v5869
        %v6870 = vpack.c.b16 %v5874, %v5870
        %v6871 = vpack.c.b16 %v5875, %v5871
        %v6872 = vpack.c.b16 %v5880, %v5876
        %v6873 = vpack.c.b16 %v5881, %v5877
        %v6874 = vpack.c.b16 %v5882, %v5878
        %v6875 = vpack.c.b16 %v5883, %v5879
        %v6876 = vpack.c.b16 %v5888, %v5884
        %v6877 = vpack.c.b16 %v5889, %v5885
        %v6878 = vpack.c.b16 %v5890, %v5886
        %v6879 = vpack.c.b16 %v5891, %v5887
        %v6880 = vpack.c.b16 %v5896, %v5892
        %v6881 = vpack.c.b16 %v5897, %v5893
        %v6882 = vpack.c.b16 %v5898, %v5894
        %v6883 = vpack.c.b16 %v5899, %v5895
        %v6884 = vpack.c.b16 %v5904, %v5900
        %v6885 = vpack.c.b16 %v5905, %v5901
        %v6886 = vpack.c.b16 %v5906, %v5902
        %v6887 = vpack.c.b16 %v5907, %v5903
        %v6888 = vpack.c.b16 %v5912, %v5908
        %v6889 = vpack.c.b16 %v5913, %v5909
        %v6890 = vpack.c.b16 %v5914, %v5910
        %v6891 = vpack.c.b16 %v5915, %v5911
        %v6892 = vpack.c.b16 %v5920, %v5916
        %v6893 = vpack.c.b16 %v5921, %v5917
        %v6894 = vpack.c.b16 %v5922, %v5918
        %v6895 = vpack.c.b16 %v5923, %v5919
        %v6896 = vpack.c.b16 %v5928, %v5924
        %v6897 = vpack.c.b16 %v5929, %v5925
        %v6898 = vpack.c.b16 %v5930, %v5926
        %v6899 = vpack.c.b16 %v5931, %v5927
        %v6900 = vpack.c.b16 %v5936, %v5932
        %v6901 = vpack.c.b16 %v5937, %v5933
        %v6902 = vpack.c.b16 %v5938, %v5934
        %v6903 = vpack.c.b16 %v5939, %v5935
        %v6904 = vpack.c.b16 %v5944, %v5940
        %v6905 = vpack.c.b16 %v5945, %v5941
        %v6906 = vpack.c.b16 %v5946, %v5942
        %v6907 = vpack.c.b16 %v5947, %v5943
        %v6908 = vpack.c.b16 %v5952, %v5948
        %v6909 = vpack.c.b16 %v5953, %v5949
        %v6910 = vpack.c.b16 %v5954, %v5950
        %v6911 = vpack.c.b16 %v5955, %v5951
        %v6912 = vpack.c.b16 %v5960, %v5956
        %v6913 = vpack.c.b16 %v5961, %v5957
        %v6914 = vpack.c.b16 %v5962, %v5958
        %v6915 = vpack.c.b16 %v5963, %v5959
        %v6916 = vpack.c.b16 %v5968, %v5964
        %v6917 = vpack.c.b16 %v5969, %v5965
        %v6918 = vpack.c.b16 %v5970, %v5966
        %v6919 = vpack.c.b16 %v5971, %v5967
        %v6920 = vpack.c.b16 %v5976, %v5972
        %v6921 = vpack.c.b16 %v5977, %v5973
        %v6922 = vpack.c.b16 %v5978, %v5974
        %v6923 = vpack.c.b16 %v5979, %v5975
        %v6924 = vpack.c.b16 %v5984, %v5980
        %v6925 = vpack.c.b16 %v5985, %v5981
        %v6926 = vpack.c.b16 %v5986, %v5982
        %v6927 = vpack.c.b16 %v5987, %v5983
        %v6928 = vpack.c.b16 %v5992, %v5988
        %v6929 = vpack.c.b16 %v5993, %v5989
        %v6930 = vpack.c.b16 %v5994, %v5990
        %v6931 = vpack.c.b16 %v5995, %v5991
        %v6932 = vpack.c.b16 %v6000, %v5996
        %v6933 = vpack.c.b16 %v6001, %v5997
        %v6934 = vpack.c.b16 %v6002, %v5998
        %v6935 = vpack.c.b16 %v6003, %v5999
        %v6936 = vpack.c.b16 %v6008, %v6004
        %v6937 = vpack.c.b16 %v6009, %v6005
        %v6938 = vpack.c.b16 %v6010, %v6006
        %v6939 = vpack.c.b16 %v6011, %v6007
        %v6940 = vpack.c.b16 %v6016, %v6012
        %v6941 = vpack.c.b16 %v6017, %v6013
        %v6942 = vpack.c.b16 %v6018, %v6014
        %v6943 = vpack.c.b16 %v6019, %v6015
        %v6944 = vpack.c.b16 %v6024, %v6020
        %v6945 = vpack.c.b16 %v6025, %v6021
        %v6946 = vpack.c.b16 %v6026, %v6022
        %v6947 = vpack.c.b16 %v6027, %v6023
        %v6948 = vpack.c.b16 %v6032, %v6028
        %v6949 = vpack.c.b16 %v6033, %v6029
        %v6950 = vpack.c.b16 %v6034, %v6030
        %v6951 = vpack.c.b16 %v6035, %v6031
        %v6952 = vpack.c.b16 %v6040, %v6036
        %v6953 = vpack.c.b16 %v6041, %v6037
        %v6954 = vpack.c.b16 %v6042, %v6038
        %v6955 = vpack.c.b16 %v6043, %v6039
        %v6956 = vpack.c.b16 %v6048, %v6044
        %v6957 = vpack.c.b16 %v6049, %v6045
        %v6958 = vpack.c.b16 %v6050, %v6046
        %v6959 = vpack.c.b16 %v6051, %v6047
        %v6960 = vpack.c.b16 %v6056, %v6052
        %v6961 = vpack.c.b16 %v6057, %v6053
        %v6962 = vpack.c.b16 %v6058, %v6054
        %v6963 = vpack.c.b16 %v6059, %v6055
        %v6964 = vpack.c.b16 %v6064, %v6060
        %v6965 = vpack.c.b16 %v6065, %v6061
        %v6966 = vpack.c.b16 %v6066, %v6062
        %v6967 = vpack.c.b16 %v6067, %v6063
        %v6968 = vpack.c.b16 %v6072, %v6068
        %v6969 = vpack.c.b16 %v6073, %v6069
        %v6970 = vpack.c.b16 %v6074, %v6070
        %v6971 = vpack.c.b16 %v6075, %v6071
        %v6972 = vpack.c.b16 %v6080, %v6076
        %v6973 = vpack.c.b16 %v6081, %v6077
        %v6974 = vpack.c.b16 %v6082, %v6078
        %v6975 = vpack.c.b16 %v6083, %v6079
        %v6976 = vpack.c.b16 %v6088, %v6084
        %v6977 = vpack.c.b16 %v6089, %v6085
        %v6978 = vpack.c.b16 %v6090, %v6086
        %v6979 = vpack.c.b16 %v6091, %v6087
        %v6980 = vpack.c.b16 %v6096, %v6092
        %v6981 = vpack.c.b16 %v6097, %v6093
        %v6982 = vpack.c.b16 %v6098, %v6094
        %v6983 = vpack.c.b16 %v6099, %v6095
        %v6984 = vpack.c.b16 %v6104, %v6100
        %v6985 = vpack.c.b16 %v6105, %v6101
        %v6986 = vpack.c.b16 %v6106, %v6102
        %v6987 = vpack.c.b16 %v6107, %v6103
        %v6988 = vpack.c.b16 %v6112, %v6108
        %v6989 = vpack.c.b16 %v6113, %v6109
        %v6990 = vpack.c.b16 %v6114, %v6110
        %v6991 = vpack.c.b16 %v6115, %v6111
        %v6992 = vpack.c.b16 %v6120, %v6116
        %v6993 = vpack.c.b16 %v6121, %v6117
        %v6994 = vpack.c.b16 %v6122, %v6118
        %v6995 = vpack.c.b16 %v6123, %v6119
        %v6996 = vpack.c.b16 %v6128, %v6124
        %v6997 = vpack.c.b16 %v6129, %v6125
        %v6998 = vpack.c.b16 %v6130, %v6126
        %v6999 = vpack.c.b16 %v6131, %v6127
        %v7000 = vpack.c.b16 %v6136, %v6132
        %v7001 = vpack.c.b16 %v6137, %v6133
        %v7002 = vpack.c.b16 %v6138, %v6134
        %v7003 = vpack.c.b16 %v6139, %v6135
        %v7004 = vpack.c.b16 %v6144, %v6140
        %v7005 = vpack.c.b16 %v6145, %v6141
        %v7006 = vpack.c.b16 %v6146, %v6142
        %v7007 = vpack.c.b16 %v6147, %v6143
        %v7008 = vpack.c.b16 %v6152, %v6148
        %v7009 = vpack.c.b16 %v6153, %v6149
        %v7010 = vpack.c.b16 %v6154, %v6150
        %v7011 = vpack.c.b16 %v6155, %v6151
        %v7012 = vpack.c.b16 %v6160, %v6156
        %v7013 = vpack.c.b16 %v6161, %v6157
        %v7014 = vpack.c.b16 %v6162, %v6158
        %v7015 = vpack.c.b16 %v6163, %v6159
        %v7016 = vpack.c.b16 %v6168, %v6164
        %v7017 = vpack.c.b16 %v6169, %v6165
        %v7018 = vpack.c.b16 %v6170, %v6166
        %v7019 = vpack.c.b16 %v6171, %v6167
        %v7020 = vpack.c.b16 %v6176, %v6172
        %v7021 = vpack.c.b16 %v6177, %v6173
        %v7022 = vpack.c.b16 %v6178, %v6174
        %v7023 = vpack.c.b16 %v6179, %v6175
        %v7024 = vpack.c.b16 %v6184, %v6180
        %v7025 = vpack.c.b16 %v6185, %v6181
        %v7026 = vpack.c.b16 %v6186, %v6182
        %v7027 = vpack.c.b16 %v6187, %v6183
        %v7028 = vpack.c.b16 %v6192, %v6188
        %v7029 = vpack.c.b16 %v6193, %v6189
        %v7030 = vpack.c.b16 %v6194, %v6190
        %v7031 = vpack.c.b16 %v6195, %v6191
        %v7032 = vpack.c.b16 %v6200, %v6196
        %v7033 = vpack.c.b16 %v6201, %v6197
        %v7034 = vpack.c.b16 %v6202, %v6198
        %v7035 = vpack.c.b16 %v6203, %v6199
        %v7036 = vpack.c.b16 %v6208, %v6204
        %v7037 = vpack.c.b16 %v6209, %v6205
        %v7038 = vpack.c.b16 %v6210, %v6206
        %v7039 = vpack.c.b16 %v6211, %v6207
        %v7040 = vpack.c.b16 %v6216, %v6212
        %v7041 = vpack.c.b16 %v6217, %v6213
        %v7042 = vpack.c.b16 %v6218, %v6214
        %v7043 = vpack.c.b16 %v6219, %v6215
        %v7044 = vpack.c.b16 %v6224, %v6220
        %v7045 = vpack.c.b16 %v6225, %v6221
        %v7046 = vpack.c.b16 %v6226, %v6222
        %v7047 = vpack.c.b16 %v6227, %v6223
        %v7048 = vpack.c.b16 %v6232, %v6228
        %v7049 = vpack.c.b16 %v6233, %v6229
        %v7050 = vpack.c.b16 %v6234, %v6230
        %v7051 = vpack.c.b16 %v6235, %v6231
        %v7052 = vpack.c.b16 %v6240, %v6236
        %v7053 = vpack.c.b16 %v6241, %v6237
        %v7054 = vpack.c.b16 %v6242, %v6238
        %v7055 = vpack.c.b16 %v6243, %v6239
        %v7056 = vpack.c.b16 %v6248, %v6244
        %v7057 = vpack.c.b16 %v6249, %v6245
        %v7058 = vpack.c.b16 %v6250, %v6246
        %v7059 = vpack.c.b16 %v6251, %v6247
        %v7060 = vpack.c.b16 %v6256, %v6252
        %v7061 = vpack.c.b16 %v6257, %v6253
        %v7062 = vpack.c.b16 %v6258, %v6254
        %v7063 = vpack.c.b16 %v6259, %v6255
        %v7064 = vpack.c.b16 %v6264, %v6260
        %v7065 = vpack.c.b16 %v6265, %v6261
        %v7066 = vpack.c.b16 %v6266, %v6262
        %v7067 = vpack.c.b16 %v6267, %v6263
        %v7068 = vpack.c.b16 %v6272, %v6268
        %v7069 = vpack.c.b16 %v6273, %v6269
        %v7070 = vpack.c.b16 %v6274, %v6270
        %v7071 = vpack.c.b16 %v6275, %v6271
        %v7072 = vpack.c.b16 %v6280, %v6276
        %v7073 = vpack.c.b16 %v6281, %v6277
        %v7074 = vpack.c.b16 %v6282, %v6278
        %v7075 = vpack.c.b16 %v6283, %v6279
        %v7076 = vpack.c.b16 %v6288, %v6284
        %v7077 = vpack.c.b16 %v6289, %v6285
        %v7078 = vpack.c.b16 %v6290, %v6286
        %v7079 = vpack.c.b16 %v6291, %v6287
        %v7080 = vpack.c.b16 %v6296, %v6292
        %v7081 = vpack.c.b16 %v6297, %v6293
        %v7082 = vpack.c.b16 %v6298, %v6294
        %v7083 = vpack.c.b16 %v6299, %v6295
        %v7084 = vpack.c.b16 %v6304, %v6300
        %v7085 = vpack.c.b16 %v6305, %v6301
        %v7086 = vpack.c.b16 %v6306, %v6302
        %v7087 = vpack.c.b16 %v6307, %v6303
        %v7088 = vpack.c.b16 %v6312, %v6308
        %v7089 = vpack.c.b16 %v6313, %v6309
        %v7090 = vpack.c.b16 %v6314, %v6310
        %v7091 = vpack.c.b16 %v6315, %v6311
        %v7092 = vpack.c.b16 %v6320, %v6316
        %v7093 = vpack.c.b16 %v6321, %v6317
        %v7094 = vpack.c.b16 %v6322, %v6318
        %v7095 = vpack.c.b16 %v6323, %v6319
        %v7096 = vpack.c.b16 %v6328, %v6324
        %v7097 = vpack.c.b16 %v6329, %v6325
        %v7098 = vpack.c.b16 %v6330, %v6326
        %v7099 = vpack.c.b16 %v6331, %v6327
        %v7100 = vpack.c.b16 %v6336, %v6332
        %v7101 = vpack.c.b16 %v6337, %v6333
        %v7102 = vpack.c.b16 %v6338, %v6334
        %v7103 = vpack.c.b16 %v6339, %v6335
        %v7104 = vpack.c.b16 %v6344, %v6340
        %v7105 = vpack.c.b16 %v6345, %v6341
        %v7106 = vpack.c.b16 %v6346, %v6342
        %v7107 = vpack.c.b16 %v6347, %v6343
        %v7108 = vpack.c.b16 %v6352, %v6348
        %v7109 = vpack.c.b16 %v6353, %v6349
        %v7110 = vpack.c.b16 %v6354, %v6350
        %v7111 = vpack.c.b16 %v6355, %v6351
        %v7112 = vpack.c.b16 %v6360, %v6356
        %v7113 = vpack.c.b16 %v6361, %v6357
        %v7114 = vpack.c.b16 %v6362, %v6358
        %v7115 = vpack.c.b16 %v6363, %v6359
        %v7116 = vpack.c.b16 %v6368, %v6364
        %v7117 = vpack.c.b16 %v6369, %v6365
        %v7118 = vpack.c.b16 %v6370, %v6366
        %v7119 = vpack.c.b16 %v6371, %v6367
        %v7120 = vpack.c.b16 %v6376, %v6372
        %v7121 = vpack.c.b16 %v6377, %v6373
        %v7122 = vpack.c.b16 %v6378, %v6374
        %v7123 = vpack.c.b16 %v6379, %v6375
        %v7124 = vpack.c.b16 %v6384, %v6380
        %v7125 = vpack.c.b16 %v6385, %v6381
        %v7126 = vpack.c.b16 %v6386, %v6382
        %v7127 = vpack.c.b16 %v6387, %v6383
        %v7128 = vpack.c.b16 %v6392, %v6388
        %v7129 = vpack.c.b16 %v6393, %v6389
        %v7130 = vpack.c.b16 %v6394, %v6390
        %v7131 = vpack.c.b16 %v6395, %v6391
        %v7132 = vpack.c.b16 %v6400, %v6396
        %v7133 = vpack.c.b16 %v6401, %v6397
        %v7134 = vpack.c.b16 %v6402, %v6398
        %v7135 = vpack.c.b16 %v6403, %v6399
        %v7136 = vpack.c.b16 %v6408, %v6404
        %v7137 = vpack.c.b16 %v6409, %v6405
        %v7138 = vpack.c.b16 %v6410, %v6406
        %v7139 = vpack.c.b16 %v6411, %v6407
        %v7140 = vpack.c.b16 %v6416, %v6412
        %v7141 = vpack.c.b16 %v6417, %v6413
        %v7142 = vpack.c.b16 %v6418, %v6414
        %v7143 = vpack.c.b16 %v6419, %v6415
        %v7144 = vpack.c.b16 %v6424, %v6420
        %v7145 = vpack.c.b16 %v6425, %v6421
        %v7146 = vpack.c.b16 %v6426, %v6422
        %v7147 = vpack.c.b16 %v6427, %v6423
        %v7148 = vpack.c.b16 %v6432, %v6428
        %v7149 = vpack.c.b16 %v6433, %v6429
        %v7150 = vpack.c.b16 %v6434, %v6430
        %v7151 = vpack.c.b16 %v6435, %v6431
        %v7152 = vpack.c.b16 %v6440, %v6436
        %v7153 = vpack.c.b16 %v6441, %v6437
        %v7154 = vpack.c.b16 %v6442, %v6438
        %v7155 = vpack.c.b16 %v6443, %v6439
        %v7156 = vpack.c.b16 %v6448, %v6444
        %v7157 = vpack.c.b16 %v6449, %v6445
        %v7158 = vpack.c.b16 %v6450, %v6446
        %v7159 = vpack.c.b16 %v6451, %v6447
        %v7160 = vpack.c.b16 %v6456, %v6452
        %v7161 = vpack.c.b16 %v6457, %v6453
        %v7162 = vpack.c.b16 %v6458, %v6454
        %v7163 = vpack.c.b16 %v6459, %v6455
        %v7164 = vpack.c.b16 %v6464, %v6460
        %v7165 = vpack.c.b16 %v6465, %v6461
        %v7166 = vpack.c.b16 %v6466, %v6462
        %v7167 = vpack.c.b16 %v6467, %v6463
        %v7168 = vpack.c.b16 %v6472, %v6468
        %v7169 = vpack.c.b16 %v6473, %v6469
        %v7170 = vpack.c.b16 %v6474, %v6470
        %v7171 = vpack.c.b16 %v6475, %v6471
        %v7172 = vpack.c.b16 %v6480, %v6476
        %v7173 = vpack.c.b16 %v6481, %v6477
        %v7174 = vpack.c.b16 %v6482, %v6478
        %v7175 = vpack.c.b16 %v6483, %v6479
        %v7176 = vpack.c.b16 %v6488, %v6484
        %v7177 = vpack.c.b16 %v6489, %v6485
        %v7178 = vpack.c.b16 %v6490, %v6486
        %v7179 = vpack.c.b16 %v6491, %v6487
        %v7180 = vpack.c.b16 %v6496, %v6492
        %v7181 = vpack.c.b16 %v6497, %v6493
        %v7182 = vpack.c.b16 %v6498, %v6494
        %v7183 = vpack.c.b16 %v6499, %v6495
        %v7184 = vpack.c.b16 %v6504, %v6500
        %v7185 = vpack.c.b16 %v6505, %v6501
        %v7186 = vpack.c.b16 %v6506, %v6502
        %v7187 = vpack.c.b16 %v6507, %v6503
        %v7188 = vpack.c.b16 %v6512, %v6508
        %v7189 = vpack.c.b16 %v6513, %v6509
        %v7190 = vpack.c.b16 %v6514, %v6510
        %v7191 = vpack.c.b16 %v6515, %v6511
        %v7192 = vpack.c.b16 %v6520, %v6516
        %v7193 = vpack.c.b16 %v6521, %v6517
        %v7194 = vpack.c.b16 %v6522, %v6518
        %v7195 = vpack.c.b16 %v6523, %v6519
        %v7196 = vpack.c.b16 %v6528, %v6524
        %v7197 = vpack.c.b16 %v6529, %v6525
        %v7198 = vpack.c.b16 %v6530, %v6526
        %v7199 = vpack.c.b16 %v6531, %v6527
        %v7200 = vpack.c.b16 %v6536, %v6532
        %v7201 = vpack.c.b16 %v6537, %v6533
        %v7202 = vpack.c.b16 %v6538, %v6534
        %v7203 = vpack.c.b16 %v6539, %v6535
        %v7204 = vpack.c.b16 %v6544, %v6540
        %v7205 = vpack.c.b16 %v6545, %v6541
        %v7206 = vpack.c.b16 %v6546, %v6542
        %v7207 = vpack.c.b16 %v6547, %v6543
        %v7208 = vpack.c.b16 %v6552, %v6548
        %v7209 = vpack.c.b16 %v6553, %v6549
        %v7210 = vpack.c.b16 %v6554, %v6550
        %v7211 = vpack.c.b16 %v6555, %v6551
        %v7212 = vpack.c.b16 %v6560, %v6556
        %v7213 = vpack.c.b16 %v6561, %v6557
        %v7214 = vpack.c.b16 %v6562, %v6558
        %v7215 = vpack.c.b16 %v6563, %v6559
        %v7216 = vpack.c.b16 %v6568, %v6564
        %v7217 = vpack.c.b16 %v6569, %v6565
        %v7218 = vpack.c.b16 %v6570, %v6566
        %v7219 = vpack.c.b16 %v6571, %v6567
        %v7220 = vpack.c.b16 %v6576, %v6572
        %v7221 = vpack.c.b16 %v6577, %v6573
        %v7222 = vpack.c.b16 %v6578, %v6574
        %v7223 = vpack.c.b16 %v6579, %v6575
        %v7224 = vpack.c.b16 %v6584, %v6580
        %v7225 = vpack.c.b16 %v6585, %v6581
        %v7226 = vpack.c.b16 %v6586, %v6582
        %v7227 = vpack.c.b16 %v6587, %v6583
        %v7228 = vpack.c.b16 %v6592, %v6588
        %v7229 = vpack.c.b16 %v6593, %v6589
        %v7230 = vpack.c.b16 %v6594, %v6590
        %v7231 = vpack.c.b16 %v6595, %v6591
        %v7232 = vpack.c.b16 %v6600, %v6596
        %v7233 = vpack.c.b16 %v6601, %v6597
        %v7234 = vpack.c.b16 %v6602, %v6598
        %v7235 = vpack.c.b16 %v6603, %v6599
        %v7236 = vpack.c.b16 %v6608, %v6604
        %v7237 = vpack.c.b16 %v6609, %v6605
        %v7238 = vpack.c.b16 %v6610, %v6606
        %v7239 = vpack.c.b16 %v6611, %v6607
        %v7240 = vpack.c.b16 %v6616, %v6612
        %v7241 = vpack.c.b16 %v6617, %v6613
        %v7242 = vpack.c.b16 %v6618, %v6614
        %v7243 = vpack.c.b16 %v6619, %v6615
        %v7244 = vpack.c.b16 %v6624, %v6620
        %v7245 = vpack.c.b16 %v6625, %v6621
        %v7246 = vpack.c.b16 %v6626, %v6622
        %v7247 = vpack.c.b16 %v6627, %v6623
        %v7248 = vpack.c.b16 %v6632, %v6628
        %v7249 = vpack.c.b16 %v6633, %v6629
        %v7250 = vpack.c.b16 %v6634, %v6630
        %v7251 = vpack.c.b16 %v6635, %v6631
        %v7252 = vpack.c.b16 %v6640, %v6636
        %v7253 = vpack.c.b16 %v6641, %v6637
        %v7254 = vpack.c.b16 %v6642, %v6638
        %v7255 = vpack.c.b16 %v6643, %v6639
        %v7256 = vpack.c.b16 %v6648, %v6644
        %v7257 = vpack.c.b16 %v6649, %v6645
        %v7258 = vpack.c.b16 %v6650, %v6646
        %v7259 = vpack.c.b16 %v6651, %v6647
        %v7260 = vpack.c.b16 %v6656, %v6652
        %v7261 = vpack.c.b16 %v6657, %v6653
        %v7262 = vpack.c.b16 %v6658, %v6654
        %v7263 = vpack.c.b16 %v6659, %v6655
        %v7264 = vpack.c.b16 %v6664, %v6660
        %v7265 = vpack.c.b16 %v6665, %v6661
        %v7266 = vpack.c.b16 %v6666, %v6662
        %v7267 = vpack.c.b16 %v6667, %v6663
        %v7268 = vpack.c.b16 %v6672, %v6668
        %v7269 = vpack.c.b16 %v6673, %v6669
        %v7270 = vpack.c.b16 %v6674, %v6670
        %v7271 = vpack.c.b16 %v6675, %v6671
        %v7272 = vpack.c.b16 %v6680, %v6676
        %v7273 = vpack.c.b16 %v6681, %v6677
        %v7274 = vpack.c.b16 %v6682, %v6678
        %v7275 = vpack.c.b16 %v6683, %v6679
        %v7276 = vpack.c.b16 %v6688, %v6684
        %v7277 = vpack.c.b16 %v6689, %v6685
        %v7278 = vpack.c.b16 %v6690, %v6686
        %v7279 = vpack.c.b16 %v6691, %v6687
        %v7280 = vpack.c.b16 %v6696, %v6692
        %v7281 = vpack.c.b16 %v6697, %v6693
        %v7282 = vpack.c.b16 %v6698, %v6694
        %v7283 = vpack.c.b16 %v6699, %v6695
        %v7284 = vpack.c.b16 %v6704, %v6700
        %v7285 = vpack.c.b16 %v6705, %v6701
        %v7286 = vpack.c.b16 %v6706, %v6702
        %v7287 = vpack.c.b16 %v6707, %v6703
        %v7288 = vpack.c.b16 %v6712, %v6708
        %v7289 = vpack.c.b16 %v6713, %v6709
        %v7290 = vpack.c.b16 %v6714, %v6710
        %v7291 = vpack.c.b16 %v6715, %v6711
        %v7292 = vpack.c.b16 %v6720, %v6716
        %v7293 = vpack.c.b16 %v6721, %v6717
        %v7294 = vpack.c.b16 %v6722, %v6718
        %v7295 = vpack.c.b16 %v6723, %v6719
        %v7296 = vpack.c.b16 %v6728, %v6724
        %v7297 = vpack.c.b16 %v6729, %v6725
        %v7298 = vpack.c.b16 %v6730, %v6726
        %v7299 = vpack.c.b16 %v6731, %v6727
        %v7300 = vpack.c.b16 %v6736, %v6732
        %v7301 = vpack.c.b16 %v6737, %v6733
        %v7302 = vpack.c.b16 %v6738, %v6734
        %v7303 = vpack.c.b16 %v6739, %v6735
        %v7304 = vpack.c.b16 %v6744, %v6740
        %v7305 = vpack.c.b16 %v6745, %v6741
        %v7306 = vpack.c.b16 %v6746, %v6742
        %v7307 = vpack.c.b16 %v6747, %v6743
        %v7308 = vpack.c.b16 %v6752, %v6748
        %v7309 = vpack.c.b16 %v6753, %v6749
        %v7310 = vpack.c.b16 %v6754, %v6750
        %v7311 = vpack.c.b16 %v6755, %v6751
        %v7312 = vpack.c.b16 %v6760, %v6756
        %v7313 = vpack.c.b16 %v6761, %v6757
        %v7314 = vpack.c.b16 %v6762, %v6758
        %v7315 = vpack.c.b16 %v6763, %v6759
        %v7316 = vpack.c.b16 %v6768, %v6764
        %v7317 = vpack.c.b16 %v6769, %v6765
        %v7318 = vpack.c.b16 %v6770, %v6766
        %v7319 = vpack.c.b16 %v6771, %v6767
        %v7320 = vpack.c.b16 %v6776, %v6772
        %v7321 = vpack.c.b16 %v6777, %v6773
        %v7322 = vpack.c.b16 %v6778, %v6774
        %v7323 = vpack.c.b16 %v6779, %v6775
        %v7324 = vpack.c.b16 %v6784, %v6780
        %v7325 = vpack.c.b16 %v6785, %v6781
        %v7326 = vpack.c.b16 %v6786, %v6782
        %v7327 = vpack.c.b16 %v6787, %v6783
        %v7328 = vpack.c.b16 %v6792, %v6788
        %v7329 = vpack.c.b16 %v6793, %v6789
        %v7330 = vpack.c.b16 %v6794, %v6790
        %v7331 = vpack.c.b16 %v6795, %v6791
        %v7332 = vpack.c.b16 %v6800, %v6796
        %v7333 = vpack.c.b16 %v6801, %v6797
        %v7334 = vpack.c.b16 %v6802, %v6798
        %v7335 = vpack.c.b16 %v6803, %v6799
        %v7336 = vpack.c.b16 %v6808, %v6804
        %v7337 = vpack.c.b16 %v6809, %v6805
        %v7338 = vpack.c.b16 %v6810, %v6806
        %v7339 = vpack.c.b16 %v6811, %v6807
        %v7340 = vpack.c.b16 %v6816, %v6812
        %v7341 = vpack.c.b16 %v6817, %v6813
        %v7342 = vpack.c.b16 %v6818, %v6814
        %v7343 = vpack.c.b16 %v6819, %v6815
        %v7344 = vpack.c.b16 %v6824, %v6820
        %v7345 = vpack.c.b16 %v6825, %v6821
        %v7346 = vpack.c.b16 %v6826, %v6822
        %v7347 = vpack.c.b16 %v6827, %v6823
        %v7348 = vpack.c.b16 %v6832, %v6828
        %v7349 = vpack.c.b16 %v6833, %v6829
        %v7350 = vpack.c.b16 %v6834, %v6830
        %v7351 = vpack.c.b16 %v6835, %v6831
        %v7352 = vpack.c.b16 %v6840, %v6836
        %v7353 = vpack.c.b16 %v6841, %v6837
        %v7354 = vpack.c.b16 %v6842, %v6838
        %v7355 = vpack.c.b16 %v6843, %v6839
        %7868 = vmatpush.bf16.msra.mxu0 %v6872
        %7869 = vmatpush.bf16.msra.mxu0 %v6868
        %7870 = vmatpush.bf16.msra.mxu0 %v6864
        %7871 = vmatpush.bf16.msra.mxu0 %v6860
        %7872 = vmatpush.bf16.msra.mxu0 %v6856
        %7873 = vmatpush.bf16.msra.mxu0 %v6852
        %7874 = vmatpush.bf16.msra.mxu0 %v6848
        %7875 = vmatpush.bf16.msra.mxu0 %v6844
        %7876 = vmatmul.bf16.gmra.mxu0 %v5292
        %v7877 = vpop.f32.mrf.mxu0
        %v7878 = vadd.f32 0.0, %v7877
        %v7879 = vpop.f32.mrf.mxu0
        %7880 = vdwg.mxu0
        %7881 = vmatpush.bf16.msra.mxu0 %v6904
        %7882 = vmatpush.bf16.msra.mxu0 %v6900
        %7883 = vmatpush.bf16.msra.mxu0 %v6896
        %7884 = vmatpush.bf16.msra.mxu0 %v6892
        %7885 = vmatpush.bf16.msra.mxu0 %v6888
        %7886 = vmatpush.bf16.msra.mxu0 %v6884
        %7887 = vmatpush.bf16.msra.mxu0 %v6880
        %7888 = vmatpush.bf16.msra.mxu0 %v6876
        %7889 = vmatmul.bf16.gmra.mxu0 %v5293
        %v7890 = vpop.f32.mrf.mxu0
        %v7891 = vadd.f32 %v7878, %v7890
        %v7892 = vpop.f32.mrf.mxu0
        %7893 = vdwg.mxu0
        %7894 = vmatpush.bf16.msra.mxu0 %v6936
        %7895 = vmatpush.bf16.msra.mxu0 %v6932
        %7896 = vmatpush.bf16.msra.mxu0 %v6928
        %7897 = vmatpush.bf16.msra.mxu0 %v6924
        %7898 = vmatpush.bf16.msra.mxu0 %v6920
        %7899 = vmatpush.bf16.msra.mxu0 %v6916
        %7900 = vmatpush.bf16.msra.mxu0 %v6912
        %7901 = vmatpush.bf16.msra.mxu0 %v6908
        %7902 = vmatmul.bf16.gmra.mxu0 %v5294
        %v7903 = vpop.f32.mrf.mxu0
        %v7904 = vadd.f32 %v7891, %v7903
        %v7905 = vpop.f32.mrf.mxu0
        %7906 = vdwg.mxu0
        %7907 = vmatpush.bf16.msra.mxu0 %v6968
        %7908 = vmatpush.bf16.msra.mxu0 %v6964
        %7909 = vmatpush.bf16.msra.mxu0 %v6960
        %7910 = vmatpush.bf16.msra.mxu0 %v6956
        %7911 = vmatpush.bf16.msra.mxu0 %v6952
        %7912 = vmatpush.bf16.msra.mxu0 %v6948
        %7913 = vmatpush.bf16.msra.mxu0 %v6944
        %7914 = vmatpush.bf16.msra.mxu0 %v6940
        %7915 = vmatmul.bf16.gmra.mxu0 %v5295
        %v7916 = vpop.f32.mrf.mxu0
        %v7917 = vadd.f32 %v7904, %v7916
        %v7918 = vpop.f32.mrf.mxu0
        %7919 = vdwg.mxu0
        %7920 = vmatpush.bf16.msra.mxu0 %v7000
        %7921 = vmatpush.bf16.msra.mxu0 %v6996
        %7922 = vmatpush.bf16.msra.mxu0 %v6992
        %7923 = vmatpush.bf16.msra.mxu0 %v6988
        %7924 = vmatpush.bf16.msra.mxu0 %v6984
        %7925 = vmatpush.bf16.msra.mxu0 %v6980
        %7926 = vmatpush.bf16.msra.mxu0 %v6976
        %7927 = vmatpush.bf16.msra.mxu0 %v6972
        %7928 = vmatmul.bf16.gmra.mxu0 %v5296
        %v7929 = vpop.f32.mrf.mxu0
        %v7930 = vadd.f32 %v7917, %v7929
        %v7931 = vpop.f32.mrf.mxu0
        %7932 = vdwg.mxu0
        %7933 = vmatpush.bf16.msra.mxu0 %v7032
        %7934 = vmatpush.bf16.msra.mxu0 %v7028
        %7935 = vmatpush.bf16.msra.mxu0 %v7024
        %7936 = vmatpush.bf16.msra.mxu0 %v7020
        %7937 = vmatpush.bf16.msra.mxu0 %v7016
        %7938 = vmatpush.bf16.msra.mxu0 %v7012
        %7939 = vmatpush.bf16.msra.mxu0 %v7008
        %7940 = vmatpush.bf16.msra.mxu0 %v7004
        %7941 = vmatmul.bf16.gmra.mxu0 %v5297
        %v7942 = vpop.f32.mrf.mxu0
        %v7943 = vadd.f32 %v7930, %v7942
        %v7944 = vpop.f32.mrf.mxu0
        %7945 = vdwg.mxu0
        %7946 = vmatpush.bf16.msra.mxu0 %v7064
        %7947 = vmatpush.bf16.msra.mxu0 %v7060
        %7948 = vmatpush.bf16.msra.mxu0 %v7056
        %7949 = vmatpush.bf16.msra.mxu0 %v7052
        %7950 = vmatpush.bf16.msra.mxu0 %v7048
        %7951 = vmatpush.bf16.msra.mxu0 %v7044
        %7952 = vmatpush.bf16.msra.mxu0 %v7040
        %7953 = vmatpush.bf16.msra.mxu0 %v7036
        %7954 = vmatmul.bf16.gmra.mxu0 %v5298
        %v7955 = vpop.f32.mrf.mxu0
        %v7956 = vadd.f32 %v7943, %v7955
        %v7957 = vpop.f32.mrf.mxu0
        %7958 = vdwg.mxu0
        %7959 = vmatpush.bf16.msra.mxu0 %v7096
        %7960 = vmatpush.bf16.msra.mxu0 %v7092
        %7961 = vmatpush.bf16.msra.mxu0 %v7088
        %7962 = vmatpush.bf16.msra.mxu0 %v7084
        %7963 = vmatpush.bf16.msra.mxu0 %v7080
        %7964 = vmatpush.bf16.msra.mxu0 %v7076
        %7965 = vmatpush.bf16.msra.mxu0 %v7072
        %7966 = vmatpush.bf16.msra.mxu0 %v7068
        %7967 = vmatmul.bf16.gmra.mxu0 %v5299
        %v7968 = vpop.f32.mrf.mxu0
        %v7969 = vadd.f32 %v7956, %v7968
        %v7970 = vpop.f32.mrf.mxu0
        %7971 = vdwg.mxu0
        %7972 = vmatpush.bf16.msra.mxu0 %v7128
        %7973 = vmatpush.bf16.msra.mxu0 %v7124
        %7974 = vmatpush.bf16.msra.mxu0 %v7120
        %7975 = vmatpush.bf16.msra.mxu0 %v7116
        %7976 = vmatpush.bf16.msra.mxu0 %v7112
        %7977 = vmatpush.bf16.msra.mxu0 %v7108
        %7978 = vmatpush.bf16.msra.mxu0 %v7104
        %7979 = vmatpush.bf16.msra.mxu0 %v7100
        %7980 = vmatmul.bf16.gmra.mxu0 %v5300
        %v7981 = vpop.f32.mrf.mxu0
        %v7982 = vadd.f32 %v7969, %v7981
        %v7983 = vpop.f32.mrf.mxu0
        %7984 = vdwg.mxu0
        %7985 = vmatpush.bf16.msra.mxu0 %v7160
        %7986 = vmatpush.bf16.msra.mxu0 %v7156
        %7987 = vmatpush.bf16.msra.mxu0 %v7152
        %7988 = vmatpush.bf16.msra.mxu0 %v7148
        %7989 = vmatpush.bf16.msra.mxu0 %v7144
        %7990 = vmatpush.bf16.msra.mxu0 %v7140
        %7991 = vmatpush.bf16.msra.mxu0 %v7136
        %7992 = vmatpush.bf16.msra.mxu0 %v7132
        %7993 = vmatmul.bf16.gmra.mxu0 %v5301
        %v7994 = vpop.f32.mrf.mxu0
        %v7995 = vadd.f32 %v7982, %v7994
        %v7996 = vpop.f32.mrf.mxu0
        %7997 = vdwg.mxu0
        %7998 = vmatpush.bf16.msra.mxu0 %v7192
        %7999 = vmatpush.bf16.msra.mxu0 %v7188
        %8000 = vmatpush.bf16.msra.mxu0 %v7184
        %8001 = vmatpush.bf16.msra.mxu0 %v7180
        %8002 = vmatpush.bf16.msra.mxu0 %v7176
        %8003 = vmatpush.bf16.msra.mxu0 %v7172
        %8004 = vmatpush.bf16.msra.mxu0 %v7168
        %8005 = vmatpush.bf16.msra.mxu0 %v7164
        %8006 = vmatmul.bf16.gmra.mxu0 %v5302
        %v8007 = vpop.f32.mrf.mxu0
        %v8008 = vadd.f32 %v7995, %v8007
        %v8009 = vpop.f32.mrf.mxu0
        %8010 = vdwg.mxu0
        %8011 = vmatpush.bf16.msra.mxu0 %v7224
        %8012 = vmatpush.bf16.msra.mxu0 %v7220
        %8013 = vmatpush.bf16.msra.mxu0 %v7216
        %8014 = vmatpush.bf16.msra.mxu0 %v7212
        %8015 = vmatpush.bf16.msra.mxu0 %v7208
        %8016 = vmatpush.bf16.msra.mxu0 %v7204
        %8017 = vmatpush.bf16.msra.mxu0 %v7200
        %8018 = vmatpush.bf16.msra.mxu0 %v7196
        %8019 = vmatmul.bf16.gmra.mxu0 %v5303
        %v8020 = vpop.f32.mrf.mxu0
        %v8021 = vadd.f32 %v8008, %v8020
        %v8022 = vpop.f32.mrf.mxu0
        %8023 = vdwg.mxu0
        %8024 = vmatpush.bf16.msra.mxu0 %v7256
        %8025 = vmatpush.bf16.msra.mxu0 %v7252
        %8026 = vmatpush.bf16.msra.mxu0 %v7248
        %8027 = vmatpush.bf16.msra.mxu0 %v7244
        %8028 = vmatpush.bf16.msra.mxu0 %v7240
        %8029 = vmatpush.bf16.msra.mxu0 %v7236
        %8030 = vmatpush.bf16.msra.mxu0 %v7232
        %8031 = vmatpush.bf16.msra.mxu0 %v7228
        %8032 = vmatmul.bf16.gmra.mxu0 %v5304
        %v8033 = vpop.f32.mrf.mxu0
        %v8034 = vadd.f32 %v8021, %v8033
        %v8035 = vpop.f32.mrf.mxu0
        %8036 = vdwg.mxu0
        %8037 = vmatpush.bf16.msra.mxu0 %v7288
        %8038 = vmatpush.bf16.msra.mxu0 %v7284
        %8039 = vmatpush.bf16.msra.mxu0 %v7280
        %8040 = vmatpush.bf16.msra.mxu0 %v7276
        %8041 = vmatpush.bf16.msra.mxu0 %v7272
        %8042 = vmatpush.bf16.msra.mxu0 %v7268
        %8043 = vmatpush.bf16.msra.mxu0 %v7264
        %8044 = vmatpush.bf16.msra.mxu0 %v7260
        %8045 = vmatmul.bf16.gmra.mxu0 %v5305
        %v8046 = vpop.f32.mrf.mxu0
        %v8047 = vadd.f32 %v8034, %v8046
        %v8048 = vpop.f32.mrf.mxu0
        %8049 = vdwg.mxu0
        %8050 = vmatpush.bf16.msra.mxu0 %v7320
        %8051 = vmatpush.bf16.msra.mxu0 %v7316
        %8052 = vmatpush.bf16.msra.mxu0 %v7312
        %8053 = vmatpush.bf16.msra.mxu0 %v7308
        %8054 = vmatpush.bf16.msra.mxu0 %v7304
        %8055 = vmatpush.bf16.msra.mxu0 %v7300
        %8056 = vmatpush.bf16.msra.mxu0 %v7296
        %8057 = vmatpush.bf16.msra.mxu0 %v7292
        %8058 = vmatmul.bf16.gmra.mxu0 %v5306
        %v8059 = vpop.f32.mrf.mxu0
        %v8060 = vadd.f32 %v8047, %v8059
        %v8061 = vpop.f32.mrf.mxu0
        %8062 = vdwg.mxu0
        %8063 = vmatpush.bf16.msra.mxu0 %v7352
        %8064 = vmatpush.bf16.msra.mxu0 %v7348
        %8065 = vmatpush.bf16.msra.mxu0 %v7344
        %8066 = vmatpush.bf16.msra.mxu0 %v7340
        %8067 = vmatpush.bf16.msra.mxu0 %v7336
        %8068 = vmatpush.bf16.msra.mxu0 %v7332
        %8069 = vmatpush.bf16.msra.mxu0 %v7328
        %8070 = vmatpush.bf16.msra.mxu0 %v7324
        %8071 = vmatmul.bf16.gmra.mxu0 %v5307
        %v8072 = vpop.f32.mrf.mxu0
        %v8073 = vadd.f32 %v8060, %v8072
        %v8074 = vpop.f32.mrf.mxu0
        %8075 = vdwg.mxu0
        %8076 = vmatpush.bf16.msra.mxu0 %v6873
        %8077 = vmatpush.bf16.msra.mxu0 %v6869
        %8078 = vmatpush.bf16.msra.mxu0 %v6865
        %8079 = vmatpush.bf16.msra.mxu0 %v6861
        %8080 = vmatpush.bf16.msra.mxu0 %v6857
        %8081 = vmatpush.bf16.msra.mxu0 %v6853
        %8082 = vmatpush.bf16.msra.mxu0 %v6849
        %8083 = vmatpush.bf16.msra.mxu0 %v6845
        %8084 = vmatmul.bf16.gmra.mxu0 %v5292
        %v8085 = vpop.f32.mrf.mxu0
        %v8086 = vadd.f32 0.0, %v8085
        %v8087 = vpop.f32.mrf.mxu0
        %8088 = vdwg.mxu0
        %8089 = vmatpush.bf16.msra.mxu0 %v6905
        %8090 = vmatpush.bf16.msra.mxu0 %v6901
        %8091 = vmatpush.bf16.msra.mxu0 %v6897
        %8092 = vmatpush.bf16.msra.mxu0 %v6893
        %8093 = vmatpush.bf16.msra.mxu0 %v6889
        %8094 = vmatpush.bf16.msra.mxu0 %v6885
        %8095 = vmatpush.bf16.msra.mxu0 %v6881
        %8096 = vmatpush.bf16.msra.mxu0 %v6877
        %8097 = vmatmul.bf16.gmra.mxu0 %v5293
        %v8098 = vpop.f32.mrf.mxu0
        %v8099 = vadd.f32 %v8086, %v8098
        %v8100 = vpop.f32.mrf.mxu0
        %8101 = vdwg.mxu0
        %8102 = vmatpush.bf16.msra.mxu0 %v6937
        %8103 = vmatpush.bf16.msra.mxu0 %v6933
        %8104 = vmatpush.bf16.msra.mxu0 %v6929
        %8105 = vmatpush.bf16.msra.mxu0 %v6925
        %8106 = vmatpush.bf16.msra.mxu0 %v6921
        %8107 = vmatpush.bf16.msra.mxu0 %v6917
        %8108 = vmatpush.bf16.msra.mxu0 %v6913
        %8109 = vmatpush.bf16.msra.mxu0 %v6909
        %8110 = vmatmul.bf16.gmra.mxu0 %v5294
        %v8111 = vpop.f32.mrf.mxu0
        %v8112 = vadd.f32 %v8099, %v8111
        %v8113 = vpop.f32.mrf.mxu0
        %8114 = vdwg.mxu0
        %8115 = vmatpush.bf16.msra.mxu0 %v6969
        %8116 = vmatpush.bf16.msra.mxu0 %v6965
        %8117 = vmatpush.bf16.msra.mxu0 %v6961
        %8118 = vmatpush.bf16.msra.mxu0 %v6957
        %8119 = vmatpush.bf16.msra.mxu0 %v6953
        %8120 = vmatpush.bf16.msra.mxu0 %v6949
        %8121 = vmatpush.bf16.msra.mxu0 %v6945
        %8122 = vmatpush.bf16.msra.mxu0 %v6941
        %8123 = vmatmul.bf16.gmra.mxu0 %v5295
        %v8124 = vpop.f32.mrf.mxu0
        %v8125 = vadd.f32 %v8112, %v8124
        %v8126 = vpop.f32.mrf.mxu0
        %8127 = vdwg.mxu0
        %8128 = vmatpush.bf16.msra.mxu0 %v7001
        %8129 = vmatpush.bf16.msra.mxu0 %v6997
        %8130 = vmatpush.bf16.msra.mxu0 %v6993
        %8131 = vmatpush.bf16.msra.mxu0 %v6989
        %8132 = vmatpush.bf16.msra.mxu0 %v6985
        %8133 = vmatpush.bf16.msra.mxu0 %v6981
        %8134 = vmatpush.bf16.msra.mxu0 %v6977
        %8135 = vmatpush.bf16.msra.mxu0 %v6973
        %8136 = vmatmul.bf16.gmra.mxu0 %v5296
        %v8137 = vpop.f32.mrf.mxu0
        %v8138 = vadd.f32 %v8125, %v8137
        %v8139 = vpop.f32.mrf.mxu0
        %8140 = vdwg.mxu0
        %8141 = vmatpush.bf16.msra.mxu0 %v7033
        %8142 = vmatpush.bf16.msra.mxu0 %v7029
        %8143 = vmatpush.bf16.msra.mxu0 %v7025
        %8144 = vmatpush.bf16.msra.mxu0 %v7021
        %8145 = vmatpush.bf16.msra.mxu0 %v7017
        %8146 = vmatpush.bf16.msra.mxu0 %v7013
        %8147 = vmatpush.bf16.msra.mxu0 %v7009
        %8148 = vmatpush.bf16.msra.mxu0 %v7005
        %8149 = vmatmul.bf16.gmra.mxu0 %v5297
        %v8150 = vpop.f32.mrf.mxu0
        %v8151 = vadd.f32 %v8138, %v8150
        %v8152 = vpop.f32.mrf.mxu0
        %8153 = vdwg.mxu0
        %8154 = vmatpush.bf16.msra.mxu0 %v7065
        %8155 = vmatpush.bf16.msra.mxu0 %v7061
        %8156 = vmatpush.bf16.msra.mxu0 %v7057
        %8157 = vmatpush.bf16.msra.mxu0 %v7053
        %8158 = vmatpush.bf16.msra.mxu0 %v7049
        %8159 = vmatpush.bf16.msra.mxu0 %v7045
        %8160 = vmatpush.bf16.msra.mxu0 %v7041
        %8161 = vmatpush.bf16.msra.mxu0 %v7037
        %8162 = vmatmul.bf16.gmra.mxu0 %v5298
        %v8163 = vpop.f32.mrf.mxu0
        %v8164 = vadd.f32 %v8151, %v8163
        %v8165 = vpop.f32.mrf.mxu0
        %8166 = vdwg.mxu0
        %8167 = vmatpush.bf16.msra.mxu0 %v7097
        %8168 = vmatpush.bf16.msra.mxu0 %v7093
        %8169 = vmatpush.bf16.msra.mxu0 %v7089
        %8170 = vmatpush.bf16.msra.mxu0 %v7085
        %8171 = vmatpush.bf16.msra.mxu0 %v7081
        %8172 = vmatpush.bf16.msra.mxu0 %v7077
        %8173 = vmatpush.bf16.msra.mxu0 %v7073
        %8174 = vmatpush.bf16.msra.mxu0 %v7069
        %8175 = vmatmul.bf16.gmra.mxu0 %v5299
        %v8176 = vpop.f32.mrf.mxu0
        %v8177 = vadd.f32 %v8164, %v8176
        %v8178 = vpop.f32.mrf.mxu0
        %8179 = vdwg.mxu0
        %8180 = vmatpush.bf16.msra.mxu0 %v7129
        %8181 = vmatpush.bf16.msra.mxu0 %v7125
        %8182 = vmatpush.bf16.msra.mxu0 %v7121
        %8183 = vmatpush.bf16.msra.mxu0 %v7117
        %8184 = vmatpush.bf16.msra.mxu0 %v7113
        %8185 = vmatpush.bf16.msra.mxu0 %v7109
        %8186 = vmatpush.bf16.msra.mxu0 %v7105
        %8187 = vmatpush.bf16.msra.mxu0 %v7101
        %8188 = vmatmul.bf16.gmra.mxu0 %v5300
        %v8189 = vpop.f32.mrf.mxu0
        %v8190 = vadd.f32 %v8177, %v8189
        %v8191 = vpop.f32.mrf.mxu0
        %8192 = vdwg.mxu0
        %8193 = vmatpush.bf16.msra.mxu0 %v7161
        %8194 = vmatpush.bf16.msra.mxu0 %v7157
        %8195 = vmatpush.bf16.msra.mxu0 %v7153
        %8196 = vmatpush.bf16.msra.mxu0 %v7149
        %8197 = vmatpush.bf16.msra.mxu0 %v7145
        %8198 = vmatpush.bf16.msra.mxu0 %v7141
        %8199 = vmatpush.bf16.msra.mxu0 %v7137
        %8200 = vmatpush.bf16.msra.mxu0 %v7133
        %8201 = vmatmul.bf16.gmra.mxu0 %v5301
        %v8202 = vpop.f32.mrf.mxu0
        %v8203 = vadd.f32 %v8190, %v8202
        %v8204 = vpop.f32.mrf.mxu0
        %8205 = vdwg.mxu0
        %8206 = vmatpush.bf16.msra.mxu0 %v7193
        %8207 = vmatpush.bf16.msra.mxu0 %v7189
        %8208 = vmatpush.bf16.msra.mxu0 %v7185
        %8209 = vmatpush.bf16.msra.mxu0 %v7181
        %8210 = vmatpush.bf16.msra.mxu0 %v7177
        %8211 = vmatpush.bf16.msra.mxu0 %v7173
        %8212 = vmatpush.bf16.msra.mxu0 %v7169
        %8213 = vmatpush.bf16.msra.mxu0 %v7165
        %8214 = vmatmul.bf16.gmra.mxu0 %v5302
        %v8215 = vpop.f32.mrf.mxu0
        %v8216 = vadd.f32 %v8203, %v8215
        %v8217 = vpop.f32.mrf.mxu0
        %8218 = vdwg.mxu0
        %8219 = vmatpush.bf16.msra.mxu0 %v7225
        %8220 = vmatpush.bf16.msra.mxu0 %v7221
        %8221 = vmatpush.bf16.msra.mxu0 %v7217
        %8222 = vmatpush.bf16.msra.mxu0 %v7213
        %8223 = vmatpush.bf16.msra.mxu0 %v7209
        %8224 = vmatpush.bf16.msra.mxu0 %v7205
        %8225 = vmatpush.bf16.msra.mxu0 %v7201
        %8226 = vmatpush.bf16.msra.mxu0 %v7197
        %8227 = vmatmul.bf16.gmra.mxu0 %v5303
        %v8228 = vpop.f32.mrf.mxu0
        %v8229 = vadd.f32 %v8216, %v8228
        %v8230 = vpop.f32.mrf.mxu0
        %8231 = vdwg.mxu0
        %8232 = vmatpush.bf16.msra.mxu0 %v7257
        %8233 = vmatpush.bf16.msra.mxu0 %v7253
        %8234 = vmatpush.bf16.msra.mxu0 %v7249
        %8235 = vmatpush.bf16.msra.mxu0 %v7245
        %8236 = vmatpush.bf16.msra.mxu0 %v7241
        %8237 = vmatpush.bf16.msra.mxu0 %v7237
        %8238 = vmatpush.bf16.msra.mxu0 %v7233
        %8239 = vmatpush.bf16.msra.mxu0 %v7229
        %8240 = vmatmul.bf16.gmra.mxu0 %v5304
        %v8241 = vpop.f32.mrf.mxu0
        %v8242 = vadd.f32 %v8229, %v8241
        %v8243 = vpop.f32.mrf.mxu0
        %8244 = vdwg.mxu0
        %8245 = vmatpush.bf16.msra.mxu0 %v7289
        %8246 = vmatpush.bf16.msra.mxu0 %v7285
        %8247 = vmatpush.bf16.msra.mxu0 %v7281
        %8248 = vmatpush.bf16.msra.mxu0 %v7277
        %8249 = vmatpush.bf16.msra.mxu0 %v7273
        %8250 = vmatpush.bf16.msra.mxu0 %v7269
        %8251 = vmatpush.bf16.msra.mxu0 %v7265
        %8252 = vmatpush.bf16.msra.mxu0 %v7261
        %8253 = vmatmul.bf16.gmra.mxu0 %v5305
        %v8254 = vpop.f32.mrf.mxu0
        %v8255 = vadd.f32 %v8242, %v8254
        %v8256 = vpop.f32.mrf.mxu0
        %8257 = vdwg.mxu0
        %8258 = vmatpush.bf16.msra.mxu0 %v7321
        %8259 = vmatpush.bf16.msra.mxu0 %v7317
        %8260 = vmatpush.bf16.msra.mxu0 %v7313
        %8261 = vmatpush.bf16.msra.mxu0 %v7309
        %8262 = vmatpush.bf16.msra.mxu0 %v7305
        %8263 = vmatpush.bf16.msra.mxu0 %v7301
        %8264 = vmatpush.bf16.msra.mxu0 %v7297
        %8265 = vmatpush.bf16.msra.mxu0 %v7293
        %8266 = vmatmul.bf16.gmra.mxu0 %v5306
        %v8267 = vpop.f32.mrf.mxu0
        %v8268 = vadd.f32 %v8255, %v8267
        %v8269 = vpop.f32.mrf.mxu0
        %8270 = vdwg.mxu0
        %8271 = vmatpush.bf16.msra.mxu0 %v7353
        %8272 = vmatpush.bf16.msra.mxu0 %v7349
        %8273 = vmatpush.bf16.msra.mxu0 %v7345
        %8274 = vmatpush.bf16.msra.mxu0 %v7341
        %8275 = vmatpush.bf16.msra.mxu0 %v7337
        %8276 = vmatpush.bf16.msra.mxu0 %v7333
        %8277 = vmatpush.bf16.msra.mxu0 %v7329
        %8278 = vmatpush.bf16.msra.mxu0 %v7325
        %8279 = vmatmul.bf16.gmra.mxu0 %v5307
        %v8280 = vpop.f32.mrf.mxu0
        %v8281 = vadd.f32 %v8268, %v8280
        %v8282 = vpop.f32.mrf.mxu0
        %8283 = vdwg.mxu0
        %8284 = vmatpush.bf16.msra.mxu0 %v6874
        %8285 = vmatpush.bf16.msra.mxu0 %v6870
        %8286 = vmatpush.bf16.msra.mxu0 %v6866
        %8287 = vmatpush.bf16.msra.mxu0 %v6862
        %8288 = vmatpush.bf16.msra.mxu0 %v6858
        %8289 = vmatpush.bf16.msra.mxu0 %v6854
        %8290 = vmatpush.bf16.msra.mxu0 %v6850
        %8291 = vmatpush.bf16.msra.mxu0 %v6846
        %8292 = vmatmul.bf16.gmra.mxu0 %v5292
        %v8293 = vpop.f32.mrf.mxu0
        %v8294 = vadd.f32 0.0, %v8293
        %v8295 = vpop.f32.mrf.mxu0
        %8296 = vdwg.mxu0
        %8297 = vmatpush.bf16.msra.mxu0 %v6906
        %8298 = vmatpush.bf16.msra.mxu0 %v6902
        %8299 = vmatpush.bf16.msra.mxu0 %v6898
        %8300 = vmatpush.bf16.msra.mxu0 %v6894
        %8301 = vmatpush.bf16.msra.mxu0 %v6890
        %8302 = vmatpush.bf16.msra.mxu0 %v6886
        %8303 = vmatpush.bf16.msra.mxu0 %v6882
        %8304 = vmatpush.bf16.msra.mxu0 %v6878
        %8305 = vmatmul.bf16.gmra.mxu0 %v5293
        %v8306 = vpop.f32.mrf.mxu0
        %v8307 = vadd.f32 %v8294, %v8306
        %v8308 = vpop.f32.mrf.mxu0
        %8309 = vdwg.mxu0
        %8310 = vmatpush.bf16.msra.mxu0 %v6938
        %8311 = vmatpush.bf16.msra.mxu0 %v6934
        %8312 = vmatpush.bf16.msra.mxu0 %v6930
        %8313 = vmatpush.bf16.msra.mxu0 %v6926
        %8314 = vmatpush.bf16.msra.mxu0 %v6922
        %8315 = vmatpush.bf16.msra.mxu0 %v6918
        %8316 = vmatpush.bf16.msra.mxu0 %v6914
        %8317 = vmatpush.bf16.msra.mxu0 %v6910
        %8318 = vmatmul.bf16.gmra.mxu0 %v5294
        %v8319 = vpop.f32.mrf.mxu0
        %v8320 = vadd.f32 %v8307, %v8319
        %v8321 = vpop.f32.mrf.mxu0
        %8322 = vdwg.mxu0
        %8323 = vmatpush.bf16.msra.mxu0 %v6970
        %8324 = vmatpush.bf16.msra.mxu0 %v6966
        %8325 = vmatpush.bf16.msra.mxu0 %v6962
        %8326 = vmatpush.bf16.msra.mxu0 %v6958
        %8327 = vmatpush.bf16.msra.mxu0 %v6954
        %8328 = vmatpush.bf16.msra.mxu0 %v6950
        %8329 = vmatpush.bf16.msra.mxu0 %v6946
        %8330 = vmatpush.bf16.msra.mxu0 %v6942
        %8331 = vmatmul.bf16.gmra.mxu0 %v5295
        %v8332 = vpop.f32.mrf.mxu0
        %v8333 = vadd.f32 %v8320, %v8332
        %v8334 = vpop.f32.mrf.mxu0
        %8335 = vdwg.mxu0
        %8336 = vmatpush.bf16.msra.mxu0 %v7002
        %8337 = vmatpush.bf16.msra.mxu0 %v6998
        %8338 = vmatpush.bf16.msra.mxu0 %v6994
        %8339 = vmatpush.bf16.msra.mxu0 %v6990
        %8340 = vmatpush.bf16.msra.mxu0 %v6986
        %8341 = vmatpush.bf16.msra.mxu0 %v6982
        %8342 = vmatpush.bf16.msra.mxu0 %v6978
        %8343 = vmatpush.bf16.msra.mxu0 %v6974
        %8344 = vmatmul.bf16.gmra.mxu0 %v5296
        %v8345 = vpop.f32.mrf.mxu0
        %v8346 = vadd.f32 %v8333, %v8345
        %v8347 = vpop.f32.mrf.mxu0
        %8348 = vdwg.mxu0
        %8349 = vmatpush.bf16.msra.mxu0 %v7034
        %8350 = vmatpush.bf16.msra.mxu0 %v7030
        %8351 = vmatpush.bf16.msra.mxu0 %v7026
        %8352 = vmatpush.bf16.msra.mxu0 %v7022
        %8353 = vmatpush.bf16.msra.mxu0 %v7018
        %8354 = vmatpush.bf16.msra.mxu0 %v7014
        %8355 = vmatpush.bf16.msra.mxu0 %v7010
        %8356 = vmatpush.bf16.msra.mxu0 %v7006
        %8357 = vmatmul.bf16.gmra.mxu0 %v5297
        %v8358 = vpop.f32.mrf.mxu0
        %v8359 = vadd.f32 %v8346, %v8358
        %v8360 = vpop.f32.mrf.mxu0
        %8361 = vdwg.mxu0
        %8362 = vmatpush.bf16.msra.mxu0 %v7066
        %8363 = vmatpush.bf16.msra.mxu0 %v7062
        %8364 = vmatpush.bf16.msra.mxu0 %v7058
        %8365 = vmatpush.bf16.msra.mxu0 %v7054
        %8366 = vmatpush.bf16.msra.mxu0 %v7050
        %8367 = vmatpush.bf16.msra.mxu0 %v7046
        %8368 = vmatpush.bf16.msra.mxu0 %v7042
        %8369 = vmatpush.bf16.msra.mxu0 %v7038
        %8370 = vmatmul.bf16.gmra.mxu0 %v5298
        %v8371 = vpop.f32.mrf.mxu0
        %v8372 = vadd.f32 %v8359, %v8371
        %v8373 = vpop.f32.mrf.mxu0
        %8374 = vdwg.mxu0
        %8375 = vmatpush.bf16.msra.mxu0 %v7098
        %8376 = vmatpush.bf16.msra.mxu0 %v7094
        %8377 = vmatpush.bf16.msra.mxu0 %v7090
        %8378 = vmatpush.bf16.msra.mxu0 %v7086
        %8379 = vmatpush.bf16.msra.mxu0 %v7082
        %8380 = vmatpush.bf16.msra.mxu0 %v7078
        %8381 = vmatpush.bf16.msra.mxu0 %v7074
        %8382 = vmatpush.bf16.msra.mxu0 %v7070
        %8383 = vmatmul.bf16.gmra.mxu0 %v5299
        %v8384 = vpop.f32.mrf.mxu0
        %v8385 = vadd.f32 %v8372, %v8384
        %v8386 = vpop.f32.mrf.mxu0
        %8387 = vdwg.mxu0
        %8388 = vmatpush.bf16.msra.mxu0 %v7130
        %8389 = vmatpush.bf16.msra.mxu0 %v7126
        %8390 = vmatpush.bf16.msra.mxu0 %v7122
        %8391 = vmatpush.bf16.msra.mxu0 %v7118
        %8392 = vmatpush.bf16.msra.mxu0 %v7114
        %8393 = vmatpush.bf16.msra.mxu0 %v7110
        %8394 = vmatpush.bf16.msra.mxu0 %v7106
        %8395 = vmatpush.bf16.msra.mxu0 %v7102
        %8396 = vmatmul.bf16.gmra.mxu0 %v5300
        %v8397 = vpop.f32.mrf.mxu0
        %v8398 = vadd.f32 %v8385, %v8397
        %v8399 = vpop.f32.mrf.mxu0
        %8400 = vdwg.mxu0
        %8401 = vmatpush.bf16.msra.mxu0 %v7162
        %8402 = vmatpush.bf16.msra.mxu0 %v7158
        %8403 = vmatpush.bf16.msra.mxu0 %v7154
        %8404 = vmatpush.bf16.msra.mxu0 %v7150
        %8405 = vmatpush.bf16.msra.mxu0 %v7146
        %8406 = vmatpush.bf16.msra.mxu0 %v7142
        %8407 = vmatpush.bf16.msra.mxu0 %v7138
        %8408 = vmatpush.bf16.msra.mxu0 %v7134
        %8409 = vmatmul.bf16.gmra.mxu0 %v5301
        %v8410 = vpop.f32.mrf.mxu0
        %v8411 = vadd.f32 %v8398, %v8410
        %v8412 = vpop.f32.mrf.mxu0
        %8413 = vdwg.mxu0
        %8414 = vmatpush.bf16.msra.mxu0 %v7194
        %8415 = vmatpush.bf16.msra.mxu0 %v7190
        %8416 = vmatpush.bf16.msra.mxu0 %v7186
        %8417 = vmatpush.bf16.msra.mxu0 %v7182
        %8418 = vmatpush.bf16.msra.mxu0 %v7178
        %8419 = vmatpush.bf16.msra.mxu0 %v7174
        %8420 = vmatpush.bf16.msra.mxu0 %v7170
        %8421 = vmatpush.bf16.msra.mxu0 %v7166
        %8422 = vmatmul.bf16.gmra.mxu0 %v5302
        %v8423 = vpop.f32.mrf.mxu0
        %v8424 = vadd.f32 %v8411, %v8423
        %v8425 = vpop.f32.mrf.mxu0
        %8426 = vdwg.mxu0
        %8427 = vmatpush.bf16.msra.mxu0 %v7226
        %8428 = vmatpush.bf16.msra.mxu0 %v7222
        %8429 = vmatpush.bf16.msra.mxu0 %v7218
        %8430 = vmatpush.bf16.msra.mxu0 %v7214
        %8431 = vmatpush.bf16.msra.mxu0 %v7210
        %8432 = vmatpush.bf16.msra.mxu0 %v7206
        %8433 = vmatpush.bf16.msra.mxu0 %v7202
        %8434 = vmatpush.bf16.msra.mxu0 %v7198
        %8435 = vmatmul.bf16.gmra.mxu0 %v5303
        %v8436 = vpop.f32.mrf.mxu0
        %v8437 = vadd.f32 %v8424, %v8436
        %v8438 = vpop.f32.mrf.mxu0
        %8439 = vdwg.mxu0
        %8440 = vmatpush.bf16.msra.mxu0 %v7258
        %8441 = vmatpush.bf16.msra.mxu0 %v7254
        %8442 = vmatpush.bf16.msra.mxu0 %v7250
        %8443 = vmatpush.bf16.msra.mxu0 %v7246
        %8444 = vmatpush.bf16.msra.mxu0 %v7242
        %8445 = vmatpush.bf16.msra.mxu0 %v7238
        %8446 = vmatpush.bf16.msra.mxu0 %v7234
        %8447 = vmatpush.bf16.msra.mxu0 %v7230
        %8448 = vmatmul.bf16.gmra.mxu0 %v5304
        %v8449 = vpop.f32.mrf.mxu0
        %v8450 = vadd.f32 %v8437, %v8449
        %v8451 = vpop.f32.mrf.mxu0
        %8452 = vdwg.mxu0
        %8453 = vmatpush.bf16.msra.mxu0 %v7290
        %8454 = vmatpush.bf16.msra.mxu0 %v7286
        %8455 = vmatpush.bf16.msra.mxu0 %v7282
        %8456 = vmatpush.bf16.msra.mxu0 %v7278
        %8457 = vmatpush.bf16.msra.mxu0 %v7274
        %8458 = vmatpush.bf16.msra.mxu0 %v7270
        %8459 = vmatpush.bf16.msra.mxu0 %v7266
        %8460 = vmatpush.bf16.msra.mxu0 %v7262
        %8461 = vmatmul.bf16.gmra.mxu0 %v5305
        %v8462 = vpop.f32.mrf.mxu0
        %v8463 = vadd.f32 %v8450, %v8462
        %v8464 = vpop.f32.mrf.mxu0
        %8465 = vdwg.mxu0
        %8466 = vmatpush.bf16.msra.mxu0 %v7322
        %8467 = vmatpush.bf16.msra.mxu0 %v7318
        %8468 = vmatpush.bf16.msra.mxu0 %v7314
        %8469 = vmatpush.bf16.msra.mxu0 %v7310
        %8470 = vmatpush.bf16.msra.mxu0 %v7306
        %8471 = vmatpush.bf16.msra.mxu0 %v7302
        %8472 = vmatpush.bf16.msra.mxu0 %v7298
        %8473 = vmatpush.bf16.msra.mxu0 %v7294
        %8474 = vmatmul.bf16.gmra.mxu0 %v5306
        %v8475 = vpop.f32.mrf.mxu0
        %v8476 = vadd.f32 %v8463, %v8475
        %v8477 = vpop.f32.mrf.mxu0
        %8478 = vdwg.mxu0
        %8479 = vmatpush.bf16.msra.mxu0 %v7354
        %8480 = vmatpush.bf16.msra.mxu0 %v7350
        %8481 = vmatpush.bf16.msra.mxu0 %v7346
        %8482 = vmatpush.bf16.msra.mxu0 %v7342
        %8483 = vmatpush.bf16.msra.mxu0 %v7338
        %8484 = vmatpush.bf16.msra.mxu0 %v7334
        %8485 = vmatpush.bf16.msra.mxu0 %v7330
        %8486 = vmatpush.bf16.msra.mxu0 %v7326
        %8487 = vmatmul.bf16.gmra.mxu0 %v5307
        %v8488 = vpop.f32.mrf.mxu0
        %v8489 = vadd.f32 %v8476, %v8488
        %v8490 = vpop.f32.mrf.mxu0
        %8491 = vdwg.mxu0
        %8492 = vmatpush.bf16.msra.mxu0 %v6875
        %8493 = vmatpush.bf16.msra.mxu0 %v6871
        %8494 = vmatpush.bf16.msra.mxu0 %v6867
        %8495 = vmatpush.bf16.msra.mxu0 %v6863
        %8496 = vmatpush.bf16.msra.mxu0 %v6859
        %8497 = vmatpush.bf16.msra.mxu0 %v6855
        %8498 = vmatpush.bf16.msra.mxu0 %v6851
        %8499 = vmatpush.bf16.msra.mxu0 %v6847
        %8500 = vmatmul.bf16.gmra.mxu0 %v5292
        %v8501 = vpop.f32.mrf.mxu0
        %v8502 = vadd.f32 0.0, %v8501
        %v8503 = vpop.f32.mrf.mxu0
        %8504 = vdwg.mxu0
        %8505 = vmatpush.bf16.msra.mxu0 %v6907
        %8506 = vmatpush.bf16.msra.mxu0 %v6903
        %8507 = vmatpush.bf16.msra.mxu0 %v6899
        %8508 = vmatpush.bf16.msra.mxu0 %v6895
        %8509 = vmatpush.bf16.msra.mxu0 %v6891
        %8510 = vmatpush.bf16.msra.mxu0 %v6887
        %8511 = vmatpush.bf16.msra.mxu0 %v6883
        %8512 = vmatpush.bf16.msra.mxu0 %v6879
        %8513 = vmatmul.bf16.gmra.mxu0 %v5293
        %v8514 = vpop.f32.mrf.mxu0
        %v8515 = vadd.f32 %v8502, %v8514
        %v8516 = vpop.f32.mrf.mxu0
        %8517 = vdwg.mxu0
        %8518 = vmatpush.bf16.msra.mxu0 %v6939
        %8519 = vmatpush.bf16.msra.mxu0 %v6935
        %8520 = vmatpush.bf16.msra.mxu0 %v6931
        %8521 = vmatpush.bf16.msra.mxu0 %v6927
        %8522 = vmatpush.bf16.msra.mxu0 %v6923
        %8523 = vmatpush.bf16.msra.mxu0 %v6919
        %8524 = vmatpush.bf16.msra.mxu0 %v6915
        %8525 = vmatpush.bf16.msra.mxu0 %v6911
        %8526 = vmatmul.bf16.gmra.mxu0 %v5294
        %v8527 = vpop.f32.mrf.mxu0
        %v8528 = vadd.f32 %v8515, %v8527
        %v8529 = vpop.f32.mrf.mxu0
        %8530 = vdwg.mxu0
        %8531 = vmatpush.bf16.msra.mxu0 %v6971
        %8532 = vmatpush.bf16.msra.mxu0 %v6967
        %8533 = vmatpush.bf16.msra.mxu0 %v6963
        %8534 = vmatpush.bf16.msra.mxu0 %v6959
        %8535 = vmatpush.bf16.msra.mxu0 %v6955
        %8536 = vmatpush.bf16.msra.mxu0 %v6951
        %8537 = vmatpush.bf16.msra.mxu0 %v6947
        %8538 = vmatpush.bf16.msra.mxu0 %v6943
        %8539 = vmatmul.bf16.gmra.mxu0 %v5295
        %v8540 = vpop.f32.mrf.mxu0
        %v8541 = vadd.f32 %v8528, %v8540
        %v8542 = vpop.f32.mrf.mxu0
        %8543 = vdwg.mxu0
        %8544 = vmatpush.bf16.msra.mxu0 %v7003
        %8545 = vmatpush.bf16.msra.mxu0 %v6999
        %8546 = vmatpush.bf16.msra.mxu0 %v6995
        %8547 = vmatpush.bf16.msra.mxu0 %v6991
        %8548 = vmatpush.bf16.msra.mxu0 %v6987
        %8549 = vmatpush.bf16.msra.mxu0 %v6983
        %8550 = vmatpush.bf16.msra.mxu0 %v6979
        %8551 = vmatpush.bf16.msra.mxu0 %v6975
        %8552 = vmatmul.bf16.gmra.mxu0 %v5296
        %v8553 = vpop.f32.mrf.mxu0
        %v8554 = vadd.f32 %v8541, %v8553
        %v8555 = vpop.f32.mrf.mxu0
        %8556 = vdwg.mxu0
        %8557 = vmatpush.bf16.msra.mxu0 %v7035
        %8558 = vmatpush.bf16.msra.mxu0 %v7031
        %8559 = vmatpush.bf16.msra.mxu0 %v7027
        %8560 = vmatpush.bf16.msra.mxu0 %v7023
        %8561 = vmatpush.bf16.msra.mxu0 %v7019
        %8562 = vmatpush.bf16.msra.mxu0 %v7015
        %8563 = vmatpush.bf16.msra.mxu0 %v7011
        %8564 = vmatpush.bf16.msra.mxu0 %v7007
        %8565 = vmatmul.bf16.gmra.mxu0 %v5297
        %v8566 = vpop.f32.mrf.mxu0
        %v8567 = vadd.f32 %v8554, %v8566
        %v8568 = vpop.f32.mrf.mxu0
        %8569 = vdwg.mxu0
        %8570 = vmatpush.bf16.msra.mxu0 %v7067
        %8571 = vmatpush.bf16.msra.mxu0 %v7063
        %8572 = vmatpush.bf16.msra.mxu0 %v7059
        %8573 = vmatpush.bf16.msra.mxu0 %v7055
        %8574 = vmatpush.bf16.msra.mxu0 %v7051
        %8575 = vmatpush.bf16.msra.mxu0 %v7047
        %8576 = vmatpush.bf16.msra.mxu0 %v7043
        %8577 = vmatpush.bf16.msra.mxu0 %v7039
        %8578 = vmatmul.bf16.gmra.mxu0 %v5298
        %v8579 = vpop.f32.mrf.mxu0
        %v8580 = vadd.f32 %v8567, %v8579
        %v8581 = vpop.f32.mrf.mxu0
        %8582 = vdwg.mxu0
        %8583 = vmatpush.bf16.msra.mxu0 %v7099
        %8584 = vmatpush.bf16.msra.mxu0 %v7095
        %8585 = vmatpush.bf16.msra.mxu0 %v7091
        %8586 = vmatpush.bf16.msra.mxu0 %v7087
        %8587 = vmatpush.bf16.msra.mxu0 %v7083
        %8588 = vmatpush.bf16.msra.mxu0 %v7079
        %8589 = vmatpush.bf16.msra.mxu0 %v7075
        %8590 = vmatpush.bf16.msra.mxu0 %v7071
        %8591 = vmatmul.bf16.gmra.mxu0 %v5299
        %v8592 = vpop.f32.mrf.mxu0
        %v8593 = vadd.f32 %v8580, %v8592
        %v8594 = vpop.f32.mrf.mxu0
        %8595 = vdwg.mxu0
        %8596 = vmatpush.bf16.msra.mxu0 %v7131
        %8597 = vmatpush.bf16.msra.mxu0 %v7127
        %8598 = vmatpush.bf16.msra.mxu0 %v7123
        %8599 = vmatpush.bf16.msra.mxu0 %v7119
        %8600 = vmatpush.bf16.msra.mxu0 %v7115
        %8601 = vmatpush.bf16.msra.mxu0 %v7111
        %8602 = vmatpush.bf16.msra.mxu0 %v7107
        %8603 = vmatpush.bf16.msra.mxu0 %v7103
        %8604 = vmatmul.bf16.gmra.mxu0 %v5300
        %v8605 = vpop.f32.mrf.mxu0
        %v8606 = vadd.f32 %v8593, %v8605
        %v8607 = vpop.f32.mrf.mxu0
        %8608 = vdwg.mxu0
        %8609 = vmatpush.bf16.msra.mxu0 %v7163
        %8610 = vmatpush.bf16.msra.mxu0 %v7159
        %8611 = vmatpush.bf16.msra.mxu0 %v7155
        %8612 = vmatpush.bf16.msra.mxu0 %v7151
        %8613 = vmatpush.bf16.msra.mxu0 %v7147
        %8614 = vmatpush.bf16.msra.mxu0 %v7143
        %8615 = vmatpush.bf16.msra.mxu0 %v7139
        %8616 = vmatpush.bf16.msra.mxu0 %v7135
        %8617 = vmatmul.bf16.gmra.mxu0 %v5301
        %v8618 = vpop.f32.mrf.mxu0
        %v8619 = vadd.f32 %v8606, %v8618
        %v8620 = vpop.f32.mrf.mxu0
        %8621 = vdwg.mxu0
        %8622 = vmatpush.bf16.msra.mxu0 %v7195
        %8623 = vmatpush.bf16.msra.mxu0 %v7191
        %8624 = vmatpush.bf16.msra.mxu0 %v7187
        %8625 = vmatpush.bf16.msra.mxu0 %v7183
        %8626 = vmatpush.bf16.msra.mxu0 %v7179
        %8627 = vmatpush.bf16.msra.mxu0 %v7175
        %8628 = vmatpush.bf16.msra.mxu0 %v7171
        %8629 = vmatpush.bf16.msra.mxu0 %v7167
        %8630 = vmatmul.bf16.gmra.mxu0 %v5302
        %v8631 = vpop.f32.mrf.mxu0
        %v8632 = vadd.f32 %v8619, %v8631
        %v8633 = vpop.f32.mrf.mxu0
        %8634 = vdwg.mxu0
        %8635 = vmatpush.bf16.msra.mxu0 %v7227
        %8636 = vmatpush.bf16.msra.mxu0 %v7223
        %8637 = vmatpush.bf16.msra.mxu0 %v7219
        %8638 = vmatpush.bf16.msra.mxu0 %v7215
        %8639 = vmatpush.bf16.msra.mxu0 %v7211
        %8640 = vmatpush.bf16.msra.mxu0 %v7207
        %8641 = vmatpush.bf16.msra.mxu0 %v7203
        %8642 = vmatpush.bf16.msra.mxu0 %v7199
        %8643 = vmatmul.bf16.gmra.mxu0 %v5303
        %v8644 = vpop.f32.mrf.mxu0
        %v8645 = vadd.f32 %v8632, %v8644
        %v8646 = vpop.f32.mrf.mxu0
        %8647 = vdwg.mxu0
        %8648 = vmatpush.bf16.msra.mxu0 %v7259
        %8649 = vmatpush.bf16.msra.mxu0 %v7255
        %8650 = vmatpush.bf16.msra.mxu0 %v7251
        %8651 = vmatpush.bf16.msra.mxu0 %v7247
        %8652 = vmatpush.bf16.msra.mxu0 %v7243
        %8653 = vmatpush.bf16.msra.mxu0 %v7239
        %8654 = vmatpush.bf16.msra.mxu0 %v7235
        %8655 = vmatpush.bf16.msra.mxu0 %v7231
        %8656 = vmatmul.bf16.gmra.mxu0 %v5304
        %v8657 = vpop.f32.mrf.mxu0
        %v8658 = vadd.f32 %v8645, %v8657
        %v8659 = vpop.f32.mrf.mxu0
        %8660 = vdwg.mxu0
        %8661 = vmatpush.bf16.msra.mxu0 %v7291
        %8662 = vmatpush.bf16.msra.mxu0 %v7287
        %8663 = vmatpush.bf16.msra.mxu0 %v7283
        %8664 = vmatpush.bf16.msra.mxu0 %v7279
        %8665 = vmatpush.bf16.msra.mxu0 %v7275
        %8666 = vmatpush.bf16.msra.mxu0 %v7271
        %8667 = vmatpush.bf16.msra.mxu0 %v7267
        %8668 = vmatpush.bf16.msra.mxu0 %v7263
        %8669 = vmatmul.bf16.gmra.mxu0 %v5305
        %v8670 = vpop.f32.mrf.mxu0
        %v8671 = vadd.f32 %v8658, %v8670
        %v8672 = vpop.f32.mrf.mxu0
        %8673 = vdwg.mxu0
        %8674 = vmatpush.bf16.msra.mxu0 %v7323
        %8675 = vmatpush.bf16.msra.mxu0 %v7319
        %8676 = vmatpush.bf16.msra.mxu0 %v7315
        %8677 = vmatpush.bf16.msra.mxu0 %v7311
        %8678 = vmatpush.bf16.msra.mxu0 %v7307
        %8679 = vmatpush.bf16.msra.mxu0 %v7303
        %8680 = vmatpush.bf16.msra.mxu0 %v7299
        %8681 = vmatpush.bf16.msra.mxu0 %v7295
        %8682 = vmatmul.bf16.gmra.mxu0 %v5306
        %v8683 = vpop.f32.mrf.mxu0
        %v8684 = vadd.f32 %v8671, %v8683
        %v8685 = vpop.f32.mrf.mxu0
        %8686 = vdwg.mxu0
        %8687 = vmatpush.bf16.msra.mxu0 %v7355
        %8688 = vmatpush.bf16.msra.mxu0 %v7351
        %8689 = vmatpush.bf16.msra.mxu0 %v7347
        %8690 = vmatpush.bf16.msra.mxu0 %v7343
        %8691 = vmatpush.bf16.msra.mxu0 %v7339
        %8692 = vmatpush.bf16.msra.mxu0 %v7335
        %8693 = vmatpush.bf16.msra.mxu0 %v7331
        %8694 = vmatpush.bf16.msra.mxu0 %v7327
        %8695 = vmatmul.bf16.gmra.mxu0 %v5307
        %v8696 = vpop.f32.mrf.mxu0
        %v8697 = vadd.f32 %v8684, %v8696
        %v8698 = vpop.f32.mrf.mxu0
        %8699 = vdwg.mxu0
        %v8700 = vadd.f32 %v4776, %v8073
        %v8701 = vadd.f32 %v4777, %v8281
        %v8702 = vadd.f32 %v4778, %v8489
        %v8703 = vadd.f32 %v4779, %v8697
        %8704 = vst [vmem:[#allocation3] sm:$0xff] %v8700
        %8705 = vst [vmem:[#allocation3 + $0x8] sm:$0xff] %v8701
        %8706 = vst [vmem:[#allocation3 + $0x10] sm:$0xff] %v8702
        %8707 = vst [vmem:[#allocation3 + $0x18] sm:$0xff] %v8703
        %p8708 = scmp.eq.s32.totalorder %s27, 1
        // Predicated region
        $region81: #{tpu_custom_call.1} parent=47 // pred_check
          %p8709 = pneg %p8708
        $region82: #{tpu_custom_call.1} parent=47 // pred_check_branch
          %8711 = sbr.rel (%p8709) target = $region84
        $region83: #{tpu_custom_call.1} parent=47 // pred_region
          %v8712 = vld [vmem:[#allocation7 + $0x40] sm:$0xf]
          %v8713 = vld [vmem:[#allocation7 + $0x44] sm:$0xf]
          %v8714 = vld [vmem:[#allocation7 + $0x48] sm:$0xf]
          %v8715 = vld [vmem:[#allocation7 + $0x4c] sm:$0xf]
          %v8716 = vld [vmem:[#allocation7 + $0x50] sm:$0xf]
          %v8717 = vld [vmem:[#allocation7 + $0x54] sm:$0xf]
          %v8718 = vld [vmem:[#allocation7 + $0x58] sm:$0xf]
          %v8719 = vld [vmem:[#allocation7 + $0x5c] sm:$0xf]
          %v8720 = vld [vmem:[#allocation7 + $0x60] sm:$0xf]
          %v8721 = vld [vmem:[#allocation7 + $0x64] sm:$0xf]
          %v8722 = vld [vmem:[#allocation7 + $0x68] sm:$0xf]
          %v8723 = vld [vmem:[#allocation7 + $0x6c] sm:$0xf]
          %v8724 = vld [vmem:[#allocation7 + $0x70] sm:$0xf]
          %v8725 = vld [vmem:[#allocation7 + $0x74] sm:$0xf]
          %v8726 = vld [vmem:[#allocation7 + $0x78] sm:$0xf]
          %v8727 = vld [vmem:[#allocation7 + $0x7c] sm:$0xf]
          %v8728 = vld [vmem:[#allocation7 + $0x80] sm:$0xf]
          %v8729 = vld [vmem:[#allocation7 + $0x84] sm:$0xf]
          %v8730 = vld [vmem:[#allocation7 + $0x88] sm:$0xf]
          %v8731 = vld [vmem:[#allocation7 + $0x8c] sm:$0xf]
          %v8732 = vld [vmem:[#allocation7 + $0x90] sm:$0xf]
          %v8733 = vld [vmem:[#allocation7 + $0x94] sm:$0xf]
          %v8734 = vld [vmem:[#allocation7 + $0x98] sm:$0xf]
          %v8735 = vld [vmem:[#allocation7 + $0x9c] sm:$0xf]
          %v8736 = vld [vmem:[#allocation7 + $0xa0] sm:$0xf]
          %v8737 = vld [vmem:[#allocation7 + $0xa4] sm:$0xf]
          %v8738 = vld [vmem:[#allocation7 + $0xa8] sm:$0xf]
          %v8739 = vld [vmem:[#allocation7 + $0xac] sm:$0xf]
          %v8740 = vld [vmem:[#allocation7 + $0xb0] sm:$0xf]
          %v8741 = vld [vmem:[#allocation7 + $0xb4] sm:$0xf]
          %v8742 = vld [vmem:[#allocation7 + $0xb8] sm:$0xf]
          %v8743 = vld [vmem:[#allocation7 + $0xbc] sm:$0xf]
          %v8744 = vld [vmem:[#allocation7 + $0xc0] sm:$0xf]
          %v8745 = vld [vmem:[#allocation7 + $0xc4] sm:$0xf]
          %v8746 = vld [vmem:[#allocation7 + $0xc8] sm:$0xf]
          %v8747 = vld [vmem:[#allocation7 + $0xcc] sm:$0xf]
          %v8748 = vld [vmem:[#allocation7 + $0xd0] sm:$0xf]
          %v8749 = vld [vmem:[#allocation7 + $0xd4] sm:$0xf]
          %v8750 = vld [vmem:[#allocation7 + $0xd8] sm:$0xf]
          %v8751 = vld [vmem:[#allocation7 + $0xdc] sm:$0xf]
          %v8752 = vld [vmem:[#allocation7 + $0xe0] sm:$0xf]
          %v8753 = vld [vmem:[#allocation7 + $0xe4] sm:$0xf]
          %v8754 = vld [vmem:[#allocation7 + $0xe8] sm:$0xf]
          %v8755 = vld [vmem:[#allocation7 + $0xec] sm:$0xf]
          %v8756 = vld [vmem:[#allocation7 + $0xf0] sm:$0xf]
          %v8757 = vld [vmem:[#allocation7 + $0xf4] sm:$0xf]
          %v8758 = vld [vmem:[#allocation7 + $0xf8] sm:$0xf]
          %v8759 = vld [vmem:[#allocation7 + $0xfc] sm:$0xf]
          %v8760 = vld [vmem:[#allocation7 + $0x100] sm:$0xf]
          %v8761 = vld [vmem:[#allocation7 + $0x104] sm:$0xf]
          %v8762 = vld [vmem:[#allocation7 + $0x108] sm:$0xf]
          %v8763 = vld [vmem:[#allocation7 + $0x10c] sm:$0xf]
          %v8764 = vld [vmem:[#allocation7 + $0x110] sm:$0xf]
          %v8765 = vld [vmem:[#allocation7 + $0x114] sm:$0xf]
          %v8766 = vld [vmem:[#allocation7 + $0x118] sm:$0xf]
          %v8767 = vld [vmem:[#allocation7 + $0x11c] sm:$0xf]
          %v8768 = vld [vmem:[#allocation7 + $0x120] sm:$0xf]
          %v8769 = vld [vmem:[#allocation7 + $0x124] sm:$0xf]
          %v8770 = vld [vmem:[#allocation7 + $0x128] sm:$0xf]
          %v8771 = vld [vmem:[#allocation7 + $0x12c] sm:$0xf]
          %v8772 = vld [vmem:[#allocation7 + $0x130] sm:$0xf]
          %v8773 = vld [vmem:[#allocation7 + $0x134] sm:$0xf]
          %v8774 = vld [vmem:[#allocation7 + $0x138] sm:$0xf]
          %v8775 = vld [vmem:[#allocation7 + $0x13c] sm:$0xf]
          %v8776 = vld [vmem:[#allocation9 + $0x10] sm:$0xf]
          %v8777 = vld [vmem:[#allocation9 + $0x24] sm:$0xf]
          %v8778 = vld [vmem:[#allocation9 + $0x38] sm:$0xf]
          %v8779 = vld [vmem:[#allocation9 + $0x4c] sm:$0xf]
          %v8780 = vld [vmem:[#allocation9 + $0x60] sm:$0xf]
          %v8781 = vld [vmem:[#allocation9 + $0x74] sm:$0xf]
          %v8782 = vld [vmem:[#allocation9 + $0x88] sm:$0xf]
          %v8783 = vld [vmem:[#allocation9 + $0x9c] sm:$0xf]
          %v8784 = vld [vmem:[#allocation9 + $0xb0] sm:$0xf]
          %v8785 = vld [vmem:[#allocation9 + $0xc4] sm:$0xf]
          %v8786 = vld [vmem:[#allocation9 + $0xd8] sm:$0xf]
          %v8787 = vld [vmem:[#allocation9 + $0xec] sm:$0xf]
          %v8788 = vld [vmem:[#allocation9 + $0x100] sm:$0xf]
          %v8789 = vld [vmem:[#allocation9 + $0x114] sm:$0xf]
          %v8790 = vld [vmem:[#allocation9 + $0x128] sm:$0xf]
          %v8791 = vld [vmem:[#allocation9 + $0x13c] sm:$0xf]
          %v8792 = vld [vmem:[#allocation10 + $0x5] sm:$0xf]
          %v8793 = vld [vmem:[#allocation10 + $0x9] sm:$0x1]
          %v8794 = vld [vmem:[#allocation10 + $0xa] sm:$0x1]
          %v8795 = vld [vmem:[#allocation3] sm:$0xff]
          %v8796 = vld [vmem:[#allocation3 + $0x8] sm:$0xff]
          %v8797 = vld [vmem:[#allocation3 + $0x10] sm:$0xff]
          %v8798 = vld [vmem:[#allocation3 + $0x18] sm:$0xff]
          %v8800 = vperm.slane %v8792, 0
          %v8801 = vperm.slane %v8792, 1
          %v8802 = vperm.slane %v8792, 2
          %v8803 = vperm.slane %v8792, 3
          %v8808 = vadd.f32 %v8795, %v8800
          %v8809 = vadd.f32 %v8796, %v8801
          %v8810 = vadd.f32 %v8797, %v8802
          %v8811 = vadd.f32 %v8798, %v8803
          %v8812 = vmax.f32 %v8808, 0.0
          %v8813 = vmax.f32 %v8809, 0.0
          %v8814 = vmax.f32 %v8810, 0.0
          %v8815 = vmax.f32 %v8811, 0.0
          %v8816 = vpack.c.bf16 %v8812, %v8812
          %v8817 = vpack.c.bf16 %v8813, %v8813
          %v8818 = vpack.c.bf16 %v8814, %v8814
          %v8819 = vpack.c.bf16 %v8815, %v8815
          %v8821 = vperm.slane %v8793, 0
          %v8887 = vunpack.c.l.b16 %v8712
          %v8888 = vunpack.c.l.b16 %v8713
          %v8889 = vunpack.c.l.b16 %v8714
          %v8890 = vunpack.c.l.b16 %v8715
          %v8891 = vunpack.c.l.b16 %v8716
          %v8892 = vunpack.c.l.b16 %v8717
          %v8893 = vunpack.c.l.b16 %v8718
          %v8894 = vunpack.c.l.b16 %v8719
          %v8895 = vunpack.c.l.b16 %v8720
          %v8896 = vunpack.c.l.b16 %v8721
          %v8897 = vunpack.c.l.b16 %v8722
          %v8898 = vunpack.c.l.b16 %v8723
          %v8899 = vunpack.c.l.b16 %v8724
          %v8900 = vunpack.c.l.b16 %v8725
          %v8901 = vunpack.c.l.b16 %v8726
          %v8902 = vunpack.c.l.b16 %v8727
          %v8903 = vunpack.c.l.b16 %v8728
          %v8904 = vunpack.c.l.b16 %v8729
          %v8905 = vunpack.c.l.b16 %v8730
          %v8906 = vunpack.c.l.b16 %v8731
          %v8907 = vunpack.c.l.b16 %v8732
          %v8908 = vunpack.c.l.b16 %v8733
          %v8909 = vunpack.c.l.b16 %v8734
          %v8910 = vunpack.c.l.b16 %v8735
          %v8911 = vunpack.c.l.b16 %v8736
          %v8912 = vunpack.c.l.b16 %v8737
          %v8913 = vunpack.c.l.b16 %v8738
          %v8914 = vunpack.c.l.b16 %v8739
          %v8915 = vunpack.c.l.b16 %v8740
          %v8916 = vunpack.c.l.b16 %v8741
          %v8917 = vunpack.c.l.b16 %v8742
          %v8918 = vunpack.c.l.b16 %v8743
          %v8919 = vunpack.c.l.b16 %v8744
          %v8920 = vunpack.c.l.b16 %v8745
          %v8921 = vunpack.c.l.b16 %v8746
          %v8922 = vunpack.c.l.b16 %v8747
          %v8923 = vunpack.c.l.b16 %v8748
          %v8924 = vunpack.c.l.b16 %v8749
          %v8925 = vunpack.c.l.b16 %v8750
          %v8926 = vunpack.c.l.b16 %v8751
          %v8927 = vunpack.c.l.b16 %v8752
          %v8928 = vunpack.c.l.b16 %v8753
          %v8929 = vunpack.c.l.b16 %v8754
          %v8930 = vunpack.c.l.b16 %v8755
          %v8931 = vunpack.c.l.b16 %v8756
          %v8932 = vunpack.c.l.b16 %v8757
          %v8933 = vunpack.c.l.b16 %v8758
          %v8934 = vunpack.c.l.b16 %v8759
          %v8935 = vunpack.c.l.b16 %v8760
          %v8936 = vunpack.c.l.b16 %v8761
          %v8937 = vunpack.c.l.b16 %v8762
          %v8938 = vunpack.c.l.b16 %v8763
          %v8939 = vunpack.c.l.b16 %v8764
          %v8940 = vunpack.c.l.b16 %v8765
          %v8941 = vunpack.c.l.b16 %v8766
          %v8942 = vunpack.c.l.b16 %v8767
          %v8943 = vunpack.c.l.b16 %v8768
          %v8944 = vunpack.c.l.b16 %v8769
          %v8945 = vunpack.c.l.b16 %v8770
          %v8946 = vunpack.c.l.b16 %v8771
          %v8947 = vunpack.c.l.b16 %v8772
          %v8948 = vunpack.c.l.b16 %v8773
          %v8949 = vunpack.c.l.b16 %v8774
          %v8950 = vunpack.c.l.b16 %v8775
          %v8951 = vpack.c.b16 %v8888, %v8887
          %v8952 = vpack.c.b16 %v8890, %v8889
          %v8953 = vpack.c.b16 %v8892, %v8891
          %v8954 = vpack.c.b16 %v8894, %v8893
          %v8955 = vpack.c.b16 %v8896, %v8895
          %v8956 = vpack.c.b16 %v8898, %v8897
          %v8957 = vpack.c.b16 %v8900, %v8899
          %v8958 = vpack.c.b16 %v8902, %v8901
          %v8959 = vpack.c.b16 %v8904, %v8903
          %v8960 = vpack.c.b16 %v8906, %v8905
          %v8961 = vpack.c.b16 %v8908, %v8907
          %v8962 = vpack.c.b16 %v8910, %v8909
          %v8963 = vpack.c.b16 %v8912, %v8911
          %v8964 = vpack.c.b16 %v8914, %v8913
          %v8965 = vpack.c.b16 %v8916, %v8915
          %v8966 = vpack.c.b16 %v8918, %v8917
          %v8967 = vpack.c.b16 %v8920, %v8919
          %v8968 = vpack.c.b16 %v8922, %v8921
          %v8969 = vpack.c.b16 %v8924, %v8923
          %v8970 = vpack.c.b16 %v8926, %v8925
          %v8971 = vpack.c.b16 %v8928, %v8927
          %v8972 = vpack.c.b16 %v8930, %v8929
          %v8973 = vpack.c.b16 %v8932, %v8931
          %v8974 = vpack.c.b16 %v8934, %v8933
          %v8975 = vpack.c.b16 %v8936, %v8935
          %v8976 = vpack.c.b16 %v8938, %v8937
          %v8977 = vpack.c.b16 %v8940, %v8939
          %v8978 = vpack.c.b16 %v8942, %v8941
          %v8979 = vpack.c.b16 %v8944, %v8943
          %v8980 = vpack.c.b16 %v8946, %v8945
          %v8981 = vpack.c.b16 %v8948, %v8947
          %v8982 = vpack.c.b16 %v8950, %v8949
          %9015 = vmatpush.bf16.msra.mxu0 %v8958
          %9016 = vmatpush.bf16.msra.mxu0 %v8957
          %9017 = vmatpush.bf16.msra.mxu0 %v8956
          %9018 = vmatpush.bf16.msra.mxu0 %v8955
          %9019 = vmatpush.bf16.msra.mxu0 %v8954
          %9020 = vmatpush.bf16.msra.mxu0 %v8953
          %9021 = vmatpush.bf16.msra.mxu0 %v8952
          %9022 = vmatpush.bf16.msra.mxu0 %v8951
          %9023 = vmatmul.bf16.gmra.mxu0 %v8816
          %v9024 = vpop.f32.mrf.mxu0
          %v9025 = vadd.f32 %v8821, %v9024
          %v9026 = vpop.f32.mrf.mxu0
          %9027 = vdwg.mxu0
          %9028 = vmatpush.bf16.msra.mxu0 %v8966
          %9029 = vmatpush.bf16.msra.mxu0 %v8965
          %9030 = vmatpush.bf16.msra.mxu0 %v8964
          %9031 = vmatpush.bf16.msra.mxu0 %v8963
          %9032 = vmatpush.bf16.msra.mxu0 %v8962
          %9033 = vmatpush.bf16.msra.mxu0 %v8961
          %9034 = vmatpush.bf16.msra.mxu0 %v8960
          %9035 = vmatpush.bf16.msra.mxu0 %v8959
          %9036 = vmatmul.bf16.gmra.mxu0 %v8817
          %v9037 = vpop.f32.mrf.mxu0
          %v9038 = vadd.f32 %v9025, %v9037
          %v9039 = vpop.f32.mrf.mxu0
          %9040 = vdwg.mxu0
          %9041 = vmatpush.bf16.msra.mxu0 %v8974
          %9042 = vmatpush.bf16.msra.mxu0 %v8973
          %9043 = vmatpush.bf16.msra.mxu0 %v8972
          %9044 = vmatpush.bf16.msra.mxu0 %v8971
          %9045 = vmatpush.bf16.msra.mxu0 %v8970
          %9046 = vmatpush.bf16.msra.mxu0 %v8969
          %9047 = vmatpush.bf16.msra.mxu0 %v8968
          %9048 = vmatpush.bf16.msra.mxu0 %v8967
          %9049 = vmatmul.bf16.gmra.mxu0 %v8818
          %v9050 = vpop.f32.mrf.mxu0
          %v9051 = vadd.f32 %v9038, %v9050
          %v9052 = vpop.f32.mrf.mxu0
          %9053 = vdwg.mxu0
          %9054 = vmatpush.bf16.msra.mxu0 %v8982
          %9055 = vmatpush.bf16.msra.mxu0 %v8981
          %9056 = vmatpush.bf16.msra.mxu0 %v8980
          %9057 = vmatpush.bf16.msra.mxu0 %v8979
          %9058 = vmatpush.bf16.msra.mxu0 %v8978
          %9059 = vmatpush.bf16.msra.mxu0 %v8977
          %9060 = vmatpush.bf16.msra.mxu0 %v8976
          %9061 = vmatpush.bf16.msra.mxu0 %v8975
          %9062 = vmatmul.bf16.gmra.mxu0 %v8819
          %v9063 = vpop.f32.mrf.mxu0
          %v9064 = vadd.f32 %v9051, %v9063
          %v9065 = vpop.f32.mrf.mxu0
          %9066 = vdwg.mxu0
          %v9067 = vmax.f32 %v9064, 0.0
          %v9068 = vpack.c.bf16 %v9067, %v9067
          %v9070 = vperm.slane %v8794, 0
          %v9088 = vunpack.c.l.b16 %v8776
          %v9089 = vunpack.c.l.b16 %v8777
          %v9090 = vunpack.c.l.b16 %v8778
          %v9091 = vunpack.c.l.b16 %v8779
          %v9092 = vunpack.c.l.b16 %v8780
          %v9093 = vunpack.c.l.b16 %v8781
          %v9094 = vunpack.c.l.b16 %v8782
          %v9095 = vunpack.c.l.b16 %v8783
          %v9096 = vunpack.c.l.b16 %v8784
          %v9097 = vunpack.c.l.b16 %v8785
          %v9098 = vunpack.c.l.b16 %v8786
          %v9099 = vunpack.c.l.b16 %v8787
          %v9100 = vunpack.c.l.b16 %v8788
          %v9101 = vunpack.c.l.b16 %v8789
          %v9102 = vunpack.c.l.b16 %v8790
          %v9103 = vunpack.c.l.b16 %v8791
          %v9104 = vpack.c.b16 %v9089, %v9088
          %v9105 = vpack.c.b16 %v9091, %v9090
          %v9106 = vpack.c.b16 %v9093, %v9092
          %v9107 = vpack.c.b16 %v9095, %v9094
          %v9108 = vpack.c.b16 %v9097, %v9096
          %v9109 = vpack.c.b16 %v9099, %v9098
          %v9110 = vpack.c.b16 %v9101, %v9100
          %v9111 = vpack.c.b16 %v9103, %v9102
          %9120 = vmatpush.bf16.msra.mxu0 %v9111
          %9121 = vmatpush.bf16.msra.mxu0 %v9110
          %9122 = vmatpush.bf16.msra.mxu0 %v9109
          %9123 = vmatpush.bf16.msra.mxu0 %v9108
          %9124 = vmatpush.bf16.msra.mxu0 %v9107
          %9125 = vmatpush.bf16.msra.mxu0 %v9106
          %9126 = vmatpush.bf16.msra.mxu0 %v9105
          %9127 = vmatpush.bf16.msra.mxu0 %v9104
          %9128 = vmatmul.bf16.gmra.mxu0 %v9068
          %v9129 = vpop.f32.mrf.mxu0
          %v9130 = vadd.f32 %v9070, %v9129
          %v9131 = vpop.f32.mrf.mxu0
          %9132 = vdwg.mxu0
          %9133 = vst [vmem:[#allocation15] sm:$0xff] %v9130
        $region84: #{tpu_custom_call.1} parent=47 // pred_fallthru
          _
        // Predicated region
        $region85: #{tpu_custom_call.1} parent=47 // pred_check
          %p9134 = pneg %p219
        $region86: #{tpu_custom_call.1} parent=47 // pred_check_branch
          %9136 = sbr.rel (%p9134) target = $region88
        $region87: #{tpu_custom_call.1} parent=47 // pred_region
          %9138 = vsyncadd [#allocation6], 0
          %s9139 = smul.addr %s26, 8
          %s9140 = scalar_lea.hbm %s7, %s9139
          %s9142 = sshll.u32 [#allocation15], 4
          %s9143 = int_to_ptr.vmem [resolvable:$true] %s9142
          %s9144 = sshll.u32 %s9140, 4
          %s9145 = int_to_ptr.hbm [resolvable:$true] %s9144
          %9147 = dma.vmem_to_hbm [thread:$0]  %s9143, 128, %s9145, [#allocation6]
        $region88: #{tpu_custom_call.1} parent=47 // pred_fallthru
          _
        // Predicated region
        $region89: #{tpu_custom_call.1} parent=47 // pred_check
          %p9148 = pneg %p219
        $region90: #{tpu_custom_call.1} parent=47 // pred_check_branch
          %9150 = sbr.rel (%p9148) target = $region92
        $region91: #{tpu_custom_call.1} parent=47 // pred_region
          %9152 = dma.done [#allocation6], 128
        $region92: #{tpu_custom_call.1} parent=47 // pred_fallthru
          _
      $region48: #{tpu_custom_call.1} parent=5 // pred_fallthru
        _
      %p9153 = scmp.le.s32.totalorder 2, %s17
      // Predicated region
      $region93: #{tpu_custom_call.1} parent=5 // pred_check
        %p9154 = pneg %p9153
      $region94: #{tpu_custom_call.1} parent=5 // pred_check_branch
        %9156 = sbr.rel (%p9154) target = $region96
      $region95: #{tpu_custom_call.1} parent=5 // pred_region
        %s9157 = ssub.s32 %s17, 2
      $region96: #{tpu_custom_call.1} parent=5 // pred_fallthru
        _
    $region6: #{tpu_custom_call.1} parent=1 // loop_footer
      %s21 = sadd.s32 1, %s17
    $region7: #{tpu_custom_call.1} parent=1 // loop_footer_branch
      %16 = sbr.rel target = $region3
    $region8: #{tpu_custom_call.1} parent=1 // loop_exit
      _
    %9158 = vsyncpa [#allocation5], 1
    %s9159 = scalar_lea.sflag [#allocation5], 1
    %9160 = vsyncpa %s9159, 1
    %9161 = vsyncpa [#allocation8], 1
    %9162 = vsyncpa [#allocation11], 1
    %9163 = vsyncpa [#allocation6], 1
    %s9164 = scalar_lea.sflag [#allocation6], 1
    %9165 = vsyncpa %s9164, 1

</llo_original>
